<compile_context>
chip_gen: v7x
topology: tpu7x:2x2x1
jax: 0.10.0
libtpu: 0.0.40
codegen_flags: <defaults>
</compile_context>

<pallas_src>
import functools

import jax
import jax.numpy as jnp
from jax.experimental import pallas as pl
from jax.experimental.pallas import tpu as pltpu

EPS = 1.1920928955078125e-07  # torch.finfo(torch.float32).eps (nn.RMSNorm default)
WPAD = 8                      # zero-pad width along W in halo scratch (sublane aligned)


# --------------------------- in-kernel helpers -------------------------------

def _mish(x):
    return x * jnp.tanh(jax.nn.softplus(x))


def _rms_norm(x2d, w_row):
    ms = jnp.mean(x2d * x2d, axis=-1, keepdims=True)
    return x2d * jax.lax.rsqrt(ms + EPS) * w_row


def _dw_conv(pad_ref, src_img, w_ref, ksize):
    """Depthwise KxK conv with implicit zero padding via a pre-zeroed scratch.

    pad_ref: VMEM ref (h + ksize - 1, w + 2*WPAD, c) with zero borders.
    src_img: (h, w, c) value.  w_ref: (ksize, ksize, c) ref.
    """
    h, w, _ = src_img.shape
    p = (ksize - 1) // 2
    pad_ref[p:p + h, WPAD:WPAD + w, :] = src_img      # sublane-aligned interior write
    xp = pad_ref[...]
    acc = None
    for kh in range(ksize):
        for kw in range(ksize):
            tap = xp[kh:kh + h, WPAD - p + kw:WPAD - p + kw + w, :] * w_ref[kh, kw, :]
            acc = tap if acc is None else acc + tap
    return acc                                        # (h, w, c)


def _conv3x3_im2col(pad_ref, src_img, w_ref, b_ref):
    """Dense 3x3 conv (padding=1) as a single im2col matmul with K = 9*cin."""
    h, w, cin = src_img.shape
    pad_ref[1:1 + h, WPAD:WPAD + w, :] = src_img
    xp = pad_ref[...]
    cols = [xp[kh:kh + h, WPAD - 1 + kw:WPAD - 1 + kw + w, :].reshape(h * w, cin)
            for kh in range(3) for kw in range(3)]
    cols = jnp.concatenate(cols, axis=-1)             # (h*w, 9*cin)
    return jnp.dot(cols, w_ref[...], preferred_element_type=jnp.float32) + b_ref[...]


# --------------------------- fused LBlock kernel -----------------------------

def _lblock_kernel(
    x_ref,
    rn1_ref, rn2_ref, g1_ref, g2_ref,
    os1_ref, qkvw_ref, qkvb_ref, getvw_ref, getvb_ref, projw_ref, projb_ref,
    os2_ref, krw_ref, valw_ref,
    cw1_ref, cb1_ref, cw2_ref, cb2_ref, cw11_ref, cb11_ref,
    o_ref,
    pad5_ref, pad3a_ref, pad3b_ref, padw_ref, att_ref,
    *, h, w, c, hidden, ws, scale):

    hw = h * w

    # Zero the halo scratch buffers once per grid step; interiors are
    # overwritten below, borders must stay zero (implicit conv padding).
    pad5_ref[...] = jnp.zeros_like(pad5_ref)
    pad3a_ref[...] = jnp.zeros_like(pad3a_ref)
    pad3b_ref[...] = jnp.zeros_like(pad3b_ref)
    padw_ref[...] = jnp.zeros_like(padw_ref)

    x_img = x_ref[0]                          # (h, w, c)
    shortcut = x_img.reshape(hw, c)           # LBlock shortcut
    x2d = shortcut

    # ------------------ TransformerBlock: attention branch -------------------
    xn = _rms_norm(x2d, rn1_ref[...])
    shifted = _dw_conv(pad5_ref, xn.reshape(h, w, c), os1_ref, 5)    # OmniShift
    qkv = (jnp.dot(shifted.reshape(hw, c), qkvw_ref[...],
                   preferred_element_type=jnp.float32) + qkvb_ref[...])
    qkv_img = qkv.reshape(h, w, 3 * c)

    # Per-window attention (single head over all C channels, scale = C^-0.5).
    for wi in range(h // ws):
        for wj in range(w // ws):
            blk = qkv_img[wi * ws:(wi + 1) * ws, wj * ws:(wj + 1) * ws, :]
            q = blk[:, :, 0:c].reshape(ws * ws, c)
            k = blk[:, :, c:2 * c].reshape(ws * ws, c)
            v_img = blk[:, :, 2 * c:3 * c]
            v = v_img.reshape(ws * ws, c)
            # lepe: depthwise 3x3 (get_v) within the 8x8 window
            lepe = (_dw_conv(padw_ref, v_img, getvw_ref, 3).reshape(ws * ws, c)
                    + getvb_ref[...])
            s = jax.lax.dot_general(q, k, (((1,), (1,)), ((), ())),
                                    preferred_element_type=jnp.float32) * scale
            s = s - jnp.max(s, axis=-1, keepdims=True)
            p = jnp.exp(s)
            p = p * pl.reciprocal(jnp.sum(p, axis=-1, keepdims=True), approx=True)
            o_win = jnp.dot(p, v, preferred_element_type=jnp.float32) + lepe
            att_ref[wi * ws:(wi + 1) * ws, wj * ws:(wj + 1) * ws, :] = (
                o_win.reshape(ws, ws, c))

    att2d = (jnp.dot(att_ref[...].reshape(hw, c), projw_ref[...],
                     preferred_element_type=jnp.float32) + projb_ref[...])
    x2d = x2d + g1_ref[...] * att2d

    # ------------------ TransformerBlock: ChannelMix branch ------------------
    xn = _rms_norm(x2d, rn2_ref[...])
    shifted = _dw_conv(pad5_ref, xn.reshape(h, w, c), os2_ref, 5)    # OmniShift
    kr = jnp.dot(shifted.reshape(hw, c), krw_ref[...],
                 preferred_element_type=jnp.float32)                 # (hw, hid+c)
    kk = jnp.square(jnp.maximum(kr[:, 0:hidden], 0.0))
    kv = jnp.dot(kk, valw_ref[...], preferred_element_type=jnp.float32)
    x2d = x2d + g2_ref[...] * (jax.nn.sigmoid(kr[:, hidden:hidden + c]) * kv)

    # ------------------ ConvBlock over cat([shortcut, x]) --------------------
    cat2d = jnp.concatenate([shortcut, x2d], axis=-1)                # VMEM only
    out1 = _mish(_conv3x3_im2col(pad3a_ref, cat2d.reshape(h, w, 2 * c),
                                 cw1_ref, cb1_ref))
    out1 = _mish(_conv3x3_im2col(pad3b_ref, out1.reshape(h, w, c),
                                 cw2_ref, cb2_ref))
    out2 = (jnp.dot(cat2d, cw11_ref[...], preferred_element_type=jnp.float32)
            + cb11_ref[...])
    o_ref[0] = (out1 + out2).reshape(h, w, c)


# --------------------------- wrapper -----------------------------------------

def lblock_forward(x, prep, *, resolution, window_size=8):
    h, w = resolution
    b, n, c = x.shape
    assert n == h * w and h % window_size == 0 and w % window_size == 0
    ws = window_size
    hidden = prep["value_w"].shape[0]
    scale = float(c) ** -0.5

    weights = [prep["rn1_w"], prep["rn2_w"], prep["gamma1"], prep["gamma2"],
               prep["os_att"], prep["qkv_w"], prep["qkv_b"],
               prep["getv_w"], prep["getv_b"], prep["proj_w"], prep["proj_b"],
               prep["os_ffn"], prep["kr_w"], prep["value_w"],
               prep["cw1"], prep["cb1"], prep["cw2"], prep["cb2"],
               prep["cw11"], prep["cb11"]]

    def bcast_spec(arr):
        nd = arr.ndim
        return pl.BlockSpec(arr.shape, lambda i, _nd=nd: (0,) * _nd)

    # TODO(synk): for large SR resolutions, stripe-tile H (with a 2-row halo via
    # manual DMA / pl.ANY) instead of one full image per grid step so the
    # working set respects v7x's 64 MiB / v5e's 16 MiB scoped VMEM.
    out = pl.pallas_call(
        functools.partial(_lblock_kernel, h=h, w=w, c=c, hidden=hidden,
                          ws=ws, scale=scale),
        grid=(b,),
        in_specs=[pl.BlockSpec((1, h, w, c), lambda i: (i, 0, 0, 0))]
                 + [bcast_spec(a) for a in weights],
        out_specs=pl.BlockSpec((1, h, w, c), lambda i: (i, 0, 0, 0)),
        out_shape=jax.ShapeDtypeStruct((b, h, w, c), jnp.float32),
        scratch_shapes=[
            pltpu.VMEM((h + 4, w + 2 * WPAD, c), jnp.float32),       # OmniShift halo
            pltpu.VMEM((h + 2, w + 2 * WPAD, 2 * c), jnp.float32),   # ConvBlock conv1 halo
            pltpu.VMEM((h + 2, w + 2 * WPAD, c), jnp.float32),       # ConvBlock conv2 halo
            pltpu.VMEM((ws + 2, ws + 2 * WPAD, c), jnp.float32),     # lepe window halo
            pltpu.VMEM((h, w, c), jnp.float32),                      # attention output
        ],
        compiler_params=pltpu.CompilerParams(
            dimension_semantics=("parallel",)),
    )(x.reshape(b, h, w, c), *weights)
    return out.reshape(b, n, c)


# --------------------------- parameters --------------------------------------

def init_params(key, dim=8, hidden_rate=4):
    hidden = dim * hidden_rate
    ks = jax.random.split(key, 20)

    def nrm(k, shape, s=0.1):
        return s * jax.random.normal(k, shape, jnp.float32)

    def os_params(k):
        k1, k2, k3, k4 = jax.random.split(k, 4)
        return {"alpha": nrm(k1, (4,), 0.5),
                "w1": nrm(k2, (dim,), 0.3),
                "w3": nrm(k3, (3, 3, dim), 0.3),
                "w5": nrm(k4, (5, 5, dim), 0.3)}

    return {
        "rn1_w": jnp.ones((dim,), jnp.float32),
        "rn2_w": jnp.ones((dim,), jnp.float32),
        "gamma1": jnp.ones((dim,), jnp.float32),
        "gamma2": jnp.ones((dim,), jnp.float32),
        "att": {
            "os": os_params(ks[0]),
            "qkv_w": nrm(ks[1], (dim, 3 * dim)),
            "qkv_b": nrm(ks[2], (3 * dim,)),
            "proj_w": nrm(ks[3], (dim, dim)),
            "proj_b": nrm(ks[4], (dim,)),
            "getv_w": nrm(ks[5], (3, 3, dim), 0.3),
            "getv_b": nrm(ks[6], (dim,)),
        },
        "ffn": {
            "os": os_params(ks[7]),
            "key_w": nrm(ks[8], (dim, hidden)),
            "value_w": nrm(ks[9], (hidden, dim)),
            "recep_w": nrm(ks[10], (dim, dim)),
        },
        "conv": {
            "w1": nrm(ks[11], (3, 3, 2 * dim, dim)),
            "b1": nrm(ks[12], (dim,)),
            "w2": nrm(ks[13], (3, 3, dim, dim)),
            "b2": nrm(ks[14], (dim,)),
            "w11": nrm(ks[15], (2 * dim, dim)),
            "b11": nrm(ks[16], (dim,)),
        },
    }


def prepare_params(params, dim=8):
    """One-time reparameterization / layout prep (outside the jitted forward)."""

    def fold_omni(osp):
        # Equivalent combined 5x5 depthwise kernel (OmniShift.reparam_5x5).
        a = osp["alpha"]
        ident = jnp.zeros((5, 5, dim), jnp.float32).at[2, 2, :].set(1.0)
        w1 = jnp.zeros((5, 5, dim), jnp.float32).at[2, 2, :].set(osp["w1"])
        w3 = jnp.zeros((5, 5, dim), jnp.float32).at[1:4, 1:4, :].set(osp["w3"])
        return a[0] * ident + a[1] * w1 + a[2] * w3 + a[3] * osp["w5"]

    att, ffn, cp = params["att"], params["ffn"], params["conv"]
    return {
        "rn1_w": params["rn1_w"].reshape(1, dim),
        "rn2_w": params["rn2_w"].reshape(1, dim),
        "gamma1": params["gamma1"].reshape(1, dim),
        "gamma2": params["gamma2"].reshape(1, dim),
        "os_att": fold_omni(att["os"]),
        "qkv_w": att["qkv_w"],
        "qkv_b": att["qkv_b"].reshape(1, 3 * dim),
        "getv_w": att["getv_w"],
        "getv_b": att["getv_b"].reshape(1, dim),
        "proj_w": att["proj_w"],
        "proj_b": att["proj_b"].reshape(1, dim),
        "os_ffn": fold_omni(ffn["os"]),
        # fused key + receptance projection: one (dim, hidden + dim) matmul
        "kr_w": jnp.concatenate([ffn["key_w"], ffn["recep_w"]], axis=1),
        "value_w": ffn["value_w"],
        # im2col weights: (3,3,Cin,Cout) -> (9*Cin, Cout)
        "cw1": cp["w1"].reshape(9 * 2 * dim, dim),
        "cb1": cp["b1"].reshape(1, dim),
        "cw2": cp["w2"].reshape(9 * dim, dim),
        "cb2": cp["b2"].reshape(1, dim),
        "cw11": cp["w11"],
        "cb11": cp["b11"].reshape(1, dim),
    }


if __name__ == "__main__":
    dim, b, h, w = 8, 2, 8, 8          # window_size=8 requires H, W multiples of 8
    key = jax.random.PRNGKey(0)
    kx, kp = jax.random.split(key)
    x = jax.random.normal(kx, (b, h * w, dim), jnp.float32)
    params = init_params(kp, dim=dim)
    prep = prepare_params(params, dim=dim)      # hoisted reparam (once, outside jit)

    fwd = jax.jit(functools.partial(lblock_forward, resolution=(h, w)))
    out = jax.block_until_ready(fwd(x, prep))

    assert out.shape == (b, h * w, dim)
    assert bool(jnp.all(jnp.isfinite(out)))
    print("KERNEL_OK")
</pallas_src>

<mosaic_0001>
module attributes {stable_mosaic.version = 11 : i64} {
  func.func @_lblock_kernel(%arg0: i32, %arg1: memref<1x8x8x8xf32, #tpu.memory_space<vmem>>, %arg2: memref<1x8xf32, #tpu.memory_space<vmem>>, %arg3: memref<1x8xf32, #tpu.memory_space<vmem>>, %arg4: memref<1x8xf32, #tpu.memory_space<vmem>>, %arg5: memref<1x8xf32, #tpu.memory_space<vmem>>, %arg6: memref<5x5x8xf32, #tpu.memory_space<vmem>>, %arg7: memref<8x24xf32, #tpu.memory_space<vmem>>, %arg8: memref<1x24xf32, #tpu.memory_space<vmem>>, %arg9: memref<3x3x8xf32, #tpu.memory_space<vmem>>, %arg10: memref<1x8xf32, #tpu.memory_space<vmem>>, %arg11: memref<8x8xf32, #tpu.memory_space<vmem>>, %arg12: memref<1x8xf32, #tpu.memory_space<vmem>>, %arg13: memref<5x5x8xf32, #tpu.memory_space<vmem>>, %arg14: memref<8x40xf32, #tpu.memory_space<vmem>>, %arg15: memref<32x8xf32, #tpu.memory_space<vmem>>, %arg16: memref<144x8xf32, #tpu.memory_space<vmem>>, %arg17: memref<1x8xf32, #tpu.memory_space<vmem>>, %arg18: memref<72x8xf32, #tpu.memory_space<vmem>>, %arg19: memref<1x8xf32, #tpu.memory_space<vmem>>, %arg20: memref<16x8xf32, #tpu.memory_space<vmem>>, %arg21: memref<1x8xf32, #tpu.memory_space<vmem>>, %arg22: memref<1x8x8x8xf32, #tpu.memory_space<vmem>>, %arg23: memref<12x24x8xf32, #tpu.memory_space<vmem>>, %arg24: memref<10x24x16xf32, #tpu.memory_space<vmem>>, %arg25: memref<10x24x8xf32, #tpu.memory_space<vmem>>, %arg26: memref<10x24x8xf32, #tpu.memory_space<vmem>>, %arg27: memref<8x8x8xf32, #tpu.memory_space<vmem>>) attributes {dimension_semantics = [#tpu.dimension_semantics<parallel>], iteration_bounds = array<i64: 2>, scalar_prefetch = 0 : i64, scratch_operands = 5 : i64, tpu.core_type = #tpu.core_type<tc>, window_params = [{transform_indices = @transform_0, window_bounds = array<i64: 1, 8, 8, 8>}, {pipeline_mode = #tpu.pipeline_mode<synchronous>, transform_indices = @transform_1, window_bounds = array<i64: 1, 8>}, {pipeline_mode = #tpu.pipeline_mode<synchronous>, transform_indices = @transform_2, window_bounds = array<i64: 1, 8>}, {pipeline_mode = #tpu.pipeline_mode<synchronous>, transform_indices = @transform_3, window_bounds = array<i64: 1, 8>}, {pipeline_mode = #tpu.pipeline_mode<synchronous>, transform_indices = @transform_4, window_bounds = array<i64: 1, 8>}, {pipeline_mode = #tpu.pipeline_mode<synchronous>, transform_indices = @transform_5, window_bounds = array<i64: 5, 5, 8>}, {pipeline_mode = #tpu.pipeline_mode<synchronous>, transform_indices = @transform_6, window_bounds = array<i64: 8, 24>}, {pipeline_mode = #tpu.pipeline_mode<synchronous>, transform_indices = @transform_7, window_bounds = array<i64: 1, 24>}, {pipeline_mode = #tpu.pipeline_mode<synchronous>, transform_indices = @transform_8, window_bounds = array<i64: 3, 3, 8>}, {pipeline_mode = #tpu.pipeline_mode<synchronous>, transform_indices = @transform_9, window_bounds = array<i64: 1, 8>}, {pipeline_mode = #tpu.pipeline_mode<synchronous>, transform_indices = @transform_10, window_bounds = array<i64: 8, 8>}, {pipeline_mode = #tpu.pipeline_mode<synchronous>, transform_indices = @transform_11, window_bounds = array<i64: 1, 8>}, {pipeline_mode = #tpu.pipeline_mode<synchronous>, transform_indices = @transform_12, window_bounds = array<i64: 5, 5, 8>}, {pipeline_mode = #tpu.pipeline_mode<synchronous>, transform_indices = @transform_13, window_bounds = array<i64: 8, 40>}, {pipeline_mode = #tpu.pipeline_mode<synchronous>, transform_indices = @transform_14, window_bounds = array<i64: 32, 8>}, {pipeline_mode = #tpu.pipeline_mode<synchronous>, transform_indices = @transform_15, window_bounds = array<i64: 144, 8>}, {pipeline_mode = #tpu.pipeline_mode<synchronous>, transform_indices = @transform_16, window_bounds = array<i64: 1, 8>}, {pipeline_mode = #tpu.pipeline_mode<synchronous>, transform_indices = @transform_17, window_bounds = array<i64: 72, 8>}, {pipeline_mode = #tpu.pipeline_mode<synchronous>, transform_indices = @transform_18, window_bounds = array<i64: 1, 8>}, {pipeline_mode = #tpu.pipeline_mode<synchronous>, transform_indices = @transform_19, window_bounds = array<i64: 16, 8>}, {pipeline_mode = #tpu.pipeline_mode<synchronous>, transform_indices = @transform_20, window_bounds = array<i64: 1, 8>}, {transform_indices = @transform_21, window_bounds = array<i64: 1, 8, 8, 8>}]} {
    %cst = arith.constant 0.000000e+00 : f32
    %0 = vector.broadcast %cst : f32 to vector<12x24x8xf32>
    %c0 = arith.constant 0 : index
    %c0_0 = arith.constant 0 : index
    %c0_1 = arith.constant 0 : index
    %1 = vector.load %arg23[%c0, %c0_0, %c0_1] : memref<12x24x8xf32, #tpu.memory_space<vmem>>, vector<12x24x8xf32>
    tpu.vector_store %arg23[%c0, %c0_0, %c0_1], %0 {strides = array<i32>} : memref<12x24x8xf32, #tpu.memory_space<vmem>>, vector<12x24x8xf32>,
    %cst_2 = arith.constant 0.000000e+00 : f32
    %2 = vector.broadcast %cst_2 : f32 to vector<10x24x16xf32>
    %c0_3 = arith.constant 0 : index
    %c0_4 = arith.constant 0 : index
    %c0_5 = arith.constant 0 : index
    %3 = vector.load %arg24[%c0_3, %c0_4, %c0_5] : memref<10x24x16xf32, #tpu.memory_space<vmem>>, vector<10x24x16xf32>
    tpu.vector_store %arg24[%c0_3, %c0_4, %c0_5], %2 {strides = array<i32>} : memref<10x24x16xf32, #tpu.memory_space<vmem>>, vector<10x24x16xf32>,
    %cst_6 = arith.constant 0.000000e+00 : f32
    %4 = vector.broadcast %cst_6 : f32 to vector<10x24x8xf32>
    %c0_7 = arith.constant 0 : index
    %c0_8 = arith.constant 0 : index
    %c0_9 = arith.constant 0 : index
    %5 = vector.load %arg25[%c0_7, %c0_8, %c0_9] : memref<10x24x8xf32, #tpu.memory_space<vmem>>, vector<10x24x8xf32>
    tpu.vector_store %arg25[%c0_7, %c0_8, %c0_9], %4 {strides = array<i32>} : memref<10x24x8xf32, #tpu.memory_space<vmem>>, vector<10x24x8xf32>,
    %cst_10 = arith.constant 0.000000e+00 : f32
    %6 = vector.broadcast %cst_10 : f32 to vector<10x24x8xf32>
    %c0_11 = arith.constant 0 : index
    %c0_12 = arith.constant 0 : index
    %c0_13 = arith.constant 0 : index
    %7 = vector.load %arg26[%c0_11, %c0_12, %c0_13] : memref<10x24x8xf32, #tpu.memory_space<vmem>>, vector<10x24x8xf32>
    tpu.vector_store %arg26[%c0_11, %c0_12, %c0_13], %6 {strides = array<i32>} : memref<10x24x8xf32, #tpu.memory_space<vmem>>, vector<10x24x8xf32>,
    %c0_14 = arith.constant 0 : index
    %c0_15 = arith.constant 0 : index
    %c0_16 = arith.constant 0 : index
    %c0_17 = arith.constant 0 : index
    %8 = vector.load %arg1[%c0_14, %c0_15, %c0_16, %c0_17] : memref<1x8x8x8xf32, #tpu.memory_space<vmem>>, vector<1x8x8x8xf32>
    %9 = vector.shape_cast %8 : vector<1x8x8x8xf32> to vector<8x8x8xf32>
    %10 = vector.shape_cast %9 : vector<8x8x8xf32> to vector<64x8xf32>
    %c0_18 = arith.constant 0 : index
    %c0_19 = arith.constant 0 : index
    %11 = vector.load %arg2[%c0_18, %c0_19] : memref<1x8xf32, #tpu.memory_space<vmem>>, vector<1x8xf32>
    %12 = arith.mulf %10, %10 : vector<64x8xf32>
    %cst_20 = arith.constant dense<0.000000e+00> : vector<64xf32>
    %13 = vector.multi_reduction <add>, %12, %cst_20 [1] : vector<64x8xf32> to vector<64xf32>
    %14 = vector.shape_cast %13 : vector<64xf32> to vector<64x1xf32>
    %cst_21 = arith.constant 8.000000e+00 : f32
    %15 = vector.broadcast %cst_21 : f32 to vector<64x1xf32>
    %16 = arith.divf %14, %15 : vector<64x1xf32>
    %cst_22 = arith.constant 1.1920929E-7 : f32
    %17 = vector.broadcast %cst_22 : f32 to vector<64x1xf32>
    %18 = arith.addf %16, %17 : vector<64x1xf32>
    %19 = math.rsqrt %18 : vector<64x1xf32>
    %20 = vector.broadcast %19 : vector<64x1xf32> to vector<64x8xf32>
    %21 = arith.mulf %10, %20 : vector<64x8xf32>
    %22 = vector.broadcast %11 : vector<1x8xf32> to vector<64x8xf32>
    %23 = arith.mulf %21, %22 : vector<64x8xf32>
    %24 = vector.shape_cast %23 : vector<64x8xf32> to vector<8x8x8xf32>
    %c2 = arith.constant 2 : index
    %c8 = arith.constant 8 : index
    %c0_23 = arith.constant 0 : index
    %25 = vector.load %arg23[%c2, %c8, %c0_23] : memref<12x24x8xf32, #tpu.memory_space<vmem>>, vector<8x8x8xf32>
    tpu.vector_store %arg23[%c2, %c8, %c0_23], %24 {strides = array<i32>} : memref<12x24x8xf32, #tpu.memory_space<vmem>>, vector<8x8x8xf32>,
    %c0_24 = arith.constant 0 : index
    %c0_25 = arith.constant 0 : index
    %c0_26 = arith.constant 0 : index
    %26 = vector.load %arg23[%c0_24, %c0_25, %c0_26] : memref<12x24x8xf32, #tpu.memory_space<vmem>>, vector<12x24x8xf32>
    %27 = vector.extract_strided_slice %26 {offsets = [0, 6, 0], sizes = [8, 8, 8], strides = [1, 1, 1]} : vector<12x24x8xf32> to vector<8x8x8xf32>
    %c0_27 = arith.constant 0 : index
    %c0_28 = arith.constant 0 : index
    %c0_29 = arith.constant 0 : index
    %28 = vector.load %arg6[%c0_27, %c0_28, %c0_29] : memref<5x5x8xf32, #tpu.memory_space<vmem>>, vector<1x1x8xf32>
    %29 = vector.shape_cast %28 : vector<1x1x8xf32> to vector<8xf32>
    %30 = vector.shape_cast %29 : vector<8xf32> to vector<1x1x8xf32>
    %31 = vector.broadcast %30 : vector<1x1x8xf32> to vector<8x8x8xf32>
    %32 = arith.mulf %27, %31 : vector<8x8x8xf32>
    %33 = vector.extract_strided_slice %26 {offsets = [0, 7, 0], sizes = [8, 8, 8], strides = [1, 1, 1]} : vector<12x24x8xf32> to vector<8x8x8xf32>
    %c0_30 = arith.constant 0 : index
    %c1 = arith.constant 1 : index
    %c0_31 = arith.constant 0 : index
    %34 = vector.load %arg6[%c0_30, %c1, %c0_31] : memref<5x5x8xf32, #tpu.memory_space<vmem>>, vector<1x1x8xf32>
    %35 = vector.shape_cast %34 : vector<1x1x8xf32> to vector<8xf32>
    %36 = vector.shape_cast %35 : vector<8xf32> to vector<1x1x8xf32>
    %37 = vector.broadcast %36 : vector<1x1x8xf32> to vector<8x8x8xf32>
    %38 = arith.mulf %33, %37 : vector<8x8x8xf32>
    %39 = arith.addf %32, %38 : vector<8x8x8xf32>
    %40 = vector.extract_strided_slice %26 {offsets = [0, 8, 0], sizes = [8, 8, 8], strides = [1, 1, 1]} : vector<12x24x8xf32> to vector<8x8x8xf32>
    %c0_32 = arith.constant 0 : index
    %c2_33 = arith.constant 2 : index
    %c0_34 = arith.constant 0 : index
    %41 = vector.load %arg6[%c0_32, %c2_33, %c0_34] : memref<5x5x8xf32, #tpu.memory_space<vmem>>, vector<1x1x8xf32>
    %42 = vector.shape_cast %41 : vector<1x1x8xf32> to vector<8xf32>
    %43 = vector.shape_cast %42 : vector<8xf32> to vector<1x1x8xf32>
    %44 = vector.broadcast %43 : vector<1x1x8xf32> to vector<8x8x8xf32>
    %45 = arith.mulf %40, %44 : vector<8x8x8xf32>
    %46 = arith.addf %39, %45 : vector<8x8x8xf32>
    %47 = vector.extract_strided_slice %26 {offsets = [0, 9, 0], sizes = [8, 8, 8], strides = [1, 1, 1]} : vector<12x24x8xf32> to vector<8x8x8xf32>
    %c0_35 = arith.constant 0 : index
    %c3 = arith.constant 3 : index
    %c0_36 = arith.constant 0 : index
    %48 = vector.load %arg6[%c0_35, %c3, %c0_36] : memref<5x5x8xf32, #tpu.memory_space<vmem>>, vector<1x1x8xf32>
    %49 = vector.shape_cast %48 : vector<1x1x8xf32> to vector<8xf32>
    %50 = vector.shape_cast %49 : vector<8xf32> to vector<1x1x8xf32>
    %51 = vector.broadcast %50 : vector<1x1x8xf32> to vector<8x8x8xf32>
    %52 = arith.mulf %47, %51 : vector<8x8x8xf32>
    %53 = arith.addf %46, %52 : vector<8x8x8xf32>
    %54 = vector.extract_strided_slice %26 {offsets = [0, 10, 0], sizes = [8, 8, 8], strides = [1, 1, 1]} : vector<12x24x8xf32> to vector<8x8x8xf32>
    %c0_37 = arith.constant 0 : index
    %c4 = arith.constant 4 : index
    %c0_38 = arith.constant 0 : index
    %55 = vector.load %arg6[%c0_37, %c4, %c0_38] : memref<5x5x8xf32, #tpu.memory_space<vmem>>, vector<1x1x8xf32>
    %56 = vector.shape_cast %55 : vector<1x1x8xf32> to vector<8xf32>
    %57 = vector.shape_cast %56 : vector<8xf32> to vector<1x1x8xf32>
    %58 = vector.broadcast %57 : vector<1x1x8xf32> to vector<8x8x8xf32>
    %59 = arith.mulf %54, %58 : vector<8x8x8xf32>
    %60 = arith.addf %53, %59 : vector<8x8x8xf32>
    %61 = vector.extract_strided_slice %26 {offsets = [1, 6, 0], sizes = [8, 8, 8], strides = [1, 1, 1]} : vector<12x24x8xf32> to vector<8x8x8xf32>
    %c1_39 = arith.constant 1 : index
    %c0_40 = arith.constant 0 : index
    %c0_41 = arith.constant 0 : index
    %62 = vector.load %arg6[%c1_39, %c0_40, %c0_41] : memref<5x5x8xf32, #tpu.memory_space<vmem>>, vector<1x1x8xf32>
    %63 = vector.shape_cast %62 : vector<1x1x8xf32> to vector<8xf32>
    %64 = vector.shape_cast %63 : vector<8xf32> to vector<1x1x8xf32>
    %65 = vector.broadcast %64 : vector<1x1x8xf32> to vector<8x8x8xf32>
    %66 = arith.mulf %61, %65 : vector<8x8x8xf32>
    %67 = arith.addf %60, %66 : vector<8x8x8xf32>
    %68 = vector.extract_strided_slice %26 {offsets = [1, 7, 0], sizes = [8, 8, 8], strides = [1, 1, 1]} : vector<12x24x8xf32> to vector<8x8x8xf32>
    %c1_42 = arith.constant 1 : index
    %c1_43 = arith.constant 1 : index
    %c0_44 = arith.constant 0 : index
    %69 = vector.load %arg6[%c1_42, %c1_43, %c0_44] : memref<5x5x8xf32, #tpu.memory_space<vmem>>, vector<1x1x8xf32>
    %70 = vector.shape_cast %69 : vector<1x1x8xf32> to vector<8xf32>
    %71 = vector.shape_cast %70 : vector<8xf32> to vector<1x1x8xf32>
    %72 = vector.broadcast %71 : vector<1x1x8xf32> to vector<8x8x8xf32>
    %73 = arith.mulf %68, %72 : vector<8x8x8xf32>
    %74 = arith.addf %67, %73 : vector<8x8x8xf32>
    %75 = vector.extract_strided_slice %26 {offsets = [1, 8, 0], sizes = [8, 8, 8], strides = [1, 1, 1]} : vector<12x24x8xf32> to vector<8x8x8xf32>
    %c1_45 = arith.constant 1 : index
    %c2_46 = arith.constant 2 : index
    %c0_47 = arith.constant 0 : index
    %76 = vector.load %arg6[%c1_45, %c2_46, %c0_47] : memref<5x5x8xf32, #tpu.memory_space<vmem>>, vector<1x1x8xf32>
    %77 = vector.shape_cast %76 : vector<1x1x8xf32> to vector<8xf32>
    %78 = vector.shape_cast %77 : vector<8xf32> to vector<1x1x8xf32>
    %79 = vector.broadcast %78 : vector<1x1x8xf32> to vector<8x8x8xf32>
    %80 = arith.mulf %75, %79 : vector<8x8x8xf32>
    %81 = arith.addf %74, %80 : vector<8x8x8xf32>
    %82 = vector.extract_strided_slice %26 {offsets = [1, 9, 0], sizes = [8, 8, 8], strides = [1, 1, 1]} : vector<12x24x8xf32> to vector<8x8x8xf32>
    %c1_48 = arith.constant 1 : index
    %c3_49 = arith.constant 3 : index
    %c0_50 = arith.constant 0 : index
    %83 = vector.load %arg6[%c1_48, %c3_49, %c0_50] : memref<5x5x8xf32, #tpu.memory_space<vmem>>, vector<1x1x8xf32>
    %84 = vector.shape_cast %83 : vector<1x1x8xf32> to vector<8xf32>
    %85 = vector.shape_cast %84 : vector<8xf32> to vector<1x1x8xf32>
    %86 = vector.broadcast %85 : vector<1x1x8xf32> to vector<8x8x8xf32>
    %87 = arith.mulf %82, %86 : vector<8x8x8xf32>
    %88 = arith.addf %81, %87 : vector<8x8x8xf32>
    %89 = vector.extract_strided_slice %26 {offsets = [1, 10, 0], sizes = [8, 8, 8], strides = [1, 1, 1]} : vector<12x24x8xf32> to vector<8x8x8xf32>
    %c1_51 = arith.constant 1 : index
    %c4_52 = arith.constant 4 : index
    %c0_53 = arith.constant 0 : index
    %90 = vector.load %arg6[%c1_51, %c4_52, %c0_53] : memref<5x5x8xf32, #tpu.memory_space<vmem>>, vector<1x1x8xf32>
    %91 = vector.shape_cast %90 : vector<1x1x8xf32> to vector<8xf32>
    %92 = vector.shape_cast %91 : vector<8xf32> to vector<1x1x8xf32>
    %93 = vector.broadcast %92 : vector<1x1x8xf32> to vector<8x8x8xf32>
    %94 = arith.mulf %89, %93 : vector<8x8x8xf32>
    %95 = arith.addf %88, %94 : vector<8x8x8xf32>
    %96 = vector.extract_strided_slice %26 {offsets = [2, 6, 0], sizes = [8, 8, 8], strides = [1, 1, 1]} : vector<12x24x8xf32> to vector<8x8x8xf32>
    %c2_54 = arith.constant 2 : index
    %c0_55 = arith.constant 0 : index
    %c0_56 = arith.constant 0 : index
    %97 = vector.load %arg6[%c2_54, %c0_55, %c0_56] : memref<5x5x8xf32, #tpu.memory_space<vmem>>, vector<1x1x8xf32>
    %98 = vector.shape_cast %97 : vector<1x1x8xf32> to vector<8xf32>
    %99 = vector.shape_cast %98 : vector<8xf32> to vector<1x1x8xf32>
    %100 = vector.broadcast %99 : vector<1x1x8xf32> to vector<8x8x8xf32>
    %101 = arith.mulf %96, %100 : vector<8x8x8xf32>
    %102 = arith.addf %95, %101 : vector<8x8x8xf32>
    %103 = vector.extract_strided_slice %26 {offsets = [2, 7, 0], sizes = [8, 8, 8], strides = [1, 1, 1]} : vector<12x24x8xf32> to vector<8x8x8xf32>
    %c2_57 = arith.constant 2 : index
    %c1_58 = arith.constant 1 : index
    %c0_59 = arith.constant 0 : index
    %104 = vector.load %arg6[%c2_57, %c1_58, %c0_59] : memref<5x5x8xf32, #tpu.memory_space<vmem>>, vector<1x1x8xf32>
    %105 = vector.shape_cast %104 : vector<1x1x8xf32> to vector<8xf32>
    %106 = vector.shape_cast %105 : vector<8xf32> to vector<1x1x8xf32>
    %107 = vector.broadcast %106 : vector<1x1x8xf32> to vector<8x8x8xf32>
    %108 = arith.mulf %103, %107 : vector<8x8x8xf32>
    %109 = arith.addf %102, %108 : vector<8x8x8xf32>
    %110 = vector.extract_strided_slice %26 {offsets = [2, 8, 0], sizes = [8, 8, 8], strides = [1, 1, 1]} : vector<12x24x8xf32> to vector<8x8x8xf32>
    %c2_60 = arith.constant 2 : index
    %c2_61 = arith.constant 2 : index
    %c0_62 = arith.constant 0 : index
    %111 = vector.load %arg6[%c2_60, %c2_61, %c0_62] : memref<5x5x8xf32, #tpu.memory_space<vmem>>, vector<1x1x8xf32>
    %112 = vector.shape_cast %111 : vector<1x1x8xf32> to vector<8xf32>
    %113 = vector.shape_cast %112 : vector<8xf32> to vector<1x1x8xf32>
    %114 = vector.broadcast %113 : vector<1x1x8xf32> to vector<8x8x8xf32>
    %115 = arith.mulf %110, %114 : vector<8x8x8xf32>
    %116 = arith.addf %109, %115 : vector<8x8x8xf32>
    %117 = vector.extract_strided_slice %26 {offsets = [2, 9, 0], sizes = [8, 8, 8], strides = [1, 1, 1]} : vector<12x24x8xf32> to vector<8x8x8xf32>
    %c2_63 = arith.constant 2 : index
    %c3_64 = arith.constant 3 : index
    %c0_65 = arith.constant 0 : index
    %118 = vector.load %arg6[%c2_63, %c3_64, %c0_65] : memref<5x5x8xf32, #tpu.memory_space<vmem>>, vector<1x1x8xf32>
    %119 = vector.shape_cast %118 : vector<1x1x8xf32> to vector<8xf32>
    %120 = vector.shape_cast %119 : vector<8xf32> to vector<1x1x8xf32>
    %121 = vector.broadcast %120 : vector<1x1x8xf32> to vector<8x8x8xf32>
    %122 = arith.mulf %117, %121 : vector<8x8x8xf32>
    %123 = arith.addf %116, %122 : vector<8x8x8xf32>
    %124 = vector.extract_strided_slice %26 {offsets = [2, 10, 0], sizes = [8, 8, 8], strides = [1, 1, 1]} : vector<12x24x8xf32> to vector<8x8x8xf32>
    %c2_66 = arith.constant 2 : index
    %c4_67 = arith.constant 4 : index
    %c0_68 = arith.constant 0 : index
    %125 = vector.load %arg6[%c2_66, %c4_67, %c0_68] : memref<5x5x8xf32, #tpu.memory_space<vmem>>, vector<1x1x8xf32>
    %126 = vector.shape_cast %125 : vector<1x1x8xf32> to vector<8xf32>
    %127 = vector.shape_cast %126 : vector<8xf32> to vector<1x1x8xf32>
    %128 = vector.broadcast %127 : vector<1x1x8xf32> to vector<8x8x8xf32>
    %129 = arith.mulf %124, %128 : vector<8x8x8xf32>
    %130 = arith.addf %123, %129 : vector<8x8x8xf32>
    %131 = vector.extract_strided_slice %26 {offsets = [3, 6, 0], sizes = [8, 8, 8], strides = [1, 1, 1]} : vector<12x24x8xf32> to vector<8x8x8xf32>
    %c3_69 = arith.constant 3 : index
    %c0_70 = arith.constant 0 : index
    %c0_71 = arith.constant 0 : index
    %132 = vector.load %arg6[%c3_69, %c0_70, %c0_71] : memref<5x5x8xf32, #tpu.memory_space<vmem>>, vector<1x1x8xf32>
    %133 = vector.shape_cast %132 : vector<1x1x8xf32> to vector<8xf32>
    %134 = vector.shape_cast %133 : vector<8xf32> to vector<1x1x8xf32>
    %135 = vector.broadcast %134 : vector<1x1x8xf32> to vector<8x8x8xf32>
    %136 = arith.mulf %131, %135 : vector<8x8x8xf32>
    %137 = arith.addf %130, %136 : vector<8x8x8xf32>
    %138 = vector.extract_strided_slice %26 {offsets = [3, 7, 0], sizes = [8, 8, 8], strides = [1, 1, 1]} : vector<12x24x8xf32> to vector<8x8x8xf32>
    %c3_72 = arith.constant 3 : index
    %c1_73 = arith.constant 1 : index
    %c0_74 = arith.constant 0 : index
    %139 = vector.load %arg6[%c3_72, %c1_73, %c0_74] : memref<5x5x8xf32, #tpu.memory_space<vmem>>, vector<1x1x8xf32>
    %140 = vector.shape_cast %139 : vector<1x1x8xf32> to vector<8xf32>
    %141 = vector.shape_cast %140 : vector<8xf32> to vector<1x1x8xf32>
    %142 = vector.broadcast %141 : vector<1x1x8xf32> to vector<8x8x8xf32>
    %143 = arith.mulf %138, %142 : vector<8x8x8xf32>
    %144 = arith.addf %137, %143 : vector<8x8x8xf32>
    %145 = vector.extract_strided_slice %26 {offsets = [3, 8, 0], sizes = [8, 8, 8], strides = [1, 1, 1]} : vector<12x24x8xf32> to vector<8x8x8xf32>
    %c3_75 = arith.constant 3 : index
    %c2_76 = arith.constant 2 : index
    %c0_77 = arith.constant 0 : index
    %146 = vector.load %arg6[%c3_75, %c2_76, %c0_77] : memref<5x5x8xf32, #tpu.memory_space<vmem>>, vector<1x1x8xf32>
    %147 = vector.shape_cast %146 : vector<1x1x8xf32> to vector<8xf32>
    %148 = vector.shape_cast %147 : vector<8xf32> to vector<1x1x8xf32>
    %149 = vector.broadcast %148 : vector<1x1x8xf32> to vector<8x8x8xf32>
    %150 = arith.mulf %145, %149 : vector<8x8x8xf32>
    %151 = arith.addf %144, %150 : vector<8x8x8xf32>
    %152 = vector.extract_strided_slice %26 {offsets = [3, 9, 0], sizes = [8, 8, 8], strides = [1, 1, 1]} : vector<12x24x8xf32> to vector<8x8x8xf32>
    %c3_78 = arith.constant 3 : index
    %c3_79 = arith.constant 3 : index
    %c0_80 = arith.constant 0 : index
    %153 = vector.load %arg6[%c3_78, %c3_79, %c0_80] : memref<5x5x8xf32, #tpu.memory_space<vmem>>, vector<1x1x8xf32>
    %154 = vector.shape_cast %153 : vector<1x1x8xf32> to vector<8xf32>
    %155 = vector.shape_cast %154 : vector<8xf32> to vector<1x1x8xf32>
    %156 = vector.broadcast %155 : vector<1x1x8xf32> to vector<8x8x8xf32>
    %157 = arith.mulf %152, %156 : vector<8x8x8xf32>
    %158 = arith.addf %151, %157 : vector<8x8x8xf32>
    %159 = vector.extract_strided_slice %26 {offsets = [3, 10, 0], sizes = [8, 8, 8], strides = [1, 1, 1]} : vector<12x24x8xf32> to vector<8x8x8xf32>
    %c3_81 = arith.constant 3 : index
    %c4_82 = arith.constant 4 : index
    %c0_83 = arith.constant 0 : index
    %160 = vector.load %arg6[%c3_81, %c4_82, %c0_83] : memref<5x5x8xf32, #tpu.memory_space<vmem>>, vector<1x1x8xf32>
    %161 = vector.shape_cast %160 : vector<1x1x8xf32> to vector<8xf32>
    %162 = vector.shape_cast %161 : vector<8xf32> to vector<1x1x8xf32>
    %163 = vector.broadcast %162 : vector<1x1x8xf32> to vector<8x8x8xf32>
    %164 = arith.mulf %159, %163 : vector<8x8x8xf32>
    %165 = arith.addf %158, %164 : vector<8x8x8xf32>
    %166 = vector.extract_strided_slice %26 {offsets = [4, 6, 0], sizes = [8, 8, 8], strides = [1, 1, 1]} : vector<12x24x8xf32> to vector<8x8x8xf32>
    %c4_84 = arith.constant 4 : index
    %c0_85 = arith.constant 0 : index
    %c0_86 = arith.constant 0 : index
    %167 = vector.load %arg6[%c4_84, %c0_85, %c0_86] : memref<5x5x8xf32, #tpu.memory_space<vmem>>, vector<1x1x8xf32>
    %168 = vector.shape_cast %167 : vector<1x1x8xf32> to vector<8xf32>
    %169 = vector.shape_cast %168 : vector<8xf32> to vector<1x1x8xf32>
    %170 = vector.broadcast %169 : vector<1x1x8xf32> to vector<8x8x8xf32>
    %171 = arith.mulf %166, %170 : vector<8x8x8xf32>
    %172 = arith.addf %165, %171 : vector<8x8x8xf32>
    %173 = vector.extract_strided_slice %26 {offsets = [4, 7, 0], sizes = [8, 8, 8], strides = [1, 1, 1]} : vector<12x24x8xf32> to vector<8x8x8xf32>
    %c4_87 = arith.constant 4 : index
    %c1_88 = arith.constant 1 : index
    %c0_89 = arith.constant 0 : index
    %174 = vector.load %arg6[%c4_87, %c1_88, %c0_89] : memref<5x5x8xf32, #tpu.memory_space<vmem>>, vector<1x1x8xf32>
    %175 = vector.shape_cast %174 : vector<1x1x8xf32> to vector<8xf32>
    %176 = vector.shape_cast %175 : vector<8xf32> to vector<1x1x8xf32>
    %177 = vector.broadcast %176 : vector<1x1x8xf32> to vector<8x8x8xf32>
    %178 = arith.mulf %173, %177 : vector<8x8x8xf32>
    %179 = arith.addf %172, %178 : vector<8x8x8xf32>
    %180 = vector.extract_strided_slice %26 {offsets = [4, 8, 0], sizes = [8, 8, 8], strides = [1, 1, 1]} : vector<12x24x8xf32> to vector<8x8x8xf32>
    %c4_90 = arith.constant 4 : index
    %c2_91 = arith.constant 2 : index
    %c0_92 = arith.constant 0 : index
    %181 = vector.load %arg6[%c4_90, %c2_91, %c0_92] : memref<5x5x8xf32, #tpu.memory_space<vmem>>, vector<1x1x8xf32>
    %182 = vector.shape_cast %181 : vector<1x1x8xf32> to vector<8xf32>
    %183 = vector.shape_cast %182 : vector<8xf32> to vector<1x1x8xf32>
    %184 = vector.broadcast %183 : vector<1x1x8xf32> to vector<8x8x8xf32>
    %185 = arith.mulf %180, %184 : vector<8x8x8xf32>
    %186 = arith.addf %179, %185 : vector<8x8x8xf32>
    %187 = vector.extract_strided_slice %26 {offsets = [4, 9, 0], sizes = [8, 8, 8], strides = [1, 1, 1]} : vector<12x24x8xf32> to vector<8x8x8xf32>
    %c4_93 = arith.constant 4 : index
    %c3_94 = arith.constant 3 : index
    %c0_95 = arith.constant 0 : index
    %188 = vector.load %arg6[%c4_93, %c3_94, %c0_95] : memref<5x5x8xf32, #tpu.memory_space<vmem>>, vector<1x1x8xf32>
    %189 = vector.shape_cast %188 : vector<1x1x8xf32> to vector<8xf32>
    %190 = vector.shape_cast %189 : vector<8xf32> to vector<1x1x8xf32>
    %191 = vector.broadcast %190 : vector<1x1x8xf32> to vector<8x8x8xf32>
    %192 = arith.mulf %187, %191 : vector<8x8x8xf32>
    %193 = arith.addf %186, %192 : vector<8x8x8xf32>
    %194 = vector.extract_strided_slice %26 {offsets = [4, 10, 0], sizes = [8, 8, 8], strides = [1, 1, 1]} : vector<12x24x8xf32> to vector<8x8x8xf32>
    %c4_96 = arith.constant 4 : index
    %c4_97 = arith.constant 4 : index
    %c0_98 = arith.constant 0 : index
    %195 = vector.load %arg6[%c4_96, %c4_97, %c0_98] : memref<5x5x8xf32, #tpu.memory_space<vmem>>, vector<1x1x8xf32>
    %196 = vector.shape_cast %195 : vector<1x1x8xf32> to vector<8xf32>
    %197 = vector.shape_cast %196 : vector<8xf32> to vector<1x1x8xf32>
    %198 = vector.broadcast %197 : vector<1x1x8xf32> to vector<8x8x8xf32>
    %199 = arith.mulf %194, %198 : vector<8x8x8xf32>
    %200 = arith.addf %193, %199 : vector<8x8x8xf32>
    %201 = vector.shape_cast %200 : vector<8x8x8xf32> to vector<64x8xf32>
    %c0_99 = arith.constant 0 : index
    %c0_100 = arith.constant 0 : index
    %202 = vector.load %arg7[%c0_99, %c0_100] : memref<8x24xf32, #tpu.memory_space<vmem>>, vector<8x24xf32>
    %cst_101 = arith.constant dense<0.000000e+00> : vector<64x24xf32>
    %203 = tpu.matmul %201, %202, %cst_101 {dimension_numbers = #tpu.dot_dimension_numbers<[1], [0], [0], [1], [0, 0, 1, 1], [], []>} : vector<64x8xf32>, vector<8x24xf32>, vector<64x24xf32> -> vector<64x24xf32>
    %c0_102 = arith.constant 0 : index
    %c0_103 = arith.constant 0 : index
    %204 = vector.load %arg8[%c0_102, %c0_103] : memref<1x24xf32, #tpu.memory_space<vmem>>, vector<1x24xf32>
    %205 = vector.broadcast %204 : vector<1x24xf32> to vector<64x24xf32>
    %206 = arith.addf %203, %205 : vector<64x24xf32>
    %207 = vector.shape_cast %206 : vector<64x24xf32> to vector<8x8x24xf32>
    %208 = vector.extract_strided_slice %207 {offsets = [0, 0, 0], sizes = [8, 8, 8], strides = [1, 1, 1]} : vector<8x8x24xf32> to vector<8x8x8xf32>
    %209 = vector.shape_cast %208 : vector<8x8x8xf32> to vector<64x8xf32>
    %210 = vector.extract_strided_slice %207 {offsets = [0, 0, 8], sizes = [8, 8, 8], strides = [1, 1, 1]} : vector<8x8x24xf32> to vector<8x8x8xf32>
    %211 = vector.shape_cast %210 : vector<8x8x8xf32> to vector<64x8xf32>
    %212 = vector.extract_strided_slice %207 {offsets = [0, 0, 16], sizes = [8, 8, 8], strides = [1, 1, 1]} : vector<8x8x24xf32> to vector<8x8x8xf32>
    %213 = vector.shape_cast %212 : vector<8x8x8xf32> to vector<64x8xf32>
    %c1_104 = arith.constant 1 : index
    %c8_105 = arith.constant 8 : index
    %c0_106 = arith.constant 0 : index
    %214 = vector.load %arg26[%c1_104, %c8_105, %c0_106] : memref<10x24x8xf32, #tpu.memory_space<vmem>>, vector<8x8x8xf32>
    tpu.vector_store %arg26[%c1_104, %c8_105, %c0_106], %212 {strides = array<i32>} : memref<10x24x8xf32, #tpu.memory_space<vmem>>, vector<8x8x8xf32>,
    %c0_107 = arith.constant 0 : index
    %c0_108 = arith.constant 0 : index
    %c0_109 = arith.constant 0 : index
    %215 = vector.load %arg26[%c0_107, %c0_108, %c0_109] : memref<10x24x8xf32, #tpu.memory_space<vmem>>, vector<10x24x8xf32>
    %216 = vector.extract_strided_slice %215 {offsets = [0, 7, 0], sizes = [8, 8, 8], strides = [1, 1, 1]} : vector<10x24x8xf32> to vector<8x8x8xf32>
    %c0_110 = arith.constant 0 : index
    %c0_111 = arith.constant 0 : index
    %c0_112 = arith.constant 0 : index
    %217 = vector.load %arg9[%c0_110, %c0_111, %c0_112] : memref<3x3x8xf32, #tpu.memory_space<vmem>>, vector<1x1x8xf32>
    %218 = vector.shape_cast %217 : vector<1x1x8xf32> to vector<8xf32>
    %219 = vector.shape_cast %218 : vector<8xf32> to vector<1x1x8xf32>
    %220 = vector.broadcast %219 : vector<1x1x8xf32> to vector<8x8x8xf32>
    %221 = arith.mulf %216, %220 : vector<8x8x8xf32>
    %222 = vector.extract_strided_slice %215 {offsets = [0, 8, 0], sizes = [8, 8, 8], strides = [1, 1, 1]} : vector<10x24x8xf32> to vector<8x8x8xf32>
    %c0_113 = arith.constant 0 : index
    %c1_114 = arith.constant 1 : index
    %c0_115 = arith.constant 0 : index
    %223 = vector.load %arg9[%c0_113, %c1_114, %c0_115] : memref<3x3x8xf32, #tpu.memory_space<vmem>>, vector<1x1x8xf32>
    %224 = vector.shape_cast %223 : vector<1x1x8xf32> to vector<8xf32>
    %225 = vector.shape_cast %224 : vector<8xf32> to vector<1x1x8xf32>
    %226 = vector.broadcast %225 : vector<1x1x8xf32> to vector<8x8x8xf32>
    %227 = arith.mulf %222, %226 : vector<8x8x8xf32>
    %228 = arith.addf %221, %227 : vector<8x8x8xf32>
    %229 = vector.extract_strided_slice %215 {offsets = [0, 9, 0], sizes = [8, 8, 8], strides = [1, 1, 1]} : vector<10x24x8xf32> to vector<8x8x8xf32>
    %c0_116 = arith.constant 0 : index
    %c2_117 = arith.constant 2 : index
    %c0_118 = arith.constant 0 : index
    %230 = vector.load %arg9[%c0_116, %c2_117, %c0_118] : memref<3x3x8xf32, #tpu.memory_space<vmem>>, vector<1x1x8xf32>
    %231 = vector.shape_cast %230 : vector<1x1x8xf32> to vector<8xf32>
    %232 = vector.shape_cast %231 : vector<8xf32> to vector<1x1x8xf32>
    %233 = vector.broadcast %232 : vector<1x1x8xf32> to vector<8x8x8xf32>
    %234 = arith.mulf %229, %233 : vector<8x8x8xf32>
    %235 = arith.addf %228, %234 : vector<8x8x8xf32>
    %236 = vector.extract_strided_slice %215 {offsets = [1, 7, 0], sizes = [8, 8, 8], strides = [1, 1, 1]} : vector<10x24x8xf32> to vector<8x8x8xf32>
    %c1_119 = arith.constant 1 : index
    %c0_120 = arith.constant 0 : index
    %c0_121 = arith.constant 0 : index
    %237 = vector.load %arg9[%c1_119, %c0_120, %c0_121] : memref<3x3x8xf32, #tpu.memory_space<vmem>>, vector<1x1x8xf32>
    %238 = vector.shape_cast %237 : vector<1x1x8xf32> to vector<8xf32>
    %239 = vector.shape_cast %238 : vector<8xf32> to vector<1x1x8xf32>
    %240 = vector.broadcast %239 : vector<1x1x8xf32> to vector<8x8x8xf32>
    %241 = arith.mulf %236, %240 : vector<8x8x8xf32>
    %242 = arith.addf %235, %241 : vector<8x8x8xf32>
    %243 = vector.extract_strided_slice %215 {offsets = [1, 8, 0], sizes = [8, 8, 8], strides = [1, 1, 1]} : vector<10x24x8xf32> to vector<8x8x8xf32>
    %c1_122 = arith.constant 1 : index
    %c1_123 = arith.constant 1 : index
    %c0_124 = arith.constant 0 : index
    %244 = vector.load %arg9[%c1_122, %c1_123, %c0_124] : memref<3x3x8xf32, #tpu.memory_space<vmem>>, vector<1x1x8xf32>
    %245 = vector.shape_cast %244 : vector<1x1x8xf32> to vector<8xf32>
    %246 = vector.shape_cast %245 : vector<8xf32> to vector<1x1x8xf32>
    %247 = vector.broadcast %246 : vector<1x1x8xf32> to vector<8x8x8xf32>
    %248 = arith.mulf %243, %247 : vector<8x8x8xf32>
    %249 = arith.addf %242, %248 : vector<8x8x8xf32>
    %250 = vector.extract_strided_slice %215 {offsets = [1, 9, 0], sizes = [8, 8, 8], strides = [1, 1, 1]} : vector<10x24x8xf32> to vector<8x8x8xf32>
    %c1_125 = arith.constant 1 : index
    %c2_126 = arith.constant 2 : index
    %c0_127 = arith.constant 0 : index
    %251 = vector.load %arg9[%c1_125, %c2_126, %c0_127] : memref<3x3x8xf32, #tpu.memory_space<vmem>>, vector<1x1x8xf32>
    %252 = vector.shape_cast %251 : vector<1x1x8xf32> to vector<8xf32>
    %253 = vector.shape_cast %252 : vector<8xf32> to vector<1x1x8xf32>
    %254 = vector.broadcast %253 : vector<1x1x8xf32> to vector<8x8x8xf32>
    %255 = arith.mulf %250, %254 : vector<8x8x8xf32>
    %256 = arith.addf %249, %255 : vector<8x8x8xf32>
    %257 = vector.extract_strided_slice %215 {offsets = [2, 7, 0], sizes = [8, 8, 8], strides = [1, 1, 1]} : vector<10x24x8xf32> to vector<8x8x8xf32>
    %c2_128 = arith.constant 2 : index
    %c0_129 = arith.constant 0 : index
    %c0_130 = arith.constant 0 : index
    %258 = vector.load %arg9[%c2_128, %c0_129, %c0_130] : memref<3x3x8xf32, #tpu.memory_space<vmem>>, vector<1x1x8xf32>
    %259 = vector.shape_cast %258 : vector<1x1x8xf32> to vector<8xf32>
    %260 = vector.shape_cast %259 : vector<8xf32> to vector<1x1x8xf32>
    %261 = vector.broadcast %260 : vector<1x1x8xf32> to vector<8x8x8xf32>
    %262 = arith.mulf %257, %261 : vector<8x8x8xf32>
    %263 = arith.addf %256, %262 : vector<8x8x8xf32>
    %264 = vector.extract_strided_slice %215 {offsets = [2, 8, 0], sizes = [8, 8, 8], strides = [1, 1, 1]} : vector<10x24x8xf32> to vector<8x8x8xf32>
    %c2_131 = arith.constant 2 : index
    %c1_132 = arith.constant 1 : index
    %c0_133 = arith.constant 0 : index
    %265 = vector.load %arg9[%c2_131, %c1_132, %c0_133] : memref<3x3x8xf32, #tpu.memory_space<vmem>>, vector<1x1x8xf32>
    %266 = vector.shape_cast %265 : vector<1x1x8xf32> to vector<8xf32>
    %267 = vector.shape_cast %266 : vector<8xf32> to vector<1x1x8xf32>
    %268 = vector.broadcast %267 : vector<1x1x8xf32> to vector<8x8x8xf32>
    %269 = arith.mulf %264, %268 : vector<8x8x8xf32>
    %270 = arith.addf %263, %269 : vector<8x8x8xf32>
    %271 = vector.extract_strided_slice %215 {offsets = [2, 9, 0], sizes = [8, 8, 8], strides = [1, 1, 1]} : vector<10x24x8xf32> to vector<8x8x8xf32>
    %c2_134 = arith.constant 2 : index
    %c2_135 = arith.constant 2 : index
    %c0_136 = arith.constant 0 : index
    %272 = vector.load %arg9[%c2_134, %c2_135, %c0_136] : memref<3x3x8xf32, #tpu.memory_space<vmem>>, vector<1x1x8xf32>
    %273 = vector.shape_cast %272 : vector<1x1x8xf32> to vector<8xf32>
    %274 = vector.shape_cast %273 : vector<8xf32> to vector<1x1x8xf32>
    %275 = vector.broadcast %274 : vector<1x1x8xf32> to vector<8x8x8xf32>
    %276 = arith.mulf %271, %275 : vector<8x8x8xf32>
    %277 = arith.addf %270, %276 : vector<8x8x8xf32>
    %278 = vector.shape_cast %277 : vector<8x8x8xf32> to vector<64x8xf32>
    %c0_137 = arith.constant 0 : index
    %c0_138 = arith.constant 0 : index
    %279 = vector.load %arg10[%c0_137, %c0_138] : memref<1x8xf32, #tpu.memory_space<vmem>>, vector<1x8xf32>
    %280 = vector.broadcast %279 : vector<1x8xf32> to vector<64x8xf32>
    %281 = arith.addf %278, %280 : vector<64x8xf32>
    %cst_139 = arith.constant dense<0.000000e+00> : vector<64x64xf32>
    %282 = tpu.matmul %209, %211, %cst_139 {dimension_numbers = #tpu.dot_dimension_numbers<[1], [1], [0], [0], [0, 0, 1, 0], [], []>} : vector<64x8xf32>, vector<64x8xf32>, vector<64x64xf32> -> vector<64x64xf32>
    %cst_140 = arith.constant 0.353553385 : f32
    %283 = vector.broadcast %cst_140 : f32 to vector<64x64xf32>
    %284 = arith.mulf %282, %283 : vector<64x64xf32>
    %cst_141 = arith.constant dense<0xFF800000> : vector<64xf32>
    %285 = vector.multi_reduction <maximumf>, %284, %cst_141 [1] : vector<64x64xf32> to vector<64xf32>
    %286 = vector.shape_cast %285 : vector<64xf32> to vector<64x1xf32>
    %287 = vector.broadcast %286 : vector<64x1xf32> to vector<64x64xf32>
    %288 = arith.subf %284, %287 : vector<64x64xf32>
    %289 = math.exp %288 : vector<64x64xf32>
    %cst_142 = arith.constant dense<0.000000e+00> : vector<64xf32>
    %290 = vector.multi_reduction <add>, %289, %cst_142 [1] : vector<64x64xf32> to vector<64xf32>
    %291 = vector.shape_cast %290 : vector<64xf32> to vector<64x1xf32>
    %292 = tpu.reciprocal %291 {approx = true} : vector<64x1xf32> -> vector<64x1xf32>
    %293 = vector.broadcast %292 : vector<64x1xf32> to vector<64x64xf32>
    %294 = arith.mulf %289, %293 : vector<64x64xf32>
    %cst_143 = arith.constant dense<0.000000e+00> : vector<64x8xf32>
    %295 = tpu.matmul %294, %213, %cst_143 {dimension_numbers = #tpu.dot_dimension_numbers<[1], [0], [0], [1], [0, 0, 1, 1], [], []>} : vector<64x64xf32>, vector<64x8xf32>, vector<64x8xf32> -> vector<64x8xf32>
    %296 = arith.addf %295, %281 : vector<64x8xf32>
    %297 = vector.shape_cast %296 : vector<64x8xf32> to vector<8x8x8xf32>
    %c0_144 = arith.constant 0 : index
    %c0_145 = arith.constant 0 : index
    %c0_146 = arith.constant 0 : index
    %298 = vector.load %arg27[%c0_144, %c0_145, %c0_146] : memref<8x8x8xf32, #tpu.memory_space<vmem>>, vector<8x8x8xf32>
    tpu.vector_store %arg27[%c0_144, %c0_145, %c0_146], %297 {strides = array<i32>} : memref<8x8x8xf32, #tpu.memory_space<vmem>>, vector<8x8x8xf32>,
    %c0_147 = arith.constant 0 : index
    %c0_148 = arith.constant 0 : index
    %c0_149 = arith.constant 0 : index
    %299 = vector.load %arg27[%c0_147, %c0_148, %c0_149] : memref<8x8x8xf32, #tpu.memory_space<vmem>>, vector<8x8x8xf32>
    %300 = vector.shape_cast %299 : vector<8x8x8xf32> to vector<64x8xf32>
    %c0_150 = arith.constant 0 : index
    %c0_151 = arith.constant 0 : index
    %301 = vector.load %arg11[%c0_150, %c0_151] : memref<8x8xf32, #tpu.memory_space<vmem>>, vector<8x8xf32>
    %cst_152 = arith.constant dense<0.000000e+00> : vector<64x8xf32>
    %302 = tpu.matmul %300, %301, %cst_152 {dimension_numbers = #tpu.dot_dimension_numbers<[1], [0], [0], [1], [0, 0, 1, 1], [], []>} : vector<64x8xf32>, vector<8x8xf32>, vector<64x8xf32> -> vector<64x8xf32>
    %c0_153 = arith.constant 0 : index
    %c0_154 = arith.constant 0 : index
    %303 = vector.load %arg12[%c0_153, %c0_154] : memref<1x8xf32, #tpu.memory_space<vmem>>, vector<1x8xf32>
    %304 = vector.broadcast %303 : vector<1x8xf32> to vector<64x8xf32>
    %305 = arith.addf %302, %304 : vector<64x8xf32>
    %c0_155 = arith.constant 0 : index
    %c0_156 = arith.constant 0 : index
    %306 = vector.load %arg4[%c0_155, %c0_156] : memref<1x8xf32, #tpu.memory_space<vmem>>, vector<1x8xf32>
    %307 = vector.broadcast %306 : vector<1x8xf32> to vector<64x8xf32>
    %308 = arith.mulf %307, %305 : vector<64x8xf32>
    %309 = arith.addf %10, %308 : vector<64x8xf32>
    %c0_157 = arith.constant 0 : index
    %c0_158 = arith.constant 0 : index
    %310 = vector.load %arg3[%c0_157, %c0_158] : memref<1x8xf32, #tpu.memory_space<vmem>>, vector<1x8xf32>
    %311 = arith.mulf %309, %309 : vector<64x8xf32>
    %cst_159 = arith.constant dense<0.000000e+00> : vector<64xf32>
    %312 = vector.multi_reduction <add>, %311, %cst_159 [1] : vector<64x8xf32> to vector<64xf32>
    %313 = vector.shape_cast %312 : vector<64xf32> to vector<64x1xf32>
    %cst_160 = arith.constant 8.000000e+00 : f32
    %314 = vector.broadcast %cst_160 : f32 to vector<64x1xf32>
    %315 = arith.divf %313, %314 : vector<64x1xf32>
    %cst_161 = arith.constant 1.1920929E-7 : f32
    %316 = vector.broadcast %cst_161 : f32 to vector<64x1xf32>
    %317 = arith.addf %315, %316 : vector<64x1xf32>
    %318 = math.rsqrt %317 : vector<64x1xf32>
    %319 = vector.broadcast %318 : vector<64x1xf32> to vector<64x8xf32>
    %320 = arith.mulf %309, %319 : vector<64x8xf32>
    %321 = vector.broadcast %310 : vector<1x8xf32> to vector<64x8xf32>
    %322 = arith.mulf %320, %321 : vector<64x8xf32>
    %323 = vector.shape_cast %322 : vector<64x8xf32> to vector<8x8x8xf32>
    %c2_162 = arith.constant 2 : index
    %c8_163 = arith.constant 8 : index
    %c0_164 = arith.constant 0 : index
    %324 = vector.load %arg23[%c2_162, %c8_163, %c0_164] : memref<12x24x8xf32, #tpu.memory_space<vmem>>, vector<8x8x8xf32>
    tpu.vector_store %arg23[%c2_162, %c8_163, %c0_164], %323 {strides = array<i32>} : memref<12x24x8xf32, #tpu.memory_space<vmem>>, vector<8x8x8xf32>,
    %c0_165 = arith.constant 0 : index
    %c0_166 = arith.constant 0 : index
    %c0_167 = arith.constant 0 : index
    %325 = vector.load %arg23[%c0_165, %c0_166, %c0_167] : memref<12x24x8xf32, #tpu.memory_space<vmem>>, vector<12x24x8xf32>
    %326 = vector.extract_strided_slice %325 {offsets = [0, 6, 0], sizes = [8, 8, 8], strides = [1, 1, 1]} : vector<12x24x8xf32> to vector<8x8x8xf32>
    %c0_168 = arith.constant 0 : index
    %c0_169 = arith.constant 0 : index
    %c0_170 = arith.constant 0 : index
    %327 = vector.load %arg13[%c0_168, %c0_169, %c0_170] : memref<5x5x8xf32, #tpu.memory_space<vmem>>, vector<1x1x8xf32>
    %328 = vector.shape_cast %327 : vector<1x1x8xf32> to vector<8xf32>
    %329 = vector.shape_cast %328 : vector<8xf32> to vector<1x1x8xf32>
    %330 = vector.broadcast %329 : vector<1x1x8xf32> to vector<8x8x8xf32>
    %331 = arith.mulf %326, %330 : vector<8x8x8xf32>
    %332 = vector.extract_strided_slice %325 {offsets = [0, 7, 0], sizes = [8, 8, 8], strides = [1, 1, 1]} : vector<12x24x8xf32> to vector<8x8x8xf32>
    %c0_171 = arith.constant 0 : index
    %c1_172 = arith.constant 1 : index
    %c0_173 = arith.constant 0 : index
    %333 = vector.load %arg13[%c0_171, %c1_172, %c0_173] : memref<5x5x8xf32, #tpu.memory_space<vmem>>, vector<1x1x8xf32>
    %334 = vector.shape_cast %333 : vector<1x1x8xf32> to vector<8xf32>
    %335 = vector.shape_cast %334 : vector<8xf32> to vector<1x1x8xf32>
    %336 = vector.broadcast %335 : vector<1x1x8xf32> to vector<8x8x8xf32>
    %337 = arith.mulf %332, %336 : vector<8x8x8xf32>
    %338 = arith.addf %331, %337 : vector<8x8x8xf32>
    %339 = vector.extract_strided_slice %325 {offsets = [0, 8, 0], sizes = [8, 8, 8], strides = [1, 1, 1]} : vector<12x24x8xf32> to vector<8x8x8xf32>
    %c0_174 = arith.constant 0 : index
    %c2_175 = arith.constant 2 : index
    %c0_176 = arith.constant 0 : index
    %340 = vector.load %arg13[%c0_174, %c2_175, %c0_176] : memref<5x5x8xf32, #tpu.memory_space<vmem>>, vector<1x1x8xf32>
    %341 = vector.shape_cast %340 : vector<1x1x8xf32> to vector<8xf32>
    %342 = vector.shape_cast %341 : vector<8xf32> to vector<1x1x8xf32>
    %343 = vector.broadcast %342 : vector<1x1x8xf32> to vector<8x8x8xf32>
    %344 = arith.mulf %339, %343 : vector<8x8x8xf32>
    %345 = arith.addf %338, %344 : vector<8x8x8xf32>
    %346 = vector.extract_strided_slice %325 {offsets = [0, 9, 0], sizes = [8, 8, 8], strides = [1, 1, 1]} : vector<12x24x8xf32> to vector<8x8x8xf32>
    %c0_177 = arith.constant 0 : index
    %c3_178 = arith.constant 3 : index
    %c0_179 = arith.constant 0 : index
    %347 = vector.load %arg13[%c0_177, %c3_178, %c0_179] : memref<5x5x8xf32, #tpu.memory_space<vmem>>, vector<1x1x8xf32>
    %348 = vector.shape_cast %347 : vector<1x1x8xf32> to vector<8xf32>
    %349 = vector.shape_cast %348 : vector<8xf32> to vector<1x1x8xf32>
    %350 = vector.broadcast %349 : vector<1x1x8xf32> to vector<8x8x8xf32>
    %351 = arith.mulf %346, %350 : vector<8x8x8xf32>
    %352 = arith.addf %345, %351 : vector<8x8x8xf32>
    %353 = vector.extract_strided_slice %325 {offsets = [0, 10, 0], sizes = [8, 8, 8], strides = [1, 1, 1]} : vector<12x24x8xf32> to vector<8x8x8xf32>
    %c0_180 = arith.constant 0 : index
    %c4_181 = arith.constant 4 : index
    %c0_182 = arith.constant 0 : index
    %354 = vector.load %arg13[%c0_180, %c4_181, %c0_182] : memref<5x5x8xf32, #tpu.memory_space<vmem>>, vector<1x1x8xf32>
    %355 = vector.shape_cast %354 : vector<1x1x8xf32> to vector<8xf32>
    %356 = vector.shape_cast %355 : vector<8xf32> to vector<1x1x8xf32>
    %357 = vector.broadcast %356 : vector<1x1x8xf32> to vector<8x8x8xf32>
    %358 = arith.mulf %353, %357 : vector<8x8x8xf32>
    %359 = arith.addf %352, %358 : vector<8x8x8xf32>
    %360 = vector.extract_strided_slice %325 {offsets = [1, 6, 0], sizes = [8, 8, 8], strides = [1, 1, 1]} : vector<12x24x8xf32> to vector<8x8x8xf32>
    %c1_183 = arith.constant 1 : index
    %c0_184 = arith.constant 0 : index
    %c0_185 = arith.constant 0 : index
    %361 = vector.load %arg13[%c1_183, %c0_184, %c0_185] : memref<5x5x8xf32, #tpu.memory_space<vmem>>, vector<1x1x8xf32>
    %362 = vector.shape_cast %361 : vector<1x1x8xf32> to vector<8xf32>
    %363 = vector.shape_cast %362 : vector<8xf32> to vector<1x1x8xf32>
    %364 = vector.broadcast %363 : vector<1x1x8xf32> to vector<8x8x8xf32>
    %365 = arith.mulf %360, %364 : vector<8x8x8xf32>
    %366 = arith.addf %359, %365 : vector<8x8x8xf32>
    %367 = vector.extract_strided_slice %325 {offsets = [1, 7, 0], sizes = [8, 8, 8], strides = [1, 1, 1]} : vector<12x24x8xf32> to vector<8x8x8xf32>
    %c1_186 = arith.constant 1 : index
    %c1_187 = arith.constant 1 : index
    %c0_188 = arith.constant 0 : index
    %368 = vector.load %arg13[%c1_186, %c1_187, %c0_188] : memref<5x5x8xf32, #tpu.memory_space<vmem>>, vector<1x1x8xf32>
    %369 = vector.shape_cast %368 : vector<1x1x8xf32> to vector<8xf32>
    %370 = vector.shape_cast %369 : vector<8xf32> to vector<1x1x8xf32>
    %371 = vector.broadcast %370 : vector<1x1x8xf32> to vector<8x8x8xf32>
    %372 = arith.mulf %367, %371 : vector<8x8x8xf32>
    %373 = arith.addf %366, %372 : vector<8x8x8xf32>
    %374 = vector.extract_strided_slice %325 {offsets = [1, 8, 0], sizes = [8, 8, 8], strides = [1, 1, 1]} : vector<12x24x8xf32> to vector<8x8x8xf32>
    %c1_189 = arith.constant 1 : index
    %c2_190 = arith.constant 2 : index
    %c0_191 = arith.constant 0 : index
    %375 = vector.load %arg13[%c1_189, %c2_190, %c0_191] : memref<5x5x8xf32, #tpu.memory_space<vmem>>, vector<1x1x8xf32>
    %376 = vector.shape_cast %375 : vector<1x1x8xf32> to vector<8xf32>
    %377 = vector.shape_cast %376 : vector<8xf32> to vector<1x1x8xf32>
    %378 = vector.broadcast %377 : vector<1x1x8xf32> to vector<8x8x8xf32>
    %379 = arith.mulf %374, %378 : vector<8x8x8xf32>
    %380 = arith.addf %373, %379 : vector<8x8x8xf32>
    %381 = vector.extract_strided_slice %325 {offsets = [1, 9, 0], sizes = [8, 8, 8], strides = [1, 1, 1]} : vector<12x24x8xf32> to vector<8x8x8xf32>
    %c1_192 = arith.constant 1 : index
    %c3_193 = arith.constant 3 : index
    %c0_194 = arith.constant 0 : index
    %382 = vector.load %arg13[%c1_192, %c3_193, %c0_194] : memref<5x5x8xf32, #tpu.memory_space<vmem>>, vector<1x1x8xf32>
    %383 = vector.shape_cast %382 : vector<1x1x8xf32> to vector<8xf32>
    %384 = vector.shape_cast %383 : vector<8xf32> to vector<1x1x8xf32>
    %385 = vector.broadcast %384 : vector<1x1x8xf32> to vector<8x8x8xf32>
    %386 = arith.mulf %381, %385 : vector<8x8x8xf32>
    %387 = arith.addf %380, %386 : vector<8x8x8xf32>
    %388 = vector.extract_strided_slice %325 {offsets = [1, 10, 0], sizes = [8, 8, 8], strides = [1, 1, 1]} : vector<12x24x8xf32> to vector<8x8x8xf32>
    %c1_195 = arith.constant 1 : index
    %c4_196 = arith.constant 4 : index
    %c0_197 = arith.constant 0 : index
    %389 = vector.load %arg13[%c1_195, %c4_196, %c0_197] : memref<5x5x8xf32, #tpu.memory_space<vmem>>, vector<1x1x8xf32>
    %390 = vector.shape_cast %389 : vector<1x1x8xf32> to vector<8xf32>
    %391 = vector.shape_cast %390 : vector<8xf32> to vector<1x1x8xf32>
    %392 = vector.broadcast %391 : vector<1x1x8xf32> to vector<8x8x8xf32>
    %393 = arith.mulf %388, %392 : vector<8x8x8xf32>
    %394 = arith.addf %387, %393 : vector<8x8x8xf32>
    %395 = vector.extract_strided_slice %325 {offsets = [2, 6, 0], sizes = [8, 8, 8], strides = [1, 1, 1]} : vector<12x24x8xf32> to vector<8x8x8xf32>
    %c2_198 = arith.constant 2 : index
    %c0_199 = arith.constant 0 : index
    %c0_200 = arith.constant 0 : index
    %396 = vector.load %arg13[%c2_198, %c0_199, %c0_200] : memref<5x5x8xf32, #tpu.memory_space<vmem>>, vector<1x1x8xf32>
    %397 = vector.shape_cast %396 : vector<1x1x8xf32> to vector<8xf32>
    %398 = vector.shape_cast %397 : vector<8xf32> to vector<1x1x8xf32>
    %399 = vector.broadcast %398 : vector<1x1x8xf32> to vector<8x8x8xf32>
    %400 = arith.mulf %395, %399 : vector<8x8x8xf32>
    %401 = arith.addf %394, %400 : vector<8x8x8xf32>
    %402 = vector.extract_strided_slice %325 {offsets = [2, 7, 0], sizes = [8, 8, 8], strides = [1, 1, 1]} : vector<12x24x8xf32> to vector<8x8x8xf32>
    %c2_201 = arith.constant 2 : index
    %c1_202 = arith.constant 1 : index
    %c0_203 = arith.constant 0 : index
    %403 = vector.load %arg13[%c2_201, %c1_202, %c0_203] : memref<5x5x8xf32, #tpu.memory_space<vmem>>, vector<1x1x8xf32>
    %404 = vector.shape_cast %403 : vector<1x1x8xf32> to vector<8xf32>
    %405 = vector.shape_cast %404 : vector<8xf32> to vector<1x1x8xf32>
    %406 = vector.broadcast %405 : vector<1x1x8xf32> to vector<8x8x8xf32>
    %407 = arith.mulf %402, %406 : vector<8x8x8xf32>
    %408 = arith.addf %401, %407 : vector<8x8x8xf32>
    %409 = vector.extract_strided_slice %325 {offsets = [2, 8, 0], sizes = [8, 8, 8], strides = [1, 1, 1]} : vector<12x24x8xf32> to vector<8x8x8xf32>
    %c2_204 = arith.constant 2 : index
    %c2_205 = arith.constant 2 : index
    %c0_206 = arith.constant 0 : index
    %410 = vector.load %arg13[%c2_204, %c2_205, %c0_206] : memref<5x5x8xf32, #tpu.memory_space<vmem>>, vector<1x1x8xf32>
    %411 = vector.shape_cast %410 : vector<1x1x8xf32> to vector<8xf32>
    %412 = vector.shape_cast %411 : vector<8xf32> to vector<1x1x8xf32>
    %413 = vector.broadcast %412 : vector<1x1x8xf32> to vector<8x8x8xf32>
    %414 = arith.mulf %409, %413 : vector<8x8x8xf32>
    %415 = arith.addf %408, %414 : vector<8x8x8xf32>
    %416 = vector.extract_strided_slice %325 {offsets = [2, 9, 0], sizes = [8, 8, 8], strides = [1, 1, 1]} : vector<12x24x8xf32> to vector<8x8x8xf32>
    %c2_207 = arith.constant 2 : index
    %c3_208 = arith.constant 3 : index
    %c0_209 = arith.constant 0 : index
    %417 = vector.load %arg13[%c2_207, %c3_208, %c0_209] : memref<5x5x8xf32, #tpu.memory_space<vmem>>, vector<1x1x8xf32>
    %418 = vector.shape_cast %417 : vector<1x1x8xf32> to vector<8xf32>
    %419 = vector.shape_cast %418 : vector<8xf32> to vector<1x1x8xf32>
    %420 = vector.broadcast %419 : vector<1x1x8xf32> to vector<8x8x8xf32>
    %421 = arith.mulf %416, %420 : vector<8x8x8xf32>
    %422 = arith.addf %415, %421 : vector<8x8x8xf32>
    %423 = vector.extract_strided_slice %325 {offsets = [2, 10, 0], sizes = [8, 8, 8], strides = [1, 1, 1]} : vector<12x24x8xf32> to vector<8x8x8xf32>
    %c2_210 = arith.constant 2 : index
    %c4_211 = arith.constant 4 : index
    %c0_212 = arith.constant 0 : index
    %424 = vector.load %arg13[%c2_210, %c4_211, %c0_212] : memref<5x5x8xf32, #tpu.memory_space<vmem>>, vector<1x1x8xf32>
    %425 = vector.shape_cast %424 : vector<1x1x8xf32> to vector<8xf32>
    %426 = vector.shape_cast %425 : vector<8xf32> to vector<1x1x8xf32>
    %427 = vector.broadcast %426 : vector<1x1x8xf32> to vector<8x8x8xf32>
    %428 = arith.mulf %423, %427 : vector<8x8x8xf32>
    %429 = arith.addf %422, %428 : vector<8x8x8xf32>
    %430 = vector.extract_strided_slice %325 {offsets = [3, 6, 0], sizes = [8, 8, 8], strides = [1, 1, 1]} : vector<12x24x8xf32> to vector<8x8x8xf32>
    %c3_213 = arith.constant 3 : index
    %c0_214 = arith.constant 0 : index
    %c0_215 = arith.constant 0 : index
    %431 = vector.load %arg13[%c3_213, %c0_214, %c0_215] : memref<5x5x8xf32, #tpu.memory_space<vmem>>, vector<1x1x8xf32>
    %432 = vector.shape_cast %431 : vector<1x1x8xf32> to vector<8xf32>
    %433 = vector.shape_cast %432 : vector<8xf32> to vector<1x1x8xf32>
    %434 = vector.broadcast %433 : vector<1x1x8xf32> to vector<8x8x8xf32>
    %435 = arith.mulf %430, %434 : vector<8x8x8xf32>
    %436 = arith.addf %429, %435 : vector<8x8x8xf32>
    %437 = vector.extract_strided_slice %325 {offsets = [3, 7, 0], sizes = [8, 8, 8], strides = [1, 1, 1]} : vector<12x24x8xf32> to vector<8x8x8xf32>
    %c3_216 = arith.constant 3 : index
    %c1_217 = arith.constant 1 : index
    %c0_218 = arith.constant 0 : index
    %438 = vector.load %arg13[%c3_216, %c1_217, %c0_218] : memref<5x5x8xf32, #tpu.memory_space<vmem>>, vector<1x1x8xf32>
    %439 = vector.shape_cast %438 : vector<1x1x8xf32> to vector<8xf32>
    %440 = vector.shape_cast %439 : vector<8xf32> to vector<1x1x8xf32>
    %441 = vector.broadcast %440 : vector<1x1x8xf32> to vector<8x8x8xf32>
    %442 = arith.mulf %437, %441 : vector<8x8x8xf32>
    %443 = arith.addf %436, %442 : vector<8x8x8xf32>
    %444 = vector.extract_strided_slice %325 {offsets = [3, 8, 0], sizes = [8, 8, 8], strides = [1, 1, 1]} : vector<12x24x8xf32> to vector<8x8x8xf32>
    %c3_219 = arith.constant 3 : index
    %c2_220 = arith.constant 2 : index
    %c0_221 = arith.constant 0 : index
    %445 = vector.load %arg13[%c3_219, %c2_220, %c0_221] : memref<5x5x8xf32, #tpu.memory_space<vmem>>, vector<1x1x8xf32>
    %446 = vector.shape_cast %445 : vector<1x1x8xf32> to vector<8xf32>
    %447 = vector.shape_cast %446 : vector<8xf32> to vector<1x1x8xf32>
    %448 = vector.broadcast %447 : vector<1x1x8xf32> to vector<8x8x8xf32>
    %449 = arith.mulf %444, %448 : vector<8x8x8xf32>
    %450 = arith.addf %443, %449 : vector<8x8x8xf32>
    %451 = vector.extract_strided_slice %325 {offsets = [3, 9, 0], sizes = [8, 8, 8], strides = [1, 1, 1]} : vector<12x24x8xf32> to vector<8x8x8xf32>
    %c3_222 = arith.constant 3 : index
    %c3_223 = arith.constant 3 : index
    %c0_224 = arith.constant 0 : index
    %452 = vector.load %arg13[%c3_222, %c3_223, %c0_224] : memref<5x5x8xf32, #tpu.memory_space<vmem>>, vector<1x1x8xf32>
    %453 = vector.shape_cast %452 : vector<1x1x8xf32> to vector<8xf32>
    %454 = vector.shape_cast %453 : vector<8xf32> to vector<1x1x8xf32>
    %455 = vector.broadcast %454 : vector<1x1x8xf32> to vector<8x8x8xf32>
    %456 = arith.mulf %451, %455 : vector<8x8x8xf32>
    %457 = arith.addf %450, %456 : vector<8x8x8xf32>
    %458 = vector.extract_strided_slice %325 {offsets = [3, 10, 0], sizes = [8, 8, 8], strides = [1, 1, 1]} : vector<12x24x8xf32> to vector<8x8x8xf32>
    %c3_225 = arith.constant 3 : index
    %c4_226 = arith.constant 4 : index
    %c0_227 = arith.constant 0 : index
    %459 = vector.load %arg13[%c3_225, %c4_226, %c0_227] : memref<5x5x8xf32, #tpu.memory_space<vmem>>, vector<1x1x8xf32>
    %460 = vector.shape_cast %459 : vector<1x1x8xf32> to vector<8xf32>
    %461 = vector.shape_cast %460 : vector<8xf32> to vector<1x1x8xf32>
    %462 = vector.broadcast %461 : vector<1x1x8xf32> to vector<8x8x8xf32>
    %463 = arith.mulf %458, %462 : vector<8x8x8xf32>
    %464 = arith.addf %457, %463 : vector<8x8x8xf32>
    %465 = vector.extract_strided_slice %325 {offsets = [4, 6, 0], sizes = [8, 8, 8], strides = [1, 1, 1]} : vector<12x24x8xf32> to vector<8x8x8xf32>
    %c4_228 = arith.constant 4 : index
    %c0_229 = arith.constant 0 : index
    %c0_230 = arith.constant 0 : index
    %466 = vector.load %arg13[%c4_228, %c0_229, %c0_230] : memref<5x5x8xf32, #tpu.memory_space<vmem>>, vector<1x1x8xf32>
    %467 = vector.shape_cast %466 : vector<1x1x8xf32> to vector<8xf32>
    %468 = vector.shape_cast %467 : vector<8xf32> to vector<1x1x8xf32>
    %469 = vector.broadcast %468 : vector<1x1x8xf32> to vector<8x8x8xf32>
    %470 = arith.mulf %465, %469 : vector<8x8x8xf32>
    %471 = arith.addf %464, %470 : vector<8x8x8xf32>
    %472 = vector.extract_strided_slice %325 {offsets = [4, 7, 0], sizes = [8, 8, 8], strides = [1, 1, 1]} : vector<12x24x8xf32> to vector<8x8x8xf32>
    %c4_231 = arith.constant 4 : index
    %c1_232 = arith.constant 1 : index
    %c0_233 = arith.constant 0 : index
    %473 = vector.load %arg13[%c4_231, %c1_232, %c0_233] : memref<5x5x8xf32, #tpu.memory_space<vmem>>, vector<1x1x8xf32>
    %474 = vector.shape_cast %473 : vector<1x1x8xf32> to vector<8xf32>
    %475 = vector.shape_cast %474 : vector<8xf32> to vector<1x1x8xf32>
    %476 = vector.broadcast %475 : vector<1x1x8xf32> to vector<8x8x8xf32>
    %477 = arith.mulf %472, %476 : vector<8x8x8xf32>
    %478 = arith.addf %471, %477 : vector<8x8x8xf32>
    %479 = vector.extract_strided_slice %325 {offsets = [4, 8, 0], sizes = [8, 8, 8], strides = [1, 1, 1]} : vector<12x24x8xf32> to vector<8x8x8xf32>
    %c4_234 = arith.constant 4 : index
    %c2_235 = arith.constant 2 : index
    %c0_236 = arith.constant 0 : index
    %480 = vector.load %arg13[%c4_234, %c2_235, %c0_236] : memref<5x5x8xf32, #tpu.memory_space<vmem>>, vector<1x1x8xf32>
    %481 = vector.shape_cast %480 : vector<1x1x8xf32> to vector<8xf32>
    %482 = vector.shape_cast %481 : vector<8xf32> to vector<1x1x8xf32>
    %483 = vector.broadcast %482 : vector<1x1x8xf32> to vector<8x8x8xf32>
    %484 = arith.mulf %479, %483 : vector<8x8x8xf32>
    %485 = arith.addf %478, %484 : vector<8x8x8xf32>
    %486 = vector.extract_strided_slice %325 {offsets = [4, 9, 0], sizes = [8, 8, 8], strides = [1, 1, 1]} : vector<12x24x8xf32> to vector<8x8x8xf32>
    %c4_237 = arith.constant 4 : index
    %c3_238 = arith.constant 3 : index
    %c0_239 = arith.constant 0 : index
    %487 = vector.load %arg13[%c4_237, %c3_238, %c0_239] : memref<5x5x8xf32, #tpu.memory_space<vmem>>, vector<1x1x8xf32>
    %488 = vector.shape_cast %487 : vector<1x1x8xf32> to vector<8xf32>
    %489 = vector.shape_cast %488 : vector<8xf32> to vector<1x1x8xf32>
    %490 = vector.broadcast %489 : vector<1x1x8xf32> to vector<8x8x8xf32>
    %491 = arith.mulf %486, %490 : vector<8x8x8xf32>
    %492 = arith.addf %485, %491 : vector<8x8x8xf32>
    %493 = vector.extract_strided_slice %325 {offsets = [4, 10, 0], sizes = [8, 8, 8], strides = [1, 1, 1]} : vector<12x24x8xf32> to vector<8x8x8xf32>
    %c4_240 = arith.constant 4 : index
    %c4_241 = arith.constant 4 : index
    %c0_242 = arith.constant 0 : index
    %494 = vector.load %arg13[%c4_240, %c4_241, %c0_242] : memref<5x5x8xf32, #tpu.memory_space<vmem>>, vector<1x1x8xf32>
    %495 = vector.shape_cast %494 : vector<1x1x8xf32> to vector<8xf32>
    %496 = vector.shape_cast %495 : vector<8xf32> to vector<1x1x8xf32>
    %497 = vector.broadcast %496 : vector<1x1x8xf32> to vector<8x8x8xf32>
    %498 = arith.mulf %493, %497 : vector<8x8x8xf32>
    %499 = arith.addf %492, %498 : vector<8x8x8xf32>
    %500 = vector.shape_cast %499 : vector<8x8x8xf32> to vector<64x8xf32>
    %c0_243 = arith.constant 0 : index
    %c0_244 = arith.constant 0 : index
    %501 = vector.load %arg14[%c0_243, %c0_244] : memref<8x40xf32, #tpu.memory_space<vmem>>, vector<8x40xf32>
    %cst_245 = arith.constant dense<0.000000e+00> : vector<64x40xf32>
    %502 = tpu.matmul %500, %501, %cst_245 {dimension_numbers = #tpu.dot_dimension_numbers<[1], [0], [0], [1], [0, 0, 1, 1], [], []>} : vector<64x8xf32>, vector<8x40xf32>, vector<64x40xf32> -> vector<64x40xf32>
    %503 = vector.extract_strided_slice %502 {offsets = [0, 0], sizes = [64, 32], strides = [1, 1]} : vector<64x40xf32> to vector<64x32xf32>
    %cst_246 = arith.constant 0.000000e+00 : f32
    %504 = vector.broadcast %cst_246 : f32 to vector<64x32xf32>
    %505 = arith.maximumf %503, %504 : vector<64x32xf32>
    %506 = arith.mulf %505, %505 : vector<64x32xf32>
    %c0_247 = arith.constant 0 : index
    %c0_248 = arith.constant 0 : index
    %507 = vector.load %arg15[%c0_247, %c0_248] : memref<32x8xf32, #tpu.memory_space<vmem>>, vector<32x8xf32>
    %cst_249 = arith.constant dense<0.000000e+00> : vector<64x8xf32>
    %508 = tpu.matmul %506, %507, %cst_249 {dimension_numbers = #tpu.dot_dimension_numbers<[1], [0], [0], [1], [0, 0, 1, 1], [], []>} : vector<64x32xf32>, vector<32x8xf32>, vector<64x8xf32> -> vector<64x8xf32>
    %c0_250 = arith.constant 0 : index
    %c0_251 = arith.constant 0 : index
    %509 = vector.load %arg5[%c0_250, %c0_251] : memref<1x8xf32, #tpu.memory_space<vmem>>, vector<1x8xf32>
    %510 = vector.extract_strided_slice %502 {offsets = [0, 32], sizes = [64, 8], strides = [1, 1]} : vector<64x40xf32> to vector<64x8xf32>
    %511 = arith.negf %510 : vector<64x8xf32>
    %512 = math.exp %511 : vector<64x8xf32>
    %cst_252 = arith.constant 1.000000e+00 : f32
    %513 = vector.broadcast %cst_252 : f32 to vector<64x8xf32>
    %514 = arith.addf %513, %512 : vector<64x8xf32>
    %515 = arith.divf %513, %514 : vector<64x8xf32>
    %516 = arith.mulf %515, %508 : vector<64x8xf32>
    %517 = vector.broadcast %509 : vector<1x8xf32> to vector<64x8xf32>
    %518 = arith.mulf %517, %516 : vector<64x8xf32>
    %519 = arith.addf %309, %518 : vector<64x8xf32>
    %520 = tpu.concatenate %10, %519 in 1 : vector<64x8xf32>, vector<64x8xf32> -> vector<64x16xf32>
    %521 = vector.shape_cast %520 : vector<64x16xf32> to vector<8x8x16xf32>
    %c1_253 = arith.constant 1 : index
    %c8_254 = arith.constant 8 : index
    %c0_255 = arith.constant 0 : index
    %522 = vector.load %arg24[%c1_253, %c8_254, %c0_255] : memref<10x24x16xf32, #tpu.memory_space<vmem>>, vector<8x8x16xf32>
    tpu.vector_store %arg24[%c1_253, %c8_254, %c0_255], %521 {strides = array<i32>} : memref<10x24x16xf32, #tpu.memory_space<vmem>>, vector<8x8x16xf32>,
    %c0_256 = arith.constant 0 : index
    %c0_257 = arith.constant 0 : index
    %c0_258 = arith.constant 0 : index
    %523 = vector.load %arg24[%c0_256, %c0_257, %c0_258] : memref<10x24x16xf32, #tpu.memory_space<vmem>>, vector<10x24x16xf32>
    %524 = vector.extract_strided_slice %523 {offsets = [0, 7, 0], sizes = [8, 8, 16], strides = [1, 1, 1]} : vector<10x24x16xf32> to vector<8x8x16xf32>
    %525 = vector.shape_cast %524 : vector<8x8x16xf32> to vector<64x16xf32>
    %526 = vector.extract_strided_slice %523 {offsets = [0, 8, 0], sizes = [8, 8, 16], strides = [1, 1, 1]} : vector<10x24x16xf32> to vector<8x8x16xf32>
    %527 = vector.shape_cast %526 : vector<8x8x16xf32> to vector<64x16xf32>
    %528 = vector.extract_strided_slice %523 {offsets = [0, 9, 0], sizes = [8, 8, 16], strides = [1, 1, 1]} : vector<10x24x16xf32> to vector<8x8x16xf32>
    %529 = vector.shape_cast %528 : vector<8x8x16xf32> to vector<64x16xf32>
    %530 = vector.extract_strided_slice %523 {offsets = [1, 7, 0], sizes = [8, 8, 16], strides = [1, 1, 1]} : vector<10x24x16xf32> to vector<8x8x16xf32>
    %531 = vector.shape_cast %530 : vector<8x8x16xf32> to vector<64x16xf32>
    %532 = vector.extract_strided_slice %523 {offsets = [1, 8, 0], sizes = [8, 8, 16], strides = [1, 1, 1]} : vector<10x24x16xf32> to vector<8x8x16xf32>
    %533 = vector.shape_cast %532 : vector<8x8x16xf32> to vector<64x16xf32>
    %534 = vector.extract_strided_slice %523 {offsets = [1, 9, 0], sizes = [8, 8, 16], strides = [1, 1, 1]} : vector<10x24x16xf32> to vector<8x8x16xf32>
    %535 = vector.shape_cast %534 : vector<8x8x16xf32> to vector<64x16xf32>
    %536 = vector.extract_strided_slice %523 {offsets = [2, 7, 0], sizes = [8, 8, 16], strides = [1, 1, 1]} : vector<10x24x16xf32> to vector<8x8x16xf32>
    %537 = vector.shape_cast %536 : vector<8x8x16xf32> to vector<64x16xf32>
    %538 = vector.extract_strided_slice %523 {offsets = [2, 8, 0], sizes = [8, 8, 16], strides = [1, 1, 1]} : vector<10x24x16xf32> to vector<8x8x16xf32>
    %539 = vector.shape_cast %538 : vector<8x8x16xf32> to vector<64x16xf32>
    %540 = vector.extract_strided_slice %523 {offsets = [2, 9, 0], sizes = [8, 8, 16], strides = [1, 1, 1]} : vector<10x24x16xf32> to vector<8x8x16xf32>
    %541 = vector.shape_cast %540 : vector<8x8x16xf32> to vector<64x16xf32>
    %542 = tpu.concatenate %525, %527, %529, %531, %533, %535, %537, %539, %541 in 1 : vector<64x16xf32>, vector<64x16xf32>, vector<64x16xf32>, vector<64x16xf32>, vector<64x16xf32>, vector<64x16xf32>, vector<64x16xf32>, vector<64x16xf32>, vector<64x16xf32> -> vector<64x144xf32>
    %c0_259 = arith.constant 0 : index
    %c0_260 = arith.constant 0 : index
    %543 = vector.load %arg16[%c0_259, %c0_260] : memref<144x8xf32, #tpu.memory_space<vmem>>, vector<144x8xf32>
    %cst_261 = arith.constant dense<0.000000e+00> : vector<64x8xf32>
    %544 = tpu.matmul %542, %543, %cst_261 {dimension_numbers = #tpu.dot_dimension_numbers<[1], [0], [0], [1], [0, 0, 1, 1], [], []>} : vector<64x144xf32>, vector<144x8xf32>, vector<64x8xf32> -> vector<64x8xf32>
    %c0_262 = arith.constant 0 : index
    %c0_263 = arith.constant 0 : index
    %545 = vector.load %arg17[%c0_262, %c0_263] : memref<1x8xf32, #tpu.memory_space<vmem>>, vector<1x8xf32>
    %546 = vector.broadcast %545 : vector<1x8xf32> to vector<64x8xf32>
    %547 = arith.addf %544, %546 : vector<64x8xf32>
    %cst_264 = arith.constant 0.000000e+00 : f32
    %548 = vector.broadcast %cst_264 : f32 to vector<64x8xf32>
    %549 = arith.maximumf %547, %548 : vector<64x8xf32>
    %550 = vector.broadcast %cst_264 : f32 to vector<64x8xf32>
    %551 = arith.subf %547, %550 : vector<64x8xf32>
    %552 = arith.cmpf one, %551, %551 : vector<64x8xf32>
    %553 = vector.broadcast %cst_264 : f32 to vector<64x8xf32>
    %554 = arith.addf %547, %553 : vector<64x8xf32>
    %555 = math.absf %551 : vector<64x8xf32>
    %cst_265 = arith.constant 0.000000e+00 : f32
    %556 = vector.broadcast %cst_265 : f32 to vector<64x8xf32>
    %557 = arith.subf %556, %555 : vector<64x8xf32>
    %558 = math.exp %557 : vector<64x8xf32>
    %559 = math.log1p %558 : vector<64x8xf32>
    %560 = arith.addf %549, %559 : vector<64x8xf32>
    %561 = arith.select %552, %554, %560 : vector<64x8xi1>, vector<64x8xf32>
    %562 = math.tanh %561 : vector<64x8xf32>
    %563 = arith.mulf %547, %562 : vector<64x8xf32>
    %564 = vector.shape_cast %563 : vector<64x8xf32> to vector<8x8x8xf32>
    %c1_266 = arith.constant 1 : index
    %c8_267 = arith.constant 8 : index
    %c0_268 = arith.constant 0 : index
    %565 = vector.load %arg25[%c1_266, %c8_267, %c0_268] : memref<10x24x8xf32, #tpu.memory_space<vmem>>, vector<8x8x8xf32>
    tpu.vector_store %arg25[%c1_266, %c8_267, %c0_268], %564 {strides = array<i32>} : memref<10x24x8xf32, #tpu.memory_space<vmem>>, vector<8x8x8xf32>,
    %c0_269 = arith.constant 0 : index
    %c0_270 = arith.constant 0 : index
    %c0_271 = arith.constant 0 : index
    %566 = vector.load %arg25[%c0_269, %c0_270, %c0_271] : memref<10x24x8xf32, #tpu.memory_space<vmem>>, vector<10x24x8xf32>
    %567 = vector.extract_strided_slice %566 {offsets = [0, 7, 0], sizes = [8, 8, 8], strides = [1, 1, 1]} : vector<10x24x8xf32> to vector<8x8x8xf32>
    %568 = vector.shape_cast %567 : vector<8x8x8xf32> to vector<64x8xf32>
    %569 = vector.extract_strided_slice %566 {offsets = [0, 8, 0], sizes = [8, 8, 8], strides = [1, 1, 1]} : vector<10x24x8xf32> to vector<8x8x8xf32>
    %570 = vector.shape_cast %569 : vector<8x8x8xf32> to vector<64x8xf32>
    %571 = vector.extract_strided_slice %566 {offsets = [0, 9, 0], sizes = [8, 8, 8], strides = [1, 1, 1]} : vector<10x24x8xf32> to vector<8x8x8xf32>
    %572 = vector.shape_cast %571 : vector<8x8x8xf32> to vector<64x8xf32>
    %573 = vector.extract_strided_slice %566 {offsets = [1, 7, 0], sizes = [8, 8, 8], strides = [1, 1, 1]} : vector<10x24x8xf32> to vector<8x8x8xf32>
    %574 = vector.shape_cast %573 : vector<8x8x8xf32> to vector<64x8xf32>
    %575 = vector.extract_strided_slice %566 {offsets = [1, 8, 0], sizes = [8, 8, 8], strides = [1, 1, 1]} : vector<10x24x8xf32> to vector<8x8x8xf32>
    %576 = vector.shape_cast %575 : vector<8x8x8xf32> to vector<64x8xf32>
    %577 = vector.extract_strided_slice %566 {offsets = [1, 9, 0], sizes = [8, 8, 8], strides = [1, 1, 1]} : vector<10x24x8xf32> to vector<8x8x8xf32>
    %578 = vector.shape_cast %577 : vector<8x8x8xf32> to vector<64x8xf32>
    %579 = vector.extract_strided_slice %566 {offsets = [2, 7, 0], sizes = [8, 8, 8], strides = [1, 1, 1]} : vector<10x24x8xf32> to vector<8x8x8xf32>
    %580 = vector.shape_cast %579 : vector<8x8x8xf32> to vector<64x8xf32>
    %581 = vector.extract_strided_slice %566 {offsets = [2, 8, 0], sizes = [8, 8, 8], strides = [1, 1, 1]} : vector<10x24x8xf32> to vector<8x8x8xf32>
    %582 = vector.shape_cast %581 : vector<8x8x8xf32> to vector<64x8xf32>
    %583 = vector.extract_strided_slice %566 {offsets = [2, 9, 0], sizes = [8, 8, 8], strides = [1, 1, 1]} : vector<10x24x8xf32> to vector<8x8x8xf32>
    %584 = vector.shape_cast %583 : vector<8x8x8xf32> to vector<64x8xf32>
    %585 = tpu.concatenate %568, %570, %572, %574, %576, %578, %580, %582, %584 in 1 : vector<64x8xf32>, vector<64x8xf32>, vector<64x8xf32>, vector<64x8xf32>, vector<64x8xf32>, vector<64x8xf32>, vector<64x8xf32>, vector<64x8xf32>, vector<64x8xf32> -> vector<64x72xf32>
    %c0_272 = arith.constant 0 : index
    %c0_273 = arith.constant 0 : index
    %586 = vector.load %arg18[%c0_272, %c0_273] : memref<72x8xf32, #tpu.memory_space<vmem>>, vector<72x8xf32>
    %cst_274 = arith.constant dense<0.000000e+00> : vector<64x8xf32>
    %587 = tpu.matmul %585, %586, %cst_274 {dimension_numbers = #tpu.dot_dimension_numbers<[1], [0], [0], [1], [0, 0, 1, 1], [], []>} : vector<64x72xf32>, vector<72x8xf32>, vector<64x8xf32> -> vector<64x8xf32>
    %c0_275 = arith.constant 0 : index
    %c0_276 = arith.constant 0 : index
    %588 = vector.load %arg19[%c0_275, %c0_276] : memref<1x8xf32, #tpu.memory_space<vmem>>, vector<1x8xf32>
    %589 = vector.broadcast %588 : vector<1x8xf32> to vector<64x8xf32>
    %590 = arith.addf %587, %589 : vector<64x8xf32>
    %cst_277 = arith.constant 0.000000e+00 : f32
    %591 = vector.broadcast %cst_277 : f32 to vector<64x8xf32>
    %592 = arith.maximumf %590, %591 : vector<64x8xf32>
    %593 = vector.broadcast %cst_277 : f32 to vector<64x8xf32>
    %594 = arith.subf %590, %593 : vector<64x8xf32>
    %595 = arith.cmpf one, %594, %594 : vector<64x8xf32>
    %596 = vector.broadcast %cst_277 : f32 to vector<64x8xf32>
    %597 = arith.addf %590, %596 : vector<64x8xf32>
    %598 = math.absf %594 : vector<64x8xf32>
    %cst_278 = arith.constant 0.000000e+00 : f32
    %599 = vector.broadcast %cst_278 : f32 to vector<64x8xf32>
    %600 = arith.subf %599, %598 : vector<64x8xf32>
    %601 = math.exp %600 : vector<64x8xf32>
    %602 = math.log1p %601 : vector<64x8xf32>
    %603 = arith.addf %592, %602 : vector<64x8xf32>
    %604 = arith.select %595, %597, %603 : vector<64x8xi1>, vector<64x8xf32>
    %605 = math.tanh %604 : vector<64x8xf32>
    %606 = arith.mulf %590, %605 : vector<64x8xf32>
    %c0_279 = arith.constant 0 : index
    %c0_280 = arith.constant 0 : index
    %607 = vector.load %arg20[%c0_279, %c0_280] : memref<16x8xf32, #tpu.memory_space<vmem>>, vector<16x8xf32>
    %cst_281 = arith.constant dense<0.000000e+00> : vector<64x8xf32>
    %608 = tpu.matmul %520, %607, %cst_281 {dimension_numbers = #tpu.dot_dimension_numbers<[1], [0], [0], [1], [0, 0, 1, 1], [], []>} : vector<64x16xf32>, vector<16x8xf32>, vector<64x8xf32> -> vector<64x8xf32>
    %c0_282 = arith.constant 0 : index
    %c0_283 = arith.constant 0 : index
    %609 = vector.load %arg21[%c0_282, %c0_283] : memref<1x8xf32, #tpu.memory_space<vmem>>, vector<1x8xf32>
    %610 = vector.broadcast %609 : vector<1x8xf32> to vector<64x8xf32>
    %611 = arith.addf %608, %610 : vector<64x8xf32>
    %612 = arith.addf %606, %611 : vector<64x8xf32>
    %613 = vector.shape_cast %612 : vector<64x8xf32> to vector<8x8x8xf32>
    %c0_284 = arith.constant 0 : index
    %c0_285 = arith.constant 0 : index
    %c0_286 = arith.constant 0 : index
    %c0_287 = arith.constant 0 : index
    %614 = vector.load %arg22[%c0_284, %c0_285, %c0_286, %c0_287] : memref<1x8x8x8xf32, #tpu.memory_space<vmem>>, vector<1x8x8x8xf32>
    %615 = vector.shape_cast %614 : vector<1x8x8x8xf32> to vector<8x8x8xf32>
    %616 = vector.shape_cast %613 : vector<8x8x8xf32> to vector<1x8x8x8xf32>
    tpu.vector_store %arg22[%c0_284, %c0_285, %c0_286, %c0_287], %616 {strides = array<i32>} : memref<1x8x8x8xf32, #tpu.memory_space<vmem>>, vector<1x8x8x8xf32>,
    return
  }
  func.func @transform_0(%arg0: i32) -> (i32, i32, i32, i32) {
    %c0_i32 = arith.constant 0 : i32
    %c0_i32_0 = arith.constant 0 : i32
    %c0_i32_1 = arith.constant 0 : i32
    %c0_i32_2 = arith.constant 0 : i32
    return %arg0, %c0_i32, %c0_i32_0, %c0_i32_1 : i32, i32, i32, i32
  }
  func.func @transform_1(%arg0: i32) -> (i32, i32) {
    %c0_i32 = arith.constant 0 : i32
    %c0_i32_0 = arith.constant 0 : i32
    %c0_i32_1 = arith.constant 0 : i32
    return %c0_i32, %c0_i32_0 : i32, i32
  }
  func.func @transform_2(%arg0: i32) -> (i32, i32) {
    %c0_i32 = arith.constant 0 : i32
    %c0_i32_0 = arith.constant 0 : i32
    %c0_i32_1 = arith.constant 0 : i32
    return %c0_i32, %c0_i32_0 : i32, i32
  }
  func.func @transform_3(%arg0: i32) -> (i32, i32) {
    %c0_i32 = arith.constant 0 : i32
    %c0_i32_0 = arith.constant 0 : i32
    %c0_i32_1 = arith.constant 0 : i32
    return %c0_i32, %c0_i32_0 : i32, i32
  }
  func.func @transform_4(%arg0: i32) -> (i32, i32) {
    %c0_i32 = arith.constant 0 : i32
    %c0_i32_0 = arith.constant 0 : i32
    %c0_i32_1 = arith.constant 0 : i32
    return %c0_i32, %c0_i32_0 : i32, i32
  }
  func.func @transform_5(%arg0: i32) -> (i32, i32, i32) {
    %c0_i32 = arith.constant 0 : i32
    %c0_i32_0 = arith.constant 0 : i32
    %c0_i32_1 = arith.constant 0 : i32
    %c0_i32_2 = arith.constant 0 : i32
    return %c0_i32, %c0_i32_0, %c0_i32_1 : i32, i32, i32
  }
  func.func @transform_6(%arg0: i32) -> (i32, i32) {
    %c0_i32 = arith.constant 0 : i32
    %c0_i32_0 = arith.constant 0 : i32
    %c0_i32_1 = arith.constant 0 : i32
    return %c0_i32, %c0_i32_0 : i32, i32
  }
  func.func @transform_7(%arg0: i32) -> (i32, i32) {
    %c0_i32 = arith.constant 0 : i32
    %c0_i32_0 = arith.constant 0 : i32
    %c0_i32_1 = arith.constant 0 : i32
    return %c0_i32, %c0_i32_0 : i32, i32
  }
  func.func @transform_8(%arg0: i32) -> (i32, i32, i32) {
    %c0_i32 = arith.constant 0 : i32
    %c0_i32_0 = arith.constant 0 : i32
    %c0_i32_1 = arith.constant 0 : i32
    %c0_i32_2 = arith.constant 0 : i32
    return %c0_i32, %c0_i32_0, %c0_i32_1 : i32, i32, i32
  }
  func.func @transform_9(%arg0: i32) -> (i32, i32) {
    %c0_i32 = arith.constant 0 : i32
    %c0_i32_0 = arith.constant 0 : i32
    %c0_i32_1 = arith.constant 0 : i32
    return %c0_i32, %c0_i32_0 : i32, i32
  }
  func.func @transform_10(%arg0: i32) -> (i32, i32) {
    %c0_i32 = arith.constant 0 : i32
    %c0_i32_0 = arith.constant 0 : i32
    %c0_i32_1 = arith.constant 0 : i32
    return %c0_i32, %c0_i32_0 : i32, i32
  }
  func.func @transform_11(%arg0: i32) -> (i32, i32) {
    %c0_i32 = arith.constant 0 : i32
    %c0_i32_0 = arith.constant 0 : i32
    %c0_i32_1 = arith.constant 0 : i32
    return %c0_i32, %c0_i32_0 : i32, i32
  }
  func.func @transform_12(%arg0: i32) -> (i32, i32, i32) {
    %c0_i32 = arith.constant 0 : i32
    %c0_i32_0 = arith.constant 0 : i32
    %c0_i32_1 = arith.constant 0 : i32
    %c0_i32_2 = arith.constant 0 : i32
    return %c0_i32, %c0_i32_0, %c0_i32_1 : i32, i32, i32
  }
  func.func @transform_13(%arg0: i32) -> (i32, i32) {
    %c0_i32 = arith.constant 0 : i32
    %c0_i32_0 = arith.constant 0 : i32
    %c0_i32_1 = arith.constant 0 : i32
    return %c0_i32, %c0_i32_0 : i32, i32
  }
  func.func @transform_14(%arg0: i32) -> (i32, i32) {
    %c0_i32 = arith.constant 0 : i32
    %c0_i32_0 = arith.constant 0 : i32
    %c0_i32_1 = arith.constant 0 : i32
    return %c0_i32, %c0_i32_0 : i32, i32
  }
  func.func @transform_15(%arg0: i32) -> (i32, i32) {
    %c0_i32 = arith.constant 0 : i32
    %c0_i32_0 = arith.constant 0 : i32
    %c0_i32_1 = arith.constant 0 : i32
    return %c0_i32, %c0_i32_0 : i32, i32
  }
  func.func @transform_16(%arg0: i32) -> (i32, i32) {
    %c0_i32 = arith.constant 0 : i32
    %c0_i32_0 = arith.constant 0 : i32
    %c0_i32_1 = arith.constant 0 : i32
    return %c0_i32, %c0_i32_0 : i32, i32
  }
  func.func @transform_17(%arg0: i32) -> (i32, i32) {
    %c0_i32 = arith.constant 0 : i32
    %c0_i32_0 = arith.constant 0 : i32
    %c0_i32_1 = arith.constant 0 : i32
    return %c0_i32, %c0_i32_0 : i32, i32
  }
  func.func @transform_18(%arg0: i32) -> (i32, i32) {
    %c0_i32 = arith.constant 0 : i32
    %c0_i32_0 = arith.constant 0 : i32
    %c0_i32_1 = arith.constant 0 : i32
    return %c0_i32, %c0_i32_0 : i32, i32
  }
  func.func @transform_19(%arg0: i32) -> (i32, i32) {
    %c0_i32 = arith.constant 0 : i32
    %c0_i32_0 = arith.constant 0 : i32
    %c0_i32_1 = arith.constant 0 : i32
    return %c0_i32, %c0_i32_0 : i32, i32
  }
  func.func @transform_20(%arg0: i32) -> (i32, i32) {
    %c0_i32 = arith.constant 0 : i32
    %c0_i32_0 = arith.constant 0 : i32
    %c0_i32_1 = arith.constant 0 : i32
    return %c0_i32, %c0_i32_0 : i32, i32
  }
  func.func @transform_21(%arg0: i32) -> (i32, i32, i32, i32) {
    %c0_i32 = arith.constant 0 : i32
    %c0_i32_0 = arith.constant 0 : i32
    %c0_i32_1 = arith.constant 0 : i32
    %c0_i32_2 = arith.constant 0 : i32
    return %arg0, %c0_i32, %c0_i32_0, %c0_i32_1 : i32, i32, i32, i32
  }
}

</mosaic_0001>

<llo_original>
// kernel: lblock_forward.1
$region0: #{lblock_forward.1}
  #allocation0 [shape = 'u32[]', space=smem, size = 0x4, offset = 0x4, fixed_abs, tag = 'smem constant byte address 0x4 - core index']
  #allocation1 [shape = 'u32[144,128]{1,0:T(1,128)}', space=vmem, size = 0x12000, scoped, tag = 'internal scratch']
  #allocation2 [shape = 'f32[12,24,8]{2,1,0:T(8,128)}', space=vmem, size = 0x24000, scoped, tag = 'scratch operand']
  #allocation3 [shape = 'f32[10,24,16]{2,1,0:T(8,128)}', space=vmem, size = 0x1e000, scoped, tag = 'scratch operand']
  #allocation4 [shape = 'f32[10,24,8]{2,1,0:T(8,128)}', space=vmem, size = 0x1e000, scoped, tag = 'scratch operand']
  #allocation5 [shape = 'f32[10,24,8]{2,1,0:T(8,128)}', space=vmem, size = 0x1e000, scoped, tag = 'scratch operand']
  #allocation6 [shape = 'f32[8,8,8]{2,1,0:T(8,128)}', space=vmem, size = 0x8000, scoped, tag = 'scratch operand']
  %s0 = inlined_call_operand.vmem [shape: f32[2,8,8,8], index: 0, kind: input, shape index: {}]
  %s1 = inlined_call_operand.vmem [shape: f32[1,8], index: 1, kind: input, shape index: {}]
  %s2 = inlined_call_operand.vmem [shape: f32[1,8], index: 2, kind: input, shape index: {}]
  %s3 = inlined_call_operand.vmem [shape: f32[1,8], index: 3, kind: input, shape index: {}]
  %s4 = inlined_call_operand.vmem [shape: f32[1,8], index: 4, kind: input, shape index: {}]
  %s5 = inlined_call_operand.vmem [shape: f32[5,5,8], index: 5, kind: input, shape index: {}]
  %s6 = inlined_call_operand.vmem [shape: f32[8,24], index: 6, kind: input, shape index: {}]
  %s7 = inlined_call_operand.vmem [shape: f32[1,24], index: 7, kind: input, shape index: {}]
  %s8 = inlined_call_operand.vmem [shape: f32[3,3,8], index: 8, kind: input, shape index: {}]
  %s9 = inlined_call_operand.vmem [shape: f32[1,8], index: 9, kind: input, shape index: {}]
  %s10 = inlined_call_operand.vmem [shape: f32[8,8], index: 10, kind: input, shape index: {}]
  %s11 = inlined_call_operand.vmem [shape: f32[1,8], index: 11, kind: input, shape index: {}]
  %s12 = inlined_call_operand.vmem [shape: f32[5,5,8], index: 12, kind: input, shape index: {}]
  %s13 = inlined_call_operand.vmem [shape: f32[8,40], index: 13, kind: input, shape index: {}]
  %s14 = inlined_call_operand.vmem [shape: f32[32,8], index: 14, kind: input, shape index: {}]
  %s15 = inlined_call_operand.vmem [shape: f32[144,8], index: 15, kind: input, shape index: {}]
  %s16 = inlined_call_operand.vmem [shape: f32[1,8], index: 16, kind: input, shape index: {}]
  %s17 = inlined_call_operand.vmem [shape: f32[72,8], index: 17, kind: input, shape index: {}]
  %s18 = inlined_call_operand.vmem [shape: f32[1,8], index: 18, kind: input, shape index: {}]
  %s19 = inlined_call_operand.vmem [shape: f32[16,8], index: 19, kind: input, shape index: {}]
  %s20 = inlined_call_operand.vmem [shape: f32[1,8], index: 20, kind: input, shape index: {}]
  %s21 = inlined_call_operand.vmem [shape: f32[2,8,8,8], index: 21, kind: output, shape index: {}]
  %s22 = sld [smem:[#allocation0]]
  $region117: #{lblock_forward.1} parent=0
    _
  %s24 = ssub.s32 1, %s22
  %s25 = scalar_select 0, %s24, %s22
  loop: start=0, step=1, limit=4
  $region2: #{lblock_forward.1} parent=0 // loop_pre_header
    _
  $region3: #{lblock_forward.1} parent=0 // loop_header
    %s27 = sphi 0, %s31
    %p28 = scmp.ge.s32.totalorder %s27, 4
    %s37 = sphi 0, %s39
    %s40 = sphi 0, %s37
    %s41 = sphi 0, %s40
    %s57 = sphi 0, %s41
    %s61 = sphi 0, %s61
    %s63 = sphi 0, %s61
    %s64 = sphi 0, %s63
    %s78 = sphi 0, %s64
    %s82 = sphi 0, %s82
    %s84 = sphi 0, %s82
    %s85 = sphi 0, %s84
    %s99 = sphi 0, %s85
    %s103 = sphi 0, %s103
    %s105 = sphi 0, %s103
    %s106 = sphi 0, %s105
    %s120 = sphi 0, %s106
    %s124 = sphi 0, %s124
    %s126 = sphi 0, %s124
    %s127 = sphi 0, %s126
    %s141 = sphi 0, %s127
    %s145 = sphi 0, %s145
    %s147 = sphi 0, %s145
    %s148 = sphi 0, %s147
    %s162 = sphi 0, %s148
    %s166 = sphi 0, %s166
    %s168 = sphi 0, %s166
    %s169 = sphi 0, %s168
    %s183 = sphi 0, %s169
    %s187 = sphi 0, %s187
    %s189 = sphi 0, %s187
    %s190 = sphi 0, %s189
    %s204 = sphi 0, %s190
    %s208 = sphi 0, %s208
    %s210 = sphi 0, %s208
    %s211 = sphi 0, %s210
    %s225 = sphi 0, %s211
    %s229 = sphi 0, %s229
    %s231 = sphi 0, %s229
    %s232 = sphi 0, %s231
    %s246 = sphi 0, %s232
    %s250 = sphi 0, %s250
    %s252 = sphi 0, %s250
    %s253 = sphi 0, %s252
    %s267 = sphi 0, %s253
    %s271 = sphi 0, %s271
    %s273 = sphi 0, %s271
    %s274 = sphi 0, %s273
    %s288 = sphi 0, %s274
    %s292 = sphi 0, %s292
    %s294 = sphi 0, %s292
    %s295 = sphi 0, %s294
    %s309 = sphi 0, %s295
    %s313 = sphi 0, %s313
    %s315 = sphi 0, %s313
    %s316 = sphi 0, %s315
    %s330 = sphi 0, %s316
    %s334 = sphi 0, %s334
    %s336 = sphi 0, %s334
    %s337 = sphi 0, %s336
    %s351 = sphi 0, %s337
    %s355 = sphi 0, %s355
    %s357 = sphi 0, %s355
    %s358 = sphi 0, %s357
    %s372 = sphi 0, %s358
    %s376 = sphi 0, %s376
    %s378 = sphi 0, %s376
    %s379 = sphi 0, %s378
    %s393 = sphi 0, %s379
    %s397 = sphi 0, %s397
    %s399 = sphi 0, %s397
    %s400 = sphi 0, %s399
    %s414 = sphi 0, %s400
    %s418 = sphi 0, %s418
    %s420 = sphi 0, %s418
    %s421 = sphi 0, %s420
    %s435 = sphi 0, %s421
    %s439 = sphi 0, %s439
    %s441 = sphi 0, %s439
    %s442 = sphi 0, %s441
    %s456 = sphi 0, %s442
    %s460 = sphi 0, %s460
    %s462 = sphi 0, %s460
    %s463 = sphi 0, %s462
    %s477 = sphi 0, %s463
    %s483 = sphi 0, %s485
    %s486 = sphi 0, %s483
    %s487 = sphi 0, %s486
    %s503 = sphi 0, %s487
  $region4: #{lblock_forward.1} parent=0 // loop_header_branch
    %30 = sbr.rel (%p28) target = $region8
  $region5: #{lblock_forward.1} parent=0 // loop_body
    %s32 = ssub.s32 %s27, 1
    %s33 = ssub.s32 %s27, 2
    %s34 = sadd.s32 %s27, 1
    %s35 = ssub.s32 %s27, %s34
    %p36 = scmp.eq.s32.totalorder %s35, 0
    %s38 = sadd.s32 %s37, 1
    %s39 = scalar_select %p36, %s37, %s38
    %p42 = pneg %p36
    %p43 = scmp.eq.s32.totalorder %s27, 1
    %p44 = por %p42, %p43
    %p45 = scmp.ne.s32.totalorder %s37, %s40
    %p46 = scmp.eq.s32.totalorder %s27, 0
    %p47 = por %p45, %p46
    %p48 = scmp.ne.s32.totalorder %s37, %s40
    %p49 = scmp.eq.s32.totalorder %s32, 1
    %p50 = por %p48, %p49
    %p51 = scmp.ne.s32.totalorder %s40, %s41
    %p52 = scmp.eq.s32.totalorder %s32, 0
    %p53 = por %p51, %p52
    %p54 = scmp.ne.s32.totalorder %s40, %s41
    %p55 = scmp.eq.s32.totalorder %s33, 1
    %p56 = por %p54, %p55
    %p58 = scmp.ne.s32.totalorder %s41, %s57
    %p59 = scmp.eq.s32.totalorder %s33, 0
    %p60 = por %p58, %p59
    %s62 = sadd.s32 %s61, 1
    %p65 = scmp.eq.s32.totalorder %s27, 1
    %p66 = scmp.ne.s32.totalorder %s61, %s63
    %p67 = scmp.eq.s32.totalorder %s27, 0
    %p68 = por %p66, %p67
    %p69 = scmp.ne.s32.totalorder %s61, %s63
    %p70 = scmp.eq.s32.totalorder %s32, 1
    %p71 = por %p69, %p70
    %p72 = scmp.ne.s32.totalorder %s63, %s64
    %p73 = scmp.eq.s32.totalorder %s32, 0
    %p74 = por %p72, %p73
    %p75 = scmp.ne.s32.totalorder %s63, %s64
    %p76 = scmp.eq.s32.totalorder %s33, 1
    %p77 = por %p75, %p76
    %p79 = scmp.ne.s32.totalorder %s64, %s78
    %p80 = scmp.eq.s32.totalorder %s33, 0
    %p81 = por %p79, %p80
    %s83 = sadd.s32 %s82, 1
    %p86 = scmp.eq.s32.totalorder %s27, 1
    %p87 = scmp.ne.s32.totalorder %s82, %s84
    %p88 = scmp.eq.s32.totalorder %s27, 0
    %p89 = por %p87, %p88
    %p90 = scmp.ne.s32.totalorder %s82, %s84
    %p91 = scmp.eq.s32.totalorder %s32, 1
    %p92 = por %p90, %p91
    %p93 = scmp.ne.s32.totalorder %s84, %s85
    %p94 = scmp.eq.s32.totalorder %s32, 0
    %p95 = por %p93, %p94
    %p96 = scmp.ne.s32.totalorder %s84, %s85
    %p97 = scmp.eq.s32.totalorder %s33, 1
    %p98 = por %p96, %p97
    %p100 = scmp.ne.s32.totalorder %s85, %s99
    %p101 = scmp.eq.s32.totalorder %s33, 0
    %p102 = por %p100, %p101
    %s104 = sadd.s32 %s103, 1
    %p107 = scmp.eq.s32.totalorder %s27, 1
    %p108 = scmp.ne.s32.totalorder %s103, %s105
    %p109 = scmp.eq.s32.totalorder %s27, 0
    %p110 = por %p108, %p109
    %p111 = scmp.ne.s32.totalorder %s103, %s105
    %p112 = scmp.eq.s32.totalorder %s32, 1
    %p113 = por %p111, %p112
    %p114 = scmp.ne.s32.totalorder %s105, %s106
    %p115 = scmp.eq.s32.totalorder %s32, 0
    %p116 = por %p114, %p115
    %p117 = scmp.ne.s32.totalorder %s105, %s106
    %p118 = scmp.eq.s32.totalorder %s33, 1
    %p119 = por %p117, %p118
    %p121 = scmp.ne.s32.totalorder %s106, %s120
    %p122 = scmp.eq.s32.totalorder %s33, 0
    %p123 = por %p121, %p122
    %s125 = sadd.s32 %s124, 1
    %p128 = scmp.eq.s32.totalorder %s27, 1
    %p129 = scmp.ne.s32.totalorder %s124, %s126
    %p130 = scmp.eq.s32.totalorder %s27, 0
    %p131 = por %p129, %p130
    %p132 = scmp.ne.s32.totalorder %s124, %s126
    %p133 = scmp.eq.s32.totalorder %s32, 1
    %p134 = por %p132, %p133
    %p135 = scmp.ne.s32.totalorder %s126, %s127
    %p136 = scmp.eq.s32.totalorder %s32, 0
    %p137 = por %p135, %p136
    %p138 = scmp.ne.s32.totalorder %s126, %s127
    %p139 = scmp.eq.s32.totalorder %s33, 1
    %p140 = por %p138, %p139
    %p142 = scmp.ne.s32.totalorder %s127, %s141
    %p143 = scmp.eq.s32.totalorder %s33, 0
    %p144 = por %p142, %p143
    %s146 = sadd.s32 %s145, 1
    %p149 = scmp.eq.s32.totalorder %s27, 1
    %p150 = scmp.ne.s32.totalorder %s145, %s147
    %p151 = scmp.eq.s32.totalorder %s27, 0
    %p152 = por %p150, %p151
    %p153 = scmp.ne.s32.totalorder %s145, %s147
    %p154 = scmp.eq.s32.totalorder %s32, 1
    %p155 = por %p153, %p154
    %p156 = scmp.ne.s32.totalorder %s147, %s148
    %p157 = scmp.eq.s32.totalorder %s32, 0
    %p158 = por %p156, %p157
    %p159 = scmp.ne.s32.totalorder %s147, %s148
    %p160 = scmp.eq.s32.totalorder %s33, 1
    %p161 = por %p159, %p160
    %p163 = scmp.ne.s32.totalorder %s148, %s162
    %p164 = scmp.eq.s32.totalorder %s33, 0
    %p165 = por %p163, %p164
    %s167 = sadd.s32 %s166, 1
    %p170 = scmp.eq.s32.totalorder %s27, 1
    %p171 = scmp.ne.s32.totalorder %s166, %s168
    %p172 = scmp.eq.s32.totalorder %s27, 0
    %p173 = por %p171, %p172
    %p174 = scmp.ne.s32.totalorder %s166, %s168
    %p175 = scmp.eq.s32.totalorder %s32, 1
    %p176 = por %p174, %p175
    %p177 = scmp.ne.s32.totalorder %s168, %s169
    %p178 = scmp.eq.s32.totalorder %s32, 0
    %p179 = por %p177, %p178
    %p180 = scmp.ne.s32.totalorder %s168, %s169
    %p181 = scmp.eq.s32.totalorder %s33, 1
    %p182 = por %p180, %p181
    %p184 = scmp.ne.s32.totalorder %s169, %s183
    %p185 = scmp.eq.s32.totalorder %s33, 0
    %p186 = por %p184, %p185
    %s188 = sadd.s32 %s187, 1
    %p191 = scmp.eq.s32.totalorder %s27, 1
    %p192 = scmp.ne.s32.totalorder %s187, %s189
    %p193 = scmp.eq.s32.totalorder %s27, 0
    %p194 = por %p192, %p193
    %p195 = scmp.ne.s32.totalorder %s187, %s189
    %p196 = scmp.eq.s32.totalorder %s32, 1
    %p197 = por %p195, %p196
    %p198 = scmp.ne.s32.totalorder %s189, %s190
    %p199 = scmp.eq.s32.totalorder %s32, 0
    %p200 = por %p198, %p199
    %p201 = scmp.ne.s32.totalorder %s189, %s190
    %p202 = scmp.eq.s32.totalorder %s33, 1
    %p203 = por %p201, %p202
    %p205 = scmp.ne.s32.totalorder %s190, %s204
    %p206 = scmp.eq.s32.totalorder %s33, 0
    %p207 = por %p205, %p206
    %s209 = sadd.s32 %s208, 1
    %p212 = scmp.eq.s32.totalorder %s27, 1
    %p213 = scmp.ne.s32.totalorder %s208, %s210
    %p214 = scmp.eq.s32.totalorder %s27, 0
    %p215 = por %p213, %p214
    %p216 = scmp.ne.s32.totalorder %s208, %s210
    %p217 = scmp.eq.s32.totalorder %s32, 1
    %p218 = por %p216, %p217
    %p219 = scmp.ne.s32.totalorder %s210, %s211
    %p220 = scmp.eq.s32.totalorder %s32, 0
    %p221 = por %p219, %p220
    %p222 = scmp.ne.s32.totalorder %s210, %s211
    %p223 = scmp.eq.s32.totalorder %s33, 1
    %p224 = por %p222, %p223
    %p226 = scmp.ne.s32.totalorder %s211, %s225
    %p227 = scmp.eq.s32.totalorder %s33, 0
    %p228 = por %p226, %p227
    %s230 = sadd.s32 %s229, 1
    %p233 = scmp.eq.s32.totalorder %s27, 1
    %p234 = scmp.ne.s32.totalorder %s229, %s231
    %p235 = scmp.eq.s32.totalorder %s27, 0
    %p236 = por %p234, %p235
    %p237 = scmp.ne.s32.totalorder %s229, %s231
    %p238 = scmp.eq.s32.totalorder %s32, 1
    %p239 = por %p237, %p238
    %p240 = scmp.ne.s32.totalorder %s231, %s232
    %p241 = scmp.eq.s32.totalorder %s32, 0
    %p242 = por %p240, %p241
    %p243 = scmp.ne.s32.totalorder %s231, %s232
    %p244 = scmp.eq.s32.totalorder %s33, 1
    %p245 = por %p243, %p244
    %p247 = scmp.ne.s32.totalorder %s232, %s246
    %p248 = scmp.eq.s32.totalorder %s33, 0
    %p249 = por %p247, %p248
    %s251 = sadd.s32 %s250, 1
    %p254 = scmp.eq.s32.totalorder %s27, 1
    %p255 = scmp.ne.s32.totalorder %s250, %s252
    %p256 = scmp.eq.s32.totalorder %s27, 0
    %p257 = por %p255, %p256
    %p258 = scmp.ne.s32.totalorder %s250, %s252
    %p259 = scmp.eq.s32.totalorder %s32, 1
    %p260 = por %p258, %p259
    %p261 = scmp.ne.s32.totalorder %s252, %s253
    %p262 = scmp.eq.s32.totalorder %s32, 0
    %p263 = por %p261, %p262
    %p264 = scmp.ne.s32.totalorder %s252, %s253
    %p265 = scmp.eq.s32.totalorder %s33, 1
    %p266 = por %p264, %p265
    %p268 = scmp.ne.s32.totalorder %s253, %s267
    %p269 = scmp.eq.s32.totalorder %s33, 0
    %p270 = por %p268, %p269
    %s272 = sadd.s32 %s271, 1
    %p275 = scmp.eq.s32.totalorder %s27, 1
    %p276 = scmp.ne.s32.totalorder %s271, %s273
    %p277 = scmp.eq.s32.totalorder %s27, 0
    %p278 = por %p276, %p277
    %p279 = scmp.ne.s32.totalorder %s271, %s273
    %p280 = scmp.eq.s32.totalorder %s32, 1
    %p281 = por %p279, %p280
    %p282 = scmp.ne.s32.totalorder %s273, %s274
    %p283 = scmp.eq.s32.totalorder %s32, 0
    %p284 = por %p282, %p283
    %p285 = scmp.ne.s32.totalorder %s273, %s274
    %p286 = scmp.eq.s32.totalorder %s33, 1
    %p287 = por %p285, %p286
    %p289 = scmp.ne.s32.totalorder %s274, %s288
    %p290 = scmp.eq.s32.totalorder %s33, 0
    %p291 = por %p289, %p290
    %s293 = sadd.s32 %s292, 1
    %p296 = scmp.eq.s32.totalorder %s27, 1
    %p297 = scmp.ne.s32.totalorder %s292, %s294
    %p298 = scmp.eq.s32.totalorder %s27, 0
    %p299 = por %p297, %p298
    %p300 = scmp.ne.s32.totalorder %s292, %s294
    %p301 = scmp.eq.s32.totalorder %s32, 1
    %p302 = por %p300, %p301
    %p303 = scmp.ne.s32.totalorder %s294, %s295
    %p304 = scmp.eq.s32.totalorder %s32, 0
    %p305 = por %p303, %p304
    %p306 = scmp.ne.s32.totalorder %s294, %s295
    %p307 = scmp.eq.s32.totalorder %s33, 1
    %p308 = por %p306, %p307
    %p310 = scmp.ne.s32.totalorder %s295, %s309
    %p311 = scmp.eq.s32.totalorder %s33, 0
    %p312 = por %p310, %p311
    %s314 = sadd.s32 %s313, 1
    %p317 = scmp.eq.s32.totalorder %s27, 1
    %p318 = scmp.ne.s32.totalorder %s313, %s315
    %p319 = scmp.eq.s32.totalorder %s27, 0
    %p320 = por %p318, %p319
    %p321 = scmp.ne.s32.totalorder %s313, %s315
    %p322 = scmp.eq.s32.totalorder %s32, 1
    %p323 = por %p321, %p322
    %p324 = scmp.ne.s32.totalorder %s315, %s316
    %p325 = scmp.eq.s32.totalorder %s32, 0
    %p326 = por %p324, %p325
    %p327 = scmp.ne.s32.totalorder %s315, %s316
    %p328 = scmp.eq.s32.totalorder %s33, 1
    %p329 = por %p327, %p328
    %p331 = scmp.ne.s32.totalorder %s316, %s330
    %p332 = scmp.eq.s32.totalorder %s33, 0
    %p333 = por %p331, %p332
    %s335 = sadd.s32 %s334, 1
    %p338 = scmp.eq.s32.totalorder %s27, 1
    %p339 = scmp.ne.s32.totalorder %s334, %s336
    %p340 = scmp.eq.s32.totalorder %s27, 0
    %p341 = por %p339, %p340
    %p342 = scmp.ne.s32.totalorder %s334, %s336
    %p343 = scmp.eq.s32.totalorder %s32, 1
    %p344 = por %p342, %p343
    %p345 = scmp.ne.s32.totalorder %s336, %s337
    %p346 = scmp.eq.s32.totalorder %s32, 0
    %p347 = por %p345, %p346
    %p348 = scmp.ne.s32.totalorder %s336, %s337
    %p349 = scmp.eq.s32.totalorder %s33, 1
    %p350 = por %p348, %p349
    %p352 = scmp.ne.s32.totalorder %s337, %s351
    %p353 = scmp.eq.s32.totalorder %s33, 0
    %p354 = por %p352, %p353
    %s356 = sadd.s32 %s355, 1
    %p359 = scmp.eq.s32.totalorder %s27, 1
    %p360 = scmp.ne.s32.totalorder %s355, %s357
    %p361 = scmp.eq.s32.totalorder %s27, 0
    %p362 = por %p360, %p361
    %p363 = scmp.ne.s32.totalorder %s355, %s357
    %p364 = scmp.eq.s32.totalorder %s32, 1
    %p365 = por %p363, %p364
    %p366 = scmp.ne.s32.totalorder %s357, %s358
    %p367 = scmp.eq.s32.totalorder %s32, 0
    %p368 = por %p366, %p367
    %p369 = scmp.ne.s32.totalorder %s357, %s358
    %p370 = scmp.eq.s32.totalorder %s33, 1
    %p371 = por %p369, %p370
    %p373 = scmp.ne.s32.totalorder %s358, %s372
    %p374 = scmp.eq.s32.totalorder %s33, 0
    %p375 = por %p373, %p374
    %s377 = sadd.s32 %s376, 1
    %p380 = scmp.eq.s32.totalorder %s27, 1
    %p381 = scmp.ne.s32.totalorder %s376, %s378
    %p382 = scmp.eq.s32.totalorder %s27, 0
    %p383 = por %p381, %p382
    %p384 = scmp.ne.s32.totalorder %s376, %s378
    %p385 = scmp.eq.s32.totalorder %s32, 1
    %p386 = por %p384, %p385
    %p387 = scmp.ne.s32.totalorder %s378, %s379
    %p388 = scmp.eq.s32.totalorder %s32, 0
    %p389 = por %p387, %p388
    %p390 = scmp.ne.s32.totalorder %s378, %s379
    %p391 = scmp.eq.s32.totalorder %s33, 1
    %p392 = por %p390, %p391
    %p394 = scmp.ne.s32.totalorder %s379, %s393
    %p395 = scmp.eq.s32.totalorder %s33, 0
    %p396 = por %p394, %p395
    %s398 = sadd.s32 %s397, 1
    %p401 = scmp.eq.s32.totalorder %s27, 1
    %p402 = scmp.ne.s32.totalorder %s397, %s399
    %p403 = scmp.eq.s32.totalorder %s27, 0
    %p404 = por %p402, %p403
    %p405 = scmp.ne.s32.totalorder %s397, %s399
    %p406 = scmp.eq.s32.totalorder %s32, 1
    %p407 = por %p405, %p406
    %p408 = scmp.ne.s32.totalorder %s399, %s400
    %p409 = scmp.eq.s32.totalorder %s32, 0
    %p410 = por %p408, %p409
    %p411 = scmp.ne.s32.totalorder %s399, %s400
    %p412 = scmp.eq.s32.totalorder %s33, 1
    %p413 = por %p411, %p412
    %p415 = scmp.ne.s32.totalorder %s400, %s414
    %p416 = scmp.eq.s32.totalorder %s33, 0
    %p417 = por %p415, %p416
    %s419 = sadd.s32 %s418, 1
    %p422 = scmp.eq.s32.totalorder %s27, 1
    %p423 = scmp.ne.s32.totalorder %s418, %s420
    %p424 = scmp.eq.s32.totalorder %s27, 0
    %p425 = por %p423, %p424
    %p426 = scmp.ne.s32.totalorder %s418, %s420
    %p427 = scmp.eq.s32.totalorder %s32, 1
    %p428 = por %p426, %p427
    %p429 = scmp.ne.s32.totalorder %s420, %s421
    %p430 = scmp.eq.s32.totalorder %s32, 0
    %p431 = por %p429, %p430
    %p432 = scmp.ne.s32.totalorder %s420, %s421
    %p433 = scmp.eq.s32.totalorder %s33, 1
    %p434 = por %p432, %p433
    %p436 = scmp.ne.s32.totalorder %s421, %s435
    %p437 = scmp.eq.s32.totalorder %s33, 0
    %p438 = por %p436, %p437
    %s440 = sadd.s32 %s439, 1
    %p443 = scmp.eq.s32.totalorder %s27, 1
    %p444 = scmp.ne.s32.totalorder %s439, %s441
    %p445 = scmp.eq.s32.totalorder %s27, 0
    %p446 = por %p444, %p445
    %p447 = scmp.ne.s32.totalorder %s439, %s441
    %p448 = scmp.eq.s32.totalorder %s32, 1
    %p449 = por %p447, %p448
    %p450 = scmp.ne.s32.totalorder %s441, %s442
    %p451 = scmp.eq.s32.totalorder %s32, 0
    %p452 = por %p450, %p451
    %p453 = scmp.ne.s32.totalorder %s441, %s442
    %p454 = scmp.eq.s32.totalorder %s33, 1
    %p455 = por %p453, %p454
    %p457 = scmp.ne.s32.totalorder %s442, %s456
    %p458 = scmp.eq.s32.totalorder %s33, 0
    %p459 = por %p457, %p458
    %s461 = sadd.s32 %s460, 1
    %p464 = scmp.eq.s32.totalorder %s27, 1
    %p465 = scmp.ne.s32.totalorder %s460, %s462
    %p466 = scmp.eq.s32.totalorder %s27, 0
    %p467 = por %p465, %p466
    %p468 = scmp.ne.s32.totalorder %s460, %s462
    %p469 = scmp.eq.s32.totalorder %s32, 1
    %p470 = por %p468, %p469
    %p471 = scmp.ne.s32.totalorder %s462, %s463
    %p472 = scmp.eq.s32.totalorder %s32, 0
    %p473 = por %p471, %p472
    %p474 = scmp.ne.s32.totalorder %s462, %s463
    %p475 = scmp.eq.s32.totalorder %s33, 1
    %p476 = por %p474, %p475
    %p478 = scmp.ne.s32.totalorder %s463, %s477
    %p479 = scmp.eq.s32.totalorder %s33, 0
    %p480 = por %p478, %p479
    %s481 = ssub.s32 %s27, %s34
    %p482 = scmp.eq.s32.totalorder %s481, 0
    %s484 = sadd.s32 %s483, 1
    %s485 = scalar_select %p482, %s483, %s484
    %p488 = pneg %p482
    %p489 = scmp.eq.s32.totalorder %s27, 1
    %p490 = por %p488, %p489
    %p491 = scmp.ne.s32.totalorder %s483, %s486
    %p492 = scmp.eq.s32.totalorder %s27, 0
    %p493 = por %p491, %p492
    %p494 = scmp.ne.s32.totalorder %s483, %s486
    %p495 = scmp.eq.s32.totalorder %s32, 1
    %p496 = por %p494, %p495
    %p497 = scmp.ne.s32.totalorder %s486, %s487
    %p498 = scmp.eq.s32.totalorder %s32, 0
    %p499 = por %p497, %p498
    %p500 = scmp.ne.s32.totalorder %s486, %s487
    %p501 = scmp.eq.s32.totalorder %s33, 1
    %p502 = por %p500, %p501
    %p504 = scmp.ne.s32.totalorder %s487, %s503
    %p505 = scmp.eq.s32.totalorder %s33, 0
    %p506 = por %p504, %p505
    %p507 = scmp.le.s32.totalorder 1, %s27
    %p508 = scmp.lt.s32.totalorder %s27, 3
    %p509 = pnand %p507, %p508
    %p510 = pneg %p509
    // Predicated region
    $region9: #{lblock_forward.1} parent=5 // pred_check
      _
    $region10: #{lblock_forward.1} parent=5 // pred_check_branch
      %512 = sbr.rel (%p509) target = $region12
    $region11: #{lblock_forward.1} parent=5 // pred_region
      %s513 = ssub.s32 %s27, 1
      // Predicated region
      $region13: #{lblock_forward.1} parent=11 // pred_check
        %p514 = pneg %p74
      $region14: #{lblock_forward.1} parent=11 // pred_check_branch
        %516 = sbr.rel (%p514) target = $region16
      $region15: #{lblock_forward.1} parent=11 // pred_region
        _
      $region16: #{lblock_forward.1} parent=11 // pred_fallthru
        _
      // Predicated region
      $region17: #{lblock_forward.1} parent=11 // pred_check
        %p517 = pneg %p95
      $region18: #{lblock_forward.1} parent=11 // pred_check_branch
        %519 = sbr.rel (%p517) target = $region20
      $region19: #{lblock_forward.1} parent=11 // pred_region
        _
      $region20: #{lblock_forward.1} parent=11 // pred_fallthru
        _
      // Predicated region
      $region21: #{lblock_forward.1} parent=11 // pred_check
        %p520 = pneg %p116
      $region22: #{lblock_forward.1} parent=11 // pred_check_branch
        %522 = sbr.rel (%p520) target = $region24
      $region23: #{lblock_forward.1} parent=11 // pred_region
        _
      $region24: #{lblock_forward.1} parent=11 // pred_fallthru
        _
      // Predicated region
      $region25: #{lblock_forward.1} parent=11 // pred_check
        %p523 = pneg %p137
      $region26: #{lblock_forward.1} parent=11 // pred_check_branch
        %525 = sbr.rel (%p523) target = $region28
      $region27: #{lblock_forward.1} parent=11 // pred_region
        _
      $region28: #{lblock_forward.1} parent=11 // pred_fallthru
        _
      // Predicated region
      $region29: #{lblock_forward.1} parent=11 // pred_check
        %p526 = pneg %p158
      $region30: #{lblock_forward.1} parent=11 // pred_check_branch
        %528 = sbr.rel (%p526) target = $region32
      $region31: #{lblock_forward.1} parent=11 // pred_region
        _
      $region32: #{lblock_forward.1} parent=11 // pred_fallthru
        _
      // Predicated region
      $region33: #{lblock_forward.1} parent=11 // pred_check
        %p529 = pneg %p179
      $region34: #{lblock_forward.1} parent=11 // pred_check_branch
        %531 = sbr.rel (%p529) target = $region36
      $region35: #{lblock_forward.1} parent=11 // pred_region
        _
      $region36: #{lblock_forward.1} parent=11 // pred_fallthru
        _
      // Predicated region
      $region37: #{lblock_forward.1} parent=11 // pred_check
        %p532 = pneg %p200
      $region38: #{lblock_forward.1} parent=11 // pred_check_branch
        %534 = sbr.rel (%p532) target = $region40
      $region39: #{lblock_forward.1} parent=11 // pred_region
        _
      $region40: #{lblock_forward.1} parent=11 // pred_fallthru
        _
      // Predicated region
      $region41: #{lblock_forward.1} parent=11 // pred_check
        %p535 = pneg %p221
      $region42: #{lblock_forward.1} parent=11 // pred_check_branch
        %537 = sbr.rel (%p535) target = $region44
      $region43: #{lblock_forward.1} parent=11 // pred_region
        _
      $region44: #{lblock_forward.1} parent=11 // pred_fallthru
        _
      // Predicated region
      $region45: #{lblock_forward.1} parent=11 // pred_check
        %p538 = pneg %p242
      $region46: #{lblock_forward.1} parent=11 // pred_check_branch
        %540 = sbr.rel (%p538) target = $region48
      $region47: #{lblock_forward.1} parent=11 // pred_region
        _
      $region48: #{lblock_forward.1} parent=11 // pred_fallthru
        _
      // Predicated region
      $region49: #{lblock_forward.1} parent=11 // pred_check
        %p541 = pneg %p263
      $region50: #{lblock_forward.1} parent=11 // pred_check_branch
        %543 = sbr.rel (%p541) target = $region52
      $region51: #{lblock_forward.1} parent=11 // pred_region
        _
      $region52: #{lblock_forward.1} parent=11 // pred_fallthru
        _
      // Predicated region
      $region53: #{lblock_forward.1} parent=11 // pred_check
        %p544 = pneg %p284
      $region54: #{lblock_forward.1} parent=11 // pred_check_branch
        %546 = sbr.rel (%p544) target = $region56
      $region55: #{lblock_forward.1} parent=11 // pred_region
        _
      $region56: #{lblock_forward.1} parent=11 // pred_fallthru
        _
      // Predicated region
      $region57: #{lblock_forward.1} parent=11 // pred_check
        %p547 = pneg %p305
      $region58: #{lblock_forward.1} parent=11 // pred_check_branch
        %549 = sbr.rel (%p547) target = $region60
      $region59: #{lblock_forward.1} parent=11 // pred_region
        _
      $region60: #{lblock_forward.1} parent=11 // pred_fallthru
        _
      // Predicated region
      $region61: #{lblock_forward.1} parent=11 // pred_check
        %p550 = pneg %p326
      $region62: #{lblock_forward.1} parent=11 // pred_check_branch
        %552 = sbr.rel (%p550) target = $region64
      $region63: #{lblock_forward.1} parent=11 // pred_region
        _
      $region64: #{lblock_forward.1} parent=11 // pred_fallthru
        _
      // Predicated region
      $region65: #{lblock_forward.1} parent=11 // pred_check
        %p553 = pneg %p347
      $region66: #{lblock_forward.1} parent=11 // pred_check_branch
        %555 = sbr.rel (%p553) target = $region68
      $region67: #{lblock_forward.1} parent=11 // pred_region
        _
      $region68: #{lblock_forward.1} parent=11 // pred_fallthru
        _
      // Predicated region
      $region69: #{lblock_forward.1} parent=11 // pred_check
        %p556 = pneg %p368
      $region70: #{lblock_forward.1} parent=11 // pred_check_branch
        %558 = sbr.rel (%p556) target = $region72
      $region71: #{lblock_forward.1} parent=11 // pred_region
        _
      $region72: #{lblock_forward.1} parent=11 // pred_fallthru
        _
      // Predicated region
      $region73: #{lblock_forward.1} parent=11 // pred_check
        %p559 = pneg %p389
      $region74: #{lblock_forward.1} parent=11 // pred_check_branch
        %561 = sbr.rel (%p559) target = $region76
      $region75: #{lblock_forward.1} parent=11 // pred_region
        _
      $region76: #{lblock_forward.1} parent=11 // pred_fallthru
        _
      // Predicated region
      $region77: #{lblock_forward.1} parent=11 // pred_check
        %p562 = pneg %p410
      $region78: #{lblock_forward.1} parent=11 // pred_check_branch
        %564 = sbr.rel (%p562) target = $region80
      $region79: #{lblock_forward.1} parent=11 // pred_region
        _
      $region80: #{lblock_forward.1} parent=11 // pred_fallthru
        _
      // Predicated region
      $region81: #{lblock_forward.1} parent=11 // pred_check
        %p565 = pneg %p431
      $region82: #{lblock_forward.1} parent=11 // pred_check_branch
        %567 = sbr.rel (%p565) target = $region84
      $region83: #{lblock_forward.1} parent=11 // pred_region
        _
      $region84: #{lblock_forward.1} parent=11 // pred_fallthru
        _
      // Predicated region
      $region85: #{lblock_forward.1} parent=11 // pred_check
        %p568 = pneg %p452
      $region86: #{lblock_forward.1} parent=11 // pred_check_branch
        %570 = sbr.rel (%p568) target = $region88
      $region87: #{lblock_forward.1} parent=11 // pred_region
        _
      $region88: #{lblock_forward.1} parent=11 // pred_fallthru
        _
      // Predicated region
      $region89: #{lblock_forward.1} parent=11 // pred_check
        %p571 = pneg %p473
      $region90: #{lblock_forward.1} parent=11 // pred_check_branch
        %573 = sbr.rel (%p571) target = $region92
      $region91: #{lblock_forward.1} parent=11 // pred_region
        _
      $region92: #{lblock_forward.1} parent=11 // pred_fallthru
        _
    $region12: #{lblock_forward.1} parent=5 // pred_fallthru
      _
    %p574 = scmp.lt.s32.totalorder %s27, 2
    // Predicated region
    $region93: #{lblock_forward.1} parent=5 // pred_check
      %p575 = pneg %p574
    $region94: #{lblock_forward.1} parent=5 // pred_check_branch
      %577 = sbr.rel (%p575) target = $region96
    $region95: #{lblock_forward.1} parent=5 // pred_region
      // Predicated region
      $region97: #{lblock_forward.1} parent=95 // pred_check
        %p578 = pneg %p47
      $region98: #{lblock_forward.1} parent=95 // pred_check_branch
        %580 = sbr.rel (%p578) target = $region100
      $region99: #{lblock_forward.1} parent=95 // pred_region
        %p581 = scmp.lt.s32.totalorder %s27, 1
        %s582 = scalar_select %p581, %s27, 1
        %s583 = smul.addr %s582, 8
        %s584 = smul.addr %s583, 8
        %s585 = scalar_lea.vmem %s0, %s584
      $region100: #{lblock_forward.1} parent=95 // pred_fallthru
        _
    $region96: #{lblock_forward.1} parent=5 // pred_fallthru
      _
    %p586 = scmp.le.s32.totalorder 1, %s27
    %p587 = scmp.lt.s32.totalorder %s27, 3
    %p588 = pnand %p586, %p587
    %p589 = pneg %p588
    // Predicated region
    $region101: #{lblock_forward.1} parent=5 // pred_check
      _
    $region102: #{lblock_forward.1} parent=5 // pred_check_branch
      %591 = sbr.rel (%p588) target = $region104
    $region103: #{lblock_forward.1} parent=5 // pred_region
      %s592 = ssub.s32 %s27, 1
      %p593 = scmp.lt.s32.totalorder %s32, 1
      %s594 = scalar_select %p593, %s32, 1
      %s595 = smul.addr %s594, 8
      %s596 = smul.addr %s595, 8
      %s597 = scalar_lea.vmem %s0, %s596
      %p598 = pneg %p53
      %p599 = pneg %p50
      %p600 = pneg %p74
      %p601 = pneg %p71
      %p602 = pneg %p95
      %p603 = pneg %p92
      %p604 = pneg %p116
      %p605 = pneg %p113
      %p606 = pneg %p137
      %p607 = pneg %p134
      %p608 = pneg %p158
      %p609 = pneg %p155
      %p610 = pneg %p179
      %p611 = pneg %p176
      %p612 = pneg %p200
      %p613 = pneg %p197
      %p614 = pneg %p221
      %p615 = pneg %p218
      %p616 = pneg %p242
      %p617 = pneg %p239
      %p618 = pneg %p263
      %p619 = pneg %p260
      %p620 = pneg %p284
      %p621 = pneg %p281
      %p622 = pneg %p305
      %p623 = pneg %p302
      %p624 = pneg %p326
      %p625 = pneg %p323
      %p626 = pneg %p347
      %p627 = pneg %p344
      %p628 = pneg %p368
      %p629 = pneg %p365
      %p630 = pneg %p389
      %p631 = pneg %p386
      %p632 = pneg %p410
      %p633 = pneg %p407
      %p634 = pneg %p431
      %p635 = pneg %p428
      %p636 = pneg %p452
      %p637 = pneg %p449
      %p638 = pneg %p473
      %p639 = pneg %p470
      %p640 = pneg %p499
      %p641 = pneg %p496
      %p642 = scmp.lt.s32.totalorder %s32, 1
      %s643 = scalar_select %p642, %s32, 1
      %s644 = smul.addr %s643, 8
      %s645 = smul.addr %s644, 8
      %s646 = scalar_lea.vmem %s21, %s645
      %p647 = scmp.lt.s32.totalorder %s32, 1
      %s648 = scalar_select %p647, %s32, 1
      %s649 = smul.addr %s648, 8
      %s650 = smul.addr %s649, 8
      %s651 = scalar_lea.vmem %s0, %s650
      %p652 = scmp.lt.s32.totalorder %s32, 1
      %s653 = scalar_select %p652, %s32, 1
      %s654 = smul.addr %s653, 8
      %s655 = smul.addr %s654, 8
      %s656 = scalar_lea.vmem %s21, %s655
      %vm657 = vcmask 64512
      %658 = vst.msk [vmem:[#allocation2] sm:$0xff] %vm657, 0.0
      %659 = vst.msk [vmem:[#allocation2 + $0x8] sm:$0xff] %vm657, 0.0
      %660 = vst.msk [vmem:[#allocation2 + $0x10] sm:$0xff] %vm657, 0.0
      %661 = vst.msk [vmem:[#allocation2 + $0x18] sm:$0xff] %vm657, 0.0
      %662 = vst.msk [vmem:[#allocation2 + $0x20] sm:$0xff] %vm657, 0.0
      %663 = vst.msk [vmem:[#allocation2 + $0x28] sm:$0xff] %vm657, 0.0
      %664 = vst.msk [vmem:[#allocation2 + $0x30] sm:$0xff] %vm657, 0.0
      %665 = vst.msk [vmem:[#allocation2 + $0x38] sm:$0xff] %vm657, 0.0
      %666 = vst.msk [vmem:[#allocation2 + $0x40] sm:$0xff] %vm657, 0.0
      %667 = vst.msk [vmem:[#allocation2 + $0x48] sm:$0xff] %vm657, 0.0
      %668 = vst.msk [vmem:[#allocation2 + $0x50] sm:$0xff] %vm657, 0.0
      %669 = vst.msk [vmem:[#allocation2 + $0x58] sm:$0xff] %vm657, 0.0
      %670 = vst.msk [vmem:[#allocation2 + $0x60] sm:$0xff] %vm657, 0.0
      %671 = vst.msk [vmem:[#allocation2 + $0x68] sm:$0xff] %vm657, 0.0
      %672 = vst.msk [vmem:[#allocation2 + $0x70] sm:$0xff] %vm657, 0.0
      %673 = vst.msk [vmem:[#allocation2 + $0x78] sm:$0xff] %vm657, 0.0
      %674 = vst.msk [vmem:[#allocation2 + $0x80] sm:$0xff] %vm657, 0.0
      %675 = vst.msk [vmem:[#allocation2 + $0x88] sm:$0xff] %vm657, 0.0
      %676 = vst.msk [vmem:[#allocation2 + $0x90] sm:$0xff] %vm657, 0.0
      %677 = vst.msk [vmem:[#allocation2 + $0x98] sm:$0xff] %vm657, 0.0
      %678 = vst.msk [vmem:[#allocation2 + $0xa0] sm:$0xff] %vm657, 0.0
      %679 = vst.msk [vmem:[#allocation2 + $0xa8] sm:$0xff] %vm657, 0.0
      %680 = vst.msk [vmem:[#allocation2 + $0xb0] sm:$0xff] %vm657, 0.0
      %681 = vst.msk [vmem:[#allocation2 + $0xb8] sm:$0xff] %vm657, 0.0
      %682 = vst.msk [vmem:[#allocation2 + $0xc0] sm:$0xff] %vm657, 0.0
      %683 = vst.msk [vmem:[#allocation2 + $0xc8] sm:$0xff] %vm657, 0.0
      %684 = vst.msk [vmem:[#allocation2 + $0xd0] sm:$0xff] %vm657, 0.0
      %685 = vst.msk [vmem:[#allocation2 + $0xd8] sm:$0xff] %vm657, 0.0
      %686 = vst.msk [vmem:[#allocation2 + $0xe0] sm:$0xff] %vm657, 0.0
      %687 = vst.msk [vmem:[#allocation2 + $0xe8] sm:$0xff] %vm657, 0.0
      %688 = vst.msk [vmem:[#allocation2 + $0xf0] sm:$0xff] %vm657, 0.0
      %689 = vst.msk [vmem:[#allocation2 + $0xf8] sm:$0xff] %vm657, 0.0
      %690 = vst.msk [vmem:[#allocation2 + $0x100] sm:$0xff] %vm657, 0.0
      %691 = vst.msk [vmem:[#allocation2 + $0x108] sm:$0xff] %vm657, 0.0
      %692 = vst.msk [vmem:[#allocation2 + $0x110] sm:$0xff] %vm657, 0.0
      %693 = vst.msk [vmem:[#allocation2 + $0x118] sm:$0xff] %vm657, 0.0
      %vm694 = vcmask 130048
      %695 = vst.msk [vmem:[#allocation3] sm:$0xff] %vm694, 0.0
      %696 = vst.msk [vmem:[#allocation3 + $0x8] sm:$0xff] %vm694, 0.0
      %697 = vst.msk [vmem:[#allocation3 + $0x10] sm:$0xff] %vm694, 0.0
      %698 = vst.msk [vmem:[#allocation3 + $0x18] sm:$0xff] %vm694, 0.0
      %699 = vst.msk [vmem:[#allocation3 + $0x20] sm:$0xff] %vm694, 0.0
      %700 = vst.msk [vmem:[#allocation3 + $0x28] sm:$0xff] %vm694, 0.0
      %701 = vst.msk [vmem:[#allocation3 + $0x30] sm:$0xff] %vm694, 0.0
      %702 = vst.msk [vmem:[#allocation3 + $0x38] sm:$0xff] %vm694, 0.0
      %703 = vst.msk [vmem:[#allocation3 + $0x40] sm:$0xff] %vm694, 0.0
      %704 = vst.msk [vmem:[#allocation3 + $0x48] sm:$0xff] %vm694, 0.0
      %705 = vst.msk [vmem:[#allocation3 + $0x50] sm:$0xff] %vm694, 0.0
      %706 = vst.msk [vmem:[#allocation3 + $0x58] sm:$0xff] %vm694, 0.0
      %707 = vst.msk [vmem:[#allocation3 + $0x60] sm:$0xff] %vm694, 0.0
      %708 = vst.msk [vmem:[#allocation3 + $0x68] sm:$0xff] %vm694, 0.0
      %709 = vst.msk [vmem:[#allocation3 + $0x70] sm:$0xff] %vm694, 0.0
      %710 = vst.msk [vmem:[#allocation3 + $0x78] sm:$0xff] %vm694, 0.0
      %711 = vst.msk [vmem:[#allocation3 + $0x80] sm:$0xff] %vm694, 0.0
      %712 = vst.msk [vmem:[#allocation3 + $0x88] sm:$0xff] %vm694, 0.0
      %713 = vst.msk [vmem:[#allocation3 + $0x90] sm:$0xff] %vm694, 0.0
      %714 = vst.msk [vmem:[#allocation3 + $0x98] sm:$0xff] %vm694, 0.0
      %715 = vst.msk [vmem:[#allocation3 + $0xa0] sm:$0xff] %vm694, 0.0
      %716 = vst.msk [vmem:[#allocation3 + $0xa8] sm:$0xff] %vm694, 0.0
      %717 = vst.msk [vmem:[#allocation3 + $0xb0] sm:$0xff] %vm694, 0.0
      %718 = vst.msk [vmem:[#allocation3 + $0xb8] sm:$0xff] %vm694, 0.0
      %719 = vst.msk [vmem:[#allocation3 + $0xc0] sm:$0xff] %vm694, 0.0
      %720 = vst.msk [vmem:[#allocation3 + $0xc8] sm:$0xff] %vm694, 0.0
      %721 = vst.msk [vmem:[#allocation3 + $0xd0] sm:$0xff] %vm694, 0.0
      %722 = vst.msk [vmem:[#allocation3 + $0xd8] sm:$0xff] %vm694, 0.0
      %723 = vst.msk [vmem:[#allocation3 + $0xe0] sm:$0xff] %vm694, 0.0
      %724 = vst.msk [vmem:[#allocation3 + $0xe8] sm:$0xff] %vm694, 0.0
      %725 = vst.msk [vmem:[#allocation4] sm:$0xff] %vm657, 0.0
      %726 = vst.msk [vmem:[#allocation4 + $0x8] sm:$0xff] %vm657, 0.0
      %727 = vst.msk [vmem:[#allocation4 + $0x10] sm:$0xff] %vm657, 0.0
      %728 = vst.msk [vmem:[#allocation4 + $0x18] sm:$0xff] %vm657, 0.0
      %729 = vst.msk [vmem:[#allocation4 + $0x20] sm:$0xff] %vm657, 0.0
      %730 = vst.msk [vmem:[#allocation4 + $0x28] sm:$0xff] %vm657, 0.0
      %731 = vst.msk [vmem:[#allocation4 + $0x30] sm:$0xff] %vm657, 0.0
      %732 = vst.msk [vmem:[#allocation4 + $0x38] sm:$0xff] %vm657, 0.0
      %733 = vst.msk [vmem:[#allocation4 + $0x40] sm:$0xff] %vm657, 0.0
      %734 = vst.msk [vmem:[#allocation4 + $0x48] sm:$0xff] %vm657, 0.0
      %735 = vst.msk [vmem:[#allocation4 + $0x50] sm:$0xff] %vm657, 0.0
      %736 = vst.msk [vmem:[#allocation4 + $0x58] sm:$0xff] %vm657, 0.0
      %737 = vst.msk [vmem:[#allocation4 + $0x60] sm:$0xff] %vm657, 0.0
      %738 = vst.msk [vmem:[#allocation4 + $0x68] sm:$0xff] %vm657, 0.0
      %739 = vst.msk [vmem:[#allocation4 + $0x70] sm:$0xff] %vm657, 0.0
      %740 = vst.msk [vmem:[#allocation4 + $0x78] sm:$0xff] %vm657, 0.0
      %741 = vst.msk [vmem:[#allocation4 + $0x80] sm:$0xff] %vm657, 0.0
      %742 = vst.msk [vmem:[#allocation4 + $0x88] sm:$0xff] %vm657, 0.0
      %743 = vst.msk [vmem:[#allocation4 + $0x90] sm:$0xff] %vm657, 0.0
      %744 = vst.msk [vmem:[#allocation4 + $0x98] sm:$0xff] %vm657, 0.0
      %745 = vst.msk [vmem:[#allocation4 + $0xa0] sm:$0xff] %vm657, 0.0
      %746 = vst.msk [vmem:[#allocation4 + $0xa8] sm:$0xff] %vm657, 0.0
      %747 = vst.msk [vmem:[#allocation4 + $0xb0] sm:$0xff] %vm657, 0.0
      %748 = vst.msk [vmem:[#allocation4 + $0xb8] sm:$0xff] %vm657, 0.0
      %749 = vst.msk [vmem:[#allocation4 + $0xc0] sm:$0xff] %vm657, 0.0
      %750 = vst.msk [vmem:[#allocation4 + $0xc8] sm:$0xff] %vm657, 0.0
      %751 = vst.msk [vmem:[#allocation4 + $0xd0] sm:$0xff] %vm657, 0.0
      %752 = vst.msk [vmem:[#allocation4 + $0xd8] sm:$0xff] %vm657, 0.0
      %753 = vst.msk [vmem:[#allocation4 + $0xe0] sm:$0xff] %vm657, 0.0
      %754 = vst.msk [vmem:[#allocation4 + $0xe8] sm:$0xff] %vm657, 0.0
      %755 = vst.msk [vmem:[#allocation5] sm:$0xff] %vm657, 0.0
      %756 = vst.msk [vmem:[#allocation5 + $0x8] sm:$0xff] %vm657, 0.0
      %757 = vst.msk [vmem:[#allocation5 + $0x10] sm:$0xff] %vm657, 0.0
      %758 = vst.msk [vmem:[#allocation5 + $0x18] sm:$0xff] %vm657, 0.0
      %759 = vst.msk [vmem:[#allocation5 + $0x20] sm:$0xff] %vm657, 0.0
      %760 = vst.msk [vmem:[#allocation5 + $0x28] sm:$0xff] %vm657, 0.0
      %761 = vst.msk [vmem:[#allocation5 + $0x30] sm:$0xff] %vm657, 0.0
      %762 = vst.msk [vmem:[#allocation5 + $0x38] sm:$0xff] %vm657, 0.0
      %763 = vst.msk [vmem:[#allocation5 + $0x40] sm:$0xff] %vm657, 0.0
      %764 = vst.msk [vmem:[#allocation5 + $0x48] sm:$0xff] %vm657, 0.0
      %765 = vst.msk [vmem:[#allocation5 + $0x50] sm:$0xff] %vm657, 0.0
      %766 = vst.msk [vmem:[#allocation5 + $0x58] sm:$0xff] %vm657, 0.0
      %767 = vst.msk [vmem:[#allocation5 + $0x60] sm:$0xff] %vm657, 0.0
      %768 = vst.msk [vmem:[#allocation5 + $0x68] sm:$0xff] %vm657, 0.0
      %769 = vst.msk [vmem:[#allocation5 + $0x70] sm:$0xff] %vm657, 0.0
      %770 = vst.msk [vmem:[#allocation5 + $0x78] sm:$0xff] %vm657, 0.0
      %771 = vst.msk [vmem:[#allocation5 + $0x80] sm:$0xff] %vm657, 0.0
      %772 = vst.msk [vmem:[#allocation5 + $0x88] sm:$0xff] %vm657, 0.0
      %773 = vst.msk [vmem:[#allocation5 + $0x90] sm:$0xff] %vm657, 0.0
      %774 = vst.msk [vmem:[#allocation5 + $0x98] sm:$0xff] %vm657, 0.0
      %775 = vst.msk [vmem:[#allocation5 + $0xa0] sm:$0xff] %vm657, 0.0
      %776 = vst.msk [vmem:[#allocation5 + $0xa8] sm:$0xff] %vm657, 0.0
      %777 = vst.msk [vmem:[#allocation5 + $0xb0] sm:$0xff] %vm657, 0.0
      %778 = vst.msk [vmem:[#allocation5 + $0xb8] sm:$0xff] %vm657, 0.0
      %779 = vst.msk [vmem:[#allocation5 + $0xc0] sm:$0xff] %vm657, 0.0
      %780 = vst.msk [vmem:[#allocation5 + $0xc8] sm:$0xff] %vm657, 0.0
      %781 = vst.msk [vmem:[#allocation5 + $0xd0] sm:$0xff] %vm657, 0.0
      %782 = vst.msk [vmem:[#allocation5 + $0xd8] sm:$0xff] %vm657, 0.0
      %783 = vst.msk [vmem:[#allocation5 + $0xe0] sm:$0xff] %vm657, 0.0
      %784 = vst.msk [vmem:[#allocation5 + $0xe8] sm:$0xff] %vm657, 0.0
      %v785 = vld [vmem:[%s651] sm:$0xff]
      %v786 = vld [vmem:[%s651 + $0x8] sm:$0xff]
      %v787 = vld [vmem:[%s651 + $0x10] sm:$0xff]
      %v788 = vld [vmem:[%s651 + $0x18] sm:$0xff]
      %v789 = vld [vmem:[%s651 + $0x20] sm:$0xff]
      %v790 = vld [vmem:[%s651 + $0x28] sm:$0xff]
      %v791 = vld [vmem:[%s651 + $0x30] sm:$0xff]
      %v792 = vld [vmem:[%s651 + $0x38] sm:$0xff]
      %v793 = vld [vmem:[%s1] sm:$0x1]
      %v794 = vmul.f32 %v785, %v785
      %v795 = vmul.f32 %v786, %v786
      %v796 = vmul.f32 %v787, %v787
      %v797 = vmul.f32 %v788, %v788
      %v798 = vmul.f32 %v789, %v789
      %v799 = vmul.f32 %v790, %v790
      %v800 = vmul.f32 %v791, %v791
      %v801 = vmul.f32 %v792, %v792
      %v802 = vsel %vm657, %v794, 0.0
      %803 = vadd.xlane.f32.xlu0 %v802
      %v804 = vpop.xlane.xlu0 %803
      %v805 = vsel %vm657, %v795, 0.0
      %806 = vadd.xlane.f32.xlu0 %v805
      %v807 = vpop.xlane.xlu0 %806
      %v808 = vsel %vm657, %v796, 0.0
      %809 = vadd.xlane.f32.xlu0 %v808
      %v810 = vpop.xlane.xlu0 %809
      %v811 = vsel %vm657, %v797, 0.0
      %812 = vadd.xlane.f32.xlu0 %v811
      %v813 = vpop.xlane.xlu0 %812
      %v814 = vsel %vm657, %v798, 0.0
      %815 = vadd.xlane.f32.xlu0 %v814
      %v816 = vpop.xlane.xlu0 %815
      %v817 = vsel %vm657, %v799, 0.0
      %818 = vadd.xlane.f32.xlu0 %v817
      %v819 = vpop.xlane.xlu0 %818
      %v820 = vsel %vm657, %v800, 0.0
      %821 = vadd.xlane.f32.xlu0 %v820
      %v822 = vpop.xlane.xlu0 %821
      %v823 = vsel %vm657, %v801, 0.0
      %824 = vadd.xlane.f32.xlu0 %v823
      %v825 = vpop.xlane.xlu0 %824
      %v826 = vrcp.pop 8.0
      %v827 = vmul.f32 %v804, %v826
      %v828 = vmul.f32 %v807, %v826
      %v829 = vmul.f32 %v810, %v826
      %v830 = vmul.f32 %v813, %v826
      %v831 = vmul.f32 %v816, %v826
      %v832 = vmul.f32 %v819, %v826
      %v833 = vmul.f32 %v822, %v826
      %v834 = vmul.f32 %v825, %v826
      %v835 = vadd.f32 %v827, 1.1920929e-07
      %v836 = vadd.f32 %v828, 1.1920929e-07
      %v837 = vadd.f32 %v829, 1.1920929e-07
      %v838 = vadd.f32 %v830, 1.1920929e-07
      %v839 = vadd.f32 %v831, 1.1920929e-07
      %v840 = vadd.f32 %v832, 1.1920929e-07
      %v841 = vadd.f32 %v833, 1.1920929e-07
      %v842 = vadd.f32 %v834, 1.1920929e-07
      %v843 = vrsqrt.pop %v835
      %v844 = vrsqrt.pop %v836
      %v845 = vrsqrt.pop %v837
      %v846 = vrsqrt.pop %v838
      %v847 = vrsqrt.pop %v839
      %v848 = vrsqrt.pop %v840
      %v849 = vrsqrt.pop %v841
      %v850 = vrsqrt.pop %v842
      %v851 = vmul.f32 %v785, %v843
      %v852 = vmul.f32 %v786, %v844
      %v853 = vmul.f32 %v787, %v845
      %v854 = vmul.f32 %v788, %v846
      %v855 = vmul.f32 %v789, %v847
      %v856 = vmul.f32 %v790, %v848
      %v857 = vmul.f32 %v791, %v849
      %v858 = vmul.f32 %v792, %v850
      %v860 = vlaneseq
      %v861 = vshrl.u32 %v860, 7
      %v862 = vsub.s32 0, %v861
      %v863 = vrot.slane %v793, %v862
      %v865 = vmul.f32 %v851, %v863
      %v866 = vmul.f32 %v852, %v863
      %v867 = vmul.f32 %v853, %v863
      %v868 = vmul.f32 %v854, %v863
      %v869 = vmul.f32 %v855, %v863
      %v870 = vmul.f32 %v856, %v863
      %v871 = vmul.f32 %v857, %v863
      %v872 = vmul.f32 %v858, %v863
      %s873 = scalar_lea.vmem [#allocation2], 48
      %874 = vst.msk [vmem:[%s873 + $0x8] sm:$0xff] %vm657, %v865
      %875 = vst.msk [vmem:[%s873 + $0x20] sm:$0xff] %vm657, %v866
      %876 = vst.msk [vmem:[%s873 + $0x38] sm:$0xff] %vm657, %v867
      %877 = vst.msk [vmem:[%s873 + $0x50] sm:$0xff] %vm657, %v868
      %878 = vst.msk [vmem:[%s873 + $0x68] sm:$0xff] %vm657, %v869
      %879 = vst.msk [vmem:[%s873 + $0x80] sm:$0xff] %vm657, %v870
      %880 = vst.msk [vmem:[%s873 + $0x98] sm:$0xff] %vm657, %v871
      %881 = vst.msk [vmem:[%s873 + $0xb0] sm:$0xff] %vm657, %v872
      %v882 = vld [vmem:[#allocation2] sm:$0xff]
      %v883 = vld [vmem:[#allocation2 + $0x8] sm:$0xff]
      %v884 = vld [vmem:[#allocation2 + $0x10] sm:$0xff]
      %v885 = vld [vmem:[#allocation2 + $0x18] sm:$0xff]
      %v886 = vld [vmem:[#allocation2 + $0x20] sm:$0xff]
      %v887 = vld [vmem:[#allocation2 + $0x28] sm:$0xff]
      %v888 = vld [vmem:[#allocation2 + $0x30] sm:$0xff]
      %v889 = vld [vmem:[#allocation2 + $0x38] sm:$0xff]
      %v890 = vld [vmem:[#allocation2 + $0x40] sm:$0xff]
      %v891 = vld [vmem:[#allocation2 + $0x48] sm:$0xff]
      %v892 = vld [vmem:[#allocation2 + $0x50] sm:$0xff]
      %v893 = vld [vmem:[#allocation2 + $0x58] sm:$0xff]
      %v894 = vld [vmem:[#allocation2 + $0x60] sm:$0xff]
      %v895 = vld [vmem:[#allocation2 + $0x68] sm:$0xff]
      %v896 = vld [vmem:[#allocation2 + $0x70] sm:$0xff]
      %v897 = vld [vmem:[#allocation2 + $0x78] sm:$0xff]
      %v898 = vld [vmem:[#allocation2 + $0x80] sm:$0xff]
      %v899 = vld [vmem:[#allocation2 + $0x88] sm:$0xff]
      %v900 = vld [vmem:[#allocation2 + $0x90] sm:$0xff]
      %v901 = vld [vmem:[#allocation2 + $0x98] sm:$0xff]
      %v902 = vld [vmem:[#allocation2 + $0xa0] sm:$0xff]
      %v903 = vld [vmem:[#allocation2 + $0xa8] sm:$0xff]
      %v904 = vld [vmem:[#allocation2 + $0xb0] sm:$0xff]
      %v905 = vld [vmem:[#allocation2 + $0xb8] sm:$0xff]
      %v906 = vld [vmem:[#allocation2 + $0xc0] sm:$0xff]
      %v907 = vld [vmem:[#allocation2 + $0xc8] sm:$0xff]
      %v908 = vld [vmem:[#allocation2 + $0xd0] sm:$0xff]
      %v909 = vld [vmem:[#allocation2 + $0xd8] sm:$0xff]
      %v910 = vld [vmem:[#allocation2 + $0xe0] sm:$0xff]
      %v911 = vld [vmem:[#allocation2 + $0xe8] sm:$0xff]
      %v912 = vld [vmem:[#allocation2 + $0xf0] sm:$0xff]
      %v913 = vld [vmem:[#allocation2 + $0xf8] sm:$0xff]
      %v914 = vld [vmem:[#allocation2 + $0x100] sm:$0xff]
      %v915 = vld [vmem:[#allocation2 + $0x108] sm:$0xff]
      %v916 = vld [vmem:[#allocation2 + $0x110] sm:$0xff]
      %v917 = vld [vmem:[#allocation2 + $0x118] sm:$0xff]
      %v918 = vld [vmem:[%s5] sm:$0x1]
      %v919 = vlaneseq
      %v920 = vshrl.u32 %v919, 7
      %v921 = vsub.s32 0, %v920
      %v922 = vrot.slane %v918, %v921
      %v923 = vmul.f32 %v882, %v922
      %v924 = vmul.f32 %v883, %v922
      %v925 = vmul.f32 %v885, %v922
      %v926 = vmul.f32 %v886, %v922
      %v927 = vmul.f32 %v888, %v922
      %v928 = vmul.f32 %v889, %v922
      %v929 = vmul.f32 %v891, %v922
      %v930 = vmul.f32 %v892, %v922
      %v931 = vmul.f32 %v894, %v922
      %v932 = vmul.f32 %v895, %v922
      %v933 = vmul.f32 %v897, %v922
      %v934 = vmul.f32 %v898, %v922
      %v935 = vmul.f32 %v900, %v922
      %v936 = vmul.f32 %v901, %v922
      %v937 = vmul.f32 %v903, %v922
      %v938 = vmul.f32 %v904, %v922
      %v939 = vld [vmem:[%s5 + $0x1] sm:$0x1]
      %v940 = vlaneseq
      %v941 = vshrl.u32 %v940, 7
      %v942 = vsub.s32 0, %v941
      %v943 = vrot.slane %v939, %v942
      %v944 = vmul.f32 %v882, %v943
      %v945 = vmul.f32 %v883, %v943
      %v946 = vmul.f32 %v885, %v943
      %v947 = vmul.f32 %v886, %v943
      %v948 = vmul.f32 %v888, %v943
      %v949 = vmul.f32 %v889, %v943
      %v950 = vmul.f32 %v891, %v943
      %v951 = vmul.f32 %v892, %v943
      %v952 = vmul.f32 %v894, %v943
      %v953 = vmul.f32 %v895, %v943
      %v954 = vmul.f32 %v897, %v943
      %v955 = vmul.f32 %v898, %v943
      %v956 = vmul.f32 %v900, %v943
      %v957 = vmul.f32 %v901, %v943
      %v958 = vmul.f32 %v903, %v943
      %v959 = vmul.f32 %v904, %v943
      %vm976 = vcmask 1046528
      %v977 = vrot.slane %v944, 1
      %v978 = vrot.slane %v945, 1
      %v979 = vsel %vm976, %v977, %v978
      %v980 = vrot.slane %v946, 1
      %v981 = vrot.slane %v947, 1
      %v982 = vsel %vm976, %v980, %v981
      %v983 = vrot.slane %v948, 1
      %v984 = vrot.slane %v949, 1
      %v985 = vsel %vm976, %v983, %v984
      %v986 = vrot.slane %v950, 1
      %v987 = vrot.slane %v951, 1
      %v988 = vsel %vm976, %v986, %v987
      %v989 = vrot.slane %v952, 1
      %v990 = vrot.slane %v953, 1
      %v991 = vsel %vm976, %v989, %v990
      %v992 = vrot.slane %v954, 1
      %v993 = vrot.slane %v955, 1
      %v994 = vsel %vm976, %v992, %v993
      %v995 = vrot.slane %v956, 1
      %v996 = vrot.slane %v957, 1
      %v997 = vsel %vm976, %v995, %v996
      %v998 = vrot.slane %v958, 1
      %v999 = vrot.slane %v959, 1
      %v1000 = vsel %vm976, %v998, %v999
      %v1017 = vadd.f32 %v923, %v979
      %v1018 = vadd.f32 %v924, %v978
      %v1019 = vadd.f32 %v925, %v982
      %v1020 = vadd.f32 %v926, %v981
      %v1021 = vadd.f32 %v927, %v985
      %v1022 = vadd.f32 %v928, %v984
      %v1023 = vadd.f32 %v929, %v988
      %v1024 = vadd.f32 %v930, %v987
      %v1025 = vadd.f32 %v931, %v991
      %v1026 = vadd.f32 %v932, %v990
      %v1027 = vadd.f32 %v933, %v994
      %v1028 = vadd.f32 %v934, %v993
      %v1029 = vadd.f32 %v935, %v997
      %v1030 = vadd.f32 %v936, %v996
      %v1031 = vadd.f32 %v937, %v1000
      %v1032 = vadd.f32 %v938, %v999
      %v1033 = vld [vmem:[%s5 + $0x2] sm:$0x1]
      %v1034 = vlaneseq
      %v1035 = vshrl.u32 %v1034, 7
      %v1036 = vsub.s32 0, %v1035
      %v1037 = vrot.slane %v1033, %v1036
      %v1038 = vmul.f32 %v883, %v1037
      %v1039 = vmul.f32 %v886, %v1037
      %v1040 = vmul.f32 %v889, %v1037
      %v1041 = vmul.f32 %v892, %v1037
      %v1042 = vmul.f32 %v895, %v1037
      %v1043 = vmul.f32 %v898, %v1037
      %v1044 = vmul.f32 %v901, %v1037
      %v1045 = vmul.f32 %v904, %v1037
      %v1054 = vrot.slane %v1038, 2
      %v1055 = vrot.slane %v1039, 2
      %v1056 = vrot.slane %v1040, 2
      %v1057 = vrot.slane %v1041, 2
      %v1058 = vrot.slane %v1042, 2
      %v1059 = vrot.slane %v1043, 2
      %v1060 = vrot.slane %v1044, 2
      %v1061 = vrot.slane %v1045, 2
      %v1070 = vadd.f32 %v1017, %v1054
      %v1071 = vadd.f32 %v1018, %v1054
      %v1072 = vadd.f32 %v1019, %v1055
      %v1073 = vadd.f32 %v1020, %v1055
      %v1074 = vadd.f32 %v1021, %v1056
      %v1075 = vadd.f32 %v1022, %v1056
      %v1076 = vadd.f32 %v1023, %v1057
      %v1077 = vadd.f32 %v1024, %v1057
      %v1078 = vadd.f32 %v1025, %v1058
      %v1079 = vadd.f32 %v1026, %v1058
      %v1080 = vadd.f32 %v1027, %v1059
      %v1081 = vadd.f32 %v1028, %v1059
      %v1082 = vadd.f32 %v1029, %v1060
      %v1083 = vadd.f32 %v1030, %v1060
      %v1084 = vadd.f32 %v1031, %v1061
      %v1085 = vadd.f32 %v1032, %v1061
      %v1086 = vld [vmem:[%s5 + $0x3] sm:$0x1]
      %v1087 = vlaneseq
      %v1088 = vshrl.u32 %v1087, 7
      %v1089 = vsub.s32 0, %v1088
      %v1090 = vrot.slane %v1086, %v1089
      %v1091 = vmul.f32 %v883, %v1090
      %v1092 = vmul.f32 %v884, %v1090
      %v1093 = vmul.f32 %v886, %v1090
      %v1094 = vmul.f32 %v887, %v1090
      %v1095 = vmul.f32 %v889, %v1090
      %v1096 = vmul.f32 %v890, %v1090
      %v1097 = vmul.f32 %v892, %v1090
      %v1098 = vmul.f32 %v893, %v1090
      %v1099 = vmul.f32 %v895, %v1090
      %v1100 = vmul.f32 %v896, %v1090
      %v1101 = vmul.f32 %v898, %v1090
      %v1102 = vmul.f32 %v899, %v1090
      %v1103 = vmul.f32 %v901, %v1090
      %v1104 = vmul.f32 %v902, %v1090
      %v1105 = vmul.f32 %v904, %v1090
      %v1106 = vmul.f32 %v905, %v1090
      %vm1123 = vcmask 1044480
      %v1124 = vrot.slane %v1091, 3
      %v1125 = vrot.slane %v1092, 3
      %v1126 = vsel %vm1123, %v1124, %v1125
      %v1127 = vrot.slane %v1093, 3
      %v1128 = vrot.slane %v1094, 3
      %v1129 = vsel %vm1123, %v1127, %v1128
      %v1130 = vrot.slane %v1095, 3
      %v1131 = vrot.slane %v1096, 3
      %v1132 = vsel %vm1123, %v1130, %v1131
      %v1133 = vrot.slane %v1097, 3
      %v1134 = vrot.slane %v1098, 3
      %v1135 = vsel %vm1123, %v1133, %v1134
      %v1136 = vrot.slane %v1099, 3
      %v1137 = vrot.slane %v1100, 3
      %v1138 = vsel %vm1123, %v1136, %v1137
      %v1139 = vrot.slane %v1101, 3
      %v1140 = vrot.slane %v1102, 3
      %v1141 = vsel %vm1123, %v1139, %v1140
      %v1142 = vrot.slane %v1103, 3
      %v1143 = vrot.slane %v1104, 3
      %v1144 = vsel %vm1123, %v1142, %v1143
      %v1145 = vrot.slane %v1105, 3
      %v1146 = vrot.slane %v1106, 3
      %v1147 = vsel %vm1123, %v1145, %v1146
      %v1164 = vadd.f32 %v1070, %v1124
      %v1165 = vadd.f32 %v1071, %v1126
      %v1166 = vadd.f32 %v1072, %v1127
      %v1167 = vadd.f32 %v1073, %v1129
      %v1168 = vadd.f32 %v1074, %v1130
      %v1169 = vadd.f32 %v1075, %v1132
      %v1170 = vadd.f32 %v1076, %v1133
      %v1171 = vadd.f32 %v1077, %v1135
      %v1172 = vadd.f32 %v1078, %v1136
      %v1173 = vadd.f32 %v1079, %v1138
      %v1174 = vadd.f32 %v1080, %v1139
      %v1175 = vadd.f32 %v1081, %v1141
      %v1176 = vadd.f32 %v1082, %v1142
      %v1177 = vadd.f32 %v1083, %v1144
      %v1178 = vadd.f32 %v1084, %v1145
      %v1179 = vadd.f32 %v1085, %v1147
      %v1180 = vld [vmem:[%s5 + $0x4] sm:$0x1]
      %v1181 = vlaneseq
      %v1182 = vshrl.u32 %v1181, 7
      %v1183 = vsub.s32 0, %v1182
      %v1184 = vrot.slane %v1180, %v1183
      %v1185 = vmul.f32 %v883, %v1184
      %v1186 = vmul.f32 %v884, %v1184
      %v1187 = vmul.f32 %v886, %v1184
      %v1188 = vmul.f32 %v887, %v1184
      %v1189 = vmul.f32 %v889, %v1184
      %v1190 = vmul.f32 %v890, %v1184
      %v1191 = vmul.f32 %v892, %v1184
      %v1192 = vmul.f32 %v893, %v1184
      %v1193 = vmul.f32 %v895, %v1184
      %v1194 = vmul.f32 %v896, %v1184
      %v1195 = vmul.f32 %v898, %v1184
      %v1196 = vmul.f32 %v899, %v1184
      %v1197 = vmul.f32 %v901, %v1184
      %v1198 = vmul.f32 %v902, %v1184
      %v1199 = vmul.f32 %v904, %v1184
      %v1200 = vmul.f32 %v905, %v1184
      %vm1217 = vcmask 1043456
      %v1218 = vrot.slane %v1185, 4
      %v1219 = vrot.slane %v1186, 4
      %v1220 = vsel %vm1217, %v1218, %v1219
      %v1221 = vrot.slane %v1187, 4
      %v1222 = vrot.slane %v1188, 4
      %v1223 = vsel %vm1217, %v1221, %v1222
      %v1224 = vrot.slane %v1189, 4
      %v1225 = vrot.slane %v1190, 4
      %v1226 = vsel %vm1217, %v1224, %v1225
      %v1227 = vrot.slane %v1191, 4
      %v1228 = vrot.slane %v1192, 4
      %v1229 = vsel %vm1217, %v1227, %v1228
      %v1230 = vrot.slane %v1193, 4
      %v1231 = vrot.slane %v1194, 4
      %v1232 = vsel %vm1217, %v1230, %v1231
      %v1233 = vrot.slane %v1195, 4
      %v1234 = vrot.slane %v1196, 4
      %v1235 = vsel %vm1217, %v1233, %v1234
      %v1236 = vrot.slane %v1197, 4
      %v1237 = vrot.slane %v1198, 4
      %v1238 = vsel %vm1217, %v1236, %v1237
      %v1239 = vrot.slane %v1199, 4
      %v1240 = vrot.slane %v1200, 4
      %v1241 = vsel %vm1217, %v1239, %v1240
      %v1258 = vadd.f32 %v1164, %v1218
      %v1259 = vadd.f32 %v1165, %v1220
      %v1260 = vadd.f32 %v1166, %v1221
      %v1261 = vadd.f32 %v1167, %v1223
      %v1262 = vadd.f32 %v1168, %v1224
      %v1263 = vadd.f32 %v1169, %v1226
      %v1264 = vadd.f32 %v1170, %v1227
      %v1265 = vadd.f32 %v1171, %v1229
      %v1266 = vadd.f32 %v1172, %v1230
      %v1267 = vadd.f32 %v1173, %v1232
      %v1268 = vadd.f32 %v1174, %v1233
      %v1269 = vadd.f32 %v1175, %v1235
      %v1270 = vadd.f32 %v1176, %v1236
      %v1271 = vadd.f32 %v1177, %v1238
      %v1272 = vadd.f32 %v1178, %v1239
      %v1273 = vadd.f32 %v1179, %v1241
      %s1274 = scalar_lea.vmem %s5, 8
      %v1275 = vld [vmem:[%s1274] sm:$0x1]
      %v1276 = vlaneseq
      %v1277 = vshrl.u32 %v1276, 7
      %v1278 = vsub.s32 0, %v1277
      %v1279 = vrot.slane %v1275, %v1278
      %v1280 = vmul.f32 %v885, %v1279
      %v1281 = vmul.f32 %v886, %v1279
      %v1282 = vmul.f32 %v888, %v1279
      %v1283 = vmul.f32 %v889, %v1279
      %v1284 = vmul.f32 %v891, %v1279
      %v1285 = vmul.f32 %v892, %v1279
      %v1286 = vmul.f32 %v894, %v1279
      %v1287 = vmul.f32 %v895, %v1279
      %v1288 = vmul.f32 %v897, %v1279
      %v1289 = vmul.f32 %v898, %v1279
      %v1290 = vmul.f32 %v900, %v1279
      %v1291 = vmul.f32 %v901, %v1279
      %v1292 = vmul.f32 %v903, %v1279
      %v1293 = vmul.f32 %v904, %v1279
      %v1294 = vmul.f32 %v906, %v1279
      %v1295 = vmul.f32 %v907, %v1279
      %v1296 = vadd.f32 %v1258, %v1280
      %v1297 = vadd.f32 %v1259, %v1281
      %v1298 = vadd.f32 %v1260, %v1282
      %v1299 = vadd.f32 %v1261, %v1283
      %v1300 = vadd.f32 %v1262, %v1284
      %v1301 = vadd.f32 %v1263, %v1285
      %v1302 = vadd.f32 %v1264, %v1286
      %v1303 = vadd.f32 %v1265, %v1287
      %v1304 = vadd.f32 %v1266, %v1288
      %v1305 = vadd.f32 %v1267, %v1289
      %v1306 = vadd.f32 %v1268, %v1290
      %v1307 = vadd.f32 %v1269, %v1291
      %v1308 = vadd.f32 %v1270, %v1292
      %v1309 = vadd.f32 %v1271, %v1293
      %v1310 = vadd.f32 %v1272, %v1294
      %v1311 = vadd.f32 %v1273, %v1295
      %v1312 = vld [vmem:[%s1274 + $0x1] sm:$0x1]
      %v1313 = vlaneseq
      %v1314 = vshrl.u32 %v1313, 7
      %v1315 = vsub.s32 0, %v1314
      %v1316 = vrot.slane %v1312, %v1315
      %v1317 = vmul.f32 %v885, %v1316
      %v1318 = vmul.f32 %v886, %v1316
      %v1319 = vmul.f32 %v888, %v1316
      %v1320 = vmul.f32 %v889, %v1316
      %v1321 = vmul.f32 %v891, %v1316
      %v1322 = vmul.f32 %v892, %v1316
      %v1323 = vmul.f32 %v894, %v1316
      %v1324 = vmul.f32 %v895, %v1316
      %v1325 = vmul.f32 %v897, %v1316
      %v1326 = vmul.f32 %v898, %v1316
      %v1327 = vmul.f32 %v900, %v1316
      %v1328 = vmul.f32 %v901, %v1316
      %v1329 = vmul.f32 %v903, %v1316
      %v1330 = vmul.f32 %v904, %v1316
      %v1331 = vmul.f32 %v906, %v1316
      %v1332 = vmul.f32 %v907, %v1316
      %v1349 = vrot.slane %v1317, 1
      %v1350 = vrot.slane %v1318, 1
      %v1351 = vsel %vm976, %v1349, %v1350
      %v1352 = vrot.slane %v1319, 1
      %v1353 = vrot.slane %v1320, 1
      %v1354 = vsel %vm976, %v1352, %v1353
      %v1355 = vrot.slane %v1321, 1
      %v1356 = vrot.slane %v1322, 1
      %v1357 = vsel %vm976, %v1355, %v1356
      %v1358 = vrot.slane %v1323, 1
      %v1359 = vrot.slane %v1324, 1
      %v1360 = vsel %vm976, %v1358, %v1359
      %v1361 = vrot.slane %v1325, 1
      %v1362 = vrot.slane %v1326, 1
      %v1363 = vsel %vm976, %v1361, %v1362
      %v1364 = vrot.slane %v1327, 1
      %v1365 = vrot.slane %v1328, 1
      %v1366 = vsel %vm976, %v1364, %v1365
      %v1367 = vrot.slane %v1329, 1
      %v1368 = vrot.slane %v1330, 1
      %v1369 = vsel %vm976, %v1367, %v1368
      %v1370 = vrot.slane %v1331, 1
      %v1371 = vrot.slane %v1332, 1
      %v1372 = vsel %vm976, %v1370, %v1371
      %v1389 = vadd.f32 %v1296, %v1351
      %v1390 = vadd.f32 %v1297, %v1350
      %v1391 = vadd.f32 %v1298, %v1354
      %v1392 = vadd.f32 %v1299, %v1353
      %v1393 = vadd.f32 %v1300, %v1357
      %v1394 = vadd.f32 %v1301, %v1356
      %v1395 = vadd.f32 %v1302, %v1360
      %v1396 = vadd.f32 %v1303, %v1359
      %v1397 = vadd.f32 %v1304, %v1363
      %v1398 = vadd.f32 %v1305, %v1362
      %v1399 = vadd.f32 %v1306, %v1366
      %v1400 = vadd.f32 %v1307, %v1365
      %v1401 = vadd.f32 %v1308, %v1369
      %v1402 = vadd.f32 %v1309, %v1368
      %v1403 = vadd.f32 %v1310, %v1372
      %v1404 = vadd.f32 %v1311, %v1371
      %v1405 = vld [vmem:[%s1274 + $0x2] sm:$0x1]
      %v1406 = vlaneseq
      %v1407 = vshrl.u32 %v1406, 7
      %v1408 = vsub.s32 0, %v1407
      %v1409 = vrot.slane %v1405, %v1408
      %v1410 = vmul.f32 %v886, %v1409
      %v1411 = vmul.f32 %v889, %v1409
      %v1412 = vmul.f32 %v892, %v1409
      %v1413 = vmul.f32 %v895, %v1409
      %v1414 = vmul.f32 %v898, %v1409
      %v1415 = vmul.f32 %v901, %v1409
      %v1416 = vmul.f32 %v904, %v1409
      %v1417 = vmul.f32 %v907, %v1409
      %v1426 = vrot.slane %v1410, 2
      %v1427 = vrot.slane %v1411, 2
      %v1428 = vrot.slane %v1412, 2
      %v1429 = vrot.slane %v1413, 2
      %v1430 = vrot.slane %v1414, 2
      %v1431 = vrot.slane %v1415, 2
      %v1432 = vrot.slane %v1416, 2
      %v1433 = vrot.slane %v1417, 2
      %v1442 = vadd.f32 %v1389, %v1426
      %v1443 = vadd.f32 %v1390, %v1426
      %v1444 = vadd.f32 %v1391, %v1427
      %v1445 = vadd.f32 %v1392, %v1427
      %v1446 = vadd.f32 %v1393, %v1428
      %v1447 = vadd.f32 %v1394, %v1428
      %v1448 = vadd.f32 %v1395, %v1429
      %v1449 = vadd.f32 %v1396, %v1429
      %v1450 = vadd.f32 %v1397, %v1430
      %v1451 = vadd.f32 %v1398, %v1430
      %v1452 = vadd.f32 %v1399, %v1431
      %v1453 = vadd.f32 %v1400, %v1431
      %v1454 = vadd.f32 %v1401, %v1432
      %v1455 = vadd.f32 %v1402, %v1432
      %v1456 = vadd.f32 %v1403, %v1433
      %v1457 = vadd.f32 %v1404, %v1433
      %v1458 = vld [vmem:[%s1274 + $0x3] sm:$0x1]
      %v1459 = vlaneseq
      %v1460 = vshrl.u32 %v1459, 7
      %v1461 = vsub.s32 0, %v1460
      %v1462 = vrot.slane %v1458, %v1461
      %v1463 = vmul.f32 %v886, %v1462
      %v1464 = vmul.f32 %v887, %v1462
      %v1465 = vmul.f32 %v889, %v1462
      %v1466 = vmul.f32 %v890, %v1462
      %v1467 = vmul.f32 %v892, %v1462
      %v1468 = vmul.f32 %v893, %v1462
      %v1469 = vmul.f32 %v895, %v1462
      %v1470 = vmul.f32 %v896, %v1462
      %v1471 = vmul.f32 %v898, %v1462
      %v1472 = vmul.f32 %v899, %v1462
      %v1473 = vmul.f32 %v901, %v1462
      %v1474 = vmul.f32 %v902, %v1462
      %v1475 = vmul.f32 %v904, %v1462
      %v1476 = vmul.f32 %v905, %v1462
      %v1477 = vmul.f32 %v907, %v1462
      %v1478 = vmul.f32 %v908, %v1462
      %v1495 = vrot.slane %v1463, 3
      %v1496 = vrot.slane %v1464, 3
      %v1497 = vsel %vm1123, %v1495, %v1496
      %v1498 = vrot.slane %v1465, 3
      %v1499 = vrot.slane %v1466, 3
      %v1500 = vsel %vm1123, %v1498, %v1499
      %v1501 = vrot.slane %v1467, 3
      %v1502 = vrot.slane %v1468, 3
      %v1503 = vsel %vm1123, %v1501, %v1502
      %v1504 = vrot.slane %v1469, 3
      %v1505 = vrot.slane %v1470, 3
      %v1506 = vsel %vm1123, %v1504, %v1505
      %v1507 = vrot.slane %v1471, 3
      %v1508 = vrot.slane %v1472, 3
      %v1509 = vsel %vm1123, %v1507, %v1508
      %v1510 = vrot.slane %v1473, 3
      %v1511 = vrot.slane %v1474, 3
      %v1512 = vsel %vm1123, %v1510, %v1511
      %v1513 = vrot.slane %v1475, 3
      %v1514 = vrot.slane %v1476, 3
      %v1515 = vsel %vm1123, %v1513, %v1514
      %v1516 = vrot.slane %v1477, 3
      %v1517 = vrot.slane %v1478, 3
      %v1518 = vsel %vm1123, %v1516, %v1517
      %v1535 = vadd.f32 %v1442, %v1495
      %v1536 = vadd.f32 %v1443, %v1497
      %v1537 = vadd.f32 %v1444, %v1498
      %v1538 = vadd.f32 %v1445, %v1500
      %v1539 = vadd.f32 %v1446, %v1501
      %v1540 = vadd.f32 %v1447, %v1503
      %v1541 = vadd.f32 %v1448, %v1504
      %v1542 = vadd.f32 %v1449, %v1506
      %v1543 = vadd.f32 %v1450, %v1507
      %v1544 = vadd.f32 %v1451, %v1509
      %v1545 = vadd.f32 %v1452, %v1510
      %v1546 = vadd.f32 %v1453, %v1512
      %v1547 = vadd.f32 %v1454, %v1513
      %v1548 = vadd.f32 %v1455, %v1515
      %v1549 = vadd.f32 %v1456, %v1516
      %v1550 = vadd.f32 %v1457, %v1518
      %v1551 = vld [vmem:[%s1274 + $0x4] sm:$0x1]
      %v1552 = vlaneseq
      %v1553 = vshrl.u32 %v1552, 7
      %v1554 = vsub.s32 0, %v1553
      %v1555 = vrot.slane %v1551, %v1554
      %v1556 = vmul.f32 %v886, %v1555
      %v1557 = vmul.f32 %v887, %v1555
      %v1558 = vmul.f32 %v889, %v1555
      %v1559 = vmul.f32 %v890, %v1555
      %v1560 = vmul.f32 %v892, %v1555
      %v1561 = vmul.f32 %v893, %v1555
      %v1562 = vmul.f32 %v895, %v1555
      %v1563 = vmul.f32 %v896, %v1555
      %v1564 = vmul.f32 %v898, %v1555
      %v1565 = vmul.f32 %v899, %v1555
      %v1566 = vmul.f32 %v901, %v1555
      %v1567 = vmul.f32 %v902, %v1555
      %v1568 = vmul.f32 %v904, %v1555
      %v1569 = vmul.f32 %v905, %v1555
      %v1570 = vmul.f32 %v907, %v1555
      %v1571 = vmul.f32 %v908, %v1555
      %v1588 = vrot.slane %v1556, 4
      %v1589 = vrot.slane %v1557, 4
      %v1590 = vsel %vm1217, %v1588, %v1589
      %v1591 = vrot.slane %v1558, 4
      %v1592 = vrot.slane %v1559, 4
      %v1593 = vsel %vm1217, %v1591, %v1592
      %v1594 = vrot.slane %v1560, 4
      %v1595 = vrot.slane %v1561, 4
      %v1596 = vsel %vm1217, %v1594, %v1595
      %v1597 = vrot.slane %v1562, 4
      %v1598 = vrot.slane %v1563, 4
      %v1599 = vsel %vm1217, %v1597, %v1598
      %v1600 = vrot.slane %v1564, 4
      %v1601 = vrot.slane %v1565, 4
      %v1602 = vsel %vm1217, %v1600, %v1601
      %v1603 = vrot.slane %v1566, 4
      %v1604 = vrot.slane %v1567, 4
      %v1605 = vsel %vm1217, %v1603, %v1604
      %v1606 = vrot.slane %v1568, 4
      %v1607 = vrot.slane %v1569, 4
      %v1608 = vsel %vm1217, %v1606, %v1607
      %v1609 = vrot.slane %v1570, 4
      %v1610 = vrot.slane %v1571, 4
      %v1611 = vsel %vm1217, %v1609, %v1610
      %v1628 = vadd.f32 %v1535, %v1588
      %v1629 = vadd.f32 %v1536, %v1590
      %v1630 = vadd.f32 %v1537, %v1591
      %v1631 = vadd.f32 %v1538, %v1593
      %v1632 = vadd.f32 %v1539, %v1594
      %v1633 = vadd.f32 %v1540, %v1596
      %v1634 = vadd.f32 %v1541, %v1597
      %v1635 = vadd.f32 %v1542, %v1599
      %v1636 = vadd.f32 %v1543, %v1600
      %v1637 = vadd.f32 %v1544, %v1602
      %v1638 = vadd.f32 %v1545, %v1603
      %v1639 = vadd.f32 %v1546, %v1605
      %v1640 = vadd.f32 %v1547, %v1606
      %v1641 = vadd.f32 %v1548, %v1608
      %v1642 = vadd.f32 %v1549, %v1609
      %v1643 = vadd.f32 %v1550, %v1611
      %s1644 = scalar_lea.vmem %s5, 16
      %v1645 = vld [vmem:[%s1644] sm:$0x1]
      %v1646 = vlaneseq
      %v1647 = vshrl.u32 %v1646, 7
      %v1648 = vsub.s32 0, %v1647
      %v1649 = vrot.slane %v1645, %v1648
      %v1650 = vmul.f32 %v888, %v1649
      %v1651 = vmul.f32 %v889, %v1649
      %v1652 = vmul.f32 %v891, %v1649
      %v1653 = vmul.f32 %v892, %v1649
      %v1654 = vmul.f32 %v894, %v1649
      %v1655 = vmul.f32 %v895, %v1649
      %v1656 = vmul.f32 %v897, %v1649
      %v1657 = vmul.f32 %v898, %v1649
      %v1658 = vmul.f32 %v900, %v1649
      %v1659 = vmul.f32 %v901, %v1649
      %v1660 = vmul.f32 %v903, %v1649
      %v1661 = vmul.f32 %v904, %v1649
      %v1662 = vmul.f32 %v906, %v1649
      %v1663 = vmul.f32 %v907, %v1649
      %v1664 = vmul.f32 %v909, %v1649
      %v1665 = vmul.f32 %v910, %v1649
      %v1666 = vadd.f32 %v1628, %v1650
      %v1667 = vadd.f32 %v1629, %v1651
      %v1668 = vadd.f32 %v1630, %v1652
      %v1669 = vadd.f32 %v1631, %v1653
      %v1670 = vadd.f32 %v1632, %v1654
      %v1671 = vadd.f32 %v1633, %v1655
      %v1672 = vadd.f32 %v1634, %v1656
      %v1673 = vadd.f32 %v1635, %v1657
      %v1674 = vadd.f32 %v1636, %v1658
      %v1675 = vadd.f32 %v1637, %v1659
      %v1676 = vadd.f32 %v1638, %v1660
      %v1677 = vadd.f32 %v1639, %v1661
      %v1678 = vadd.f32 %v1640, %v1662
      %v1679 = vadd.f32 %v1641, %v1663
      %v1680 = vadd.f32 %v1642, %v1664
      %v1681 = vadd.f32 %v1643, %v1665
      %v1682 = vld [vmem:[%s1644 + $0x1] sm:$0x1]
      %v1683 = vlaneseq
      %v1684 = vshrl.u32 %v1683, 7
      %v1685 = vsub.s32 0, %v1684
      %v1686 = vrot.slane %v1682, %v1685
      %v1687 = vmul.f32 %v888, %v1686
      %v1688 = vmul.f32 %v889, %v1686
      %v1689 = vmul.f32 %v891, %v1686
      %v1690 = vmul.f32 %v892, %v1686
      %v1691 = vmul.f32 %v894, %v1686
      %v1692 = vmul.f32 %v895, %v1686
      %v1693 = vmul.f32 %v897, %v1686
      %v1694 = vmul.f32 %v898, %v1686
      %v1695 = vmul.f32 %v900, %v1686
      %v1696 = vmul.f32 %v901, %v1686
      %v1697 = vmul.f32 %v903, %v1686
      %v1698 = vmul.f32 %v904, %v1686
      %v1699 = vmul.f32 %v906, %v1686
      %v1700 = vmul.f32 %v907, %v1686
      %v1701 = vmul.f32 %v909, %v1686
      %v1702 = vmul.f32 %v910, %v1686
      %v1719 = vrot.slane %v1687, 1
      %v1720 = vrot.slane %v1688, 1
      %v1721 = vsel %vm976, %v1719, %v1720
      %v1722 = vrot.slane %v1689, 1
      %v1723 = vrot.slane %v1690, 1
      %v1724 = vsel %vm976, %v1722, %v1723
      %v1725 = vrot.slane %v1691, 1
      %v1726 = vrot.slane %v1692, 1
      %v1727 = vsel %vm976, %v1725, %v1726
      %v1728 = vrot.slane %v1693, 1
      %v1729 = vrot.slane %v1694, 1
      %v1730 = vsel %vm976, %v1728, %v1729
      %v1731 = vrot.slane %v1695, 1
      %v1732 = vrot.slane %v1696, 1
      %v1733 = vsel %vm976, %v1731, %v1732
      %v1734 = vrot.slane %v1697, 1
      %v1735 = vrot.slane %v1698, 1
      %v1736 = vsel %vm976, %v1734, %v1735
      %v1737 = vrot.slane %v1699, 1
      %v1738 = vrot.slane %v1700, 1
      %v1739 = vsel %vm976, %v1737, %v1738
      %v1740 = vrot.slane %v1701, 1
      %v1741 = vrot.slane %v1702, 1
      %v1742 = vsel %vm976, %v1740, %v1741
      %v1759 = vadd.f32 %v1666, %v1721
      %v1760 = vadd.f32 %v1667, %v1720
      %v1761 = vadd.f32 %v1668, %v1724
      %v1762 = vadd.f32 %v1669, %v1723
      %v1763 = vadd.f32 %v1670, %v1727
      %v1764 = vadd.f32 %v1671, %v1726
      %v1765 = vadd.f32 %v1672, %v1730
      %v1766 = vadd.f32 %v1673, %v1729
      %v1767 = vadd.f32 %v1674, %v1733
      %v1768 = vadd.f32 %v1675, %v1732
      %v1769 = vadd.f32 %v1676, %v1736
      %v1770 = vadd.f32 %v1677, %v1735
      %v1771 = vadd.f32 %v1678, %v1739
      %v1772 = vadd.f32 %v1679, %v1738
      %v1773 = vadd.f32 %v1680, %v1742
      %v1774 = vadd.f32 %v1681, %v1741
      %v1775 = vld [vmem:[%s1644 + $0x2] sm:$0x1]
      %v1776 = vlaneseq
      %v1777 = vshrl.u32 %v1776, 7
      %v1778 = vsub.s32 0, %v1777
      %v1779 = vrot.slane %v1775, %v1778
      %v1780 = vmul.f32 %v889, %v1779
      %v1781 = vmul.f32 %v892, %v1779
      %v1782 = vmul.f32 %v895, %v1779
      %v1783 = vmul.f32 %v898, %v1779
      %v1784 = vmul.f32 %v901, %v1779
      %v1785 = vmul.f32 %v904, %v1779
      %v1786 = vmul.f32 %v907, %v1779
      %v1787 = vmul.f32 %v910, %v1779
      %v1796 = vrot.slane %v1780, 2
      %v1797 = vrot.slane %v1781, 2
      %v1798 = vrot.slane %v1782, 2
      %v1799 = vrot.slane %v1783, 2
      %v1800 = vrot.slane %v1784, 2
      %v1801 = vrot.slane %v1785, 2
      %v1802 = vrot.slane %v1786, 2
      %v1803 = vrot.slane %v1787, 2
      %v1812 = vadd.f32 %v1759, %v1796
      %v1813 = vadd.f32 %v1760, %v1796
      %v1814 = vadd.f32 %v1761, %v1797
      %v1815 = vadd.f32 %v1762, %v1797
      %v1816 = vadd.f32 %v1763, %v1798
      %v1817 = vadd.f32 %v1764, %v1798
      %v1818 = vadd.f32 %v1765, %v1799
      %v1819 = vadd.f32 %v1766, %v1799
      %v1820 = vadd.f32 %v1767, %v1800
      %v1821 = vadd.f32 %v1768, %v1800
      %v1822 = vadd.f32 %v1769, %v1801
      %v1823 = vadd.f32 %v1770, %v1801
      %v1824 = vadd.f32 %v1771, %v1802
      %v1825 = vadd.f32 %v1772, %v1802
      %v1826 = vadd.f32 %v1773, %v1803
      %v1827 = vadd.f32 %v1774, %v1803
      %v1828 = vld [vmem:[%s1644 + $0x3] sm:$0x1]
      %v1829 = vlaneseq
      %v1830 = vshrl.u32 %v1829, 7
      %v1831 = vsub.s32 0, %v1830
      %v1832 = vrot.slane %v1828, %v1831
      %v1833 = vmul.f32 %v889, %v1832
      %v1834 = vmul.f32 %v890, %v1832
      %v1835 = vmul.f32 %v892, %v1832
      %v1836 = vmul.f32 %v893, %v1832
      %v1837 = vmul.f32 %v895, %v1832
      %v1838 = vmul.f32 %v896, %v1832
      %v1839 = vmul.f32 %v898, %v1832
      %v1840 = vmul.f32 %v899, %v1832
      %v1841 = vmul.f32 %v901, %v1832
      %v1842 = vmul.f32 %v902, %v1832
      %v1843 = vmul.f32 %v904, %v1832
      %v1844 = vmul.f32 %v905, %v1832
      %v1845 = vmul.f32 %v907, %v1832
      %v1846 = vmul.f32 %v908, %v1832
      %v1847 = vmul.f32 %v910, %v1832
      %v1848 = vmul.f32 %v911, %v1832
      %v1865 = vrot.slane %v1833, 3
      %v1866 = vrot.slane %v1834, 3
      %v1867 = vsel %vm1123, %v1865, %v1866
      %v1868 = vrot.slane %v1835, 3
      %v1869 = vrot.slane %v1836, 3
      %v1870 = vsel %vm1123, %v1868, %v1869
      %v1871 = vrot.slane %v1837, 3
      %v1872 = vrot.slane %v1838, 3
      %v1873 = vsel %vm1123, %v1871, %v1872
      %v1874 = vrot.slane %v1839, 3
      %v1875 = vrot.slane %v1840, 3
      %v1876 = vsel %vm1123, %v1874, %v1875
      %v1877 = vrot.slane %v1841, 3
      %v1878 = vrot.slane %v1842, 3
      %v1879 = vsel %vm1123, %v1877, %v1878
      %v1880 = vrot.slane %v1843, 3
      %v1881 = vrot.slane %v1844, 3
      %v1882 = vsel %vm1123, %v1880, %v1881
      %v1883 = vrot.slane %v1845, 3
      %v1884 = vrot.slane %v1846, 3
      %v1885 = vsel %vm1123, %v1883, %v1884
      %v1886 = vrot.slane %v1847, 3
      %v1887 = vrot.slane %v1848, 3
      %v1888 = vsel %vm1123, %v1886, %v1887
      %v1905 = vadd.f32 %v1812, %v1865
      %v1906 = vadd.f32 %v1813, %v1867
      %v1907 = vadd.f32 %v1814, %v1868
      %v1908 = vadd.f32 %v1815, %v1870
      %v1909 = vadd.f32 %v1816, %v1871
      %v1910 = vadd.f32 %v1817, %v1873
      %v1911 = vadd.f32 %v1818, %v1874
      %v1912 = vadd.f32 %v1819, %v1876
      %v1913 = vadd.f32 %v1820, %v1877
      %v1914 = vadd.f32 %v1821, %v1879
      %v1915 = vadd.f32 %v1822, %v1880
      %v1916 = vadd.f32 %v1823, %v1882
      %v1917 = vadd.f32 %v1824, %v1883
      %v1918 = vadd.f32 %v1825, %v1885
      %v1919 = vadd.f32 %v1826, %v1886
      %v1920 = vadd.f32 %v1827, %v1888
      %v1921 = vld [vmem:[%s1644 + $0x4] sm:$0x1]
      %v1922 = vlaneseq
      %v1923 = vshrl.u32 %v1922, 7
      %v1924 = vsub.s32 0, %v1923
      %v1925 = vrot.slane %v1921, %v1924
      %v1926 = vmul.f32 %v889, %v1925
      %v1927 = vmul.f32 %v890, %v1925
      %v1928 = vmul.f32 %v892, %v1925
      %v1929 = vmul.f32 %v893, %v1925
      %v1930 = vmul.f32 %v895, %v1925
      %v1931 = vmul.f32 %v896, %v1925
      %v1932 = vmul.f32 %v898, %v1925
      %v1933 = vmul.f32 %v899, %v1925
      %v1934 = vmul.f32 %v901, %v1925
      %v1935 = vmul.f32 %v902, %v1925
      %v1936 = vmul.f32 %v904, %v1925
      %v1937 = vmul.f32 %v905, %v1925
      %v1938 = vmul.f32 %v907, %v1925
      %v1939 = vmul.f32 %v908, %v1925
      %v1940 = vmul.f32 %v910, %v1925
      %v1941 = vmul.f32 %v911, %v1925
      %v1958 = vrot.slane %v1926, 4
      %v1959 = vrot.slane %v1927, 4
      %v1960 = vsel %vm1217, %v1958, %v1959
      %v1961 = vrot.slane %v1928, 4
      %v1962 = vrot.slane %v1929, 4
      %v1963 = vsel %vm1217, %v1961, %v1962
      %v1964 = vrot.slane %v1930, 4
      %v1965 = vrot.slane %v1931, 4
      %v1966 = vsel %vm1217, %v1964, %v1965
      %v1967 = vrot.slane %v1932, 4
      %v1968 = vrot.slane %v1933, 4
      %v1969 = vsel %vm1217, %v1967, %v1968
      %v1970 = vrot.slane %v1934, 4
      %v1971 = vrot.slane %v1935, 4
      %v1972 = vsel %vm1217, %v1970, %v1971
      %v1973 = vrot.slane %v1936, 4
      %v1974 = vrot.slane %v1937, 4
      %v1975 = vsel %vm1217, %v1973, %v1974
      %v1976 = vrot.slane %v1938, 4
      %v1977 = vrot.slane %v1939, 4
      %v1978 = vsel %vm1217, %v1976, %v1977
      %v1979 = vrot.slane %v1940, 4
      %v1980 = vrot.slane %v1941, 4
      %v1981 = vsel %vm1217, %v1979, %v1980
      %v1998 = vadd.f32 %v1905, %v1958
      %v1999 = vadd.f32 %v1906, %v1960
      %v2000 = vadd.f32 %v1907, %v1961
      %v2001 = vadd.f32 %v1908, %v1963
      %v2002 = vadd.f32 %v1909, %v1964
      %v2003 = vadd.f32 %v1910, %v1966
      %v2004 = vadd.f32 %v1911, %v1967
      %v2005 = vadd.f32 %v1912, %v1969
      %v2006 = vadd.f32 %v1913, %v1970
      %v2007 = vadd.f32 %v1914, %v1972
      %v2008 = vadd.f32 %v1915, %v1973
      %v2009 = vadd.f32 %v1916, %v1975
      %v2010 = vadd.f32 %v1917, %v1976
      %v2011 = vadd.f32 %v1918, %v1978
      %v2012 = vadd.f32 %v1919, %v1979
      %v2013 = vadd.f32 %v1920, %v1981
      %s2014 = scalar_lea.vmem %s5, 24
      %v2015 = vld [vmem:[%s2014] sm:$0x1]
      %v2016 = vlaneseq
      %v2017 = vshrl.u32 %v2016, 7
      %v2018 = vsub.s32 0, %v2017
      %v2019 = vrot.slane %v2015, %v2018
      %v2020 = vmul.f32 %v891, %v2019
      %v2021 = vmul.f32 %v892, %v2019
      %v2022 = vmul.f32 %v894, %v2019
      %v2023 = vmul.f32 %v895, %v2019
      %v2024 = vmul.f32 %v897, %v2019
      %v2025 = vmul.f32 %v898, %v2019
      %v2026 = vmul.f32 %v900, %v2019
      %v2027 = vmul.f32 %v901, %v2019
      %v2028 = vmul.f32 %v903, %v2019
      %v2029 = vmul.f32 %v904, %v2019
      %v2030 = vmul.f32 %v906, %v2019
      %v2031 = vmul.f32 %v907, %v2019
      %v2032 = vmul.f32 %v909, %v2019
      %v2033 = vmul.f32 %v910, %v2019
      %v2034 = vmul.f32 %v912, %v2019
      %v2035 = vmul.f32 %v913, %v2019
      %v2036 = vadd.f32 %v1998, %v2020
      %v2037 = vadd.f32 %v1999, %v2021
      %v2038 = vadd.f32 %v2000, %v2022
      %v2039 = vadd.f32 %v2001, %v2023
      %v2040 = vadd.f32 %v2002, %v2024
      %v2041 = vadd.f32 %v2003, %v2025
      %v2042 = vadd.f32 %v2004, %v2026
      %v2043 = vadd.f32 %v2005, %v2027
      %v2044 = vadd.f32 %v2006, %v2028
      %v2045 = vadd.f32 %v2007, %v2029
      %v2046 = vadd.f32 %v2008, %v2030
      %v2047 = vadd.f32 %v2009, %v2031
      %v2048 = vadd.f32 %v2010, %v2032
      %v2049 = vadd.f32 %v2011, %v2033
      %v2050 = vadd.f32 %v2012, %v2034
      %v2051 = vadd.f32 %v2013, %v2035
      %v2052 = vld [vmem:[%s2014 + $0x1] sm:$0x1]
      %v2053 = vlaneseq
      %v2054 = vshrl.u32 %v2053, 7
      %v2055 = vsub.s32 0, %v2054
      %v2056 = vrot.slane %v2052, %v2055
      %v2057 = vmul.f32 %v891, %v2056
      %v2058 = vmul.f32 %v892, %v2056
      %v2059 = vmul.f32 %v894, %v2056
      %v2060 = vmul.f32 %v895, %v2056
      %v2061 = vmul.f32 %v897, %v2056
      %v2062 = vmul.f32 %v898, %v2056
      %v2063 = vmul.f32 %v900, %v2056
      %v2064 = vmul.f32 %v901, %v2056
      %v2065 = vmul.f32 %v903, %v2056
      %v2066 = vmul.f32 %v904, %v2056
      %v2067 = vmul.f32 %v906, %v2056
      %v2068 = vmul.f32 %v907, %v2056
      %v2069 = vmul.f32 %v909, %v2056
      %v2070 = vmul.f32 %v910, %v2056
      %v2071 = vmul.f32 %v912, %v2056
      %v2072 = vmul.f32 %v913, %v2056
      %v2089 = vrot.slane %v2057, 1
      %v2090 = vrot.slane %v2058, 1
      %v2091 = vsel %vm976, %v2089, %v2090
      %v2092 = vrot.slane %v2059, 1
      %v2093 = vrot.slane %v2060, 1
      %v2094 = vsel %vm976, %v2092, %v2093
      %v2095 = vrot.slane %v2061, 1
      %v2096 = vrot.slane %v2062, 1
      %v2097 = vsel %vm976, %v2095, %v2096
      %v2098 = vrot.slane %v2063, 1
      %v2099 = vrot.slane %v2064, 1
      %v2100 = vsel %vm976, %v2098, %v2099
      %v2101 = vrot.slane %v2065, 1
      %v2102 = vrot.slane %v2066, 1
      %v2103 = vsel %vm976, %v2101, %v2102
      %v2104 = vrot.slane %v2067, 1
      %v2105 = vrot.slane %v2068, 1
      %v2106 = vsel %vm976, %v2104, %v2105
      %v2107 = vrot.slane %v2069, 1
      %v2108 = vrot.slane %v2070, 1
      %v2109 = vsel %vm976, %v2107, %v2108
      %v2110 = vrot.slane %v2071, 1
      %v2111 = vrot.slane %v2072, 1
      %v2112 = vsel %vm976, %v2110, %v2111
      %v2129 = vadd.f32 %v2036, %v2091
      %v2130 = vadd.f32 %v2037, %v2090
      %v2131 = vadd.f32 %v2038, %v2094
      %v2132 = vadd.f32 %v2039, %v2093
      %v2133 = vadd.f32 %v2040, %v2097
      %v2134 = vadd.f32 %v2041, %v2096
      %v2135 = vadd.f32 %v2042, %v2100
      %v2136 = vadd.f32 %v2043, %v2099
      %v2137 = vadd.f32 %v2044, %v2103
      %v2138 = vadd.f32 %v2045, %v2102
      %v2139 = vadd.f32 %v2046, %v2106
      %v2140 = vadd.f32 %v2047, %v2105
      %v2141 = vadd.f32 %v2048, %v2109
      %v2142 = vadd.f32 %v2049, %v2108
      %v2143 = vadd.f32 %v2050, %v2112
      %v2144 = vadd.f32 %v2051, %v2111
      %v2145 = vld [vmem:[%s2014 + $0x2] sm:$0x1]
      %v2146 = vlaneseq
      %v2147 = vshrl.u32 %v2146, 7
      %v2148 = vsub.s32 0, %v2147
      %v2149 = vrot.slane %v2145, %v2148
      %v2150 = vmul.f32 %v892, %v2149
      %v2151 = vmul.f32 %v895, %v2149
      %v2152 = vmul.f32 %v898, %v2149
      %v2153 = vmul.f32 %v901, %v2149
      %v2154 = vmul.f32 %v904, %v2149
      %v2155 = vmul.f32 %v907, %v2149
      %v2156 = vmul.f32 %v910, %v2149
      %v2157 = vmul.f32 %v913, %v2149
      %v2166 = vrot.slane %v2150, 2
      %v2167 = vrot.slane %v2151, 2
      %v2168 = vrot.slane %v2152, 2
      %v2169 = vrot.slane %v2153, 2
      %v2170 = vrot.slane %v2154, 2
      %v2171 = vrot.slane %v2155, 2
      %v2172 = vrot.slane %v2156, 2
      %v2173 = vrot.slane %v2157, 2
      %v2182 = vadd.f32 %v2129, %v2166
      %v2183 = vadd.f32 %v2130, %v2166
      %v2184 = vadd.f32 %v2131, %v2167
      %v2185 = vadd.f32 %v2132, %v2167
      %v2186 = vadd.f32 %v2133, %v2168
      %v2187 = vadd.f32 %v2134, %v2168
      %v2188 = vadd.f32 %v2135, %v2169
      %v2189 = vadd.f32 %v2136, %v2169
      %v2190 = vadd.f32 %v2137, %v2170
      %v2191 = vadd.f32 %v2138, %v2170
      %v2192 = vadd.f32 %v2139, %v2171
      %v2193 = vadd.f32 %v2140, %v2171
      %v2194 = vadd.f32 %v2141, %v2172
      %v2195 = vadd.f32 %v2142, %v2172
      %v2196 = vadd.f32 %v2143, %v2173
      %v2197 = vadd.f32 %v2144, %v2173
      %v2198 = vld [vmem:[%s2014 + $0x3] sm:$0x1]
      %v2199 = vlaneseq
      %v2200 = vshrl.u32 %v2199, 7
      %v2201 = vsub.s32 0, %v2200
      %v2202 = vrot.slane %v2198, %v2201
      %v2203 = vmul.f32 %v892, %v2202
      %v2204 = vmul.f32 %v893, %v2202
      %v2205 = vmul.f32 %v895, %v2202
      %v2206 = vmul.f32 %v896, %v2202
      %v2207 = vmul.f32 %v898, %v2202
      %v2208 = vmul.f32 %v899, %v2202
      %v2209 = vmul.f32 %v901, %v2202
      %v2210 = vmul.f32 %v902, %v2202
      %v2211 = vmul.f32 %v904, %v2202
      %v2212 = vmul.f32 %v905, %v2202
      %v2213 = vmul.f32 %v907, %v2202
      %v2214 = vmul.f32 %v908, %v2202
      %v2215 = vmul.f32 %v910, %v2202
      %v2216 = vmul.f32 %v911, %v2202
      %v2217 = vmul.f32 %v913, %v2202
      %v2218 = vmul.f32 %v914, %v2202
      %v2235 = vrot.slane %v2203, 3
      %v2236 = vrot.slane %v2204, 3
      %v2237 = vsel %vm1123, %v2235, %v2236
      %v2238 = vrot.slane %v2205, 3
      %v2239 = vrot.slane %v2206, 3
      %v2240 = vsel %vm1123, %v2238, %v2239
      %v2241 = vrot.slane %v2207, 3
      %v2242 = vrot.slane %v2208, 3
      %v2243 = vsel %vm1123, %v2241, %v2242
      %v2244 = vrot.slane %v2209, 3
      %v2245 = vrot.slane %v2210, 3
      %v2246 = vsel %vm1123, %v2244, %v2245
      %v2247 = vrot.slane %v2211, 3
      %v2248 = vrot.slane %v2212, 3
      %v2249 = vsel %vm1123, %v2247, %v2248
      %v2250 = vrot.slane %v2213, 3
      %v2251 = vrot.slane %v2214, 3
      %v2252 = vsel %vm1123, %v2250, %v2251
      %v2253 = vrot.slane %v2215, 3
      %v2254 = vrot.slane %v2216, 3
      %v2255 = vsel %vm1123, %v2253, %v2254
      %v2256 = vrot.slane %v2217, 3
      %v2257 = vrot.slane %v2218, 3
      %v2258 = vsel %vm1123, %v2256, %v2257
      %v2275 = vadd.f32 %v2182, %v2235
      %v2276 = vadd.f32 %v2183, %v2237
      %v2277 = vadd.f32 %v2184, %v2238
      %v2278 = vadd.f32 %v2185, %v2240
      %v2279 = vadd.f32 %v2186, %v2241
      %v2280 = vadd.f32 %v2187, %v2243
      %v2281 = vadd.f32 %v2188, %v2244
      %v2282 = vadd.f32 %v2189, %v2246
      %v2283 = vadd.f32 %v2190, %v2247
      %v2284 = vadd.f32 %v2191, %v2249
      %v2285 = vadd.f32 %v2192, %v2250
      %v2286 = vadd.f32 %v2193, %v2252
      %v2287 = vadd.f32 %v2194, %v2253
      %v2288 = vadd.f32 %v2195, %v2255
      %v2289 = vadd.f32 %v2196, %v2256
      %v2290 = vadd.f32 %v2197, %v2258
      %v2291 = vld [vmem:[%s2014 + $0x4] sm:$0x1]
      %v2292 = vlaneseq
      %v2293 = vshrl.u32 %v2292, 7
      %v2294 = vsub.s32 0, %v2293
      %v2295 = vrot.slane %v2291, %v2294
      %v2296 = vmul.f32 %v892, %v2295
      %v2297 = vmul.f32 %v893, %v2295
      %v2298 = vmul.f32 %v895, %v2295
      %v2299 = vmul.f32 %v896, %v2295
      %v2300 = vmul.f32 %v898, %v2295
      %v2301 = vmul.f32 %v899, %v2295
      %v2302 = vmul.f32 %v901, %v2295
      %v2303 = vmul.f32 %v902, %v2295
      %v2304 = vmul.f32 %v904, %v2295
      %v2305 = vmul.f32 %v905, %v2295
      %v2306 = vmul.f32 %v907, %v2295
      %v2307 = vmul.f32 %v908, %v2295
      %v2308 = vmul.f32 %v910, %v2295
      %v2309 = vmul.f32 %v911, %v2295
      %v2310 = vmul.f32 %v913, %v2295
      %v2311 = vmul.f32 %v914, %v2295
      %v2328 = vrot.slane %v2296, 4
      %v2329 = vrot.slane %v2297, 4
      %v2330 = vsel %vm1217, %v2328, %v2329
      %v2331 = vrot.slane %v2298, 4
      %v2332 = vrot.slane %v2299, 4
      %v2333 = vsel %vm1217, %v2331, %v2332
      %v2334 = vrot.slane %v2300, 4
      %v2335 = vrot.slane %v2301, 4
      %v2336 = vsel %vm1217, %v2334, %v2335
      %v2337 = vrot.slane %v2302, 4
      %v2338 = vrot.slane %v2303, 4
      %v2339 = vsel %vm1217, %v2337, %v2338
      %v2340 = vrot.slane %v2304, 4
      %v2341 = vrot.slane %v2305, 4
      %v2342 = vsel %vm1217, %v2340, %v2341
      %v2343 = vrot.slane %v2306, 4
      %v2344 = vrot.slane %v2307, 4
      %v2345 = vsel %vm1217, %v2343, %v2344
      %v2346 = vrot.slane %v2308, 4
      %v2347 = vrot.slane %v2309, 4
      %v2348 = vsel %vm1217, %v2346, %v2347
      %v2349 = vrot.slane %v2310, 4
      %v2350 = vrot.slane %v2311, 4
      %v2351 = vsel %vm1217, %v2349, %v2350
      %v2368 = vadd.f32 %v2275, %v2328
      %v2369 = vadd.f32 %v2276, %v2330
      %v2370 = vadd.f32 %v2277, %v2331
      %v2371 = vadd.f32 %v2278, %v2333
      %v2372 = vadd.f32 %v2279, %v2334
      %v2373 = vadd.f32 %v2280, %v2336
      %v2374 = vadd.f32 %v2281, %v2337
      %v2375 = vadd.f32 %v2282, %v2339
      %v2376 = vadd.f32 %v2283, %v2340
      %v2377 = vadd.f32 %v2284, %v2342
      %v2378 = vadd.f32 %v2285, %v2343
      %v2379 = vadd.f32 %v2286, %v2345
      %v2380 = vadd.f32 %v2287, %v2346
      %v2381 = vadd.f32 %v2288, %v2348
      %v2382 = vadd.f32 %v2289, %v2349
      %v2383 = vadd.f32 %v2290, %v2351
      %s2384 = scalar_lea.vmem %s5, 32
      %v2385 = vld [vmem:[%s2384] sm:$0x1]
      %v2386 = vlaneseq
      %v2387 = vshrl.u32 %v2386, 7
      %v2388 = vsub.s32 0, %v2387
      %v2389 = vrot.slane %v2385, %v2388
      %v2390 = vmul.f32 %v894, %v2389
      %v2391 = vmul.f32 %v895, %v2389
      %v2392 = vmul.f32 %v897, %v2389
      %v2393 = vmul.f32 %v898, %v2389
      %v2394 = vmul.f32 %v900, %v2389
      %v2395 = vmul.f32 %v901, %v2389
      %v2396 = vmul.f32 %v903, %v2389
      %v2397 = vmul.f32 %v904, %v2389
      %v2398 = vmul.f32 %v906, %v2389
      %v2399 = vmul.f32 %v907, %v2389
      %v2400 = vmul.f32 %v909, %v2389
      %v2401 = vmul.f32 %v910, %v2389
      %v2402 = vmul.f32 %v912, %v2389
      %v2403 = vmul.f32 %v913, %v2389
      %v2404 = vmul.f32 %v915, %v2389
      %v2405 = vmul.f32 %v916, %v2389
      %v2406 = vadd.f32 %v2368, %v2390
      %v2407 = vadd.f32 %v2369, %v2391
      %v2408 = vadd.f32 %v2370, %v2392
      %v2409 = vadd.f32 %v2371, %v2393
      %v2410 = vadd.f32 %v2372, %v2394
      %v2411 = vadd.f32 %v2373, %v2395
      %v2412 = vadd.f32 %v2374, %v2396
      %v2413 = vadd.f32 %v2375, %v2397
      %v2414 = vadd.f32 %v2376, %v2398
      %v2415 = vadd.f32 %v2377, %v2399
      %v2416 = vadd.f32 %v2378, %v2400
      %v2417 = vadd.f32 %v2379, %v2401
      %v2418 = vadd.f32 %v2380, %v2402
      %v2419 = vadd.f32 %v2381, %v2403
      %v2420 = vadd.f32 %v2382, %v2404
      %v2421 = vadd.f32 %v2383, %v2405
      %v2422 = vld [vmem:[%s2384 + $0x1] sm:$0x1]
      %v2423 = vlaneseq
      %v2424 = vshrl.u32 %v2423, 7
      %v2425 = vsub.s32 0, %v2424
      %v2426 = vrot.slane %v2422, %v2425
      %v2427 = vmul.f32 %v894, %v2426
      %v2428 = vmul.f32 %v895, %v2426
      %v2429 = vmul.f32 %v897, %v2426
      %v2430 = vmul.f32 %v898, %v2426
      %v2431 = vmul.f32 %v900, %v2426
      %v2432 = vmul.f32 %v901, %v2426
      %v2433 = vmul.f32 %v903, %v2426
      %v2434 = vmul.f32 %v904, %v2426
      %v2435 = vmul.f32 %v906, %v2426
      %v2436 = vmul.f32 %v907, %v2426
      %v2437 = vmul.f32 %v909, %v2426
      %v2438 = vmul.f32 %v910, %v2426
      %v2439 = vmul.f32 %v912, %v2426
      %v2440 = vmul.f32 %v913, %v2426
      %v2441 = vmul.f32 %v915, %v2426
      %v2442 = vmul.f32 %v916, %v2426
      %v2459 = vrot.slane %v2427, 1
      %v2460 = vrot.slane %v2428, 1
      %v2461 = vsel %vm976, %v2459, %v2460
      %v2462 = vrot.slane %v2429, 1
      %v2463 = vrot.slane %v2430, 1
      %v2464 = vsel %vm976, %v2462, %v2463
      %v2465 = vrot.slane %v2431, 1
      %v2466 = vrot.slane %v2432, 1
      %v2467 = vsel %vm976, %v2465, %v2466
      %v2468 = vrot.slane %v2433, 1
      %v2469 = vrot.slane %v2434, 1
      %v2470 = vsel %vm976, %v2468, %v2469
      %v2471 = vrot.slane %v2435, 1
      %v2472 = vrot.slane %v2436, 1
      %v2473 = vsel %vm976, %v2471, %v2472
      %v2474 = vrot.slane %v2437, 1
      %v2475 = vrot.slane %v2438, 1
      %v2476 = vsel %vm976, %v2474, %v2475
      %v2477 = vrot.slane %v2439, 1
      %v2478 = vrot.slane %v2440, 1
      %v2479 = vsel %vm976, %v2477, %v2478
      %v2480 = vrot.slane %v2441, 1
      %v2481 = vrot.slane %v2442, 1
      %v2482 = vsel %vm976, %v2480, %v2481
      %v2499 = vadd.f32 %v2406, %v2461
      %v2500 = vadd.f32 %v2407, %v2460
      %v2501 = vadd.f32 %v2408, %v2464
      %v2502 = vadd.f32 %v2409, %v2463
      %v2503 = vadd.f32 %v2410, %v2467
      %v2504 = vadd.f32 %v2411, %v2466
      %v2505 = vadd.f32 %v2412, %v2470
      %v2506 = vadd.f32 %v2413, %v2469
      %v2507 = vadd.f32 %v2414, %v2473
      %v2508 = vadd.f32 %v2415, %v2472
      %v2509 = vadd.f32 %v2416, %v2476
      %v2510 = vadd.f32 %v2417, %v2475
      %v2511 = vadd.f32 %v2418, %v2479
      %v2512 = vadd.f32 %v2419, %v2478
      %v2513 = vadd.f32 %v2420, %v2482
      %v2514 = vadd.f32 %v2421, %v2481
      %v2515 = vld [vmem:[%s2384 + $0x2] sm:$0x1]
      %v2516 = vlaneseq
      %v2517 = vshrl.u32 %v2516, 7
      %v2518 = vsub.s32 0, %v2517
      %v2519 = vrot.slane %v2515, %v2518
      %v2520 = vmul.f32 %v895, %v2519
      %v2521 = vmul.f32 %v898, %v2519
      %v2522 = vmul.f32 %v901, %v2519
      %v2523 = vmul.f32 %v904, %v2519
      %v2524 = vmul.f32 %v907, %v2519
      %v2525 = vmul.f32 %v910, %v2519
      %v2526 = vmul.f32 %v913, %v2519
      %v2527 = vmul.f32 %v916, %v2519
      %v2536 = vrot.slane %v2520, 2
      %v2537 = vrot.slane %v2521, 2
      %v2538 = vrot.slane %v2522, 2
      %v2539 = vrot.slane %v2523, 2
      %v2540 = vrot.slane %v2524, 2
      %v2541 = vrot.slane %v2525, 2
      %v2542 = vrot.slane %v2526, 2
      %v2543 = vrot.slane %v2527, 2
      %v2552 = vadd.f32 %v2499, %v2536
      %v2553 = vadd.f32 %v2500, %v2536
      %v2554 = vadd.f32 %v2501, %v2537
      %v2555 = vadd.f32 %v2502, %v2537
      %v2556 = vadd.f32 %v2503, %v2538
      %v2557 = vadd.f32 %v2504, %v2538
      %v2558 = vadd.f32 %v2505, %v2539
      %v2559 = vadd.f32 %v2506, %v2539
      %v2560 = vadd.f32 %v2507, %v2540
      %v2561 = vadd.f32 %v2508, %v2540
      %v2562 = vadd.f32 %v2509, %v2541
      %v2563 = vadd.f32 %v2510, %v2541
      %v2564 = vadd.f32 %v2511, %v2542
      %v2565 = vadd.f32 %v2512, %v2542
      %v2566 = vadd.f32 %v2513, %v2543
      %v2567 = vadd.f32 %v2514, %v2543
      %v2568 = vld [vmem:[%s2384 + $0x3] sm:$0x1]
      %v2569 = vlaneseq
      %v2570 = vshrl.u32 %v2569, 7
      %v2571 = vsub.s32 0, %v2570
      %v2572 = vrot.slane %v2568, %v2571
      %v2573 = vmul.f32 %v895, %v2572
      %v2574 = vmul.f32 %v896, %v2572
      %v2575 = vmul.f32 %v898, %v2572
      %v2576 = vmul.f32 %v899, %v2572
      %v2577 = vmul.f32 %v901, %v2572
      %v2578 = vmul.f32 %v902, %v2572
      %v2579 = vmul.f32 %v904, %v2572
      %v2580 = vmul.f32 %v905, %v2572
      %v2581 = vmul.f32 %v907, %v2572
      %v2582 = vmul.f32 %v908, %v2572
      %v2583 = vmul.f32 %v910, %v2572
      %v2584 = vmul.f32 %v911, %v2572
      %v2585 = vmul.f32 %v913, %v2572
      %v2586 = vmul.f32 %v914, %v2572
      %v2587 = vmul.f32 %v916, %v2572
      %v2588 = vmul.f32 %v917, %v2572
      %v2605 = vrot.slane %v2573, 3
      %v2606 = vrot.slane %v2574, 3
      %v2607 = vsel %vm1123, %v2605, %v2606
      %v2608 = vrot.slane %v2575, 3
      %v2609 = vrot.slane %v2576, 3
      %v2610 = vsel %vm1123, %v2608, %v2609
      %v2611 = vrot.slane %v2577, 3
      %v2612 = vrot.slane %v2578, 3
      %v2613 = vsel %vm1123, %v2611, %v2612
      %v2614 = vrot.slane %v2579, 3
      %v2615 = vrot.slane %v2580, 3
      %v2616 = vsel %vm1123, %v2614, %v2615
      %v2617 = vrot.slane %v2581, 3
      %v2618 = vrot.slane %v2582, 3
      %v2619 = vsel %vm1123, %v2617, %v2618
      %v2620 = vrot.slane %v2583, 3
      %v2621 = vrot.slane %v2584, 3
      %v2622 = vsel %vm1123, %v2620, %v2621
      %v2623 = vrot.slane %v2585, 3
      %v2624 = vrot.slane %v2586, 3
      %v2625 = vsel %vm1123, %v2623, %v2624
      %v2626 = vrot.slane %v2587, 3
      %v2627 = vrot.slane %v2588, 3
      %v2628 = vsel %vm1123, %v2626, %v2627
      %v2645 = vadd.f32 %v2552, %v2605
      %v2646 = vadd.f32 %v2553, %v2607
      %v2647 = vadd.f32 %v2554, %v2608
      %v2648 = vadd.f32 %v2555, %v2610
      %v2649 = vadd.f32 %v2556, %v2611
      %v2650 = vadd.f32 %v2557, %v2613
      %v2651 = vadd.f32 %v2558, %v2614
      %v2652 = vadd.f32 %v2559, %v2616
      %v2653 = vadd.f32 %v2560, %v2617
      %v2654 = vadd.f32 %v2561, %v2619
      %v2655 = vadd.f32 %v2562, %v2620
      %v2656 = vadd.f32 %v2563, %v2622
      %v2657 = vadd.f32 %v2564, %v2623
      %v2658 = vadd.f32 %v2565, %v2625
      %v2659 = vadd.f32 %v2566, %v2626
      %v2660 = vadd.f32 %v2567, %v2628
      %v2661 = vld [vmem:[%s2384 + $0x4] sm:$0x1]
      %v2662 = vlaneseq
      %v2663 = vshrl.u32 %v2662, 7
      %v2664 = vsub.s32 0, %v2663
      %v2665 = vrot.slane %v2661, %v2664
      %v2666 = vmul.f32 %v895, %v2665
      %v2667 = vmul.f32 %v896, %v2665
      %v2668 = vmul.f32 %v898, %v2665
      %v2669 = vmul.f32 %v899, %v2665
      %v2670 = vmul.f32 %v901, %v2665
      %v2671 = vmul.f32 %v902, %v2665
      %v2672 = vmul.f32 %v904, %v2665
      %v2673 = vmul.f32 %v905, %v2665
      %v2674 = vmul.f32 %v907, %v2665
      %v2675 = vmul.f32 %v908, %v2665
      %v2676 = vmul.f32 %v910, %v2665
      %v2677 = vmul.f32 %v911, %v2665
      %v2678 = vmul.f32 %v913, %v2665
      %v2679 = vmul.f32 %v914, %v2665
      %v2680 = vmul.f32 %v916, %v2665
      %v2681 = vmul.f32 %v917, %v2665
      %v2698 = vrot.slane %v2666, 4
      %v2699 = vrot.slane %v2667, 4
      %v2700 = vsel %vm1217, %v2698, %v2699
      %v2701 = vrot.slane %v2668, 4
      %v2702 = vrot.slane %v2669, 4
      %v2703 = vsel %vm1217, %v2701, %v2702
      %v2704 = vrot.slane %v2670, 4
      %v2705 = vrot.slane %v2671, 4
      %v2706 = vsel %vm1217, %v2704, %v2705
      %v2707 = vrot.slane %v2672, 4
      %v2708 = vrot.slane %v2673, 4
      %v2709 = vsel %vm1217, %v2707, %v2708
      %v2710 = vrot.slane %v2674, 4
      %v2711 = vrot.slane %v2675, 4
      %v2712 = vsel %vm1217, %v2710, %v2711
      %v2713 = vrot.slane %v2676, 4
      %v2714 = vrot.slane %v2677, 4
      %v2715 = vsel %vm1217, %v2713, %v2714
      %v2716 = vrot.slane %v2678, 4
      %v2717 = vrot.slane %v2679, 4
      %v2718 = vsel %vm1217, %v2716, %v2717
      %v2719 = vrot.slane %v2680, 4
      %v2720 = vrot.slane %v2681, 4
      %v2721 = vsel %vm1217, %v2719, %v2720
      %v2738 = vadd.f32 %v2645, %v2698
      %v2739 = vadd.f32 %v2646, %v2700
      %v2740 = vadd.f32 %v2647, %v2701
      %v2741 = vadd.f32 %v2648, %v2703
      %v2742 = vadd.f32 %v2649, %v2704
      %v2743 = vadd.f32 %v2650, %v2706
      %v2744 = vadd.f32 %v2651, %v2707
      %v2745 = vadd.f32 %v2652, %v2709
      %v2746 = vadd.f32 %v2653, %v2710
      %v2747 = vadd.f32 %v2654, %v2712
      %v2748 = vadd.f32 %v2655, %v2713
      %v2749 = vadd.f32 %v2656, %v2715
      %v2750 = vadd.f32 %v2657, %v2716
      %v2751 = vadd.f32 %v2658, %v2718
      %v2752 = vadd.f32 %v2659, %v2719
      %v2753 = vadd.f32 %v2660, %v2721
      %vm2770 = vcmask 1041408
      %v2771 = vrot.slane %v2738, 6
      %v2772 = vrot.slane %v2739, 6
      %v2773 = vsel %vm2770, %v2771, %v2772
      %v2774 = vrot.slane %v2740, 6
      %v2775 = vrot.slane %v2741, 6
      %v2776 = vsel %vm2770, %v2774, %v2775
      %v2777 = vrot.slane %v2742, 6
      %v2778 = vrot.slane %v2743, 6
      %v2779 = vsel %vm2770, %v2777, %v2778
      %v2780 = vrot.slane %v2744, 6
      %v2781 = vrot.slane %v2745, 6
      %v2782 = vsel %vm2770, %v2780, %v2781
      %v2783 = vrot.slane %v2746, 6
      %v2784 = vrot.slane %v2747, 6
      %v2785 = vsel %vm2770, %v2783, %v2784
      %v2786 = vrot.slane %v2748, 6
      %v2787 = vrot.slane %v2749, 6
      %v2788 = vsel %vm2770, %v2786, %v2787
      %v2789 = vrot.slane %v2750, 6
      %v2790 = vrot.slane %v2751, 6
      %v2791 = vsel %vm2770, %v2789, %v2790
      %v2792 = vrot.slane %v2752, 6
      %v2793 = vrot.slane %v2753, 6
      %v2794 = vsel %vm2770, %v2792, %v2793
      %v2795 = vld [vmem:[%s6] sm:$0xff]
      %v2796 = vld [vmem:[%s7] sm:$0x1]
      %v2798 = vlaneseq
      %v2799 = vshrl.u32 %v2798, 7
      %v2800 = vsub.s32 0, %v2799
      %v2801 = vrot.slane %v2796, %v2800
      %v2803 = vsel %vm657, %v2773, 0
      %v2805 = vsel %vm657, %v2776, 0
      %v2807 = vsel %vm657, %v2779, 0
      %v2809 = vsel %vm657, %v2782, 0
      %v2811 = vsel %vm657, %v2785, 0
      %v2813 = vsel %vm657, %v2788, 0
      %v2815 = vsel %vm657, %v2791, 0
      %v2817 = vsel %vm657, %v2794, 0
      %2819 = vmatprep.subr.mxu0 0.0
      %2820 = vmatpush1.msra.mxu0 %v2795
      %2821 = vmatprep.subr.mxu0 0.0
      %2822 = vmatpush1.msra.mxu0 0.0
      %2823 = vmatprep.subr.mxu0 0.0
      %2824 = vmatpush1.msra.mxu0 0.0
      %2825 = vmatprep.subr.mxu0 0.0
      %2826 = vmatpush1.msra.mxu0 0.0
      %2827 = vmatprep.subr.mxu0 0.0
      %2828 = vmatpush1.msra.mxu0 0.0
      %2829 = vmatprep.subr.mxu0 0.0
      %2830 = vmatpush1.msra.mxu0 0.0
      %2831 = vmatprep.subr.mxu0 0.0
      %2832 = vmatpush1.msra.mxu0 0.0
      %2833 = vmatprep.subr.mxu0 0.0
      %2834 = vmatpush1.msra.mxu0 0.0
      %2835 = vmatprep.subr.mxu0 0.0
      %2836 = vmatpush1.msra.mxu0 0.0
      %2837 = vmatprep.subr.mxu0 0.0
      %2838 = vmatpush1.msra.mxu0 0.0
      %2839 = vmatprep.subr.mxu0 0.0
      %2840 = vmatpush1.msra.mxu0 0.0
      %2841 = vmatprep.subr.mxu0 0.0
      %2842 = vmatpush1.msra.mxu0 0.0
      %2843 = vmatprep.subr.mxu0 0.0
      %2844 = vmatpush1.msra.mxu0 0.0
      %2845 = vmatprep.subr.mxu0 0.0
      %2846 = vmatpush1.msra.mxu0 0.0
      %2847 = vmatprep.subr.mxu0 0.0
      %2848 = vmatpush1.msra.mxu0 0.0
      %2849 = vmatprep.subr.mxu0 0.0
      %2850 = vmatpush1.msra.mxu0 0.0
      %2851 = vmatprep.subr.mxu0 0.0
      %2852 = vmatpush1.msra.mxu0 0.0
      %2853 = vmatprep.subr.mxu0 0.0
      %2854 = vmatpush1.msra.mxu0 0.0
      %2855 = vmatprep.subr.mxu0 0.0
      %2856 = vmatpush1.msra.mxu0 0.0
      %2857 = vmatprep.subr.mxu0 0.0
      %2858 = vmatpush1.msra.mxu0 0.0
      %2859 = vmatprep.subr.mxu0 0.0
      %2860 = vmatpush1.msra.mxu0 0.0
      %2861 = vmatprep.subr.mxu0 0.0
      %2862 = vmatpush1.msra.mxu0 0.0
      %2863 = vmatprep.subr.mxu0 0.0
      %2864 = vmatpush1.msra.mxu0 0.0
      %2865 = vmatprep.subr.mxu0 0.0
      %2866 = vmatpush1.msra.mxu0 0.0
      %2867 = vmatprep.subr.mxu0 0.0
      %2868 = vmatpush1.msra.mxu0 0.0
      %2869 = vmatprep.subr.mxu0 0.0
      %2870 = vmatpush1.msra.mxu0 0.0
      %2871 = vmatprep.subr.mxu0 0.0
      %2872 = vmatpush1.msra.mxu0 0.0
      %2873 = vmatprep.subr.mxu0 0.0
      %2874 = vmatpush1.msra.mxu0 0.0
      %2875 = vmatprep.subr.mxu0 0.0
      %2876 = vmatpush1.msra.mxu0 0.0
      %2877 = vmatprep.subr.mxu0 0.0
      %2878 = vmatpush1.msra.mxu0 0.0
      %2879 = vmatprep.subr.mxu0 0.0
      %2880 = vmatpush1.msra.mxu0 0.0
      %2881 = vmatprep.subr.mxu0 0.0
      %2882 = vmatpush1.msra.mxu0 0.0
      %2883 = vmatprep.mubr.f32.mxu0 0.0
      %2884 = vmatmul.mubr.f32.gmra.mrb[0].mxu0 %v2803
      %v2885 = vpop.f32.mrb[0].mxu0
      %v2886 = vadd.f32 %v2801, %v2885
      %v2887 = vpop.f32.mrb[0].mxu0
      %2888 = vmatprep.mubr.f32.mxu0 0.0
      %2889 = vmatmul.mubr.f32.gmra.mrb[0].mxu0 %v2805
      %v2890 = vpop.f32.mrb[0].mxu0
      %v2891 = vadd.f32 %v2801, %v2890
      %v2892 = vpop.f32.mrb[0].mxu0
      %2893 = vmatprep.mubr.f32.mxu0 0.0
      %2894 = vmatmul.mubr.f32.gmra.mrb[0].mxu0 %v2807
      %v2895 = vpop.f32.mrb[0].mxu0
      %v2896 = vadd.f32 %v2801, %v2895
      %v2897 = vpop.f32.mrb[0].mxu0
      %2898 = vmatprep.mubr.f32.mxu0 0.0
      %2899 = vmatmul.mubr.f32.gmra.mrb[0].mxu0 %v2809
      %v2900 = vpop.f32.mrb[0].mxu0
      %v2901 = vadd.f32 %v2801, %v2900
      %v2902 = vpop.f32.mrb[0].mxu0
      %2903 = vmatprep.mubr.f32.mxu0 0.0
      %2904 = vmatmul.mubr.f32.gmra.mrb[0].mxu0 %v2811
      %v2905 = vpop.f32.mrb[0].mxu0
      %v2906 = vadd.f32 %v2801, %v2905
      %v2907 = vpop.f32.mrb[0].mxu0
      %2908 = vmatprep.mubr.f32.mxu0 0.0
      %2909 = vmatmul.mubr.f32.gmra.mrb[0].mxu0 %v2813
      %v2910 = vpop.f32.mrb[0].mxu0
      %v2911 = vadd.f32 %v2801, %v2910
      %v2912 = vpop.f32.mrb[0].mxu0
      %2913 = vmatprep.mubr.f32.mxu0 0.0
      %2914 = vmatmul.mubr.f32.gmra.mrb[0].mxu0 %v2815
      %v2915 = vpop.f32.mrb[0].mxu0
      %v2916 = vadd.f32 %v2801, %v2915
      %v2917 = vpop.f32.mrb[0].mxu0
      %2918 = vmatprep.mubr.f32.mxu0 0.0
      %2919 = vmatmul.mubr.f32.gmra.mrb[0].mxu0 %v2817
      %v2920 = vpop.f32.mrb[0].mxu0
      %v2921 = vadd.f32 %v2801, %v2920
      %v2922 = vpop.f32.mrb[0].mxu0
      %2923 = vdwg.mxu0
      %2932 = vrot.lane.b32.xlu0 %v2886, 112
      %v2933 = vpop.permute.xlu0 %2932
      %2934 = vrot.lane.b32.xlu0 %v2891, 112
      %v2935 = vpop.permute.xlu0 %2934
      %2936 = vrot.lane.b32.xlu0 %v2896, 112
      %v2937 = vpop.permute.xlu0 %2936
      %2938 = vrot.lane.b32.xlu0 %v2901, 112
      %v2939 = vpop.permute.xlu0 %2938
      %2940 = vrot.lane.b32.xlu0 %v2906, 112
      %v2941 = vpop.permute.xlu0 %2940
      %2942 = vrot.lane.b32.xlu0 %v2911, 112
      %v2943 = vpop.permute.xlu0 %2942
      %2944 = vrot.lane.b32.xlu0 %v2916, 112
      %v2945 = vpop.permute.xlu0 %2944
      %2946 = vrot.lane.b32.xlu0 %v2921, 112
      %v2947 = vpop.permute.xlu0 %2946
      %s2956 = scalar_lea.vmem [#allocation5], 24
      %2957 = vst.msk [vmem:[%s2956 + $0x8] sm:$0xff] %vm657, %v2933
      %2958 = vst.msk [vmem:[%s2956 + $0x20] sm:$0xff] %vm657, %v2935
      %2959 = vst.msk [vmem:[%s2956 + $0x38] sm:$0xff] %vm657, %v2937
      %2960 = vst.msk [vmem:[%s2956 + $0x50] sm:$0xff] %vm657, %v2939
      %2961 = vst.msk [vmem:[%s2956 + $0x68] sm:$0xff] %vm657, %v2941
      %2962 = vst.msk [vmem:[%s2956 + $0x80] sm:$0xff] %vm657, %v2943
      %2963 = vst.msk [vmem:[%s2956 + $0x98] sm:$0xff] %vm657, %v2945
      %2964 = vst.msk [vmem:[%s2956 + $0xb0] sm:$0xff] %vm657, %v2947
      %v2965 = vld [vmem:[#allocation5] sm:$0xff]
      %v2966 = vld [vmem:[#allocation5 + $0x8] sm:$0xff]
      %v2967 = vld [vmem:[#allocation5 + $0x10] sm:$0xff]
      %v2968 = vld [vmem:[#allocation5 + $0x18] sm:$0xff]
      %v2969 = vld [vmem:[#allocation5 + $0x20] sm:$0xff]
      %v2970 = vld [vmem:[#allocation5 + $0x28] sm:$0xff]
      %v2971 = vld [vmem:[#allocation5 + $0x30] sm:$0xff]
      %v2972 = vld [vmem:[#allocation5 + $0x38] sm:$0xff]
      %v2973 = vld [vmem:[#allocation5 + $0x40] sm:$0xff]
      %v2974 = vld [vmem:[#allocation5 + $0x48] sm:$0xff]
      %v2975 = vld [vmem:[#allocation5 + $0x50] sm:$0xff]
      %v2976 = vld [vmem:[#allocation5 + $0x58] sm:$0xff]
      %v2977 = vld [vmem:[#allocation5 + $0x60] sm:$0xff]
      %v2978 = vld [vmem:[#allocation5 + $0x68] sm:$0xff]
      %v2979 = vld [vmem:[#allocation5 + $0x70] sm:$0xff]
      %v2980 = vld [vmem:[#allocation5 + $0x78] sm:$0xff]
      %v2981 = vld [vmem:[#allocation5 + $0x80] sm:$0xff]
      %v2982 = vld [vmem:[#allocation5 + $0x88] sm:$0xff]
      %v2983 = vld [vmem:[#allocation5 + $0x90] sm:$0xff]
      %v2984 = vld [vmem:[#allocation5 + $0x98] sm:$0xff]
      %v2985 = vld [vmem:[#allocation5 + $0xa0] sm:$0xff]
      %v2986 = vld [vmem:[#allocation5 + $0xa8] sm:$0xff]
      %v2987 = vld [vmem:[#allocation5 + $0xb0] sm:$0xff]
      %v2988 = vld [vmem:[#allocation5 + $0xb8] sm:$0xff]
      %v2989 = vld [vmem:[#allocation5 + $0xc0] sm:$0xff]
      %v2990 = vld [vmem:[#allocation5 + $0xc8] sm:$0xff]
      %v2991 = vld [vmem:[#allocation5 + $0xd0] sm:$0xff]
      %v2992 = vld [vmem:[#allocation5 + $0xd8] sm:$0xff]
      %v2993 = vld [vmem:[#allocation5 + $0xe0] sm:$0xff]
      %v2994 = vld [vmem:[#allocation5 + $0xe8] sm:$0xff]
      %v2995 = vld [vmem:[%s8] sm:$0x1]
      %v2996 = vlaneseq
      %v2997 = vshrl.u32 %v2996, 7
      %v2998 = vsub.s32 0, %v2997
      %v2999 = vrot.slane %v2995, %v2998
      %v3000 = vmul.f32 %v2965, %v2999
      %v3001 = vmul.f32 %v2966, %v2999
      %v3002 = vmul.f32 %v2968, %v2999
      %v3003 = vmul.f32 %v2969, %v2999
      %v3004 = vmul.f32 %v2971, %v2999
      %v3005 = vmul.f32 %v2972, %v2999
      %v3006 = vmul.f32 %v2974, %v2999
      %v3007 = vmul.f32 %v2975, %v2999
      %v3008 = vmul.f32 %v2977, %v2999
      %v3009 = vmul.f32 %v2978, %v2999
      %v3010 = vmul.f32 %v2980, %v2999
      %v3011 = vmul.f32 %v2981, %v2999
      %v3012 = vmul.f32 %v2983, %v2999
      %v3013 = vmul.f32 %v2984, %v2999
      %v3014 = vmul.f32 %v2986, %v2999
      %v3015 = vmul.f32 %v2987, %v2999
      %v3016 = vld [vmem:[%s8 + $0x1] sm:$0x1]
      %v3017 = vlaneseq
      %v3018 = vshrl.u32 %v3017, 7
      %v3019 = vsub.s32 0, %v3018
      %v3020 = vrot.slane %v3016, %v3019
      %v3021 = vmul.f32 %v2966, %v3020
      %v3022 = vmul.f32 %v2969, %v3020
      %v3023 = vmul.f32 %v2972, %v3020
      %v3024 = vmul.f32 %v2975, %v3020
      %v3025 = vmul.f32 %v2978, %v3020
      %v3026 = vmul.f32 %v2981, %v3020
      %v3027 = vmul.f32 %v2984, %v3020
      %v3028 = vmul.f32 %v2987, %v3020
      %v3037 = vrot.slane %v3021, 1
      %v3038 = vrot.slane %v3022, 1
      %v3039 = vrot.slane %v3023, 1
      %v3040 = vrot.slane %v3024, 1
      %v3041 = vrot.slane %v3025, 1
      %v3042 = vrot.slane %v3026, 1
      %v3043 = vrot.slane %v3027, 1
      %v3044 = vrot.slane %v3028, 1
      %v3053 = vadd.f32 %v3000, %v3037
      %v3054 = vadd.f32 %v3001, %v3037
      %v3055 = vadd.f32 %v3002, %v3038
      %v3056 = vadd.f32 %v3003, %v3038
      %v3057 = vadd.f32 %v3004, %v3039
      %v3058 = vadd.f32 %v3005, %v3039
      %v3059 = vadd.f32 %v3006, %v3040
      %v3060 = vadd.f32 %v3007, %v3040
      %v3061 = vadd.f32 %v3008, %v3041
      %v3062 = vadd.f32 %v3009, %v3041
      %v3063 = vadd.f32 %v3010, %v3042
      %v3064 = vadd.f32 %v3011, %v3042
      %v3065 = vadd.f32 %v3012, %v3043
      %v3066 = vadd.f32 %v3013, %v3043
      %v3067 = vadd.f32 %v3014, %v3044
      %v3068 = vadd.f32 %v3015, %v3044
      %v3069 = vld [vmem:[%s8 + $0x2] sm:$0x1]
      %v3070 = vlaneseq
      %v3071 = vshrl.u32 %v3070, 7
      %v3072 = vsub.s32 0, %v3071
      %v3073 = vrot.slane %v3069, %v3072
      %v3074 = vmul.f32 %v2966, %v3073
      %v3075 = vmul.f32 %v2967, %v3073
      %v3076 = vmul.f32 %v2969, %v3073
      %v3077 = vmul.f32 %v2970, %v3073
      %v3078 = vmul.f32 %v2972, %v3073
      %v3079 = vmul.f32 %v2973, %v3073
      %v3080 = vmul.f32 %v2975, %v3073
      %v3081 = vmul.f32 %v2976, %v3073
      %v3082 = vmul.f32 %v2978, %v3073
      %v3083 = vmul.f32 %v2979, %v3073
      %v3084 = vmul.f32 %v2981, %v3073
      %v3085 = vmul.f32 %v2982, %v3073
      %v3086 = vmul.f32 %v2984, %v3073
      %v3087 = vmul.f32 %v2985, %v3073
      %v3088 = vmul.f32 %v2987, %v3073
      %v3089 = vmul.f32 %v2988, %v3073
      %vm3106 = vcmask 1045504
      %v3107 = vrot.slane %v3074, 2
      %v3108 = vrot.slane %v3075, 2
      %v3109 = vsel %vm3106, %v3107, %v3108
      %v3110 = vrot.slane %v3076, 2
      %v3111 = vrot.slane %v3077, 2
      %v3112 = vsel %vm3106, %v3110, %v3111
      %v3113 = vrot.slane %v3078, 2
      %v3114 = vrot.slane %v3079, 2
      %v3115 = vsel %vm3106, %v3113, %v3114
      %v3116 = vrot.slane %v3080, 2
      %v3117 = vrot.slane %v3081, 2
      %v3118 = vsel %vm3106, %v3116, %v3117
      %v3119 = vrot.slane %v3082, 2
      %v3120 = vrot.slane %v3083, 2
      %v3121 = vsel %vm3106, %v3119, %v3120
      %v3122 = vrot.slane %v3084, 2
      %v3123 = vrot.slane %v3085, 2
      %v3124 = vsel %vm3106, %v3122, %v3123
      %v3125 = vrot.slane %v3086, 2
      %v3126 = vrot.slane %v3087, 2
      %v3127 = vsel %vm3106, %v3125, %v3126
      %v3128 = vrot.slane %v3088, 2
      %v3129 = vrot.slane %v3089, 2
      %v3130 = vsel %vm3106, %v3128, %v3129
      %v3147 = vadd.f32 %v3053, %v3107
      %v3148 = vadd.f32 %v3054, %v3109
      %v3149 = vadd.f32 %v3055, %v3110
      %v3150 = vadd.f32 %v3056, %v3112
      %v3151 = vadd.f32 %v3057, %v3113
      %v3152 = vadd.f32 %v3058, %v3115
      %v3153 = vadd.f32 %v3059, %v3116
      %v3154 = vadd.f32 %v3060, %v3118
      %v3155 = vadd.f32 %v3061, %v3119
      %v3156 = vadd.f32 %v3062, %v3121
      %v3157 = vadd.f32 %v3063, %v3122
      %v3158 = vadd.f32 %v3064, %v3124
      %v3159 = vadd.f32 %v3065, %v3125
      %v3160 = vadd.f32 %v3066, %v3127
      %v3161 = vadd.f32 %v3067, %v3128
      %v3162 = vadd.f32 %v3068, %v3130
      %s3163 = scalar_lea.vmem %s8, 4
      %v3164 = vld [vmem:[%s3163] sm:$0x1]
      %v3165 = vlaneseq
      %v3166 = vshrl.u32 %v3165, 7
      %v3167 = vsub.s32 0, %v3166
      %v3168 = vrot.slane %v3164, %v3167
      %v3169 = vmul.f32 %v2968, %v3168
      %v3170 = vmul.f32 %v2969, %v3168
      %v3171 = vmul.f32 %v2971, %v3168
      %v3172 = vmul.f32 %v2972, %v3168
      %v3173 = vmul.f32 %v2974, %v3168
      %v3174 = vmul.f32 %v2975, %v3168
      %v3175 = vmul.f32 %v2977, %v3168
      %v3176 = vmul.f32 %v2978, %v3168
      %v3177 = vmul.f32 %v2980, %v3168
      %v3178 = vmul.f32 %v2981, %v3168
      %v3179 = vmul.f32 %v2983, %v3168
      %v3180 = vmul.f32 %v2984, %v3168
      %v3181 = vmul.f32 %v2986, %v3168
      %v3182 = vmul.f32 %v2987, %v3168
      %v3183 = vmul.f32 %v2989, %v3168
      %v3184 = vmul.f32 %v2990, %v3168
      %v3185 = vadd.f32 %v3147, %v3169
      %v3186 = vadd.f32 %v3148, %v3170
      %v3187 = vadd.f32 %v3149, %v3171
      %v3188 = vadd.f32 %v3150, %v3172
      %v3189 = vadd.f32 %v3151, %v3173
      %v3190 = vadd.f32 %v3152, %v3174
      %v3191 = vadd.f32 %v3153, %v3175
      %v3192 = vadd.f32 %v3154, %v3176
      %v3193 = vadd.f32 %v3155, %v3177
      %v3194 = vadd.f32 %v3156, %v3178
      %v3195 = vadd.f32 %v3157, %v3179
      %v3196 = vadd.f32 %v3158, %v3180
      %v3197 = vadd.f32 %v3159, %v3181
      %v3198 = vadd.f32 %v3160, %v3182
      %v3199 = vadd.f32 %v3161, %v3183
      %v3200 = vadd.f32 %v3162, %v3184
      %v3201 = vld [vmem:[%s3163 + $0x1] sm:$0x1]
      %v3202 = vlaneseq
      %v3203 = vshrl.u32 %v3202, 7
      %v3204 = vsub.s32 0, %v3203
      %v3205 = vrot.slane %v3201, %v3204
      %v3206 = vmul.f32 %v2969, %v3205
      %v3207 = vmul.f32 %v2972, %v3205
      %v3208 = vmul.f32 %v2975, %v3205
      %v3209 = vmul.f32 %v2978, %v3205
      %v3210 = vmul.f32 %v2981, %v3205
      %v3211 = vmul.f32 %v2984, %v3205
      %v3212 = vmul.f32 %v2987, %v3205
      %v3213 = vmul.f32 %v2990, %v3205
      %v3222 = vrot.slane %v3206, 1
      %v3223 = vrot.slane %v3207, 1
      %v3224 = vrot.slane %v3208, 1
      %v3225 = vrot.slane %v3209, 1
      %v3226 = vrot.slane %v3210, 1
      %v3227 = vrot.slane %v3211, 1
      %v3228 = vrot.slane %v3212, 1
      %v3229 = vrot.slane %v3213, 1
      %v3238 = vadd.f32 %v3185, %v3222
      %v3239 = vadd.f32 %v3186, %v3222
      %v3240 = vadd.f32 %v3187, %v3223
      %v3241 = vadd.f32 %v3188, %v3223
      %v3242 = vadd.f32 %v3189, %v3224
      %v3243 = vadd.f32 %v3190, %v3224
      %v3244 = vadd.f32 %v3191, %v3225
      %v3245 = vadd.f32 %v3192, %v3225
      %v3246 = vadd.f32 %v3193, %v3226
      %v3247 = vadd.f32 %v3194, %v3226
      %v3248 = vadd.f32 %v3195, %v3227
      %v3249 = vadd.f32 %v3196, %v3227
      %v3250 = vadd.f32 %v3197, %v3228
      %v3251 = vadd.f32 %v3198, %v3228
      %v3252 = vadd.f32 %v3199, %v3229
      %v3253 = vadd.f32 %v3200, %v3229
      %v3254 = vld [vmem:[%s3163 + $0x2] sm:$0x1]
      %v3255 = vlaneseq
      %v3256 = vshrl.u32 %v3255, 7
      %v3257 = vsub.s32 0, %v3256
      %v3258 = vrot.slane %v3254, %v3257
      %v3259 = vmul.f32 %v2969, %v3258
      %v3260 = vmul.f32 %v2970, %v3258
      %v3261 = vmul.f32 %v2972, %v3258
      %v3262 = vmul.f32 %v2973, %v3258
      %v3263 = vmul.f32 %v2975, %v3258
      %v3264 = vmul.f32 %v2976, %v3258
      %v3265 = vmul.f32 %v2978, %v3258
      %v3266 = vmul.f32 %v2979, %v3258
      %v3267 = vmul.f32 %v2981, %v3258
      %v3268 = vmul.f32 %v2982, %v3258
      %v3269 = vmul.f32 %v2984, %v3258
      %v3270 = vmul.f32 %v2985, %v3258
      %v3271 = vmul.f32 %v2987, %v3258
      %v3272 = vmul.f32 %v2988, %v3258
      %v3273 = vmul.f32 %v2990, %v3258
      %v3274 = vmul.f32 %v2991, %v3258
      %v3291 = vrot.slane %v3259, 2
      %v3292 = vrot.slane %v3260, 2
      %v3293 = vsel %vm3106, %v3291, %v3292
      %v3294 = vrot.slane %v3261, 2
      %v3295 = vrot.slane %v3262, 2
      %v3296 = vsel %vm3106, %v3294, %v3295
      %v3297 = vrot.slane %v3263, 2
      %v3298 = vrot.slane %v3264, 2
      %v3299 = vsel %vm3106, %v3297, %v3298
      %v3300 = vrot.slane %v3265, 2
      %v3301 = vrot.slane %v3266, 2
      %v3302 = vsel %vm3106, %v3300, %v3301
      %v3303 = vrot.slane %v3267, 2
      %v3304 = vrot.slane %v3268, 2
      %v3305 = vsel %vm3106, %v3303, %v3304
      %v3306 = vrot.slane %v3269, 2
      %v3307 = vrot.slane %v3270, 2
      %v3308 = vsel %vm3106, %v3306, %v3307
      %v3309 = vrot.slane %v3271, 2
      %v3310 = vrot.slane %v3272, 2
      %v3311 = vsel %vm3106, %v3309, %v3310
      %v3312 = vrot.slane %v3273, 2
      %v3313 = vrot.slane %v3274, 2
      %v3314 = vsel %vm3106, %v3312, %v3313
      %v3331 = vadd.f32 %v3238, %v3291
      %v3332 = vadd.f32 %v3239, %v3293
      %v3333 = vadd.f32 %v3240, %v3294
      %v3334 = vadd.f32 %v3241, %v3296
      %v3335 = vadd.f32 %v3242, %v3297
      %v3336 = vadd.f32 %v3243, %v3299
      %v3337 = vadd.f32 %v3244, %v3300
      %v3338 = vadd.f32 %v3245, %v3302
      %v3339 = vadd.f32 %v3246, %v3303
      %v3340 = vadd.f32 %v3247, %v3305
      %v3341 = vadd.f32 %v3248, %v3306
      %v3342 = vadd.f32 %v3249, %v3308
      %v3343 = vadd.f32 %v3250, %v3309
      %v3344 = vadd.f32 %v3251, %v3311
      %v3345 = vadd.f32 %v3252, %v3312
      %v3346 = vadd.f32 %v3253, %v3314
      %s3347 = scalar_lea.vmem %s8, 8
      %v3348 = vld [vmem:[%s3347] sm:$0x1]
      %v3349 = vlaneseq
      %v3350 = vshrl.u32 %v3349, 7
      %v3351 = vsub.s32 0, %v3350
      %v3352 = vrot.slane %v3348, %v3351
      %v3353 = vmul.f32 %v2971, %v3352
      %v3354 = vmul.f32 %v2972, %v3352
      %v3355 = vmul.f32 %v2974, %v3352
      %v3356 = vmul.f32 %v2975, %v3352
      %v3357 = vmul.f32 %v2977, %v3352
      %v3358 = vmul.f32 %v2978, %v3352
      %v3359 = vmul.f32 %v2980, %v3352
      %v3360 = vmul.f32 %v2981, %v3352
      %v3361 = vmul.f32 %v2983, %v3352
      %v3362 = vmul.f32 %v2984, %v3352
      %v3363 = vmul.f32 %v2986, %v3352
      %v3364 = vmul.f32 %v2987, %v3352
      %v3365 = vmul.f32 %v2989, %v3352
      %v3366 = vmul.f32 %v2990, %v3352
      %v3367 = vmul.f32 %v2992, %v3352
      %v3368 = vmul.f32 %v2993, %v3352
      %v3369 = vadd.f32 %v3331, %v3353
      %v3370 = vadd.f32 %v3332, %v3354
      %v3371 = vadd.f32 %v3333, %v3355
      %v3372 = vadd.f32 %v3334, %v3356
      %v3373 = vadd.f32 %v3335, %v3357
      %v3374 = vadd.f32 %v3336, %v3358
      %v3375 = vadd.f32 %v3337, %v3359
      %v3376 = vadd.f32 %v3338, %v3360
      %v3377 = vadd.f32 %v3339, %v3361
      %v3378 = vadd.f32 %v3340, %v3362
      %v3379 = vadd.f32 %v3341, %v3363
      %v3380 = vadd.f32 %v3342, %v3364
      %v3381 = vadd.f32 %v3343, %v3365
      %v3382 = vadd.f32 %v3344, %v3366
      %v3383 = vadd.f32 %v3345, %v3367
      %v3384 = vadd.f32 %v3346, %v3368
      %v3385 = vld [vmem:[%s3347 + $0x1] sm:$0x1]
      %v3386 = vlaneseq
      %v3387 = vshrl.u32 %v3386, 7
      %v3388 = vsub.s32 0, %v3387
      %v3389 = vrot.slane %v3385, %v3388
      %v3390 = vmul.f32 %v2972, %v3389
      %v3391 = vmul.f32 %v2975, %v3389
      %v3392 = vmul.f32 %v2978, %v3389
      %v3393 = vmul.f32 %v2981, %v3389
      %v3394 = vmul.f32 %v2984, %v3389
      %v3395 = vmul.f32 %v2987, %v3389
      %v3396 = vmul.f32 %v2990, %v3389
      %v3397 = vmul.f32 %v2993, %v3389
      %v3406 = vrot.slane %v3390, 1
      %v3407 = vrot.slane %v3391, 1
      %v3408 = vrot.slane %v3392, 1
      %v3409 = vrot.slane %v3393, 1
      %v3410 = vrot.slane %v3394, 1
      %v3411 = vrot.slane %v3395, 1
      %v3412 = vrot.slane %v3396, 1
      %v3413 = vrot.slane %v3397, 1
      %v3422 = vadd.f32 %v3369, %v3406
      %v3423 = vadd.f32 %v3370, %v3406
      %v3424 = vadd.f32 %v3371, %v3407
      %v3425 = vadd.f32 %v3372, %v3407
      %v3426 = vadd.f32 %v3373, %v3408
      %v3427 = vadd.f32 %v3374, %v3408
      %v3428 = vadd.f32 %v3375, %v3409
      %v3429 = vadd.f32 %v3376, %v3409
      %v3430 = vadd.f32 %v3377, %v3410
      %v3431 = vadd.f32 %v3378, %v3410
      %v3432 = vadd.f32 %v3379, %v3411
      %v3433 = vadd.f32 %v3380, %v3411
      %v3434 = vadd.f32 %v3381, %v3412
      %v3435 = vadd.f32 %v3382, %v3412
      %v3436 = vadd.f32 %v3383, %v3413
      %v3437 = vadd.f32 %v3384, %v3413
      %v3438 = vld [vmem:[%s3347 + $0x2] sm:$0x1]
      %v3439 = vlaneseq
      %v3440 = vshrl.u32 %v3439, 7
      %v3441 = vsub.s32 0, %v3440
      %v3442 = vrot.slane %v3438, %v3441
      %v3443 = vmul.f32 %v2972, %v3442
      %v3444 = vmul.f32 %v2973, %v3442
      %v3445 = vmul.f32 %v2975, %v3442
      %v3446 = vmul.f32 %v2976, %v3442
      %v3447 = vmul.f32 %v2978, %v3442
      %v3448 = vmul.f32 %v2979, %v3442
      %v3449 = vmul.f32 %v2981, %v3442
      %v3450 = vmul.f32 %v2982, %v3442
      %v3451 = vmul.f32 %v2984, %v3442
      %v3452 = vmul.f32 %v2985, %v3442
      %v3453 = vmul.f32 %v2987, %v3442
      %v3454 = vmul.f32 %v2988, %v3442
      %v3455 = vmul.f32 %v2990, %v3442
      %v3456 = vmul.f32 %v2991, %v3442
      %v3457 = vmul.f32 %v2993, %v3442
      %v3458 = vmul.f32 %v2994, %v3442
      %v3475 = vrot.slane %v3443, 2
      %v3476 = vrot.slane %v3444, 2
      %v3477 = vsel %vm3106, %v3475, %v3476
      %v3478 = vrot.slane %v3445, 2
      %v3479 = vrot.slane %v3446, 2
      %v3480 = vsel %vm3106, %v3478, %v3479
      %v3481 = vrot.slane %v3447, 2
      %v3482 = vrot.slane %v3448, 2
      %v3483 = vsel %vm3106, %v3481, %v3482
      %v3484 = vrot.slane %v3449, 2
      %v3485 = vrot.slane %v3450, 2
      %v3486 = vsel %vm3106, %v3484, %v3485
      %v3487 = vrot.slane %v3451, 2
      %v3488 = vrot.slane %v3452, 2
      %v3489 = vsel %vm3106, %v3487, %v3488
      %v3490 = vrot.slane %v3453, 2
      %v3491 = vrot.slane %v3454, 2
      %v3492 = vsel %vm3106, %v3490, %v3491
      %v3493 = vrot.slane %v3455, 2
      %v3494 = vrot.slane %v3456, 2
      %v3495 = vsel %vm3106, %v3493, %v3494
      %v3496 = vrot.slane %v3457, 2
      %v3497 = vrot.slane %v3458, 2
      %v3498 = vsel %vm3106, %v3496, %v3497
      %v3515 = vadd.f32 %v3422, %v3475
      %v3516 = vadd.f32 %v3423, %v3477
      %v3517 = vadd.f32 %v3424, %v3478
      %v3518 = vadd.f32 %v3425, %v3480
      %v3519 = vadd.f32 %v3426, %v3481
      %v3520 = vadd.f32 %v3427, %v3483
      %v3521 = vadd.f32 %v3428, %v3484
      %v3522 = vadd.f32 %v3429, %v3486
      %v3523 = vadd.f32 %v3430, %v3487
      %v3524 = vadd.f32 %v3431, %v3489
      %v3525 = vadd.f32 %v3432, %v3490
      %v3526 = vadd.f32 %v3433, %v3492
      %v3527 = vadd.f32 %v3434, %v3493
      %v3528 = vadd.f32 %v3435, %v3495
      %v3529 = vadd.f32 %v3436, %v3496
      %v3530 = vadd.f32 %v3437, %v3498
      %vm3547 = vcmask 1040384
      %v3548 = vrot.slane %v3515, 7
      %v3549 = vrot.slane %v3516, 7
      %v3550 = vsel %vm3547, %v3548, %v3549
      %v3551 = vrot.slane %v3517, 7
      %v3552 = vrot.slane %v3518, 7
      %v3553 = vsel %vm3547, %v3551, %v3552
      %v3554 = vrot.slane %v3519, 7
      %v3555 = vrot.slane %v3520, 7
      %v3556 = vsel %vm3547, %v3554, %v3555
      %v3557 = vrot.slane %v3521, 7
      %v3558 = vrot.slane %v3522, 7
      %v3559 = vsel %vm3547, %v3557, %v3558
      %v3560 = vrot.slane %v3523, 7
      %v3561 = vrot.slane %v3524, 7
      %v3562 = vsel %vm3547, %v3560, %v3561
      %v3563 = vrot.slane %v3525, 7
      %v3564 = vrot.slane %v3526, 7
      %v3565 = vsel %vm3547, %v3563, %v3564
      %v3566 = vrot.slane %v3527, 7
      %v3567 = vrot.slane %v3528, 7
      %v3568 = vsel %vm3547, %v3566, %v3567
      %v3569 = vrot.slane %v3529, 7
      %v3570 = vrot.slane %v3530, 7
      %v3571 = vsel %vm3547, %v3569, %v3570
      %v3580 = vld [vmem:[%s9] sm:$0x1]
      %v3582 = vlaneseq
      %v3583 = vshrl.u32 %v3582, 7
      %v3584 = vsub.s32 0, %v3583
      %v3585 = vrot.slane %v3580, %v3584
      %v3587 = vadd.f32 %v3550, %v3585
      %v3588 = vadd.f32 %v3553, %v3585
      %v3589 = vadd.f32 %v3556, %v3585
      %v3590 = vadd.f32 %v3559, %v3585
      %v3591 = vadd.f32 %v3562, %v3585
      %v3592 = vadd.f32 %v3565, %v3585
      %v3593 = vadd.f32 %v3568, %v3585
      %v3594 = vadd.f32 %v3571, %v3585
      %3595 = vrot.lane.b32.xlu0 %v2886, 120
      %v3596 = vpop.permute.xlu0 %3595
      %3597 = vrot.lane.b32.xlu0 %v2891, 120
      %v3598 = vpop.permute.xlu0 %3597
      %3599 = vrot.lane.b32.xlu0 %v2896, 120
      %v3600 = vpop.permute.xlu0 %3599
      %3601 = vrot.lane.b32.xlu0 %v2901, 120
      %v3602 = vpop.permute.xlu0 %3601
      %3603 = vrot.lane.b32.xlu0 %v2906, 120
      %v3604 = vpop.permute.xlu0 %3603
      %3605 = vrot.lane.b32.xlu0 %v2911, 120
      %v3606 = vpop.permute.xlu0 %3605
      %3607 = vrot.lane.b32.xlu0 %v2916, 120
      %v3608 = vpop.permute.xlu0 %3607
      %3609 = vrot.lane.b32.xlu0 %v2921, 120
      %v3610 = vpop.permute.xlu0 %3609
      %v3611 = vsel %vm657, %v2886, 0
      %v3613 = vsel %vm657, %v2891, 0
      %v3615 = vsel %vm657, %v2896, 0
      %v3617 = vsel %vm657, %v2901, 0
      %v3619 = vsel %vm657, %v2906, 0
      %v3621 = vsel %vm657, %v2911, 0
      %v3623 = vsel %vm657, %v2916, 0
      %v3625 = vsel %vm657, %v2921, 0
      %v3627 = vsel %vm657, %v3596, 0
      %v3629 = vsel %vm657, %v3598, 0
      %v3631 = vsel %vm657, %v3600, 0
      %v3633 = vsel %vm657, %v3602, 0
      %v3635 = vsel %vm657, %v3604, 0
      %v3637 = vsel %vm657, %v3606, 0
      %v3639 = vsel %vm657, %v3608, 0
      %v3641 = vsel %vm657, %v3610, 0
      %3643 = vmatprep.subr.mxu0 0.0
      %3644 = vmatpush1.xpose.msra.mxu0 %v3627
      %3645 = vmatprep.subr.mxu0 0.0
      %3646 = vmatpush1.xpose.msra.mxu0 %v3629
      %3647 = vmatprep.subr.mxu0 0.0
      %3648 = vmatpush1.xpose.msra.mxu0 %v3631
      %3649 = vmatprep.subr.mxu0 0.0
      %3650 = vmatpush1.xpose.msra.mxu0 %v3633
      %3651 = vmatprep.subr.mxu0 0.0
      %3652 = vmatpush1.xpose.msra.mxu0 %v3635
      %3653 = vmatprep.subr.mxu0 0.0
      %3654 = vmatpush1.xpose.msra.mxu0 %v3637
      %3655 = vmatprep.subr.mxu0 0.0
      %3656 = vmatpush1.xpose.msra.mxu0 %v3639
      %3657 = vmatprep.subr.mxu0 0.0
      %3658 = vmatpush1.xpose.msra.mxu0 %v3641
      %3659 = vmatprep.subr.mxu0 0.0
      %3660 = vmatpush1.xpose.msra.mxu0 0.0
      %3661 = vmatprep.subr.mxu0 0.0
      %3662 = vmatpush1.xpose.msra.mxu0 0.0
      %3663 = vmatprep.subr.mxu0 0.0
      %3664 = vmatpush1.xpose.msra.mxu0 0.0
      %3665 = vmatprep.subr.mxu0 0.0
      %3666 = vmatpush1.xpose.msra.mxu0 0.0
      %3667 = vmatprep.subr.mxu0 0.0
      %3668 = vmatpush1.xpose.msra.mxu0 0.0
      %3669 = vmatprep.subr.mxu0 0.0
      %3670 = vmatpush1.xpose.msra.mxu0 0.0
      %3671 = vmatprep.subr.mxu0 0.0
      %3672 = vmatpush1.xpose.msra.mxu0 0.0
      %3673 = vmatprep.subr.mxu0 0.0
      %3674 = vmatpush1.xpose.msra.mxu0 0.0
      %3675 = vmatprep.subr.mxu0 0.0
      %3676 = vmatpush1.xpose.msra.mxu0 0.0
      %3677 = vmatprep.subr.mxu0 0.0
      %3678 = vmatpush1.xpose.msra.mxu0 0.0
      %3679 = vmatprep.subr.mxu0 0.0
      %3680 = vmatpush1.xpose.msra.mxu0 0.0
      %3681 = vmatprep.subr.mxu0 0.0
      %3682 = vmatpush1.xpose.msra.mxu0 0.0
      %3683 = vmatprep.subr.mxu0 0.0
      %3684 = vmatpush1.xpose.msra.mxu0 0.0
      %3685 = vmatprep.subr.mxu0 0.0
      %3686 = vmatpush1.xpose.msra.mxu0 0.0
      %3687 = vmatprep.subr.mxu0 0.0
      %3688 = vmatpush1.xpose.msra.mxu0 0.0
      %3689 = vmatprep.subr.mxu0 0.0
      %3690 = vmatpush1.xpose.msra.mxu0 0.0
      %3691 = vmatprep.subr.mxu0 0.0
      %3692 = vmatpush1.xpose.msra.mxu0 0.0
      %3693 = vmatprep.subr.mxu0 0.0
      %3694 = vmatpush1.xpose.msra.mxu0 0.0
      %3695 = vmatprep.subr.mxu0 0.0
      %3696 = vmatpush1.xpose.msra.mxu0 0.0
      %3697 = vmatprep.subr.mxu0 0.0
      %3698 = vmatpush1.xpose.msra.mxu0 0.0
      %3699 = vmatprep.subr.mxu0 0.0
      %3700 = vmatpush1.xpose.msra.mxu0 0.0
      %3701 = vmatprep.subr.mxu0 0.0
      %3702 = vmatpush1.xpose.msra.mxu0 0.0
      %3703 = vmatprep.subr.mxu0 0.0
      %3704 = vmatpush1.xpose.msra.mxu0 0.0
      %3705 = vmatprep.subr.mxu0 0.0
      %3706 = vmatpush1.xpose.msra.mxu0 0.0
      %3707 = vmatprep.mubr.f32.mxu0 0.0
      %3708 = vmatmul.mubr.f32.gmra.mrb[0].mxu0 %v3611
      %v3709 = vpop.f32.mrb[0].mxu0
      %v3710 = vadd.f32 0.0, %v3709
      %v3711 = vpop.f32.mrb[0].mxu0
      %3712 = vmatprep.mubr.f32.mxu0 0.0
      %3713 = vmatmul.mubr.f32.gmra.mrb[0].mxu0 %v3613
      %v3714 = vpop.f32.mrb[0].mxu0
      %v3715 = vadd.f32 0.0, %v3714
      %v3716 = vpop.f32.mrb[0].mxu0
      %3717 = vmatprep.mubr.f32.mxu0 0.0
      %3718 = vmatmul.mubr.f32.gmra.mrb[0].mxu0 %v3615
      %v3719 = vpop.f32.mrb[0].mxu0
      %v3720 = vadd.f32 0.0, %v3719
      %v3721 = vpop.f32.mrb[0].mxu0
      %3722 = vmatprep.mubr.f32.mxu0 0.0
      %3723 = vmatmul.mubr.f32.gmra.mrb[0].mxu0 %v3617
      %v3724 = vpop.f32.mrb[0].mxu0
      %v3725 = vadd.f32 0.0, %v3724
      %v3726 = vpop.f32.mrb[0].mxu0
      %3727 = vmatprep.mubr.f32.mxu0 0.0
      %3728 = vmatmul.mubr.f32.gmra.mrb[0].mxu0 %v3619
      %v3729 = vpop.f32.mrb[0].mxu0
      %v3730 = vadd.f32 0.0, %v3729
      %v3731 = vpop.f32.mrb[0].mxu0
      %3732 = vmatprep.mubr.f32.mxu0 0.0
      %3733 = vmatmul.mubr.f32.gmra.mrb[0].mxu0 %v3621
      %v3734 = vpop.f32.mrb[0].mxu0
      %v3735 = vadd.f32 0.0, %v3734
      %v3736 = vpop.f32.mrb[0].mxu0
      %3737 = vmatprep.mubr.f32.mxu0 0.0
      %3738 = vmatmul.mubr.f32.gmra.mrb[0].mxu0 %v3623
      %v3739 = vpop.f32.mrb[0].mxu0
      %v3740 = vadd.f32 0.0, %v3739
      %v3741 = vpop.f32.mrb[0].mxu0
      %3742 = vmatprep.mubr.f32.mxu0 0.0
      %3743 = vmatmul.mubr.f32.gmra.mrb[0].mxu0 %v3625
      %v3744 = vpop.f32.mrb[0].mxu0
      %v3745 = vadd.f32 0.0, %v3744
      %v3746 = vpop.f32.mrb[0].mxu0
      %3747 = vdwg.mxu0
      %v3748 = vmul.f32 %v3710, 0.35355338
      %v3749 = vmul.f32 %v3715, 0.35355338
      %v3750 = vmul.f32 %v3720, 0.35355338
      %v3751 = vmul.f32 %v3725, 0.35355338
      %v3752 = vmul.f32 %v3730, 0.35355338
      %v3753 = vmul.f32 %v3735, 0.35355338
      %v3754 = vmul.f32 %v3740, 0.35355338
      %v3755 = vmul.f32 %v3745, 0.35355338
      %vm3756 = vcmask 523264
      %v3757 = vsel %vm3756, %v3748, -inf
      %3758 = vmax.xlane.f32.xlu0 %v3757
      %v3759 = vpop.xlane.xlu0 %3758
      %v3760 = vsel %vm3756, %v3749, -inf
      %3761 = vmax.xlane.f32.xlu0 %v3760
      %v3762 = vpop.xlane.xlu0 %3761
      %v3763 = vsel %vm3756, %v3750, -inf
      %3764 = vmax.xlane.f32.xlu0 %v3763
      %v3765 = vpop.xlane.xlu0 %3764
      %v3766 = vsel %vm3756, %v3751, -inf
      %3767 = vmax.xlane.f32.xlu0 %v3766
      %v3768 = vpop.xlane.xlu0 %3767
      %v3769 = vsel %vm3756, %v3752, -inf
      %3770 = vmax.xlane.f32.xlu0 %v3769
      %v3771 = vpop.xlane.xlu0 %3770
      %v3772 = vsel %vm3756, %v3753, -inf
      %3773 = vmax.xlane.f32.xlu0 %v3772
      %v3774 = vpop.xlane.xlu0 %3773
      %v3775 = vsel %vm3756, %v3754, -inf
      %3776 = vmax.xlane.f32.xlu0 %v3775
      %v3777 = vpop.xlane.xlu0 %3776
      %v3778 = vsel %vm3756, %v3755, -inf
      %3779 = vmax.xlane.f32.xlu0 %v3778
      %v3780 = vpop.xlane.xlu0 %3779
      %v3781 = vsub.f32 %v3748, %v3759
      %v3782 = vsub.f32 %v3749, %v3762
      %v3783 = vsub.f32 %v3750, %v3765
      %v3784 = vsub.f32 %v3751, %v3768
      %v3785 = vsub.f32 %v3752, %v3771
      %v3786 = vsub.f32 %v3753, %v3774
      %v3787 = vsub.f32 %v3754, %v3777
      %v3788 = vsub.f32 %v3755, %v3780
      %v3789 = vmul.f32 %v3781, 1.442695
      %v3790 = vpow.pop %v3789
      %v3791 = vmul.f32 %v3782, 1.442695
      %v3792 = vpow.pop %v3791
      %v3793 = vmul.f32 %v3783, 1.442695
      %v3794 = vpow.pop %v3793
      %v3795 = vmul.f32 %v3784, 1.442695
      %v3796 = vpow.pop %v3795
      %v3797 = vmul.f32 %v3785, 1.442695
      %v3798 = vpow.pop %v3797
      %v3799 = vmul.f32 %v3786, 1.442695
      %v3800 = vpow.pop %v3799
      %v3801 = vmul.f32 %v3787, 1.442695
      %v3802 = vpow.pop %v3801
      %v3803 = vmul.f32 %v3788, 1.442695
      %v3804 = vpow.pop %v3803
      %v3805 = vsel %vm3756, %v3790, 0.0
      %3806 = vadd.xlane.f32.xlu0 %v3805
      %v3807 = vpop.xlane.xlu0 %3806
      %v3808 = vsel %vm3756, %v3792, 0.0
      %3809 = vadd.xlane.f32.xlu0 %v3808
      %v3810 = vpop.xlane.xlu0 %3809
      %v3811 = vsel %vm3756, %v3794, 0.0
      %3812 = vadd.xlane.f32.xlu0 %v3811
      %v3813 = vpop.xlane.xlu0 %3812
      %v3814 = vsel %vm3756, %v3796, 0.0
      %3815 = vadd.xlane.f32.xlu0 %v3814
      %v3816 = vpop.xlane.xlu0 %3815
      %v3817 = vsel %vm3756, %v3798, 0.0
      %3818 = vadd.xlane.f32.xlu0 %v3817
      %v3819 = vpop.xlane.xlu0 %3818
      %v3820 = vsel %vm3756, %v3800, 0.0
      %3821 = vadd.xlane.f32.xlu0 %v3820
      %v3822 = vpop.xlane.xlu0 %3821
      %v3823 = vsel %vm3756, %v3802, 0.0
      %3824 = vadd.xlane.f32.xlu0 %v3823
      %v3825 = vpop.xlane.xlu0 %3824
      %v3826 = vsel %vm3756, %v3804, 0.0
      %3827 = vadd.xlane.f32.xlu0 %v3826
      %v3828 = vpop.xlane.xlu0 %3827
      %v3829 = vrcp.pop %v3807
      %v3830 = vrcp.pop %v3810
      %v3831 = vrcp.pop %v3813
      %v3832 = vrcp.pop %v3816
      %v3833 = vrcp.pop %v3819
      %v3834 = vrcp.pop %v3822
      %v3835 = vrcp.pop %v3825
      %v3836 = vrcp.pop %v3828
      %v3837 = vmul.f32 %v3790, %v3829
      %v3838 = vmul.f32 %v3792, %v3830
      %v3839 = vmul.f32 %v3794, %v3831
      %v3840 = vmul.f32 %v3796, %v3832
      %v3841 = vmul.f32 %v3798, %v3833
      %v3842 = vmul.f32 %v3800, %v3834
      %v3843 = vmul.f32 %v3802, %v3835
      %v3844 = vmul.f32 %v3804, %v3836
      %v3846 = vsel %vm3756, %v3837, 0
      %v3849 = vsel %vm3756, %v3838, 0
      %v3852 = vsel %vm3756, %v3839, 0
      %v3855 = vsel %vm3756, %v3840, 0
      %v3858 = vsel %vm3756, %v3841, 0
      %v3861 = vsel %vm3756, %v3842, 0
      %v3864 = vsel %vm3756, %v3843, 0
      %v3867 = vsel %vm3756, %v3844, 0
      %3869 = vmatprep.subr.mxu0 0.0
      %3870 = vmatpush1.msra.mxu0 %v2933
      %3871 = vmatprep.subr.mxu0 0.0
      %3872 = vmatpush1.msra.mxu0 %v2935
      %3873 = vmatprep.subr.mxu0 0.0
      %3874 = vmatpush1.msra.mxu0 %v2937
      %3875 = vmatprep.subr.mxu0 0.0
      %3876 = vmatpush1.msra.mxu0 %v2939
      %3877 = vmatprep.subr.mxu0 0.0
      %3878 = vmatpush1.msra.mxu0 %v2941
      %3879 = vmatprep.subr.mxu0 0.0
      %3880 = vmatpush1.msra.mxu0 %v2943
      %3881 = vmatprep.subr.mxu0 0.0
      %3882 = vmatpush1.msra.mxu0 %v2945
      %3883 = vmatprep.subr.mxu0 0.0
      %3884 = vmatpush1.msra.mxu0 %v2947
      %3885 = vmatprep.subr.mxu0 0.0
      %3886 = vmatpush1.msra.mxu0 0.0
      %3887 = vmatprep.subr.mxu0 0.0
      %3888 = vmatpush1.msra.mxu0 0.0
      %3889 = vmatprep.subr.mxu0 0.0
      %3890 = vmatpush1.msra.mxu0 0.0
      %3891 = vmatprep.subr.mxu0 0.0
      %3892 = vmatpush1.msra.mxu0 0.0
      %3893 = vmatprep.subr.mxu0 0.0
      %3894 = vmatpush1.msra.mxu0 0.0
      %3895 = vmatprep.subr.mxu0 0.0
      %3896 = vmatpush1.msra.mxu0 0.0
      %3897 = vmatprep.subr.mxu0 0.0
      %3898 = vmatpush1.msra.mxu0 0.0
      %3899 = vmatprep.subr.mxu0 0.0
      %3900 = vmatpush1.msra.mxu0 0.0
      %3901 = vmatprep.subr.mxu0 0.0
      %3902 = vmatpush1.msra.mxu0 0.0
      %3903 = vmatprep.subr.mxu0 0.0
      %3904 = vmatpush1.msra.mxu0 0.0
      %3905 = vmatprep.subr.mxu0 0.0
      %3906 = vmatpush1.msra.mxu0 0.0
      %3907 = vmatprep.subr.mxu0 0.0
      %3908 = vmatpush1.msra.mxu0 0.0
      %3909 = vmatprep.subr.mxu0 0.0
      %3910 = vmatpush1.msra.mxu0 0.0
      %3911 = vmatprep.subr.mxu0 0.0
      %3912 = vmatpush1.msra.mxu0 0.0
      %3913 = vmatprep.subr.mxu0 0.0
      %3914 = vmatpush1.msra.mxu0 0.0
      %3915 = vmatprep.subr.mxu0 0.0
      %3916 = vmatpush1.msra.mxu0 0.0
      %3917 = vmatprep.subr.mxu0 0.0
      %3918 = vmatpush1.msra.mxu0 0.0
      %3919 = vmatprep.subr.mxu0 0.0
      %3920 = vmatpush1.msra.mxu0 0.0
      %3921 = vmatprep.subr.mxu0 0.0
      %3922 = vmatpush1.msra.mxu0 0.0
      %3923 = vmatprep.subr.mxu0 0.0
      %3924 = vmatpush1.msra.mxu0 0.0
      %3925 = vmatprep.subr.mxu0 0.0
      %3926 = vmatpush1.msra.mxu0 0.0
      %3927 = vmatprep.subr.mxu0 0.0
      %3928 = vmatpush1.msra.mxu0 0.0
      %3929 = vmatprep.subr.mxu0 0.0
      %3930 = vmatpush1.msra.mxu0 0.0
      %3931 = vmatprep.subr.mxu0 0.0
      %3932 = vmatpush1.msra.mxu0 0.0
      %3933 = vmatprep.mubr.f32.mxu0 0.0
      %3934 = vmatmul.mubr.f32.gmra.mrb[0].mxu0 %v3846
      %v3935 = vpop.f32.mrb[0].mxu0
      %v3936 = vadd.f32 %v3587, %v3935
      %v3937 = vpop.f32.mrb[0].mxu0
      %3938 = vmatprep.mubr.f32.mxu0 0.0
      %3939 = vmatmul.mubr.f32.gmra.mrb[0].mxu0 %v3849
      %v3940 = vpop.f32.mrb[0].mxu0
      %v3941 = vadd.f32 %v3588, %v3940
      %v3942 = vpop.f32.mrb[0].mxu0
      %3943 = vmatprep.mubr.f32.mxu0 0.0
      %3944 = vmatmul.mubr.f32.gmra.mrb[0].mxu0 %v3852
      %v3945 = vpop.f32.mrb[0].mxu0
      %v3946 = vadd.f32 %v3589, %v3945
      %v3947 = vpop.f32.mrb[0].mxu0
      %3948 = vmatprep.mubr.f32.mxu0 0.0
      %3949 = vmatmul.mubr.f32.gmra.mrb[0].mxu0 %v3855
      %v3950 = vpop.f32.mrb[0].mxu0
      %v3951 = vadd.f32 %v3590, %v3950
      %v3952 = vpop.f32.mrb[0].mxu0
      %3953 = vmatprep.mubr.f32.mxu0 0.0
      %3954 = vmatmul.mubr.f32.gmra.mrb[0].mxu0 %v3858
      %v3955 = vpop.f32.mrb[0].mxu0
      %v3956 = vadd.f32 %v3591, %v3955
      %v3957 = vpop.f32.mrb[0].mxu0
      %3958 = vmatprep.mubr.f32.mxu0 0.0
      %3959 = vmatmul.mubr.f32.gmra.mrb[0].mxu0 %v3861
      %v3960 = vpop.f32.mrb[0].mxu0
      %v3961 = vadd.f32 %v3592, %v3960
      %v3962 = vpop.f32.mrb[0].mxu0
      %3963 = vmatprep.mubr.f32.mxu0 0.0
      %3964 = vmatmul.mubr.f32.gmra.mrb[0].mxu0 %v3864
      %v3965 = vpop.f32.mrb[0].mxu0
      %v3966 = vadd.f32 %v3593, %v3965
      %v3967 = vpop.f32.mrb[0].mxu0
      %3968 = vmatprep.mubr.f32.mxu0 0.0
      %3969 = vmatmul.mubr.f32.gmra.mrb[0].mxu0 %v3867
      %v3970 = vpop.f32.mrb[0].mxu0
      %v3971 = vadd.f32 %v3594, %v3970
      %v3972 = vpop.f32.mrb[0].mxu0
      %3973 = vdwg.mxu0
      %3974 = vst.msk [vmem:[#allocation6] sm:$0xff] %vm657, %v3936
      %3975 = vst.msk [vmem:[#allocation6 + $0x8] sm:$0xff] %vm657, %v3941
      %3976 = vst.msk [vmem:[#allocation6 + $0x10] sm:$0xff] %vm657, %v3946
      %3977 = vst.msk [vmem:[#allocation6 + $0x18] sm:$0xff] %vm657, %v3951
      %3978 = vst.msk [vmem:[#allocation6 + $0x20] sm:$0xff] %vm657, %v3956
      %3979 = vst.msk [vmem:[#allocation6 + $0x28] sm:$0xff] %vm657, %v3961
      %3980 = vst.msk [vmem:[#allocation6 + $0x30] sm:$0xff] %vm657, %v3966
      %3981 = vst.msk [vmem:[#allocation6 + $0x38] sm:$0xff] %vm657, %v3971
      %v3982 = vld [vmem:[#allocation6] sm:$0xff]
      %v3983 = vld [vmem:[#allocation6 + $0x8] sm:$0xff]
      %v3984 = vld [vmem:[#allocation6 + $0x10] sm:$0xff]
      %v3985 = vld [vmem:[#allocation6 + $0x18] sm:$0xff]
      %v3986 = vld [vmem:[#allocation6 + $0x20] sm:$0xff]
      %v3987 = vld [vmem:[#allocation6 + $0x28] sm:$0xff]
      %v3988 = vld [vmem:[#allocation6 + $0x30] sm:$0xff]
      %v3989 = vld [vmem:[#allocation6 + $0x38] sm:$0xff]
      %v3990 = vld [vmem:[%s10] sm:$0xff]
      %v3991 = vld [vmem:[%s11] sm:$0x1]
      %v3993 = vlaneseq
      %v3994 = vshrl.u32 %v3993, 7
      %v3995 = vsub.s32 0, %v3994
      %v3996 = vrot.slane %v3991, %v3995
      %v3999 = vsel %vm657, %v3982, 0
      %v4002 = vsel %vm657, %v3983, 0
      %v4005 = vsel %vm657, %v3984, 0
      %v4008 = vsel %vm657, %v3985, 0
      %v4011 = vsel %vm657, %v3986, 0
      %v4014 = vsel %vm657, %v3987, 0
      %v4017 = vsel %vm657, %v3988, 0
      %v4020 = vsel %vm657, %v3989, 0
      %4022 = vmatprep.subr.mxu0 0.0
      %4023 = vmatpush1.msra.mxu0 %v3990
      %4024 = vmatprep.subr.mxu0 0.0
      %4025 = vmatpush1.msra.mxu0 0.0
      %4026 = vmatprep.subr.mxu0 0.0
      %4027 = vmatpush1.msra.mxu0 0.0
      %4028 = vmatprep.subr.mxu0 0.0
      %4029 = vmatpush1.msra.mxu0 0.0
      %4030 = vmatprep.subr.mxu0 0.0
      %4031 = vmatpush1.msra.mxu0 0.0
      %4032 = vmatprep.subr.mxu0 0.0
      %4033 = vmatpush1.msra.mxu0 0.0
      %4034 = vmatprep.subr.mxu0 0.0
      %4035 = vmatpush1.msra.mxu0 0.0
      %4036 = vmatprep.subr.mxu0 0.0
      %4037 = vmatpush1.msra.mxu0 0.0
      %4038 = vmatprep.subr.mxu0 0.0
      %4039 = vmatpush1.msra.mxu0 0.0
      %4040 = vmatprep.subr.mxu0 0.0
      %4041 = vmatpush1.msra.mxu0 0.0
      %4042 = vmatprep.subr.mxu0 0.0
      %4043 = vmatpush1.msra.mxu0 0.0
      %4044 = vmatprep.subr.mxu0 0.0
      %4045 = vmatpush1.msra.mxu0 0.0
      %4046 = vmatprep.subr.mxu0 0.0
      %4047 = vmatpush1.msra.mxu0 0.0
      %4048 = vmatprep.subr.mxu0 0.0
      %4049 = vmatpush1.msra.mxu0 0.0
      %4050 = vmatprep.subr.mxu0 0.0
      %4051 = vmatpush1.msra.mxu0 0.0
      %4052 = vmatprep.subr.mxu0 0.0
      %4053 = vmatpush1.msra.mxu0 0.0
      %4054 = vmatprep.subr.mxu0 0.0
      %4055 = vmatpush1.msra.mxu0 0.0
      %4056 = vmatprep.subr.mxu0 0.0
      %4057 = vmatpush1.msra.mxu0 0.0
      %4058 = vmatprep.subr.mxu0 0.0
      %4059 = vmatpush1.msra.mxu0 0.0
      %4060 = vmatprep.subr.mxu0 0.0
      %4061 = vmatpush1.msra.mxu0 0.0
      %4062 = vmatprep.subr.mxu0 0.0
      %4063 = vmatpush1.msra.mxu0 0.0
      %4064 = vmatprep.subr.mxu0 0.0
      %4065 = vmatpush1.msra.mxu0 0.0
      %4066 = vmatprep.subr.mxu0 0.0
      %4067 = vmatpush1.msra.mxu0 0.0
      %4068 = vmatprep.subr.mxu0 0.0
      %4069 = vmatpush1.msra.mxu0 0.0
      %4070 = vmatprep.subr.mxu0 0.0
      %4071 = vmatpush1.msra.mxu0 0.0
      %4072 = vmatprep.subr.mxu0 0.0
      %4073 = vmatpush1.msra.mxu0 0.0
      %4074 = vmatprep.subr.mxu0 0.0
      %4075 = vmatpush1.msra.mxu0 0.0
      %4076 = vmatprep.subr.mxu0 0.0
      %4077 = vmatpush1.msra.mxu0 0.0
      %4078 = vmatprep.subr.mxu0 0.0
      %4079 = vmatpush1.msra.mxu0 0.0
      %4080 = vmatprep.subr.mxu0 0.0
      %4081 = vmatpush1.msra.mxu0 0.0
      %4082 = vmatprep.subr.mxu0 0.0
      %4083 = vmatpush1.msra.mxu0 0.0
      %4084 = vmatprep.subr.mxu0 0.0
      %4085 = vmatpush1.msra.mxu0 0.0
      %4086 = vmatprep.mubr.f32.mxu0 0.0
      %4087 = vmatmul.mubr.f32.gmra.mrb[0].mxu0 %v3999
      %v4088 = vpop.f32.mrb[0].mxu0
      %v4089 = vadd.f32 %v3996, %v4088
      %v4090 = vpop.f32.mrb[0].mxu0
      %4091 = vmatprep.mubr.f32.mxu0 0.0
      %4092 = vmatmul.mubr.f32.gmra.mrb[0].mxu0 %v4002
      %v4093 = vpop.f32.mrb[0].mxu0
      %v4094 = vadd.f32 %v3996, %v4093
      %v4095 = vpop.f32.mrb[0].mxu0
      %4096 = vmatprep.mubr.f32.mxu0 0.0
      %4097 = vmatmul.mubr.f32.gmra.mrb[0].mxu0 %v4005
      %v4098 = vpop.f32.mrb[0].mxu0
      %v4099 = vadd.f32 %v3996, %v4098
      %v4100 = vpop.f32.mrb[0].mxu0
      %4101 = vmatprep.mubr.f32.mxu0 0.0
      %4102 = vmatmul.mubr.f32.gmra.mrb[0].mxu0 %v4008
      %v4103 = vpop.f32.mrb[0].mxu0
      %v4104 = vadd.f32 %v3996, %v4103
      %v4105 = vpop.f32.mrb[0].mxu0
      %4106 = vmatprep.mubr.f32.mxu0 0.0
      %4107 = vmatmul.mubr.f32.gmra.mrb[0].mxu0 %v4011
      %v4108 = vpop.f32.mrb[0].mxu0
      %v4109 = vadd.f32 %v3996, %v4108
      %v4110 = vpop.f32.mrb[0].mxu0
      %4111 = vmatprep.mubr.f32.mxu0 0.0
      %4112 = vmatmul.mubr.f32.gmra.mrb[0].mxu0 %v4014
      %v4113 = vpop.f32.mrb[0].mxu0
      %v4114 = vadd.f32 %v3996, %v4113
      %v4115 = vpop.f32.mrb[0].mxu0
      %4116 = vmatprep.mubr.f32.mxu0 0.0
      %4117 = vmatmul.mubr.f32.gmra.mrb[0].mxu0 %v4017
      %v4118 = vpop.f32.mrb[0].mxu0
      %v4119 = vadd.f32 %v3996, %v4118
      %v4120 = vpop.f32.mrb[0].mxu0
      %4121 = vmatprep.mubr.f32.mxu0 0.0
      %4122 = vmatmul.mubr.f32.gmra.mrb[0].mxu0 %v4020
      %v4123 = vpop.f32.mrb[0].mxu0
      %v4124 = vadd.f32 %v3996, %v4123
      %v4125 = vpop.f32.mrb[0].mxu0
      %4126 = vdwg.mxu0
      %v4127 = vld [vmem:[%s3] sm:$0x1]
      %v4129 = vlaneseq
      %v4130 = vshrl.u32 %v4129, 7
      %v4131 = vsub.s32 0, %v4130
      %v4132 = vrot.slane %v4127, %v4131
      %v4134 = vmul.f32 %v4132, %v4089
      %v4135 = vmul.f32 %v4132, %v4094
      %v4136 = vmul.f32 %v4132, %v4099
      %v4137 = vmul.f32 %v4132, %v4104
      %v4138 = vmul.f32 %v4132, %v4109
      %v4139 = vmul.f32 %v4132, %v4114
      %v4140 = vmul.f32 %v4132, %v4119
      %v4141 = vmul.f32 %v4132, %v4124
      %v4142 = vadd.f32 %v785, %v4134
      %v4143 = vadd.f32 %v786, %v4135
      %v4144 = vadd.f32 %v787, %v4136
      %v4145 = vadd.f32 %v788, %v4137
      %v4146 = vadd.f32 %v789, %v4138
      %v4147 = vadd.f32 %v790, %v4139
      %v4148 = vadd.f32 %v791, %v4140
      %v4149 = vadd.f32 %v792, %v4141
      %v4150 = vld [vmem:[%s2] sm:$0x1]
      %v4151 = vmul.f32 %v4142, %v4142
      %v4152 = vmul.f32 %v4143, %v4143
      %v4153 = vmul.f32 %v4144, %v4144
      %v4154 = vmul.f32 %v4145, %v4145
      %v4155 = vmul.f32 %v4146, %v4146
      %v4156 = vmul.f32 %v4147, %v4147
      %v4157 = vmul.f32 %v4148, %v4148
      %v4158 = vmul.f32 %v4149, %v4149
      %v4159 = vsel %vm657, %v4151, 0.0
      %4160 = vadd.xlane.f32.xlu0 %v4159
      %v4161 = vpop.xlane.xlu0 %4160
      %v4162 = vsel %vm657, %v4152, 0.0
      %4163 = vadd.xlane.f32.xlu0 %v4162
      %v4164 = vpop.xlane.xlu0 %4163
      %v4165 = vsel %vm657, %v4153, 0.0
      %4166 = vadd.xlane.f32.xlu0 %v4165
      %v4167 = vpop.xlane.xlu0 %4166
      %v4168 = vsel %vm657, %v4154, 0.0
      %4169 = vadd.xlane.f32.xlu0 %v4168
      %v4170 = vpop.xlane.xlu0 %4169
      %v4171 = vsel %vm657, %v4155, 0.0
      %4172 = vadd.xlane.f32.xlu0 %v4171
      %v4173 = vpop.xlane.xlu0 %4172
      %v4174 = vsel %vm657, %v4156, 0.0
      %4175 = vadd.xlane.f32.xlu0 %v4174
      %v4176 = vpop.xlane.xlu0 %4175
      %v4177 = vsel %vm657, %v4157, 0.0
      %4178 = vadd.xlane.f32.xlu0 %v4177
      %v4179 = vpop.xlane.xlu0 %4178
      %v4180 = vsel %vm657, %v4158, 0.0
      %4181 = vadd.xlane.f32.xlu0 %v4180
      %v4182 = vpop.xlane.xlu0 %4181
      %v4183 = vmul.f32 %v4161, %v826
      %v4184 = vmul.f32 %v4164, %v826
      %v4185 = vmul.f32 %v4167, %v826
      %v4186 = vmul.f32 %v4170, %v826
      %v4187 = vmul.f32 %v4173, %v826
      %v4188 = vmul.f32 %v4176, %v826
      %v4189 = vmul.f32 %v4179, %v826
      %v4190 = vmul.f32 %v4182, %v826
      %v4191 = vadd.f32 %v4183, 1.1920929e-07
      %v4192 = vadd.f32 %v4184, 1.1920929e-07
      %v4193 = vadd.f32 %v4185, 1.1920929e-07
      %v4194 = vadd.f32 %v4186, 1.1920929e-07
      %v4195 = vadd.f32 %v4187, 1.1920929e-07
      %v4196 = vadd.f32 %v4188, 1.1920929e-07
      %v4197 = vadd.f32 %v4189, 1.1920929e-07
      %v4198 = vadd.f32 %v4190, 1.1920929e-07
      %v4199 = vrsqrt.pop %v4191
      %v4200 = vrsqrt.pop %v4192
      %v4201 = vrsqrt.pop %v4193
      %v4202 = vrsqrt.pop %v4194
      %v4203 = vrsqrt.pop %v4195
      %v4204 = vrsqrt.pop %v4196
      %v4205 = vrsqrt.pop %v4197
      %v4206 = vrsqrt.pop %v4198
      %v4207 = vmul.f32 %v4142, %v4199
      %v4208 = vmul.f32 %v4143, %v4200
      %v4209 = vmul.f32 %v4144, %v4201
      %v4210 = vmul.f32 %v4145, %v4202
      %v4211 = vmul.f32 %v4146, %v4203
      %v4212 = vmul.f32 %v4147, %v4204
      %v4213 = vmul.f32 %v4148, %v4205
      %v4214 = vmul.f32 %v4149, %v4206
      %v4216 = vlaneseq
      %v4217 = vshrl.u32 %v4216, 7
      %v4218 = vsub.s32 0, %v4217
      %v4219 = vrot.slane %v4150, %v4218
      %v4221 = vmul.f32 %v4207, %v4219
      %v4222 = vmul.f32 %v4208, %v4219
      %v4223 = vmul.f32 %v4209, %v4219
      %v4224 = vmul.f32 %v4210, %v4219
      %v4225 = vmul.f32 %v4211, %v4219
      %v4226 = vmul.f32 %v4212, %v4219
      %v4227 = vmul.f32 %v4213, %v4219
      %v4228 = vmul.f32 %v4214, %v4219
      %4229 = vst.msk [vmem:[%s873 + $0x8] sm:$0xff] %vm657, %v4221
      %4230 = vst.msk [vmem:[%s873 + $0x20] sm:$0xff] %vm657, %v4222
      %4231 = vst.msk [vmem:[%s873 + $0x38] sm:$0xff] %vm657, %v4223
      %4232 = vst.msk [vmem:[%s873 + $0x50] sm:$0xff] %vm657, %v4224
      %4233 = vst.msk [vmem:[%s873 + $0x68] sm:$0xff] %vm657, %v4225
      %4234 = vst.msk [vmem:[%s873 + $0x80] sm:$0xff] %vm657, %v4226
      %4235 = vst.msk [vmem:[%s873 + $0x98] sm:$0xff] %vm657, %v4227
      %4236 = vst.msk [vmem:[%s873 + $0xb0] sm:$0xff] %vm657, %v4228
      %v4237 = vld [vmem:[#allocation2] sm:$0xff]
      %v4238 = vld [vmem:[#allocation2 + $0x8] sm:$0xff]
      %v4239 = vld [vmem:[#allocation2 + $0x10] sm:$0xff]
      %v4240 = vld [vmem:[#allocation2 + $0x18] sm:$0xff]
      %v4241 = vld [vmem:[#allocation2 + $0x20] sm:$0xff]
      %v4242 = vld [vmem:[#allocation2 + $0x28] sm:$0xff]
      %v4243 = vld [vmem:[#allocation2 + $0x30] sm:$0xff]
      %v4244 = vld [vmem:[#allocation2 + $0x38] sm:$0xff]
      %v4245 = vld [vmem:[#allocation2 + $0x40] sm:$0xff]
      %v4246 = vld [vmem:[#allocation2 + $0x48] sm:$0xff]
      %v4247 = vld [vmem:[#allocation2 + $0x50] sm:$0xff]
      %v4248 = vld [vmem:[#allocation2 + $0x58] sm:$0xff]
      %v4249 = vld [vmem:[#allocation2 + $0x60] sm:$0xff]
      %v4250 = vld [vmem:[#allocation2 + $0x68] sm:$0xff]
      %v4251 = vld [vmem:[#allocation2 + $0x70] sm:$0xff]
      %v4252 = vld [vmem:[#allocation2 + $0x78] sm:$0xff]
      %v4253 = vld [vmem:[#allocation2 + $0x80] sm:$0xff]
      %v4254 = vld [vmem:[#allocation2 + $0x88] sm:$0xff]
      %v4255 = vld [vmem:[#allocation2 + $0x90] sm:$0xff]
      %v4256 = vld [vmem:[#allocation2 + $0x98] sm:$0xff]
      %v4257 = vld [vmem:[#allocation2 + $0xa0] sm:$0xff]
      %v4258 = vld [vmem:[#allocation2 + $0xa8] sm:$0xff]
      %v4259 = vld [vmem:[#allocation2 + $0xb0] sm:$0xff]
      %v4260 = vld [vmem:[#allocation2 + $0xb8] sm:$0xff]
      %v4261 = vld [vmem:[#allocation2 + $0xc0] sm:$0xff]
      %v4262 = vld [vmem:[#allocation2 + $0xc8] sm:$0xff]
      %v4263 = vld [vmem:[#allocation2 + $0xd0] sm:$0xff]
      %v4264 = vld [vmem:[#allocation2 + $0xd8] sm:$0xff]
      %v4265 = vld [vmem:[#allocation2 + $0xe0] sm:$0xff]
      %v4266 = vld [vmem:[#allocation2 + $0xe8] sm:$0xff]
      %v4267 = vld [vmem:[#allocation2 + $0xf0] sm:$0xff]
      %v4268 = vld [vmem:[#allocation2 + $0xf8] sm:$0xff]
      %v4269 = vld [vmem:[#allocation2 + $0x100] sm:$0xff]
      %v4270 = vld [vmem:[#allocation2 + $0x108] sm:$0xff]
      %v4271 = vld [vmem:[#allocation2 + $0x110] sm:$0xff]
      %v4272 = vld [vmem:[#allocation2 + $0x118] sm:$0xff]
      %v4273 = vld [vmem:[%s12] sm:$0x1]
      %v4274 = vlaneseq
      %v4275 = vshrl.u32 %v4274, 7
      %v4276 = vsub.s32 0, %v4275
      %v4277 = vrot.slane %v4273, %v4276
      %v4278 = vmul.f32 %v4237, %v4277
      %v4279 = vmul.f32 %v4238, %v4277
      %v4280 = vmul.f32 %v4240, %v4277
      %v4281 = vmul.f32 %v4241, %v4277
      %v4282 = vmul.f32 %v4243, %v4277
      %v4283 = vmul.f32 %v4244, %v4277
      %v4284 = vmul.f32 %v4246, %v4277
      %v4285 = vmul.f32 %v4247, %v4277
      %v4286 = vmul.f32 %v4249, %v4277
      %v4287 = vmul.f32 %v4250, %v4277
      %v4288 = vmul.f32 %v4252, %v4277
      %v4289 = vmul.f32 %v4253, %v4277
      %v4290 = vmul.f32 %v4255, %v4277
      %v4291 = vmul.f32 %v4256, %v4277
      %v4292 = vmul.f32 %v4258, %v4277
      %v4293 = vmul.f32 %v4259, %v4277
      %v4294 = vld [vmem:[%s12 + $0x1] sm:$0x1]
      %v4295 = vlaneseq
      %v4296 = vshrl.u32 %v4295, 7
      %v4297 = vsub.s32 0, %v4296
      %v4298 = vrot.slane %v4294, %v4297
      %v4299 = vmul.f32 %v4237, %v4298
      %v4300 = vmul.f32 %v4238, %v4298
      %v4301 = vmul.f32 %v4240, %v4298
      %v4302 = vmul.f32 %v4241, %v4298
      %v4303 = vmul.f32 %v4243, %v4298
      %v4304 = vmul.f32 %v4244, %v4298
      %v4305 = vmul.f32 %v4246, %v4298
      %v4306 = vmul.f32 %v4247, %v4298
      %v4307 = vmul.f32 %v4249, %v4298
      %v4308 = vmul.f32 %v4250, %v4298
      %v4309 = vmul.f32 %v4252, %v4298
      %v4310 = vmul.f32 %v4253, %v4298
      %v4311 = vmul.f32 %v4255, %v4298
      %v4312 = vmul.f32 %v4256, %v4298
      %v4313 = vmul.f32 %v4258, %v4298
      %v4314 = vmul.f32 %v4259, %v4298
      %v4331 = vrot.slane %v4299, 1
      %v4332 = vrot.slane %v4300, 1
      %v4333 = vsel %vm976, %v4331, %v4332
      %v4334 = vrot.slane %v4301, 1
      %v4335 = vrot.slane %v4302, 1
      %v4336 = vsel %vm976, %v4334, %v4335
      %v4337 = vrot.slane %v4303, 1
      %v4338 = vrot.slane %v4304, 1
      %v4339 = vsel %vm976, %v4337, %v4338
      %v4340 = vrot.slane %v4305, 1
      %v4341 = vrot.slane %v4306, 1
      %v4342 = vsel %vm976, %v4340, %v4341
      %v4343 = vrot.slane %v4307, 1
      %v4344 = vrot.slane %v4308, 1
      %v4345 = vsel %vm976, %v4343, %v4344
      %v4346 = vrot.slane %v4309, 1
      %v4347 = vrot.slane %v4310, 1
      %v4348 = vsel %vm976, %v4346, %v4347
      %v4349 = vrot.slane %v4311, 1
      %v4350 = vrot.slane %v4312, 1
      %v4351 = vsel %vm976, %v4349, %v4350
      %v4352 = vrot.slane %v4313, 1
      %v4353 = vrot.slane %v4314, 1
      %v4354 = vsel %vm976, %v4352, %v4353
      %v4371 = vadd.f32 %v4278, %v4333
      %v4372 = vadd.f32 %v4279, %v4332
      %v4373 = vadd.f32 %v4280, %v4336
      %v4374 = vadd.f32 %v4281, %v4335
      %v4375 = vadd.f32 %v4282, %v4339
      %v4376 = vadd.f32 %v4283, %v4338
      %v4377 = vadd.f32 %v4284, %v4342
      %v4378 = vadd.f32 %v4285, %v4341
      %v4379 = vadd.f32 %v4286, %v4345
      %v4380 = vadd.f32 %v4287, %v4344
      %v4381 = vadd.f32 %v4288, %v4348
      %v4382 = vadd.f32 %v4289, %v4347
      %v4383 = vadd.f32 %v4290, %v4351
      %v4384 = vadd.f32 %v4291, %v4350
      %v4385 = vadd.f32 %v4292, %v4354
      %v4386 = vadd.f32 %v4293, %v4353
      %v4387 = vld [vmem:[%s12 + $0x2] sm:$0x1]
      %v4388 = vlaneseq
      %v4389 = vshrl.u32 %v4388, 7
      %v4390 = vsub.s32 0, %v4389
      %v4391 = vrot.slane %v4387, %v4390
      %v4392 = vmul.f32 %v4238, %v4391
      %v4393 = vmul.f32 %v4241, %v4391
      %v4394 = vmul.f32 %v4244, %v4391
      %v4395 = vmul.f32 %v4247, %v4391
      %v4396 = vmul.f32 %v4250, %v4391
      %v4397 = vmul.f32 %v4253, %v4391
      %v4398 = vmul.f32 %v4256, %v4391
      %v4399 = vmul.f32 %v4259, %v4391
      %v4408 = vrot.slane %v4392, 2
      %v4409 = vrot.slane %v4393, 2
      %v4410 = vrot.slane %v4394, 2
      %v4411 = vrot.slane %v4395, 2
      %v4412 = vrot.slane %v4396, 2
      %v4413 = vrot.slane %v4397, 2
      %v4414 = vrot.slane %v4398, 2
      %v4415 = vrot.slane %v4399, 2
      %v4424 = vadd.f32 %v4371, %v4408
      %v4425 = vadd.f32 %v4372, %v4408
      %v4426 = vadd.f32 %v4373, %v4409
      %v4427 = vadd.f32 %v4374, %v4409
      %v4428 = vadd.f32 %v4375, %v4410
      %v4429 = vadd.f32 %v4376, %v4410
      %v4430 = vadd.f32 %v4377, %v4411
      %v4431 = vadd.f32 %v4378, %v4411
      %v4432 = vadd.f32 %v4379, %v4412
      %v4433 = vadd.f32 %v4380, %v4412
      %v4434 = vadd.f32 %v4381, %v4413
      %v4435 = vadd.f32 %v4382, %v4413
      %v4436 = vadd.f32 %v4383, %v4414
      %v4437 = vadd.f32 %v4384, %v4414
      %v4438 = vadd.f32 %v4385, %v4415
      %v4439 = vadd.f32 %v4386, %v4415
      %v4440 = vld [vmem:[%s12 + $0x3] sm:$0x1]
      %v4441 = vlaneseq
      %v4442 = vshrl.u32 %v4441, 7
      %v4443 = vsub.s32 0, %v4442
      %v4444 = vrot.slane %v4440, %v4443
      %v4445 = vmul.f32 %v4238, %v4444
      %v4446 = vmul.f32 %v4239, %v4444
      %v4447 = vmul.f32 %v4241, %v4444
      %v4448 = vmul.f32 %v4242, %v4444
      %v4449 = vmul.f32 %v4244, %v4444
      %v4450 = vmul.f32 %v4245, %v4444
      %v4451 = vmul.f32 %v4247, %v4444
      %v4452 = vmul.f32 %v4248, %v4444
      %v4453 = vmul.f32 %v4250, %v4444
      %v4454 = vmul.f32 %v4251, %v4444
      %v4455 = vmul.f32 %v4253, %v4444
      %v4456 = vmul.f32 %v4254, %v4444
      %v4457 = vmul.f32 %v4256, %v4444
      %v4458 = vmul.f32 %v4257, %v4444
      %v4459 = vmul.f32 %v4259, %v4444
      %v4460 = vmul.f32 %v4260, %v4444
      %v4477 = vrot.slane %v4445, 3
      %v4478 = vrot.slane %v4446, 3
      %v4479 = vsel %vm1123, %v4477, %v4478
      %v4480 = vrot.slane %v4447, 3
      %v4481 = vrot.slane %v4448, 3
      %v4482 = vsel %vm1123, %v4480, %v4481
      %v4483 = vrot.slane %v4449, 3
      %v4484 = vrot.slane %v4450, 3
      %v4485 = vsel %vm1123, %v4483, %v4484
      %v4486 = vrot.slane %v4451, 3
      %v4487 = vrot.slane %v4452, 3
      %v4488 = vsel %vm1123, %v4486, %v4487
      %v4489 = vrot.slane %v4453, 3
      %v4490 = vrot.slane %v4454, 3
      %v4491 = vsel %vm1123, %v4489, %v4490
      %v4492 = vrot.slane %v4455, 3
      %v4493 = vrot.slane %v4456, 3
      %v4494 = vsel %vm1123, %v4492, %v4493
      %v4495 = vrot.slane %v4457, 3
      %v4496 = vrot.slane %v4458, 3
      %v4497 = vsel %vm1123, %v4495, %v4496
      %v4498 = vrot.slane %v4459, 3
      %v4499 = vrot.slane %v4460, 3
      %v4500 = vsel %vm1123, %v4498, %v4499
      %v4517 = vadd.f32 %v4424, %v4477
      %v4518 = vadd.f32 %v4425, %v4479
      %v4519 = vadd.f32 %v4426, %v4480
      %v4520 = vadd.f32 %v4427, %v4482
      %v4521 = vadd.f32 %v4428, %v4483
      %v4522 = vadd.f32 %v4429, %v4485
      %v4523 = vadd.f32 %v4430, %v4486
      %v4524 = vadd.f32 %v4431, %v4488
      %v4525 = vadd.f32 %v4432, %v4489
      %v4526 = vadd.f32 %v4433, %v4491
      %v4527 = vadd.f32 %v4434, %v4492
      %v4528 = vadd.f32 %v4435, %v4494
      %v4529 = vadd.f32 %v4436, %v4495
      %v4530 = vadd.f32 %v4437, %v4497
      %v4531 = vadd.f32 %v4438, %v4498
      %v4532 = vadd.f32 %v4439, %v4500
      %v4533 = vld [vmem:[%s12 + $0x4] sm:$0x1]
      %v4534 = vlaneseq
      %v4535 = vshrl.u32 %v4534, 7
      %v4536 = vsub.s32 0, %v4535
      %v4537 = vrot.slane %v4533, %v4536
      %v4538 = vmul.f32 %v4238, %v4537
      %v4539 = vmul.f32 %v4239, %v4537
      %v4540 = vmul.f32 %v4241, %v4537
      %v4541 = vmul.f32 %v4242, %v4537
      %v4542 = vmul.f32 %v4244, %v4537
      %v4543 = vmul.f32 %v4245, %v4537
      %v4544 = vmul.f32 %v4247, %v4537
      %v4545 = vmul.f32 %v4248, %v4537
      %v4546 = vmul.f32 %v4250, %v4537
      %v4547 = vmul.f32 %v4251, %v4537
      %v4548 = vmul.f32 %v4253, %v4537
      %v4549 = vmul.f32 %v4254, %v4537
      %v4550 = vmul.f32 %v4256, %v4537
      %v4551 = vmul.f32 %v4257, %v4537
      %v4552 = vmul.f32 %v4259, %v4537
      %v4553 = vmul.f32 %v4260, %v4537
      %v4570 = vrot.slane %v4538, 4
      %v4571 = vrot.slane %v4539, 4
      %v4572 = vsel %vm1217, %v4570, %v4571
      %v4573 = vrot.slane %v4540, 4
      %v4574 = vrot.slane %v4541, 4
      %v4575 = vsel %vm1217, %v4573, %v4574
      %v4576 = vrot.slane %v4542, 4
      %v4577 = vrot.slane %v4543, 4
      %v4578 = vsel %vm1217, %v4576, %v4577
      %v4579 = vrot.slane %v4544, 4
      %v4580 = vrot.slane %v4545, 4
      %v4581 = vsel %vm1217, %v4579, %v4580
      %v4582 = vrot.slane %v4546, 4
      %v4583 = vrot.slane %v4547, 4
      %v4584 = vsel %vm1217, %v4582, %v4583
      %v4585 = vrot.slane %v4548, 4
      %v4586 = vrot.slane %v4549, 4
      %v4587 = vsel %vm1217, %v4585, %v4586
      %v4588 = vrot.slane %v4550, 4
      %v4589 = vrot.slane %v4551, 4
      %v4590 = vsel %vm1217, %v4588, %v4589
      %v4591 = vrot.slane %v4552, 4
      %v4592 = vrot.slane %v4553, 4
      %v4593 = vsel %vm1217, %v4591, %v4592
      %v4610 = vadd.f32 %v4517, %v4570
      %v4611 = vadd.f32 %v4518, %v4572
      %v4612 = vadd.f32 %v4519, %v4573
      %v4613 = vadd.f32 %v4520, %v4575
      %v4614 = vadd.f32 %v4521, %v4576
      %v4615 = vadd.f32 %v4522, %v4578
      %v4616 = vadd.f32 %v4523, %v4579
      %v4617 = vadd.f32 %v4524, %v4581
      %v4618 = vadd.f32 %v4525, %v4582
      %v4619 = vadd.f32 %v4526, %v4584
      %v4620 = vadd.f32 %v4527, %v4585
      %v4621 = vadd.f32 %v4528, %v4587
      %v4622 = vadd.f32 %v4529, %v4588
      %v4623 = vadd.f32 %v4530, %v4590
      %v4624 = vadd.f32 %v4531, %v4591
      %v4625 = vadd.f32 %v4532, %v4593
      %s4626 = scalar_lea.vmem %s12, 8
      %v4627 = vld [vmem:[%s4626] sm:$0x1]
      %v4628 = vlaneseq
      %v4629 = vshrl.u32 %v4628, 7
      %v4630 = vsub.s32 0, %v4629
      %v4631 = vrot.slane %v4627, %v4630
      %v4632 = vmul.f32 %v4240, %v4631
      %v4633 = vmul.f32 %v4241, %v4631
      %v4634 = vmul.f32 %v4243, %v4631
      %v4635 = vmul.f32 %v4244, %v4631
      %v4636 = vmul.f32 %v4246, %v4631
      %v4637 = vmul.f32 %v4247, %v4631
      %v4638 = vmul.f32 %v4249, %v4631
      %v4639 = vmul.f32 %v4250, %v4631
      %v4640 = vmul.f32 %v4252, %v4631
      %v4641 = vmul.f32 %v4253, %v4631
      %v4642 = vmul.f32 %v4255, %v4631
      %v4643 = vmul.f32 %v4256, %v4631
      %v4644 = vmul.f32 %v4258, %v4631
      %v4645 = vmul.f32 %v4259, %v4631
      %v4646 = vmul.f32 %v4261, %v4631
      %v4647 = vmul.f32 %v4262, %v4631
      %v4648 = vadd.f32 %v4610, %v4632
      %v4649 = vadd.f32 %v4611, %v4633
      %v4650 = vadd.f32 %v4612, %v4634
      %v4651 = vadd.f32 %v4613, %v4635
      %v4652 = vadd.f32 %v4614, %v4636
      %v4653 = vadd.f32 %v4615, %v4637
      %v4654 = vadd.f32 %v4616, %v4638
      %v4655 = vadd.f32 %v4617, %v4639
      %v4656 = vadd.f32 %v4618, %v4640
      %v4657 = vadd.f32 %v4619, %v4641
      %v4658 = vadd.f32 %v4620, %v4642
      %v4659 = vadd.f32 %v4621, %v4643
      %v4660 = vadd.f32 %v4622, %v4644
      %v4661 = vadd.f32 %v4623, %v4645
      %v4662 = vadd.f32 %v4624, %v4646
      %v4663 = vadd.f32 %v4625, %v4647
      %v4664 = vld [vmem:[%s4626 + $0x1] sm:$0x1]
      %v4665 = vlaneseq
      %v4666 = vshrl.u32 %v4665, 7
      %v4667 = vsub.s32 0, %v4666
      %v4668 = vrot.slane %v4664, %v4667
      %v4669 = vmul.f32 %v4240, %v4668
      %v4670 = vmul.f32 %v4241, %v4668
      %v4671 = vmul.f32 %v4243, %v4668
      %v4672 = vmul.f32 %v4244, %v4668
      %v4673 = vmul.f32 %v4246, %v4668
      %v4674 = vmul.f32 %v4247, %v4668
      %v4675 = vmul.f32 %v4249, %v4668
      %v4676 = vmul.f32 %v4250, %v4668
      %v4677 = vmul.f32 %v4252, %v4668
      %v4678 = vmul.f32 %v4253, %v4668
      %v4679 = vmul.f32 %v4255, %v4668
      %v4680 = vmul.f32 %v4256, %v4668
      %v4681 = vmul.f32 %v4258, %v4668
      %v4682 = vmul.f32 %v4259, %v4668
      %v4683 = vmul.f32 %v4261, %v4668
      %v4684 = vmul.f32 %v4262, %v4668
      %v4701 = vrot.slane %v4669, 1
      %v4702 = vrot.slane %v4670, 1
      %v4703 = vsel %vm976, %v4701, %v4702
      %v4704 = vrot.slane %v4671, 1
      %v4705 = vrot.slane %v4672, 1
      %v4706 = vsel %vm976, %v4704, %v4705
      %v4707 = vrot.slane %v4673, 1
      %v4708 = vrot.slane %v4674, 1
      %v4709 = vsel %vm976, %v4707, %v4708
      %v4710 = vrot.slane %v4675, 1
      %v4711 = vrot.slane %v4676, 1
      %v4712 = vsel %vm976, %v4710, %v4711
      %v4713 = vrot.slane %v4677, 1
      %v4714 = vrot.slane %v4678, 1
      %v4715 = vsel %vm976, %v4713, %v4714
      %v4716 = vrot.slane %v4679, 1
      %v4717 = vrot.slane %v4680, 1
      %v4718 = vsel %vm976, %v4716, %v4717
      %v4719 = vrot.slane %v4681, 1
      %v4720 = vrot.slane %v4682, 1
      %v4721 = vsel %vm976, %v4719, %v4720
      %v4722 = vrot.slane %v4683, 1
      %v4723 = vrot.slane %v4684, 1
      %v4724 = vsel %vm976, %v4722, %v4723
      %v4741 = vadd.f32 %v4648, %v4703
      %v4742 = vadd.f32 %v4649, %v4702
      %v4743 = vadd.f32 %v4650, %v4706
      %v4744 = vadd.f32 %v4651, %v4705
      %v4745 = vadd.f32 %v4652, %v4709
      %v4746 = vadd.f32 %v4653, %v4708
      %v4747 = vadd.f32 %v4654, %v4712
      %v4748 = vadd.f32 %v4655, %v4711
      %v4749 = vadd.f32 %v4656, %v4715
      %v4750 = vadd.f32 %v4657, %v4714
      %v4751 = vadd.f32 %v4658, %v4718
      %v4752 = vadd.f32 %v4659, %v4717
      %v4753 = vadd.f32 %v4660, %v4721
      %v4754 = vadd.f32 %v4661, %v4720
      %v4755 = vadd.f32 %v4662, %v4724
      %v4756 = vadd.f32 %v4663, %v4723
      %v4757 = vld [vmem:[%s4626 + $0x2] sm:$0x1]
      %v4758 = vlaneseq
      %v4759 = vshrl.u32 %v4758, 7
      %v4760 = vsub.s32 0, %v4759
      %v4761 = vrot.slane %v4757, %v4760
      %v4762 = vmul.f32 %v4241, %v4761
      %v4763 = vmul.f32 %v4244, %v4761
      %v4764 = vmul.f32 %v4247, %v4761
      %v4765 = vmul.f32 %v4250, %v4761
      %v4766 = vmul.f32 %v4253, %v4761
      %v4767 = vmul.f32 %v4256, %v4761
      %v4768 = vmul.f32 %v4259, %v4761
      %v4769 = vmul.f32 %v4262, %v4761
      %v4778 = vrot.slane %v4762, 2
      %v4779 = vrot.slane %v4763, 2
      %v4780 = vrot.slane %v4764, 2
      %v4781 = vrot.slane %v4765, 2
      %v4782 = vrot.slane %v4766, 2
      %v4783 = vrot.slane %v4767, 2
      %v4784 = vrot.slane %v4768, 2
      %v4785 = vrot.slane %v4769, 2
      %v4794 = vadd.f32 %v4741, %v4778
      %v4795 = vadd.f32 %v4742, %v4778
      %v4796 = vadd.f32 %v4743, %v4779
      %v4797 = vadd.f32 %v4744, %v4779
      %v4798 = vadd.f32 %v4745, %v4780
      %v4799 = vadd.f32 %v4746, %v4780
      %v4800 = vadd.f32 %v4747, %v4781
      %v4801 = vadd.f32 %v4748, %v4781
      %v4802 = vadd.f32 %v4749, %v4782
      %v4803 = vadd.f32 %v4750, %v4782
      %v4804 = vadd.f32 %v4751, %v4783
      %v4805 = vadd.f32 %v4752, %v4783
      %v4806 = vadd.f32 %v4753, %v4784
      %v4807 = vadd.f32 %v4754, %v4784
      %v4808 = vadd.f32 %v4755, %v4785
      %v4809 = vadd.f32 %v4756, %v4785
      %v4810 = vld [vmem:[%s4626 + $0x3] sm:$0x1]
      %v4811 = vlaneseq
      %v4812 = vshrl.u32 %v4811, 7
      %v4813 = vsub.s32 0, %v4812
      %v4814 = vrot.slane %v4810, %v4813
      %v4815 = vmul.f32 %v4241, %v4814
      %v4816 = vmul.f32 %v4242, %v4814
      %v4817 = vmul.f32 %v4244, %v4814
      %v4818 = vmul.f32 %v4245, %v4814
      %v4819 = vmul.f32 %v4247, %v4814
      %v4820 = vmul.f32 %v4248, %v4814
      %v4821 = vmul.f32 %v4250, %v4814
      %v4822 = vmul.f32 %v4251, %v4814
      %v4823 = vmul.f32 %v4253, %v4814
      %v4824 = vmul.f32 %v4254, %v4814
      %v4825 = vmul.f32 %v4256, %v4814
      %v4826 = vmul.f32 %v4257, %v4814
      %v4827 = vmul.f32 %v4259, %v4814
      %v4828 = vmul.f32 %v4260, %v4814
      %v4829 = vmul.f32 %v4262, %v4814
      %v4830 = vmul.f32 %v4263, %v4814
      %v4847 = vrot.slane %v4815, 3
      %v4848 = vrot.slane %v4816, 3
      %v4849 = vsel %vm1123, %v4847, %v4848
      %v4850 = vrot.slane %v4817, 3
      %v4851 = vrot.slane %v4818, 3
      %v4852 = vsel %vm1123, %v4850, %v4851
      %v4853 = vrot.slane %v4819, 3
      %v4854 = vrot.slane %v4820, 3
      %v4855 = vsel %vm1123, %v4853, %v4854
      %v4856 = vrot.slane %v4821, 3
      %v4857 = vrot.slane %v4822, 3
      %v4858 = vsel %vm1123, %v4856, %v4857
      %v4859 = vrot.slane %v4823, 3
      %v4860 = vrot.slane %v4824, 3
      %v4861 = vsel %vm1123, %v4859, %v4860
      %v4862 = vrot.slane %v4825, 3
      %v4863 = vrot.slane %v4826, 3
      %v4864 = vsel %vm1123, %v4862, %v4863
      %v4865 = vrot.slane %v4827, 3
      %v4866 = vrot.slane %v4828, 3
      %v4867 = vsel %vm1123, %v4865, %v4866
      %v4868 = vrot.slane %v4829, 3
      %v4869 = vrot.slane %v4830, 3
      %v4870 = vsel %vm1123, %v4868, %v4869
      %v4887 = vadd.f32 %v4794, %v4847
      %v4888 = vadd.f32 %v4795, %v4849
      %v4889 = vadd.f32 %v4796, %v4850
      %v4890 = vadd.f32 %v4797, %v4852
      %v4891 = vadd.f32 %v4798, %v4853
      %v4892 = vadd.f32 %v4799, %v4855
      %v4893 = vadd.f32 %v4800, %v4856
      %v4894 = vadd.f32 %v4801, %v4858
      %v4895 = vadd.f32 %v4802, %v4859
      %v4896 = vadd.f32 %v4803, %v4861
      %v4897 = vadd.f32 %v4804, %v4862
      %v4898 = vadd.f32 %v4805, %v4864
      %v4899 = vadd.f32 %v4806, %v4865
      %v4900 = vadd.f32 %v4807, %v4867
      %v4901 = vadd.f32 %v4808, %v4868
      %v4902 = vadd.f32 %v4809, %v4870
      %v4903 = vld [vmem:[%s4626 + $0x4] sm:$0x1]
      %v4904 = vlaneseq
      %v4905 = vshrl.u32 %v4904, 7
      %v4906 = vsub.s32 0, %v4905
      %v4907 = vrot.slane %v4903, %v4906
      %v4908 = vmul.f32 %v4241, %v4907
      %v4909 = vmul.f32 %v4242, %v4907
      %v4910 = vmul.f32 %v4244, %v4907
      %v4911 = vmul.f32 %v4245, %v4907
      %v4912 = vmul.f32 %v4247, %v4907
      %v4913 = vmul.f32 %v4248, %v4907
      %v4914 = vmul.f32 %v4250, %v4907
      %v4915 = vmul.f32 %v4251, %v4907
      %v4916 = vmul.f32 %v4253, %v4907
      %v4917 = vmul.f32 %v4254, %v4907
      %v4918 = vmul.f32 %v4256, %v4907
      %v4919 = vmul.f32 %v4257, %v4907
      %v4920 = vmul.f32 %v4259, %v4907
      %v4921 = vmul.f32 %v4260, %v4907
      %v4922 = vmul.f32 %v4262, %v4907
      %v4923 = vmul.f32 %v4263, %v4907
      %v4940 = vrot.slane %v4908, 4
      %v4941 = vrot.slane %v4909, 4
      %v4942 = vsel %vm1217, %v4940, %v4941
      %v4943 = vrot.slane %v4910, 4
      %v4944 = vrot.slane %v4911, 4
      %v4945 = vsel %vm1217, %v4943, %v4944
      %v4946 = vrot.slane %v4912, 4
      %v4947 = vrot.slane %v4913, 4
      %v4948 = vsel %vm1217, %v4946, %v4947
      %v4949 = vrot.slane %v4914, 4
      %v4950 = vrot.slane %v4915, 4
      %v4951 = vsel %vm1217, %v4949, %v4950
      %v4952 = vrot.slane %v4916, 4
      %v4953 = vrot.slane %v4917, 4
      %v4954 = vsel %vm1217, %v4952, %v4953
      %v4955 = vrot.slane %v4918, 4
      %v4956 = vrot.slane %v4919, 4
      %v4957 = vsel %vm1217, %v4955, %v4956
      %v4958 = vrot.slane %v4920, 4
      %v4959 = vrot.slane %v4921, 4
      %v4960 = vsel %vm1217, %v4958, %v4959
      %v4961 = vrot.slane %v4922, 4
      %v4962 = vrot.slane %v4923, 4
      %v4963 = vsel %vm1217, %v4961, %v4962
      %v4980 = vadd.f32 %v4887, %v4940
      %v4981 = vadd.f32 %v4888, %v4942
      %v4982 = vadd.f32 %v4889, %v4943
      %v4983 = vadd.f32 %v4890, %v4945
      %v4984 = vadd.f32 %v4891, %v4946
      %v4985 = vadd.f32 %v4892, %v4948
      %v4986 = vadd.f32 %v4893, %v4949
      %v4987 = vadd.f32 %v4894, %v4951
      %v4988 = vadd.f32 %v4895, %v4952
      %v4989 = vadd.f32 %v4896, %v4954
      %v4990 = vadd.f32 %v4897, %v4955
      %v4991 = vadd.f32 %v4898, %v4957
      %v4992 = vadd.f32 %v4899, %v4958
      %v4993 = vadd.f32 %v4900, %v4960
      %v4994 = vadd.f32 %v4901, %v4961
      %v4995 = vadd.f32 %v4902, %v4963
      %s4996 = scalar_lea.vmem %s12, 16
      %v4997 = vld [vmem:[%s4996] sm:$0x1]
      %v4998 = vlaneseq
      %v4999 = vshrl.u32 %v4998, 7
      %v5000 = vsub.s32 0, %v4999
      %v5001 = vrot.slane %v4997, %v5000
      %v5002 = vmul.f32 %v4243, %v5001
      %v5003 = vmul.f32 %v4244, %v5001
      %v5004 = vmul.f32 %v4246, %v5001
      %v5005 = vmul.f32 %v4247, %v5001
      %v5006 = vmul.f32 %v4249, %v5001
      %v5007 = vmul.f32 %v4250, %v5001
      %v5008 = vmul.f32 %v4252, %v5001
      %v5009 = vmul.f32 %v4253, %v5001
      %v5010 = vmul.f32 %v4255, %v5001
      %v5011 = vmul.f32 %v4256, %v5001
      %v5012 = vmul.f32 %v4258, %v5001
      %v5013 = vmul.f32 %v4259, %v5001
      %v5014 = vmul.f32 %v4261, %v5001
      %v5015 = vmul.f32 %v4262, %v5001
      %v5016 = vmul.f32 %v4264, %v5001
      %v5017 = vmul.f32 %v4265, %v5001
      %v5018 = vadd.f32 %v4980, %v5002
      %v5019 = vadd.f32 %v4981, %v5003
      %v5020 = vadd.f32 %v4982, %v5004
      %v5021 = vadd.f32 %v4983, %v5005
      %v5022 = vadd.f32 %v4984, %v5006
      %v5023 = vadd.f32 %v4985, %v5007
      %v5024 = vadd.f32 %v4986, %v5008
      %v5025 = vadd.f32 %v4987, %v5009
      %v5026 = vadd.f32 %v4988, %v5010
      %v5027 = vadd.f32 %v4989, %v5011
      %v5028 = vadd.f32 %v4990, %v5012
      %v5029 = vadd.f32 %v4991, %v5013
      %v5030 = vadd.f32 %v4992, %v5014
      %v5031 = vadd.f32 %v4993, %v5015
      %v5032 = vadd.f32 %v4994, %v5016
      %v5033 = vadd.f32 %v4995, %v5017
      %v5034 = vld [vmem:[%s4996 + $0x1] sm:$0x1]
      %v5035 = vlaneseq
      %v5036 = vshrl.u32 %v5035, 7
      %v5037 = vsub.s32 0, %v5036
      %v5038 = vrot.slane %v5034, %v5037
      %v5039 = vmul.f32 %v4243, %v5038
      %v5040 = vmul.f32 %v4244, %v5038
      %v5041 = vmul.f32 %v4246, %v5038
      %v5042 = vmul.f32 %v4247, %v5038
      %v5043 = vmul.f32 %v4249, %v5038
      %v5044 = vmul.f32 %v4250, %v5038
      %v5045 = vmul.f32 %v4252, %v5038
      %v5046 = vmul.f32 %v4253, %v5038
      %v5047 = vmul.f32 %v4255, %v5038
      %v5048 = vmul.f32 %v4256, %v5038
      %v5049 = vmul.f32 %v4258, %v5038
      %v5050 = vmul.f32 %v4259, %v5038
      %v5051 = vmul.f32 %v4261, %v5038
      %v5052 = vmul.f32 %v4262, %v5038
      %v5053 = vmul.f32 %v4264, %v5038
      %v5054 = vmul.f32 %v4265, %v5038
      %v5071 = vrot.slane %v5039, 1
      %v5072 = vrot.slane %v5040, 1
      %v5073 = vsel %vm976, %v5071, %v5072
      %v5074 = vrot.slane %v5041, 1
      %v5075 = vrot.slane %v5042, 1
      %v5076 = vsel %vm976, %v5074, %v5075
      %v5077 = vrot.slane %v5043, 1
      %v5078 = vrot.slane %v5044, 1
      %v5079 = vsel %vm976, %v5077, %v5078
      %v5080 = vrot.slane %v5045, 1
      %v5081 = vrot.slane %v5046, 1
      %v5082 = vsel %vm976, %v5080, %v5081
      %v5083 = vrot.slane %v5047, 1
      %v5084 = vrot.slane %v5048, 1
      %v5085 = vsel %vm976, %v5083, %v5084
      %v5086 = vrot.slane %v5049, 1
      %v5087 = vrot.slane %v5050, 1
      %v5088 = vsel %vm976, %v5086, %v5087
      %v5089 = vrot.slane %v5051, 1
      %v5090 = vrot.slane %v5052, 1
      %v5091 = vsel %vm976, %v5089, %v5090
      %v5092 = vrot.slane %v5053, 1
      %v5093 = vrot.slane %v5054, 1
      %v5094 = vsel %vm976, %v5092, %v5093
      %v5111 = vadd.f32 %v5018, %v5073
      %v5112 = vadd.f32 %v5019, %v5072
      %v5113 = vadd.f32 %v5020, %v5076
      %v5114 = vadd.f32 %v5021, %v5075
      %v5115 = vadd.f32 %v5022, %v5079
      %v5116 = vadd.f32 %v5023, %v5078
      %v5117 = vadd.f32 %v5024, %v5082
      %v5118 = vadd.f32 %v5025, %v5081
      %v5119 = vadd.f32 %v5026, %v5085
      %v5120 = vadd.f32 %v5027, %v5084
      %v5121 = vadd.f32 %v5028, %v5088
      %v5122 = vadd.f32 %v5029, %v5087
      %v5123 = vadd.f32 %v5030, %v5091
      %v5124 = vadd.f32 %v5031, %v5090
      %v5125 = vadd.f32 %v5032, %v5094
      %v5126 = vadd.f32 %v5033, %v5093
      %v5127 = vld [vmem:[%s4996 + $0x2] sm:$0x1]
      %v5128 = vlaneseq
      %v5129 = vshrl.u32 %v5128, 7
      %v5130 = vsub.s32 0, %v5129
      %v5131 = vrot.slane %v5127, %v5130
      %v5132 = vmul.f32 %v4244, %v5131
      %v5133 = vmul.f32 %v4247, %v5131
      %v5134 = vmul.f32 %v4250, %v5131
      %v5135 = vmul.f32 %v4253, %v5131
      %v5136 = vmul.f32 %v4256, %v5131
      %v5137 = vmul.f32 %v4259, %v5131
      %v5138 = vmul.f32 %v4262, %v5131
      %v5139 = vmul.f32 %v4265, %v5131
      %v5148 = vrot.slane %v5132, 2
      %v5149 = vrot.slane %v5133, 2
      %v5150 = vrot.slane %v5134, 2
      %v5151 = vrot.slane %v5135, 2
      %v5152 = vrot.slane %v5136, 2
      %v5153 = vrot.slane %v5137, 2
      %v5154 = vrot.slane %v5138, 2
      %v5155 = vrot.slane %v5139, 2
      %v5164 = vadd.f32 %v5111, %v5148
      %v5165 = vadd.f32 %v5112, %v5148
      %v5166 = vadd.f32 %v5113, %v5149
      %v5167 = vadd.f32 %v5114, %v5149
      %v5168 = vadd.f32 %v5115, %v5150
      %v5169 = vadd.f32 %v5116, %v5150
      %v5170 = vadd.f32 %v5117, %v5151
      %v5171 = vadd.f32 %v5118, %v5151
      %v5172 = vadd.f32 %v5119, %v5152
      %v5173 = vadd.f32 %v5120, %v5152
      %v5174 = vadd.f32 %v5121, %v5153
      %v5175 = vadd.f32 %v5122, %v5153
      %v5176 = vadd.f32 %v5123, %v5154
      %v5177 = vadd.f32 %v5124, %v5154
      %v5178 = vadd.f32 %v5125, %v5155
      %v5179 = vadd.f32 %v5126, %v5155
      %v5180 = vld [vmem:[%s4996 + $0x3] sm:$0x1]
      %v5181 = vlaneseq
      %v5182 = vshrl.u32 %v5181, 7
      %v5183 = vsub.s32 0, %v5182
      %v5184 = vrot.slane %v5180, %v5183
      %v5185 = vmul.f32 %v4244, %v5184
      %v5186 = vmul.f32 %v4245, %v5184
      %v5187 = vmul.f32 %v4247, %v5184
      %v5188 = vmul.f32 %v4248, %v5184
      %v5189 = vmul.f32 %v4250, %v5184
      %v5190 = vmul.f32 %v4251, %v5184
      %v5191 = vmul.f32 %v4253, %v5184
      %v5192 = vmul.f32 %v4254, %v5184
      %v5193 = vmul.f32 %v4256, %v5184
      %v5194 = vmul.f32 %v4257, %v5184
      %v5195 = vmul.f32 %v4259, %v5184
      %v5196 = vmul.f32 %v4260, %v5184
      %v5197 = vmul.f32 %v4262, %v5184
      %v5198 = vmul.f32 %v4263, %v5184
      %v5199 = vmul.f32 %v4265, %v5184
      %v5200 = vmul.f32 %v4266, %v5184
      %v5217 = vrot.slane %v5185, 3
      %v5218 = vrot.slane %v5186, 3
      %v5219 = vsel %vm1123, %v5217, %v5218
      %v5220 = vrot.slane %v5187, 3
      %v5221 = vrot.slane %v5188, 3
      %v5222 = vsel %vm1123, %v5220, %v5221
      %v5223 = vrot.slane %v5189, 3
      %v5224 = vrot.slane %v5190, 3
      %v5225 = vsel %vm1123, %v5223, %v5224
      %v5226 = vrot.slane %v5191, 3
      %v5227 = vrot.slane %v5192, 3
      %v5228 = vsel %vm1123, %v5226, %v5227
      %v5229 = vrot.slane %v5193, 3
      %v5230 = vrot.slane %v5194, 3
      %v5231 = vsel %vm1123, %v5229, %v5230
      %v5232 = vrot.slane %v5195, 3
      %v5233 = vrot.slane %v5196, 3
      %v5234 = vsel %vm1123, %v5232, %v5233
      %v5235 = vrot.slane %v5197, 3
      %v5236 = vrot.slane %v5198, 3
      %v5237 = vsel %vm1123, %v5235, %v5236
      %v5238 = vrot.slane %v5199, 3
      %v5239 = vrot.slane %v5200, 3
      %v5240 = vsel %vm1123, %v5238, %v5239
      %v5257 = vadd.f32 %v5164, %v5217
      %v5258 = vadd.f32 %v5165, %v5219
      %v5259 = vadd.f32 %v5166, %v5220
      %v5260 = vadd.f32 %v5167, %v5222
      %v5261 = vadd.f32 %v5168, %v5223
      %v5262 = vadd.f32 %v5169, %v5225
      %v5263 = vadd.f32 %v5170, %v5226
      %v5264 = vadd.f32 %v5171, %v5228
      %v5265 = vadd.f32 %v5172, %v5229
      %v5266 = vadd.f32 %v5173, %v5231
      %v5267 = vadd.f32 %v5174, %v5232
      %v5268 = vadd.f32 %v5175, %v5234
      %v5269 = vadd.f32 %v5176, %v5235
      %v5270 = vadd.f32 %v5177, %v5237
      %v5271 = vadd.f32 %v5178, %v5238
      %v5272 = vadd.f32 %v5179, %v5240
      %v5273 = vld [vmem:[%s4996 + $0x4] sm:$0x1]
      %v5274 = vlaneseq
      %v5275 = vshrl.u32 %v5274, 7
      %v5276 = vsub.s32 0, %v5275
      %v5277 = vrot.slane %v5273, %v5276
      %v5278 = vmul.f32 %v4244, %v5277
      %v5279 = vmul.f32 %v4245, %v5277
      %v5280 = vmul.f32 %v4247, %v5277
      %v5281 = vmul.f32 %v4248, %v5277
      %v5282 = vmul.f32 %v4250, %v5277
      %v5283 = vmul.f32 %v4251, %v5277
      %v5284 = vmul.f32 %v4253, %v5277
      %v5285 = vmul.f32 %v4254, %v5277
      %v5286 = vmul.f32 %v4256, %v5277
      %v5287 = vmul.f32 %v4257, %v5277
      %v5288 = vmul.f32 %v4259, %v5277
      %v5289 = vmul.f32 %v4260, %v5277
      %v5290 = vmul.f32 %v4262, %v5277
      %v5291 = vmul.f32 %v4263, %v5277
      %v5292 = vmul.f32 %v4265, %v5277
      %v5293 = vmul.f32 %v4266, %v5277
      %v5310 = vrot.slane %v5278, 4
      %v5311 = vrot.slane %v5279, 4
      %v5312 = vsel %vm1217, %v5310, %v5311
      %v5313 = vrot.slane %v5280, 4
      %v5314 = vrot.slane %v5281, 4
      %v5315 = vsel %vm1217, %v5313, %v5314
      %v5316 = vrot.slane %v5282, 4
      %v5317 = vrot.slane %v5283, 4
      %v5318 = vsel %vm1217, %v5316, %v5317
      %v5319 = vrot.slane %v5284, 4
      %v5320 = vrot.slane %v5285, 4
      %v5321 = vsel %vm1217, %v5319, %v5320
      %v5322 = vrot.slane %v5286, 4
      %v5323 = vrot.slane %v5287, 4
      %v5324 = vsel %vm1217, %v5322, %v5323
      %v5325 = vrot.slane %v5288, 4
      %v5326 = vrot.slane %v5289, 4
      %v5327 = vsel %vm1217, %v5325, %v5326
      %v5328 = vrot.slane %v5290, 4
      %v5329 = vrot.slane %v5291, 4
      %v5330 = vsel %vm1217, %v5328, %v5329
      %v5331 = vrot.slane %v5292, 4
      %v5332 = vrot.slane %v5293, 4
      %v5333 = vsel %vm1217, %v5331, %v5332
      %v5350 = vadd.f32 %v5257, %v5310
      %v5351 = vadd.f32 %v5258, %v5312
      %v5352 = vadd.f32 %v5259, %v5313
      %v5353 = vadd.f32 %v5260, %v5315
      %v5354 = vadd.f32 %v5261, %v5316
      %v5355 = vadd.f32 %v5262, %v5318
      %v5356 = vadd.f32 %v5263, %v5319
      %v5357 = vadd.f32 %v5264, %v5321
      %v5358 = vadd.f32 %v5265, %v5322
      %v5359 = vadd.f32 %v5266, %v5324
      %v5360 = vadd.f32 %v5267, %v5325
      %v5361 = vadd.f32 %v5268, %v5327
      %v5362 = vadd.f32 %v5269, %v5328
      %v5363 = vadd.f32 %v5270, %v5330
      %v5364 = vadd.f32 %v5271, %v5331
      %v5365 = vadd.f32 %v5272, %v5333
      %s5366 = scalar_lea.vmem %s12, 24
      %v5367 = vld [vmem:[%s5366] sm:$0x1]
      %v5368 = vlaneseq
      %v5369 = vshrl.u32 %v5368, 7
      %v5370 = vsub.s32 0, %v5369
      %v5371 = vrot.slane %v5367, %v5370
      %v5372 = vmul.f32 %v4246, %v5371
      %v5373 = vmul.f32 %v4247, %v5371
      %v5374 = vmul.f32 %v4249, %v5371
      %v5375 = vmul.f32 %v4250, %v5371
      %v5376 = vmul.f32 %v4252, %v5371
      %v5377 = vmul.f32 %v4253, %v5371
      %v5378 = vmul.f32 %v4255, %v5371
      %v5379 = vmul.f32 %v4256, %v5371
      %v5380 = vmul.f32 %v4258, %v5371
      %v5381 = vmul.f32 %v4259, %v5371
      %v5382 = vmul.f32 %v4261, %v5371
      %v5383 = vmul.f32 %v4262, %v5371
      %v5384 = vmul.f32 %v4264, %v5371
      %v5385 = vmul.f32 %v4265, %v5371
      %v5386 = vmul.f32 %v4267, %v5371
      %v5387 = vmul.f32 %v4268, %v5371
      %v5388 = vadd.f32 %v5350, %v5372
      %v5389 = vadd.f32 %v5351, %v5373
      %v5390 = vadd.f32 %v5352, %v5374
      %v5391 = vadd.f32 %v5353, %v5375
      %v5392 = vadd.f32 %v5354, %v5376
      %v5393 = vadd.f32 %v5355, %v5377
      %v5394 = vadd.f32 %v5356, %v5378
      %v5395 = vadd.f32 %v5357, %v5379
      %v5396 = vadd.f32 %v5358, %v5380
      %v5397 = vadd.f32 %v5359, %v5381
      %v5398 = vadd.f32 %v5360, %v5382
      %v5399 = vadd.f32 %v5361, %v5383
      %v5400 = vadd.f32 %v5362, %v5384
      %v5401 = vadd.f32 %v5363, %v5385
      %v5402 = vadd.f32 %v5364, %v5386
      %v5403 = vadd.f32 %v5365, %v5387
      %v5404 = vld [vmem:[%s5366 + $0x1] sm:$0x1]
      %v5405 = vlaneseq
      %v5406 = vshrl.u32 %v5405, 7
      %v5407 = vsub.s32 0, %v5406
      %v5408 = vrot.slane %v5404, %v5407
      %v5409 = vmul.f32 %v4246, %v5408
      %v5410 = vmul.f32 %v4247, %v5408
      %v5411 = vmul.f32 %v4249, %v5408
      %v5412 = vmul.f32 %v4250, %v5408
      %v5413 = vmul.f32 %v4252, %v5408
      %v5414 = vmul.f32 %v4253, %v5408
      %v5415 = vmul.f32 %v4255, %v5408
      %v5416 = vmul.f32 %v4256, %v5408
      %v5417 = vmul.f32 %v4258, %v5408
      %v5418 = vmul.f32 %v4259, %v5408
      %v5419 = vmul.f32 %v4261, %v5408
      %v5420 = vmul.f32 %v4262, %v5408
      %v5421 = vmul.f32 %v4264, %v5408
      %v5422 = vmul.f32 %v4265, %v5408
      %v5423 = vmul.f32 %v4267, %v5408
      %v5424 = vmul.f32 %v4268, %v5408
      %v5441 = vrot.slane %v5409, 1
      %v5442 = vrot.slane %v5410, 1
      %v5443 = vsel %vm976, %v5441, %v5442
      %v5444 = vrot.slane %v5411, 1
      %v5445 = vrot.slane %v5412, 1
      %v5446 = vsel %vm976, %v5444, %v5445
      %v5447 = vrot.slane %v5413, 1
      %v5448 = vrot.slane %v5414, 1
      %v5449 = vsel %vm976, %v5447, %v5448
      %v5450 = vrot.slane %v5415, 1
      %v5451 = vrot.slane %v5416, 1
      %v5452 = vsel %vm976, %v5450, %v5451
      %v5453 = vrot.slane %v5417, 1
      %v5454 = vrot.slane %v5418, 1
      %v5455 = vsel %vm976, %v5453, %v5454
      %v5456 = vrot.slane %v5419, 1
      %v5457 = vrot.slane %v5420, 1
      %v5458 = vsel %vm976, %v5456, %v5457
      %v5459 = vrot.slane %v5421, 1
      %v5460 = vrot.slane %v5422, 1
      %v5461 = vsel %vm976, %v5459, %v5460
      %v5462 = vrot.slane %v5423, 1
      %v5463 = vrot.slane %v5424, 1
      %v5464 = vsel %vm976, %v5462, %v5463
      %v5481 = vadd.f32 %v5388, %v5443
      %v5482 = vadd.f32 %v5389, %v5442
      %v5483 = vadd.f32 %v5390, %v5446
      %v5484 = vadd.f32 %v5391, %v5445
      %v5485 = vadd.f32 %v5392, %v5449
      %v5486 = vadd.f32 %v5393, %v5448
      %v5487 = vadd.f32 %v5394, %v5452
      %v5488 = vadd.f32 %v5395, %v5451
      %v5489 = vadd.f32 %v5396, %v5455
      %v5490 = vadd.f32 %v5397, %v5454
      %v5491 = vadd.f32 %v5398, %v5458
      %v5492 = vadd.f32 %v5399, %v5457
      %v5493 = vadd.f32 %v5400, %v5461
      %v5494 = vadd.f32 %v5401, %v5460
      %v5495 = vadd.f32 %v5402, %v5464
      %v5496 = vadd.f32 %v5403, %v5463
      %v5497 = vld [vmem:[%s5366 + $0x2] sm:$0x1]
      %v5498 = vlaneseq
      %v5499 = vshrl.u32 %v5498, 7
      %v5500 = vsub.s32 0, %v5499
      %v5501 = vrot.slane %v5497, %v5500
      %v5502 = vmul.f32 %v4247, %v5501
      %v5503 = vmul.f32 %v4250, %v5501
      %v5504 = vmul.f32 %v4253, %v5501
      %v5505 = vmul.f32 %v4256, %v5501
      %v5506 = vmul.f32 %v4259, %v5501
      %v5507 = vmul.f32 %v4262, %v5501
      %v5508 = vmul.f32 %v4265, %v5501
      %v5509 = vmul.f32 %v4268, %v5501
      %v5518 = vrot.slane %v5502, 2
      %v5519 = vrot.slane %v5503, 2
      %v5520 = vrot.slane %v5504, 2
      %v5521 = vrot.slane %v5505, 2
      %v5522 = vrot.slane %v5506, 2
      %v5523 = vrot.slane %v5507, 2
      %v5524 = vrot.slane %v5508, 2
      %v5525 = vrot.slane %v5509, 2
      %v5534 = vadd.f32 %v5481, %v5518
      %v5535 = vadd.f32 %v5482, %v5518
      %v5536 = vadd.f32 %v5483, %v5519
      %v5537 = vadd.f32 %v5484, %v5519
      %v5538 = vadd.f32 %v5485, %v5520
      %v5539 = vadd.f32 %v5486, %v5520
      %v5540 = vadd.f32 %v5487, %v5521
      %v5541 = vadd.f32 %v5488, %v5521
      %v5542 = vadd.f32 %v5489, %v5522
      %v5543 = vadd.f32 %v5490, %v5522
      %v5544 = vadd.f32 %v5491, %v5523
      %v5545 = vadd.f32 %v5492, %v5523
      %v5546 = vadd.f32 %v5493, %v5524
      %v5547 = vadd.f32 %v5494, %v5524
      %v5548 = vadd.f32 %v5495, %v5525
      %v5549 = vadd.f32 %v5496, %v5525
      %v5550 = vld [vmem:[%s5366 + $0x3] sm:$0x1]
      %v5551 = vlaneseq
      %v5552 = vshrl.u32 %v5551, 7
      %v5553 = vsub.s32 0, %v5552
      %v5554 = vrot.slane %v5550, %v5553
      %v5555 = vmul.f32 %v4247, %v5554
      %v5556 = vmul.f32 %v4248, %v5554
      %v5557 = vmul.f32 %v4250, %v5554
      %v5558 = vmul.f32 %v4251, %v5554
      %v5559 = vmul.f32 %v4253, %v5554
      %v5560 = vmul.f32 %v4254, %v5554
      %v5561 = vmul.f32 %v4256, %v5554
      %v5562 = vmul.f32 %v4257, %v5554
      %v5563 = vmul.f32 %v4259, %v5554
      %v5564 = vmul.f32 %v4260, %v5554
      %v5565 = vmul.f32 %v4262, %v5554
      %v5566 = vmul.f32 %v4263, %v5554
      %v5567 = vmul.f32 %v4265, %v5554
      %v5568 = vmul.f32 %v4266, %v5554
      %v5569 = vmul.f32 %v4268, %v5554
      %v5570 = vmul.f32 %v4269, %v5554
      %v5587 = vrot.slane %v5555, 3
      %v5588 = vrot.slane %v5556, 3
      %v5589 = vsel %vm1123, %v5587, %v5588
      %v5590 = vrot.slane %v5557, 3
      %v5591 = vrot.slane %v5558, 3
      %v5592 = vsel %vm1123, %v5590, %v5591
      %v5593 = vrot.slane %v5559, 3
      %v5594 = vrot.slane %v5560, 3
      %v5595 = vsel %vm1123, %v5593, %v5594
      %v5596 = vrot.slane %v5561, 3
      %v5597 = vrot.slane %v5562, 3
      %v5598 = vsel %vm1123, %v5596, %v5597
      %v5599 = vrot.slane %v5563, 3
      %v5600 = vrot.slane %v5564, 3
      %v5601 = vsel %vm1123, %v5599, %v5600
      %v5602 = vrot.slane %v5565, 3
      %v5603 = vrot.slane %v5566, 3
      %v5604 = vsel %vm1123, %v5602, %v5603
      %v5605 = vrot.slane %v5567, 3
      %v5606 = vrot.slane %v5568, 3
      %v5607 = vsel %vm1123, %v5605, %v5606
      %v5608 = vrot.slane %v5569, 3
      %v5609 = vrot.slane %v5570, 3
      %v5610 = vsel %vm1123, %v5608, %v5609
      %v5627 = vadd.f32 %v5534, %v5587
      %v5628 = vadd.f32 %v5535, %v5589
      %v5629 = vadd.f32 %v5536, %v5590
      %v5630 = vadd.f32 %v5537, %v5592
      %v5631 = vadd.f32 %v5538, %v5593
      %v5632 = vadd.f32 %v5539, %v5595
      %v5633 = vadd.f32 %v5540, %v5596
      %v5634 = vadd.f32 %v5541, %v5598
      %v5635 = vadd.f32 %v5542, %v5599
      %v5636 = vadd.f32 %v5543, %v5601
      %v5637 = vadd.f32 %v5544, %v5602
      %v5638 = vadd.f32 %v5545, %v5604
      %v5639 = vadd.f32 %v5546, %v5605
      %v5640 = vadd.f32 %v5547, %v5607
      %v5641 = vadd.f32 %v5548, %v5608
      %v5642 = vadd.f32 %v5549, %v5610
      %v5643 = vld [vmem:[%s5366 + $0x4] sm:$0x1]
      %v5644 = vlaneseq
      %v5645 = vshrl.u32 %v5644, 7
      %v5646 = vsub.s32 0, %v5645
      %v5647 = vrot.slane %v5643, %v5646
      %v5648 = vmul.f32 %v4247, %v5647
      %v5649 = vmul.f32 %v4248, %v5647
      %v5650 = vmul.f32 %v4250, %v5647
      %v5651 = vmul.f32 %v4251, %v5647
      %v5652 = vmul.f32 %v4253, %v5647
      %v5653 = vmul.f32 %v4254, %v5647
      %v5654 = vmul.f32 %v4256, %v5647
      %v5655 = vmul.f32 %v4257, %v5647
      %v5656 = vmul.f32 %v4259, %v5647
      %v5657 = vmul.f32 %v4260, %v5647
      %v5658 = vmul.f32 %v4262, %v5647
      %v5659 = vmul.f32 %v4263, %v5647
      %v5660 = vmul.f32 %v4265, %v5647
      %v5661 = vmul.f32 %v4266, %v5647
      %v5662 = vmul.f32 %v4268, %v5647
      %v5663 = vmul.f32 %v4269, %v5647
      %v5680 = vrot.slane %v5648, 4
      %v5681 = vrot.slane %v5649, 4
      %v5682 = vsel %vm1217, %v5680, %v5681
      %v5683 = vrot.slane %v5650, 4
      %v5684 = vrot.slane %v5651, 4
      %v5685 = vsel %vm1217, %v5683, %v5684
      %v5686 = vrot.slane %v5652, 4
      %v5687 = vrot.slane %v5653, 4
      %v5688 = vsel %vm1217, %v5686, %v5687
      %v5689 = vrot.slane %v5654, 4
      %v5690 = vrot.slane %v5655, 4
      %v5691 = vsel %vm1217, %v5689, %v5690
      %v5692 = vrot.slane %v5656, 4
      %v5693 = vrot.slane %v5657, 4
      %v5694 = vsel %vm1217, %v5692, %v5693
      %v5695 = vrot.slane %v5658, 4
      %v5696 = vrot.slane %v5659, 4
      %v5697 = vsel %vm1217, %v5695, %v5696
      %v5698 = vrot.slane %v5660, 4
      %v5699 = vrot.slane %v5661, 4
      %v5700 = vsel %vm1217, %v5698, %v5699
      %v5701 = vrot.slane %v5662, 4
      %v5702 = vrot.slane %v5663, 4
      %v5703 = vsel %vm1217, %v5701, %v5702
      %v5720 = vadd.f32 %v5627, %v5680
      %v5721 = vadd.f32 %v5628, %v5682
      %v5722 = vadd.f32 %v5629, %v5683
      %v5723 = vadd.f32 %v5630, %v5685
      %v5724 = vadd.f32 %v5631, %v5686
      %v5725 = vadd.f32 %v5632, %v5688
      %v5726 = vadd.f32 %v5633, %v5689
      %v5727 = vadd.f32 %v5634, %v5691
      %v5728 = vadd.f32 %v5635, %v5692
      %v5729 = vadd.f32 %v5636, %v5694
      %v5730 = vadd.f32 %v5637, %v5695
      %v5731 = vadd.f32 %v5638, %v5697
      %v5732 = vadd.f32 %v5639, %v5698
      %v5733 = vadd.f32 %v5640, %v5700
      %v5734 = vadd.f32 %v5641, %v5701
      %v5735 = vadd.f32 %v5642, %v5703
      %s5736 = scalar_lea.vmem %s12, 32
      %v5737 = vld [vmem:[%s5736] sm:$0x1]
      %v5738 = vlaneseq
      %v5739 = vshrl.u32 %v5738, 7
      %v5740 = vsub.s32 0, %v5739
      %v5741 = vrot.slane %v5737, %v5740
      %v5742 = vmul.f32 %v4249, %v5741
      %v5743 = vmul.f32 %v4250, %v5741
      %v5744 = vmul.f32 %v4252, %v5741
      %v5745 = vmul.f32 %v4253, %v5741
      %v5746 = vmul.f32 %v4255, %v5741
      %v5747 = vmul.f32 %v4256, %v5741
      %v5748 = vmul.f32 %v4258, %v5741
      %v5749 = vmul.f32 %v4259, %v5741
      %v5750 = vmul.f32 %v4261, %v5741
      %v5751 = vmul.f32 %v4262, %v5741
      %v5752 = vmul.f32 %v4264, %v5741
      %v5753 = vmul.f32 %v4265, %v5741
      %v5754 = vmul.f32 %v4267, %v5741
      %v5755 = vmul.f32 %v4268, %v5741
      %v5756 = vmul.f32 %v4270, %v5741
      %v5757 = vmul.f32 %v4271, %v5741
      %v5758 = vadd.f32 %v5720, %v5742
      %v5759 = vadd.f32 %v5721, %v5743
      %v5760 = vadd.f32 %v5722, %v5744
      %v5761 = vadd.f32 %v5723, %v5745
      %v5762 = vadd.f32 %v5724, %v5746
      %v5763 = vadd.f32 %v5725, %v5747
      %v5764 = vadd.f32 %v5726, %v5748
      %v5765 = vadd.f32 %v5727, %v5749
      %v5766 = vadd.f32 %v5728, %v5750
      %v5767 = vadd.f32 %v5729, %v5751
      %v5768 = vadd.f32 %v5730, %v5752
      %v5769 = vadd.f32 %v5731, %v5753
      %v5770 = vadd.f32 %v5732, %v5754
      %v5771 = vadd.f32 %v5733, %v5755
      %v5772 = vadd.f32 %v5734, %v5756
      %v5773 = vadd.f32 %v5735, %v5757
      %v5774 = vld [vmem:[%s5736 + $0x1] sm:$0x1]
      %v5775 = vlaneseq
      %v5776 = vshrl.u32 %v5775, 7
      %v5777 = vsub.s32 0, %v5776
      %v5778 = vrot.slane %v5774, %v5777
      %v5779 = vmul.f32 %v4249, %v5778
      %v5780 = vmul.f32 %v4250, %v5778
      %v5781 = vmul.f32 %v4252, %v5778
      %v5782 = vmul.f32 %v4253, %v5778
      %v5783 = vmul.f32 %v4255, %v5778
      %v5784 = vmul.f32 %v4256, %v5778
      %v5785 = vmul.f32 %v4258, %v5778
      %v5786 = vmul.f32 %v4259, %v5778
      %v5787 = vmul.f32 %v4261, %v5778
      %v5788 = vmul.f32 %v4262, %v5778
      %v5789 = vmul.f32 %v4264, %v5778
      %v5790 = vmul.f32 %v4265, %v5778
      %v5791 = vmul.f32 %v4267, %v5778
      %v5792 = vmul.f32 %v4268, %v5778
      %v5793 = vmul.f32 %v4270, %v5778
      %v5794 = vmul.f32 %v4271, %v5778
      %v5811 = vrot.slane %v5779, 1
      %v5812 = vrot.slane %v5780, 1
      %v5813 = vsel %vm976, %v5811, %v5812
      %v5814 = vrot.slane %v5781, 1
      %v5815 = vrot.slane %v5782, 1
      %v5816 = vsel %vm976, %v5814, %v5815
      %v5817 = vrot.slane %v5783, 1
      %v5818 = vrot.slane %v5784, 1
      %v5819 = vsel %vm976, %v5817, %v5818
      %v5820 = vrot.slane %v5785, 1
      %v5821 = vrot.slane %v5786, 1
      %v5822 = vsel %vm976, %v5820, %v5821
      %v5823 = vrot.slane %v5787, 1
      %v5824 = vrot.slane %v5788, 1
      %v5825 = vsel %vm976, %v5823, %v5824
      %v5826 = vrot.slane %v5789, 1
      %v5827 = vrot.slane %v5790, 1
      %v5828 = vsel %vm976, %v5826, %v5827
      %v5829 = vrot.slane %v5791, 1
      %v5830 = vrot.slane %v5792, 1
      %v5831 = vsel %vm976, %v5829, %v5830
      %v5832 = vrot.slane %v5793, 1
      %v5833 = vrot.slane %v5794, 1
      %v5834 = vsel %vm976, %v5832, %v5833
      %v5851 = vadd.f32 %v5758, %v5813
      %v5852 = vadd.f32 %v5759, %v5812
      %v5853 = vadd.f32 %v5760, %v5816
      %v5854 = vadd.f32 %v5761, %v5815
      %v5855 = vadd.f32 %v5762, %v5819
      %v5856 = vadd.f32 %v5763, %v5818
      %v5857 = vadd.f32 %v5764, %v5822
      %v5858 = vadd.f32 %v5765, %v5821
      %v5859 = vadd.f32 %v5766, %v5825
      %v5860 = vadd.f32 %v5767, %v5824
      %v5861 = vadd.f32 %v5768, %v5828
      %v5862 = vadd.f32 %v5769, %v5827
      %v5863 = vadd.f32 %v5770, %v5831
      %v5864 = vadd.f32 %v5771, %v5830
      %v5865 = vadd.f32 %v5772, %v5834
      %v5866 = vadd.f32 %v5773, %v5833
      %v5867 = vld [vmem:[%s5736 + $0x2] sm:$0x1]
      %v5868 = vlaneseq
      %v5869 = vshrl.u32 %v5868, 7
      %v5870 = vsub.s32 0, %v5869
      %v5871 = vrot.slane %v5867, %v5870
      %v5872 = vmul.f32 %v4250, %v5871
      %v5873 = vmul.f32 %v4253, %v5871
      %v5874 = vmul.f32 %v4256, %v5871
      %v5875 = vmul.f32 %v4259, %v5871
      %v5876 = vmul.f32 %v4262, %v5871
      %v5877 = vmul.f32 %v4265, %v5871
      %v5878 = vmul.f32 %v4268, %v5871
      %v5879 = vmul.f32 %v4271, %v5871
      %v5888 = vrot.slane %v5872, 2
      %v5889 = vrot.slane %v5873, 2
      %v5890 = vrot.slane %v5874, 2
      %v5891 = vrot.slane %v5875, 2
      %v5892 = vrot.slane %v5876, 2
      %v5893 = vrot.slane %v5877, 2
      %v5894 = vrot.slane %v5878, 2
      %v5895 = vrot.slane %v5879, 2
      %v5904 = vadd.f32 %v5851, %v5888
      %v5905 = vadd.f32 %v5852, %v5888
      %v5906 = vadd.f32 %v5853, %v5889
      %v5907 = vadd.f32 %v5854, %v5889
      %v5908 = vadd.f32 %v5855, %v5890
      %v5909 = vadd.f32 %v5856, %v5890
      %v5910 = vadd.f32 %v5857, %v5891
      %v5911 = vadd.f32 %v5858, %v5891
      %v5912 = vadd.f32 %v5859, %v5892
      %v5913 = vadd.f32 %v5860, %v5892
      %v5914 = vadd.f32 %v5861, %v5893
      %v5915 = vadd.f32 %v5862, %v5893
      %v5916 = vadd.f32 %v5863, %v5894
      %v5917 = vadd.f32 %v5864, %v5894
      %v5918 = vadd.f32 %v5865, %v5895
      %v5919 = vadd.f32 %v5866, %v5895
      %v5920 = vld [vmem:[%s5736 + $0x3] sm:$0x1]
      %v5921 = vlaneseq
      %v5922 = vshrl.u32 %v5921, 7
      %v5923 = vsub.s32 0, %v5922
      %v5924 = vrot.slane %v5920, %v5923
      %v5925 = vmul.f32 %v4250, %v5924
      %v5926 = vmul.f32 %v4251, %v5924
      %v5927 = vmul.f32 %v4253, %v5924
      %v5928 = vmul.f32 %v4254, %v5924
      %v5929 = vmul.f32 %v4256, %v5924
      %v5930 = vmul.f32 %v4257, %v5924
      %v5931 = vmul.f32 %v4259, %v5924
      %v5932 = vmul.f32 %v4260, %v5924
      %v5933 = vmul.f32 %v4262, %v5924
      %v5934 = vmul.f32 %v4263, %v5924
      %v5935 = vmul.f32 %v4265, %v5924
      %v5936 = vmul.f32 %v4266, %v5924
      %v5937 = vmul.f32 %v4268, %v5924
      %v5938 = vmul.f32 %v4269, %v5924
      %v5939 = vmul.f32 %v4271, %v5924
      %v5940 = vmul.f32 %v4272, %v5924
      %v5957 = vrot.slane %v5925, 3
      %v5958 = vrot.slane %v5926, 3
      %v5959 = vsel %vm1123, %v5957, %v5958
      %v5960 = vrot.slane %v5927, 3
      %v5961 = vrot.slane %v5928, 3
      %v5962 = vsel %vm1123, %v5960, %v5961
      %v5963 = vrot.slane %v5929, 3
      %v5964 = vrot.slane %v5930, 3
      %v5965 = vsel %vm1123, %v5963, %v5964
      %v5966 = vrot.slane %v5931, 3
      %v5967 = vrot.slane %v5932, 3
      %v5968 = vsel %vm1123, %v5966, %v5967
      %v5969 = vrot.slane %v5933, 3
      %v5970 = vrot.slane %v5934, 3
      %v5971 = vsel %vm1123, %v5969, %v5970
      %v5972 = vrot.slane %v5935, 3
      %v5973 = vrot.slane %v5936, 3
      %v5974 = vsel %vm1123, %v5972, %v5973
      %v5975 = vrot.slane %v5937, 3
      %v5976 = vrot.slane %v5938, 3
      %v5977 = vsel %vm1123, %v5975, %v5976
      %v5978 = vrot.slane %v5939, 3
      %v5979 = vrot.slane %v5940, 3
      %v5980 = vsel %vm1123, %v5978, %v5979
      %v5997 = vadd.f32 %v5904, %v5957
      %v5998 = vadd.f32 %v5905, %v5959
      %v5999 = vadd.f32 %v5906, %v5960
      %v6000 = vadd.f32 %v5907, %v5962
      %v6001 = vadd.f32 %v5908, %v5963
      %v6002 = vadd.f32 %v5909, %v5965
      %v6003 = vadd.f32 %v5910, %v5966
      %v6004 = vadd.f32 %v5911, %v5968
      %v6005 = vadd.f32 %v5912, %v5969
      %v6006 = vadd.f32 %v5913, %v5971
      %v6007 = vadd.f32 %v5914, %v5972
      %v6008 = vadd.f32 %v5915, %v5974
      %v6009 = vadd.f32 %v5916, %v5975
      %v6010 = vadd.f32 %v5917, %v5977
      %v6011 = vadd.f32 %v5918, %v5978
      %v6012 = vadd.f32 %v5919, %v5980
      %v6013 = vld [vmem:[%s5736 + $0x4] sm:$0x1]
      %v6014 = vlaneseq
      %v6015 = vshrl.u32 %v6014, 7
      %v6016 = vsub.s32 0, %v6015
      %v6017 = vrot.slane %v6013, %v6016
      %v6018 = vmul.f32 %v4250, %v6017
      %v6019 = vmul.f32 %v4251, %v6017
      %v6020 = vmul.f32 %v4253, %v6017
      %v6021 = vmul.f32 %v4254, %v6017
      %v6022 = vmul.f32 %v4256, %v6017
      %v6023 = vmul.f32 %v4257, %v6017
      %v6024 = vmul.f32 %v4259, %v6017
      %v6025 = vmul.f32 %v4260, %v6017
      %v6026 = vmul.f32 %v4262, %v6017
      %v6027 = vmul.f32 %v4263, %v6017
      %v6028 = vmul.f32 %v4265, %v6017
      %v6029 = vmul.f32 %v4266, %v6017
      %v6030 = vmul.f32 %v4268, %v6017
      %v6031 = vmul.f32 %v4269, %v6017
      %v6032 = vmul.f32 %v4271, %v6017
      %v6033 = vmul.f32 %v4272, %v6017
      %v6050 = vrot.slane %v6018, 4
      %v6051 = vrot.slane %v6019, 4
      %v6052 = vsel %vm1217, %v6050, %v6051
      %v6053 = vrot.slane %v6020, 4
      %v6054 = vrot.slane %v6021, 4
      %v6055 = vsel %vm1217, %v6053, %v6054
      %v6056 = vrot.slane %v6022, 4
      %v6057 = vrot.slane %v6023, 4
      %v6058 = vsel %vm1217, %v6056, %v6057
      %v6059 = vrot.slane %v6024, 4
      %v6060 = vrot.slane %v6025, 4
      %v6061 = vsel %vm1217, %v6059, %v6060
      %v6062 = vrot.slane %v6026, 4
      %v6063 = vrot.slane %v6027, 4
      %v6064 = vsel %vm1217, %v6062, %v6063
      %v6065 = vrot.slane %v6028, 4
      %v6066 = vrot.slane %v6029, 4
      %v6067 = vsel %vm1217, %v6065, %v6066
      %v6068 = vrot.slane %v6030, 4
      %v6069 = vrot.slane %v6031, 4
      %v6070 = vsel %vm1217, %v6068, %v6069
      %v6071 = vrot.slane %v6032, 4
      %v6072 = vrot.slane %v6033, 4
      %v6073 = vsel %vm1217, %v6071, %v6072
      %v6090 = vadd.f32 %v5997, %v6050
      %v6091 = vadd.f32 %v5998, %v6052
      %v6092 = vadd.f32 %v5999, %v6053
      %v6093 = vadd.f32 %v6000, %v6055
      %v6094 = vadd.f32 %v6001, %v6056
      %v6095 = vadd.f32 %v6002, %v6058
      %v6096 = vadd.f32 %v6003, %v6059
      %v6097 = vadd.f32 %v6004, %v6061
      %v6098 = vadd.f32 %v6005, %v6062
      %v6099 = vadd.f32 %v6006, %v6064
      %v6100 = vadd.f32 %v6007, %v6065
      %v6101 = vadd.f32 %v6008, %v6067
      %v6102 = vadd.f32 %v6009, %v6068
      %v6103 = vadd.f32 %v6010, %v6070
      %v6104 = vadd.f32 %v6011, %v6071
      %v6105 = vadd.f32 %v6012, %v6073
      %v6122 = vrot.slane %v6090, 6
      %v6123 = vrot.slane %v6091, 6
      %v6124 = vsel %vm2770, %v6122, %v6123
      %v6125 = vrot.slane %v6092, 6
      %v6126 = vrot.slane %v6093, 6
      %v6127 = vsel %vm2770, %v6125, %v6126
      %v6128 = vrot.slane %v6094, 6
      %v6129 = vrot.slane %v6095, 6
      %v6130 = vsel %vm2770, %v6128, %v6129
      %v6131 = vrot.slane %v6096, 6
      %v6132 = vrot.slane %v6097, 6
      %v6133 = vsel %vm2770, %v6131, %v6132
      %v6134 = vrot.slane %v6098, 6
      %v6135 = vrot.slane %v6099, 6
      %v6136 = vsel %vm2770, %v6134, %v6135
      %v6137 = vrot.slane %v6100, 6
      %v6138 = vrot.slane %v6101, 6
      %v6139 = vsel %vm2770, %v6137, %v6138
      %v6140 = vrot.slane %v6102, 6
      %v6141 = vrot.slane %v6103, 6
      %v6142 = vsel %vm2770, %v6140, %v6141
      %v6143 = vrot.slane %v6104, 6
      %v6144 = vrot.slane %v6105, 6
      %v6145 = vsel %vm2770, %v6143, %v6144
      %v6146 = vld [vmem:[%s13] sm:$0xff]
      %v6147 = vsel %vm657, %v6124, 0
      %v6149 = vsel %vm657, %v6127, 0
      %v6151 = vsel %vm657, %v6130, 0
      %v6153 = vsel %vm657, %v6133, 0
      %v6155 = vsel %vm657, %v6136, 0
      %v6157 = vsel %vm657, %v6139, 0
      %v6159 = vsel %vm657, %v6142, 0
      %v6161 = vsel %vm657, %v6145, 0
      %6163 = vmatprep.subr.mxu0 0.0
      %6164 = vmatpush1.msra.mxu0 %v6146
      %6165 = vmatprep.subr.mxu0 0.0
      %6166 = vmatpush1.msra.mxu0 0.0
      %6167 = vmatprep.subr.mxu0 0.0
      %6168 = vmatpush1.msra.mxu0 0.0
      %6169 = vmatprep.subr.mxu0 0.0
      %6170 = vmatpush1.msra.mxu0 0.0
      %6171 = vmatprep.subr.mxu0 0.0
      %6172 = vmatpush1.msra.mxu0 0.0
      %6173 = vmatprep.subr.mxu0 0.0
      %6174 = vmatpush1.msra.mxu0 0.0
      %6175 = vmatprep.subr.mxu0 0.0
      %6176 = vmatpush1.msra.mxu0 0.0
      %6177 = vmatprep.subr.mxu0 0.0
      %6178 = vmatpush1.msra.mxu0 0.0
      %6179 = vmatprep.subr.mxu0 0.0
      %6180 = vmatpush1.msra.mxu0 0.0
      %6181 = vmatprep.subr.mxu0 0.0
      %6182 = vmatpush1.msra.mxu0 0.0
      %6183 = vmatprep.subr.mxu0 0.0
      %6184 = vmatpush1.msra.mxu0 0.0
      %6185 = vmatprep.subr.mxu0 0.0
      %6186 = vmatpush1.msra.mxu0 0.0
      %6187 = vmatprep.subr.mxu0 0.0
      %6188 = vmatpush1.msra.mxu0 0.0
      %6189 = vmatprep.subr.mxu0 0.0
      %6190 = vmatpush1.msra.mxu0 0.0
      %6191 = vmatprep.subr.mxu0 0.0
      %6192 = vmatpush1.msra.mxu0 0.0
      %6193 = vmatprep.subr.mxu0 0.0
      %6194 = vmatpush1.msra.mxu0 0.0
      %6195 = vmatprep.subr.mxu0 0.0
      %6196 = vmatpush1.msra.mxu0 0.0
      %6197 = vmatprep.subr.mxu0 0.0
      %6198 = vmatpush1.msra.mxu0 0.0
      %6199 = vmatprep.subr.mxu0 0.0
      %6200 = vmatpush1.msra.mxu0 0.0
      %6201 = vmatprep.subr.mxu0 0.0
      %6202 = vmatpush1.msra.mxu0 0.0
      %6203 = vmatprep.subr.mxu0 0.0
      %6204 = vmatpush1.msra.mxu0 0.0
      %6205 = vmatprep.subr.mxu0 0.0
      %6206 = vmatpush1.msra.mxu0 0.0
      %6207 = vmatprep.subr.mxu0 0.0
      %6208 = vmatpush1.msra.mxu0 0.0
      %6209 = vmatprep.subr.mxu0 0.0
      %6210 = vmatpush1.msra.mxu0 0.0
      %6211 = vmatprep.subr.mxu0 0.0
      %6212 = vmatpush1.msra.mxu0 0.0
      %6213 = vmatprep.subr.mxu0 0.0
      %6214 = vmatpush1.msra.mxu0 0.0
      %6215 = vmatprep.subr.mxu0 0.0
      %6216 = vmatpush1.msra.mxu0 0.0
      %6217 = vmatprep.subr.mxu0 0.0
      %6218 = vmatpush1.msra.mxu0 0.0
      %6219 = vmatprep.subr.mxu0 0.0
      %6220 = vmatpush1.msra.mxu0 0.0
      %6221 = vmatprep.subr.mxu0 0.0
      %6222 = vmatpush1.msra.mxu0 0.0
      %6223 = vmatprep.subr.mxu0 0.0
      %6224 = vmatpush1.msra.mxu0 0.0
      %6225 = vmatprep.subr.mxu0 0.0
      %6226 = vmatpush1.msra.mxu0 0.0
      %6227 = vmatprep.mubr.f32.mxu0 0.0
      %6228 = vmatmul.mubr.f32.gmra.mrb[0].mxu0 %v6147
      %v6229 = vpop.f32.mrb[0].mxu0
      %v6230 = vadd.f32 0.0, %v6229
      %v6231 = vpop.f32.mrb[0].mxu0
      %6232 = vmatprep.mubr.f32.mxu0 0.0
      %6233 = vmatmul.mubr.f32.gmra.mrb[0].mxu0 %v6149
      %v6234 = vpop.f32.mrb[0].mxu0
      %v6235 = vadd.f32 0.0, %v6234
      %v6236 = vpop.f32.mrb[0].mxu0
      %6237 = vmatprep.mubr.f32.mxu0 0.0
      %6238 = vmatmul.mubr.f32.gmra.mrb[0].mxu0 %v6151
      %v6239 = vpop.f32.mrb[0].mxu0
      %v6240 = vadd.f32 0.0, %v6239
      %v6241 = vpop.f32.mrb[0].mxu0
      %6242 = vmatprep.mubr.f32.mxu0 0.0
      %6243 = vmatmul.mubr.f32.gmra.mrb[0].mxu0 %v6153
      %v6244 = vpop.f32.mrb[0].mxu0
      %v6245 = vadd.f32 0.0, %v6244
      %v6246 = vpop.f32.mrb[0].mxu0
      %6247 = vmatprep.mubr.f32.mxu0 0.0
      %6248 = vmatmul.mubr.f32.gmra.mrb[0].mxu0 %v6155
      %v6249 = vpop.f32.mrb[0].mxu0
      %v6250 = vadd.f32 0.0, %v6249
      %v6251 = vpop.f32.mrb[0].mxu0
      %6252 = vmatprep.mubr.f32.mxu0 0.0
      %6253 = vmatmul.mubr.f32.gmra.mrb[0].mxu0 %v6157
      %v6254 = vpop.f32.mrb[0].mxu0
      %v6255 = vadd.f32 0.0, %v6254
      %v6256 = vpop.f32.mrb[0].mxu0
      %6257 = vmatprep.mubr.f32.mxu0 0.0
      %6258 = vmatmul.mubr.f32.gmra.mrb[0].mxu0 %v6159
      %v6259 = vpop.f32.mrb[0].mxu0
      %v6260 = vadd.f32 0.0, %v6259
      %v6261 = vpop.f32.mrb[0].mxu0
      %6262 = vmatprep.mubr.f32.mxu0 0.0
      %6263 = vmatmul.mubr.f32.gmra.mrb[0].mxu0 %v6161
      %v6264 = vpop.f32.mrb[0].mxu0
      %v6265 = vadd.f32 0.0, %v6264
      %v6266 = vpop.f32.mrb[0].mxu0
      %6267 = vdwg.mxu0
      %v6268 = vmax.f32 %v6230, 0.0
      %v6269 = vmax.f32 %v6235, 0.0
      %v6270 = vmax.f32 %v6240, 0.0
      %v6271 = vmax.f32 %v6245, 0.0
      %v6272 = vmax.f32 %v6250, 0.0
      %v6273 = vmax.f32 %v6255, 0.0
      %v6274 = vmax.f32 %v6260, 0.0
      %v6275 = vmax.f32 %v6265, 0.0
      %v6276 = vmul.f32 %v6268, %v6268
      %v6277 = vmul.f32 %v6269, %v6269
      %v6278 = vmul.f32 %v6270, %v6270
      %v6279 = vmul.f32 %v6271, %v6271
      %v6280 = vmul.f32 %v6272, %v6272
      %v6281 = vmul.f32 %v6273, %v6273
      %v6282 = vmul.f32 %v6274, %v6274
      %v6283 = vmul.f32 %v6275, %v6275
      %v6284 = vld [vmem:[%s14] sm:$0xff]
      %v6285 = vld [vmem:[%s14 + $0x8] sm:$0xff]
      %v6286 = vld [vmem:[%s14 + $0x10] sm:$0xff]
      %v6287 = vld [vmem:[%s14 + $0x18] sm:$0xff]
      %vm6288 = vcmask 261120
      %v6290 = vsel %vm6288, %v6276, 0
      %v6293 = vsel %vm6288, %v6277, 0
      %v6296 = vsel %vm6288, %v6278, 0
      %v6299 = vsel %vm6288, %v6279, 0
      %v6302 = vsel %vm6288, %v6280, 0
      %v6305 = vsel %vm6288, %v6281, 0
      %v6308 = vsel %vm6288, %v6282, 0
      %v6311 = vsel %vm6288, %v6283, 0
      %6313 = vmatprep.subr.mxu0 0.0
      %6314 = vmatpush1.msra.mxu0 %v6284
      %6315 = vmatprep.subr.mxu0 0.0
      %6316 = vmatpush1.msra.mxu0 %v6285
      %6317 = vmatprep.subr.mxu0 0.0
      %6318 = vmatpush1.msra.mxu0 %v6286
      %6319 = vmatprep.subr.mxu0 0.0
      %6320 = vmatpush1.msra.mxu0 %v6287
      %6321 = vmatprep.subr.mxu0 0.0
      %6322 = vmatpush1.msra.mxu0 0.0
      %6323 = vmatprep.subr.mxu0 0.0
      %6324 = vmatpush1.msra.mxu0 0.0
      %6325 = vmatprep.subr.mxu0 0.0
      %6326 = vmatpush1.msra.mxu0 0.0
      %6327 = vmatprep.subr.mxu0 0.0
      %6328 = vmatpush1.msra.mxu0 0.0
      %6329 = vmatprep.subr.mxu0 0.0
      %6330 = vmatpush1.msra.mxu0 0.0
      %6331 = vmatprep.subr.mxu0 0.0
      %6332 = vmatpush1.msra.mxu0 0.0
      %6333 = vmatprep.subr.mxu0 0.0
      %6334 = vmatpush1.msra.mxu0 0.0
      %6335 = vmatprep.subr.mxu0 0.0
      %6336 = vmatpush1.msra.mxu0 0.0
      %6337 = vmatprep.subr.mxu0 0.0
      %6338 = vmatpush1.msra.mxu0 0.0
      %6339 = vmatprep.subr.mxu0 0.0
      %6340 = vmatpush1.msra.mxu0 0.0
      %6341 = vmatprep.subr.mxu0 0.0
      %6342 = vmatpush1.msra.mxu0 0.0
      %6343 = vmatprep.subr.mxu0 0.0
      %6344 = vmatpush1.msra.mxu0 0.0
      %6345 = vmatprep.subr.mxu0 0.0
      %6346 = vmatpush1.msra.mxu0 0.0
      %6347 = vmatprep.subr.mxu0 0.0
      %6348 = vmatpush1.msra.mxu0 0.0
      %6349 = vmatprep.subr.mxu0 0.0
      %6350 = vmatpush1.msra.mxu0 0.0
      %6351 = vmatprep.subr.mxu0 0.0
      %6352 = vmatpush1.msra.mxu0 0.0
      %6353 = vmatprep.subr.mxu0 0.0
      %6354 = vmatpush1.msra.mxu0 0.0
      %6355 = vmatprep.subr.mxu0 0.0
      %6356 = vmatpush1.msra.mxu0 0.0
      %6357 = vmatprep.subr.mxu0 0.0
      %6358 = vmatpush1.msra.mxu0 0.0
      %6359 = vmatprep.subr.mxu0 0.0
      %6360 = vmatpush1.msra.mxu0 0.0
      %6361 = vmatprep.subr.mxu0 0.0
      %6362 = vmatpush1.msra.mxu0 0.0
      %6363 = vmatprep.subr.mxu0 0.0
      %6364 = vmatpush1.msra.mxu0 0.0
      %6365 = vmatprep.subr.mxu0 0.0
      %6366 = vmatpush1.msra.mxu0 0.0
      %6367 = vmatprep.subr.mxu0 0.0
      %6368 = vmatpush1.msra.mxu0 0.0
      %6369 = vmatprep.subr.mxu0 0.0
      %6370 = vmatpush1.msra.mxu0 0.0
      %6371 = vmatprep.subr.mxu0 0.0
      %6372 = vmatpush1.msra.mxu0 0.0
      %6373 = vmatprep.subr.mxu0 0.0
      %6374 = vmatpush1.msra.mxu0 0.0
      %6375 = vmatprep.subr.mxu0 0.0
      %6376 = vmatpush1.msra.mxu0 0.0
      %6377 = vmatprep.mubr.f32.mxu0 0.0
      %6378 = vmatmul.mubr.f32.gmra.mrb[0].mxu0 %v6290
      %v6379 = vpop.f32.mrb[0].mxu0
      %v6380 = vadd.f32 0.0, %v6379
      %v6381 = vpop.f32.mrb[0].mxu0
      %6382 = vmatprep.mubr.f32.mxu0 0.0
      %6383 = vmatmul.mubr.f32.gmra.mrb[0].mxu0 %v6293
      %v6384 = vpop.f32.mrb[0].mxu0
      %v6385 = vadd.f32 0.0, %v6384
      %v6386 = vpop.f32.mrb[0].mxu0
      %6387 = vmatprep.mubr.f32.mxu0 0.0
      %6388 = vmatmul.mubr.f32.gmra.mrb[0].mxu0 %v6296
      %v6389 = vpop.f32.mrb[0].mxu0
      %v6390 = vadd.f32 0.0, %v6389
      %v6391 = vpop.f32.mrb[0].mxu0
      %6392 = vmatprep.mubr.f32.mxu0 0.0
      %6393 = vmatmul.mubr.f32.gmra.mrb[0].mxu0 %v6299
      %v6394 = vpop.f32.mrb[0].mxu0
      %v6395 = vadd.f32 0.0, %v6394
      %v6396 = vpop.f32.mrb[0].mxu0
      %6397 = vmatprep.mubr.f32.mxu0 0.0
      %6398 = vmatmul.mubr.f32.gmra.mrb[0].mxu0 %v6302
      %v6399 = vpop.f32.mrb[0].mxu0
      %v6400 = vadd.f32 0.0, %v6399
      %v6401 = vpop.f32.mrb[0].mxu0
      %6402 = vmatprep.mubr.f32.mxu0 0.0
      %6403 = vmatmul.mubr.f32.gmra.mrb[0].mxu0 %v6305
      %v6404 = vpop.f32.mrb[0].mxu0
      %v6405 = vadd.f32 0.0, %v6404
      %v6406 = vpop.f32.mrb[0].mxu0
      %6407 = vmatprep.mubr.f32.mxu0 0.0
      %6408 = vmatmul.mubr.f32.gmra.mrb[0].mxu0 %v6308
      %v6409 = vpop.f32.mrb[0].mxu0
      %v6410 = vadd.f32 0.0, %v6409
      %v6411 = vpop.f32.mrb[0].mxu0
      %6412 = vmatprep.mubr.f32.mxu0 0.0
      %6413 = vmatmul.mubr.f32.gmra.mrb[0].mxu0 %v6311
      %v6414 = vpop.f32.mrb[0].mxu0
      %v6415 = vadd.f32 0.0, %v6414
      %v6416 = vpop.f32.mrb[0].mxu0
      %6417 = vdwg.mxu0
      %v6418 = vld [vmem:[%s4] sm:$0x1]
      %v6419 = vxor.u32 %v6230, 2147483648
      %v6420 = vxor.u32 %v6235, 2147483648
      %v6421 = vxor.u32 %v6240, 2147483648
      %v6422 = vxor.u32 %v6245, 2147483648
      %v6423 = vxor.u32 %v6250, 2147483648
      %v6424 = vxor.u32 %v6255, 2147483648
      %v6425 = vxor.u32 %v6260, 2147483648
      %v6426 = vxor.u32 %v6265, 2147483648
      %v6427 = vmul.f32 %v6419, 1.442695
      %v6428 = vpow.pop %v6427
      %v6429 = vmul.f32 %v6420, 1.442695
      %v6430 = vpow.pop %v6429
      %v6431 = vmul.f32 %v6421, 1.442695
      %v6432 = vpow.pop %v6431
      %v6433 = vmul.f32 %v6422, 1.442695
      %v6434 = vpow.pop %v6433
      %v6435 = vmul.f32 %v6423, 1.442695
      %v6436 = vpow.pop %v6435
      %v6437 = vmul.f32 %v6424, 1.442695
      %v6438 = vpow.pop %v6437
      %v6439 = vmul.f32 %v6425, 1.442695
      %v6440 = vpow.pop %v6439
      %v6441 = vmul.f32 %v6426, 1.442695
      %v6442 = vpow.pop %v6441
      %v6443 = vadd.f32 %v6428, 1.0
      %v6444 = vadd.f32 %v6430, 1.0
      %v6445 = vadd.f32 %v6432, 1.0
      %v6446 = vadd.f32 %v6434, 1.0
      %v6447 = vadd.f32 %v6436, 1.0
      %v6448 = vadd.f32 %v6438, 1.0
      %v6449 = vadd.f32 %v6440, 1.0
      %v6450 = vadd.f32 %v6442, 1.0
      %v6451 = vrcp.pop %v6443
      %v6452 = vmul.f32 1.0, %v6451
      %v6453 = vrcp.pop %v6444
      %v6454 = vmul.f32 1.0, %v6453
      %v6455 = vrcp.pop %v6445
      %v6456 = vmul.f32 1.0, %v6455
      %v6457 = vrcp.pop %v6446
      %v6458 = vmul.f32 1.0, %v6457
      %v6459 = vrcp.pop %v6447
      %v6460 = vmul.f32 1.0, %v6459
      %v6461 = vrcp.pop %v6448
      %v6462 = vmul.f32 1.0, %v6461
      %v6463 = vrcp.pop %v6449
      %v6464 = vmul.f32 1.0, %v6463
      %v6465 = vrcp.pop %v6450
      %v6466 = vmul.f32 1.0, %v6465
      %6475 = vrot.lane.b32.xlu0 %v6380, 32
      %v6476 = vpop.permute.xlu0 %6475
      %6477 = vrot.lane.b32.xlu0 %v6385, 32
      %v6478 = vpop.permute.xlu0 %6477
      %6479 = vrot.lane.b32.xlu0 %v6390, 32
      %v6480 = vpop.permute.xlu0 %6479
      %6481 = vrot.lane.b32.xlu0 %v6395, 32
      %v6482 = vpop.permute.xlu0 %6481
      %6483 = vrot.lane.b32.xlu0 %v6400, 32
      %v6484 = vpop.permute.xlu0 %6483
      %6485 = vrot.lane.b32.xlu0 %v6405, 32
      %v6486 = vpop.permute.xlu0 %6485
      %6487 = vrot.lane.b32.xlu0 %v6410, 32
      %v6488 = vpop.permute.xlu0 %6487
      %6489 = vrot.lane.b32.xlu0 %v6415, 32
      %v6490 = vpop.permute.xlu0 %6489
      %v6499 = vmul.f32 %v6452, %v6476
      %v6500 = vmul.f32 %v6454, %v6478
      %v6501 = vmul.f32 %v6456, %v6480
      %v6502 = vmul.f32 %v6458, %v6482
      %v6503 = vmul.f32 %v6460, %v6484
      %v6504 = vmul.f32 %v6462, %v6486
      %v6505 = vmul.f32 %v6464, %v6488
      %v6506 = vmul.f32 %v6466, %v6490
      %v6508 = vlaneseq
      %v6509 = vshrl.u32 %v6508, 7
      %v6510 = vsub.s32 0, %v6509
      %v6511 = vrot.slane %v6418, %v6510
      %6521 = vrot.lane.b32.xlu0 %v6499, 96
      %v6522 = vpop.permute.xlu0 %6521
      %6523 = vrot.lane.b32.xlu0 %v6500, 96
      %v6524 = vpop.permute.xlu0 %6523
      %6525 = vrot.lane.b32.xlu0 %v6501, 96
      %v6526 = vpop.permute.xlu0 %6525
      %6527 = vrot.lane.b32.xlu0 %v6502, 96
      %v6528 = vpop.permute.xlu0 %6527
      %6529 = vrot.lane.b32.xlu0 %v6503, 96
      %v6530 = vpop.permute.xlu0 %6529
      %6531 = vrot.lane.b32.xlu0 %v6504, 96
      %v6532 = vpop.permute.xlu0 %6531
      %6533 = vrot.lane.b32.xlu0 %v6505, 96
      %v6534 = vpop.permute.xlu0 %6533
      %6535 = vrot.lane.b32.xlu0 %v6506, 96
      %v6536 = vpop.permute.xlu0 %6535
      %v6545 = vmul.f32 %v6511, %v6522
      %v6546 = vmul.f32 %v6511, %v6524
      %v6547 = vmul.f32 %v6511, %v6526
      %v6548 = vmul.f32 %v6511, %v6528
      %v6549 = vmul.f32 %v6511, %v6530
      %v6550 = vmul.f32 %v6511, %v6532
      %v6551 = vmul.f32 %v6511, %v6534
      %v6552 = vmul.f32 %v6511, %v6536
      %v6553 = vadd.f32 %v4142, %v6545
      %v6554 = vadd.f32 %v4143, %v6546
      %v6555 = vadd.f32 %v4144, %v6547
      %v6556 = vadd.f32 %v4145, %v6548
      %v6557 = vadd.f32 %v4146, %v6549
      %v6558 = vadd.f32 %v4147, %v6550
      %v6559 = vadd.f32 %v4148, %v6551
      %v6560 = vadd.f32 %v4149, %v6552
      %6569 = vrot.lane.b32.xlu0 %v6553, 8
      %v6570 = vpop.permute.xlu0 %6569
      %6571 = vrot.lane.b32.xlu0 %v6554, 8
      %v6572 = vpop.permute.xlu0 %6571
      %6573 = vrot.lane.b32.xlu0 %v6555, 8
      %v6574 = vpop.permute.xlu0 %6573
      %6575 = vrot.lane.b32.xlu0 %v6556, 8
      %v6576 = vpop.permute.xlu0 %6575
      %6577 = vrot.lane.b32.xlu0 %v6557, 8
      %v6578 = vpop.permute.xlu0 %6577
      %6579 = vrot.lane.b32.xlu0 %v6558, 8
      %v6580 = vpop.permute.xlu0 %6579
      %6581 = vrot.lane.b32.xlu0 %v6559, 8
      %v6582 = vpop.permute.xlu0 %6581
      %6583 = vrot.lane.b32.xlu0 %v6560, 8
      %v6584 = vpop.permute.xlu0 %6583
      %v6593 = vsel %vm657, %v785, %v6570
      %v6594 = vsel %vm657, %v786, %v6572
      %v6595 = vsel %vm657, %v787, %v6574
      %v6596 = vsel %vm657, %v788, %v6576
      %v6597 = vsel %vm657, %v789, %v6578
      %v6598 = vsel %vm657, %v790, %v6580
      %v6599 = vsel %vm657, %v791, %v6582
      %v6600 = vsel %vm657, %v792, %v6584
      %s6601 = scalar_lea.vmem [#allocation3], 24
      %6602 = vst.msk [vmem:[%s6601 + $0x8] sm:$0xff] %vm694, %v6593
      %6603 = vst.msk [vmem:[%s6601 + $0x20] sm:$0xff] %vm694, %v6594
      %6604 = vst.msk [vmem:[%s6601 + $0x38] sm:$0xff] %vm694, %v6595
      %6605 = vst.msk [vmem:[%s6601 + $0x50] sm:$0xff] %vm694, %v6596
      %6606 = vst.msk [vmem:[%s6601 + $0x68] sm:$0xff] %vm694, %v6597
      %6607 = vst.msk [vmem:[%s6601 + $0x80] sm:$0xff] %vm694, %v6598
      %6608 = vst.msk [vmem:[%s6601 + $0x98] sm:$0xff] %vm694, %v6599
      %6609 = vst.msk [vmem:[%s6601 + $0xb0] sm:$0xff] %vm694, %v6600
      %v6610 = vld [vmem:[#allocation3] sm:$0xff]
      %v6611 = vld [vmem:[#allocation3 + $0x8] sm:$0xff]
      %v6612 = vld [vmem:[#allocation3 + $0x10] sm:$0xff]
      %v6613 = vld [vmem:[#allocation3 + $0x18] sm:$0xff]
      %v6614 = vld [vmem:[#allocation3 + $0x20] sm:$0xff]
      %v6615 = vld [vmem:[#allocation3 + $0x28] sm:$0xff]
      %v6616 = vld [vmem:[#allocation3 + $0x30] sm:$0xff]
      %v6617 = vld [vmem:[#allocation3 + $0x38] sm:$0xff]
      %v6618 = vld [vmem:[#allocation3 + $0x40] sm:$0xff]
      %v6619 = vld [vmem:[#allocation3 + $0x48] sm:$0xff]
      %v6620 = vld [vmem:[#allocation3 + $0x50] sm:$0xff]
      %v6621 = vld [vmem:[#allocation3 + $0x58] sm:$0xff]
      %v6622 = vld [vmem:[#allocation3 + $0x60] sm:$0xff]
      %v6623 = vld [vmem:[#allocation3 + $0x68] sm:$0xff]
      %v6624 = vld [vmem:[#allocation3 + $0x70] sm:$0xff]
      %v6625 = vld [vmem:[#allocation3 + $0x78] sm:$0xff]
      %v6626 = vld [vmem:[#allocation3 + $0x80] sm:$0xff]
      %v6627 = vld [vmem:[#allocation3 + $0x88] sm:$0xff]
      %v6628 = vld [vmem:[#allocation3 + $0x90] sm:$0xff]
      %v6629 = vld [vmem:[#allocation3 + $0x98] sm:$0xff]
      %v6630 = vld [vmem:[#allocation3 + $0xa0] sm:$0xff]
      %v6631 = vld [vmem:[#allocation3 + $0xa8] sm:$0xff]
      %v6632 = vld [vmem:[#allocation3 + $0xb0] sm:$0xff]
      %v6633 = vld [vmem:[#allocation3 + $0xb8] sm:$0xff]
      %v6634 = vld [vmem:[#allocation3 + $0xc0] sm:$0xff]
      %v6635 = vld [vmem:[#allocation3 + $0xc8] sm:$0xff]
      %v6636 = vld [vmem:[#allocation3 + $0xd0] sm:$0xff]
      %v6637 = vld [vmem:[#allocation3 + $0xd8] sm:$0xff]
      %v6638 = vld [vmem:[#allocation3 + $0xe0] sm:$0xff]
      %v6639 = vld [vmem:[#allocation3 + $0xe8] sm:$0xff]
      %v6656 = vrot.slane %v6610, 7
      %v6657 = vrot.slane %v6611, 7
      %v6658 = vsel %vm3547, %v6656, %v6657
      %v6659 = vrot.slane %v6613, 7
      %v6660 = vrot.slane %v6614, 7
      %v6661 = vsel %vm3547, %v6659, %v6660
      %v6662 = vrot.slane %v6616, 7
      %v6663 = vrot.slane %v6617, 7
      %v6664 = vsel %vm3547, %v6662, %v6663
      %v6665 = vrot.slane %v6619, 7
      %v6666 = vrot.slane %v6620, 7
      %v6667 = vsel %vm3547, %v6665, %v6666
      %v6668 = vrot.slane %v6622, 7
      %v6669 = vrot.slane %v6623, 7
      %v6670 = vsel %vm3547, %v6668, %v6669
      %v6671 = vrot.slane %v6625, 7
      %v6672 = vrot.slane %v6626, 7
      %v6673 = vsel %vm3547, %v6671, %v6672
      %v6674 = vrot.slane %v6628, 7
      %v6675 = vrot.slane %v6629, 7
      %v6676 = vsel %vm3547, %v6674, %v6675
      %v6677 = vrot.slane %v6631, 7
      %v6678 = vrot.slane %v6632, 7
      %v6679 = vsel %vm3547, %v6677, %v6678
      %v6696 = vrot.slane %v6611, 1
      %v6697 = vrot.slane %v6612, 1
      %v6698 = vsel %vm976, %v6696, %v6697
      %v6699 = vrot.slane %v6614, 1
      %v6700 = vrot.slane %v6615, 1
      %v6701 = vsel %vm976, %v6699, %v6700
      %v6702 = vrot.slane %v6617, 1
      %v6703 = vrot.slane %v6618, 1
      %v6704 = vsel %vm976, %v6702, %v6703
      %v6705 = vrot.slane %v6620, 1
      %v6706 = vrot.slane %v6621, 1
      %v6707 = vsel %vm976, %v6705, %v6706
      %v6708 = vrot.slane %v6623, 1
      %v6709 = vrot.slane %v6624, 1
      %v6710 = vsel %vm976, %v6708, %v6709
      %v6711 = vrot.slane %v6626, 1
      %v6712 = vrot.slane %v6627, 1
      %v6713 = vsel %vm976, %v6711, %v6712
      %v6714 = vrot.slane %v6629, 1
      %v6715 = vrot.slane %v6630, 1
      %v6716 = vsel %vm976, %v6714, %v6715
      %v6717 = vrot.slane %v6632, 1
      %v6718 = vrot.slane %v6633, 1
      %v6719 = vsel %vm976, %v6717, %v6718
      %v6722 = vrot.slane %v6634, 7
      %v6723 = vrot.slane %v6635, 7
      %v6724 = vsel %vm3547, %v6722, %v6723
      %v6726 = vrot.slane %v6635, 1
      %v6727 = vrot.slane %v6636, 1
      %v6728 = vsel %vm976, %v6726, %v6727
      %v6731 = vrot.slane %v6637, 7
      %v6732 = vrot.slane %v6638, 7
      %v6733 = vsel %vm3547, %v6731, %v6732
      %v6735 = vrot.slane %v6638, 1
      %v6736 = vrot.slane %v6639, 1
      %v6737 = vsel %vm976, %v6735, %v6736
      %6738 = vrot.lane.b32.xlu0 %v6611, 16
      %v6739 = vpop.permute.xlu0 %6738
      %6740 = vrot.lane.b32.xlu0 %v6614, 16
      %v6741 = vpop.permute.xlu0 %6740
      %6742 = vrot.lane.b32.xlu0 %v6617, 16
      %v6743 = vpop.permute.xlu0 %6742
      %6744 = vrot.lane.b32.xlu0 %v6620, 16
      %v6745 = vpop.permute.xlu0 %6744
      %6746 = vrot.lane.b32.xlu0 %v6623, 16
      %v6747 = vpop.permute.xlu0 %6746
      %6748 = vrot.lane.b32.xlu0 %v6626, 16
      %v6749 = vpop.permute.xlu0 %6748
      %6750 = vrot.lane.b32.xlu0 %v6629, 16
      %v6751 = vpop.permute.xlu0 %6750
      %6752 = vrot.lane.b32.xlu0 %v6632, 16
      %v6753 = vpop.permute.xlu0 %6752
      %6762 = vrot.lane.b32.xlu0 %v6698, 32
      %v6763 = vpop.permute.xlu0 %6762
      %6764 = vrot.lane.b32.xlu0 %v6701, 32
      %v6765 = vpop.permute.xlu0 %6764
      %6766 = vrot.lane.b32.xlu0 %v6704, 32
      %v6767 = vpop.permute.xlu0 %6766
      %6768 = vrot.lane.b32.xlu0 %v6707, 32
      %v6769 = vpop.permute.xlu0 %6768
      %6770 = vrot.lane.b32.xlu0 %v6710, 32
      %v6771 = vpop.permute.xlu0 %6770
      %6772 = vrot.lane.b32.xlu0 %v6713, 32
      %v6773 = vpop.permute.xlu0 %6772
      %6774 = vrot.lane.b32.xlu0 %v6716, 32
      %v6775 = vpop.permute.xlu0 %6774
      %6776 = vrot.lane.b32.xlu0 %v6719, 32
      %v6777 = vpop.permute.xlu0 %6776
      %6786 = vrot.lane.b32.xlu0 %v6661, 48
      %v6787 = vpop.permute.xlu0 %6786
      %6788 = vrot.lane.b32.xlu0 %v6664, 48
      %v6789 = vpop.permute.xlu0 %6788
      %6790 = vrot.lane.b32.xlu0 %v6667, 48
      %v6791 = vpop.permute.xlu0 %6790
      %6792 = vrot.lane.b32.xlu0 %v6670, 48
      %v6793 = vpop.permute.xlu0 %6792
      %6794 = vrot.lane.b32.xlu0 %v6673, 48
      %v6795 = vpop.permute.xlu0 %6794
      %6796 = vrot.lane.b32.xlu0 %v6676, 48
      %v6797 = vpop.permute.xlu0 %6796
      %6798 = vrot.lane.b32.xlu0 %v6679, 48
      %v6799 = vpop.permute.xlu0 %6798
      %6800 = vrot.lane.b32.xlu0 %v6724, 48
      %v6801 = vpop.permute.xlu0 %6800
      %6810 = vrot.lane.b32.xlu0 %v6614, 64
      %v6811 = vpop.permute.xlu0 %6810
      %6812 = vrot.lane.b32.xlu0 %v6617, 64
      %v6813 = vpop.permute.xlu0 %6812
      %6814 = vrot.lane.b32.xlu0 %v6620, 64
      %v6815 = vpop.permute.xlu0 %6814
      %6816 = vrot.lane.b32.xlu0 %v6623, 64
      %v6817 = vpop.permute.xlu0 %6816
      %6818 = vrot.lane.b32.xlu0 %v6626, 64
      %v6819 = vpop.permute.xlu0 %6818
      %6820 = vrot.lane.b32.xlu0 %v6629, 64
      %v6821 = vpop.permute.xlu0 %6820
      %6822 = vrot.lane.b32.xlu0 %v6632, 64
      %v6823 = vpop.permute.xlu0 %6822
      %6824 = vrot.lane.b32.xlu0 %v6635, 64
      %v6825 = vpop.permute.xlu0 %6824
      %6834 = vrot.lane.b32.xlu0 %v6701, 80
      %v6835 = vpop.permute.xlu0 %6834
      %6836 = vrot.lane.b32.xlu0 %v6704, 80
      %v6837 = vpop.permute.xlu0 %6836
      %6838 = vrot.lane.b32.xlu0 %v6707, 80
      %v6839 = vpop.permute.xlu0 %6838
      %6840 = vrot.lane.b32.xlu0 %v6710, 80
      %v6841 = vpop.permute.xlu0 %6840
      %6842 = vrot.lane.b32.xlu0 %v6713, 80
      %v6843 = vpop.permute.xlu0 %6842
      %6844 = vrot.lane.b32.xlu0 %v6716, 80
      %v6845 = vpop.permute.xlu0 %6844
      %6846 = vrot.lane.b32.xlu0 %v6719, 80
      %v6847 = vpop.permute.xlu0 %6846
      %6848 = vrot.lane.b32.xlu0 %v6728, 80
      %v6849 = vpop.permute.xlu0 %6848
      %6858 = vrot.lane.b32.xlu0 %v6664, 96
      %v6859 = vpop.permute.xlu0 %6858
      %6860 = vrot.lane.b32.xlu0 %v6667, 96
      %v6861 = vpop.permute.xlu0 %6860
      %6862 = vrot.lane.b32.xlu0 %v6670, 96
      %v6863 = vpop.permute.xlu0 %6862
      %6864 = vrot.lane.b32.xlu0 %v6673, 96
      %v6865 = vpop.permute.xlu0 %6864
      %6866 = vrot.lane.b32.xlu0 %v6676, 96
      %v6867 = vpop.permute.xlu0 %6866
      %6868 = vrot.lane.b32.xlu0 %v6679, 96
      %v6869 = vpop.permute.xlu0 %6868
      %6870 = vrot.lane.b32.xlu0 %v6724, 96
      %v6871 = vpop.permute.xlu0 %6870
      %6872 = vrot.lane.b32.xlu0 %v6733, 96
      %v6873 = vpop.permute.xlu0 %6872
      %6882 = vrot.lane.b32.xlu0 %v6617, 112
      %v6883 = vpop.permute.xlu0 %6882
      %6884 = vrot.lane.b32.xlu0 %v6620, 112
      %v6885 = vpop.permute.xlu0 %6884
      %6886 = vrot.lane.b32.xlu0 %v6623, 112
      %v6887 = vpop.permute.xlu0 %6886
      %6888 = vrot.lane.b32.xlu0 %v6626, 112
      %v6889 = vpop.permute.xlu0 %6888
      %6890 = vrot.lane.b32.xlu0 %v6629, 112
      %v6891 = vpop.permute.xlu0 %6890
      %6892 = vrot.lane.b32.xlu0 %v6632, 112
      %v6893 = vpop.permute.xlu0 %6892
      %6894 = vrot.lane.b32.xlu0 %v6635, 112
      %v6895 = vpop.permute.xlu0 %6894
      %6896 = vrot.lane.b32.xlu0 %v6638, 112
      %v6897 = vpop.permute.xlu0 %6896
      %v6906 = vsel %vm694, %v6658, %v6739
      %v6907 = vsel %vm694, %v6661, %v6741
      %v6908 = vsel %vm694, %v6664, %v6743
      %v6909 = vsel %vm694, %v6667, %v6745
      %v6910 = vsel %vm694, %v6670, %v6747
      %v6911 = vsel %vm694, %v6673, %v6749
      %v6912 = vsel %vm694, %v6676, %v6751
      %v6913 = vsel %vm694, %v6679, %v6753
      %v6914 = vsel %vm6288, %v6906, %v6763
      %v6915 = vsel %vm6288, %v6907, %v6765
      %v6916 = vsel %vm6288, %v6908, %v6767
      %v6917 = vsel %vm6288, %v6909, %v6769
      %v6918 = vsel %vm6288, %v6910, %v6771
      %v6919 = vsel %vm6288, %v6911, %v6773
      %v6920 = vsel %vm6288, %v6912, %v6775
      %v6921 = vsel %vm6288, %v6913, %v6777
      %vm6922 = vcmask 392192
      %v6923 = vsel %vm6922, %v6914, %v6787
      %v6924 = vsel %vm6922, %v6915, %v6789
      %v6925 = vsel %vm6922, %v6916, %v6791
      %v6926 = vsel %vm6922, %v6917, %v6793
      %v6927 = vsel %vm6922, %v6918, %v6795
      %v6928 = vsel %vm6922, %v6919, %v6797
      %v6929 = vsel %vm6922, %v6920, %v6799
      %v6930 = vsel %vm6922, %v6921, %v6801
      %v6931 = vsel %vm3756, %v6923, %v6811
      %v6932 = vsel %vm3756, %v6924, %v6813
      %v6933 = vsel %vm3756, %v6925, %v6815
      %v6934 = vsel %vm3756, %v6926, %v6817
      %v6935 = vsel %vm3756, %v6927, %v6819
      %v6936 = vsel %vm3756, %v6928, %v6821
      %v6937 = vsel %vm3756, %v6929, %v6823
      %v6938 = vsel %vm3756, %v6930, %v6825
      %vm6939 = vcmask 654336
      %v6940 = vsel %vm6939, %v6931, %v6835
      %v6941 = vsel %vm6939, %v6932, %v6837
      %v6942 = vsel %vm6939, %v6933, %v6839
      %v6943 = vsel %vm6939, %v6934, %v6841
      %v6944 = vsel %vm6939, %v6935, %v6843
      %v6945 = vsel %vm6939, %v6936, %v6845
      %v6946 = vsel %vm6939, %v6937, %v6847
      %v6947 = vsel %vm6939, %v6938, %v6849
      %vm6948 = vcmask 785408
      %v6949 = vsel %vm6948, %v6940, %v6859
      %v6950 = vsel %vm6948, %v6941, %v6861
      %v6951 = vsel %vm6948, %v6942, %v6863
      %v6952 = vsel %vm6948, %v6943, %v6865
      %v6953 = vsel %vm6948, %v6944, %v6867
      %v6954 = vsel %vm6948, %v6945, %v6869
      %v6955 = vsel %vm6948, %v6946, %v6871
      %v6956 = vsel %vm6948, %v6947, %v6873
      %vm6957 = vcmask 916480
      %v6958 = vsel %vm6957, %v6949, %v6883
      %v6959 = vsel %vm6957, %v6950, %v6885
      %v6960 = vsel %vm6957, %v6951, %v6887
      %v6961 = vsel %vm6957, %v6952, %v6889
      %v6962 = vsel %vm6957, %v6953, %v6891
      %v6963 = vsel %vm6957, %v6954, %v6893
      %v6964 = vsel %vm6957, %v6955, %v6895
      %v6965 = vsel %vm6957, %v6956, %v6897
      %v6966 = vld [vmem:[%s15] sm:$0xff]
      %v6967 = vld [vmem:[%s15 + $0x8] sm:$0xff]
      %v6968 = vld [vmem:[%s15 + $0x10] sm:$0xff]
      %v6969 = vld [vmem:[%s15 + $0x18] sm:$0xff]
      %v6970 = vld [vmem:[%s15 + $0x20] sm:$0xff]
      %v6971 = vld [vmem:[%s15 + $0x28] sm:$0xff]
      %v6972 = vld [vmem:[%s15 + $0x30] sm:$0xff]
      %v6973 = vld [vmem:[%s15 + $0x38] sm:$0xff]
      %v6974 = vld [vmem:[%s15 + $0x40] sm:$0xff]
      %v6975 = vld [vmem:[%s15 + $0x48] sm:$0xff]
      %v6976 = vld [vmem:[%s15 + $0x50] sm:$0xff]
      %v6977 = vld [vmem:[%s15 + $0x58] sm:$0xff]
      %v6978 = vld [vmem:[%s15 + $0x60] sm:$0xff]
      %v6979 = vld [vmem:[%s15 + $0x68] sm:$0xff]
      %v6980 = vld [vmem:[%s15 + $0x70] sm:$0xff]
      %v6981 = vld [vmem:[%s15 + $0x78] sm:$0xff]
      %v6982 = vld [vmem:[%s15 + $0x80] sm:$0xff]
      %v6983 = vld [vmem:[%s15 + $0x88] sm:$0xff]
      %v6984 = vld [vmem:[%s16] sm:$0x1]
      %v6986 = vlaneseq
      %v6987 = vshrl.u32 %v6986, 7
      %v6988 = vsub.s32 0, %v6987
      %v6989 = vrot.slane %v6984, %v6988
      %v6991 = vsel %vm694, %v6704, 0
      %v6993 = vsel %vm694, %v6707, 0
      %v6995 = vsel %vm694, %v6710, 0
      %v6997 = vsel %vm694, %v6713, 0
      %v6999 = vsel %vm694, %v6716, 0
      %v7001 = vsel %vm694, %v6719, 0
      %v7003 = vsel %vm694, %v6728, 0
      %v7005 = vsel %vm694, %v6737, 0
      %7007 = vmatprep.subr.mxu0 0.0
      %7008 = vmatpush1.msra.mxu0 %v6966
      %7009 = vmatprep.subr.mxu0 0.0
      %7010 = vmatpush1.msra.mxu0 %v6967
      %7011 = vmatprep.subr.mxu0 0.0
      %7012 = vmatpush1.msra.mxu0 %v6968
      %7013 = vmatprep.subr.mxu0 0.0
      %7014 = vmatpush1.msra.mxu0 %v6969
      %7015 = vmatprep.subr.mxu0 0.0
      %7016 = vmatpush1.msra.mxu0 %v6970
      %7017 = vmatprep.subr.mxu0 0.0
      %7018 = vmatpush1.msra.mxu0 %v6971
      %7019 = vmatprep.subr.mxu0 0.0
      %7020 = vmatpush1.msra.mxu0 %v6972
      %7021 = vmatprep.subr.mxu0 0.0
      %7022 = vmatpush1.msra.mxu0 %v6973
      %7023 = vmatprep.subr.mxu0 0.0
      %7024 = vmatpush1.msra.mxu0 %v6974
      %7025 = vmatprep.subr.mxu0 0.0
      %7026 = vmatpush1.msra.mxu0 %v6975
      %7027 = vmatprep.subr.mxu0 0.0
      %7028 = vmatpush1.msra.mxu0 %v6976
      %7029 = vmatprep.subr.mxu0 0.0
      %7030 = vmatpush1.msra.mxu0 %v6977
      %7031 = vmatprep.subr.mxu0 0.0
      %7032 = vmatpush1.msra.mxu0 %v6978
      %7033 = vmatprep.subr.mxu0 0.0
      %7034 = vmatpush1.msra.mxu0 %v6979
      %7035 = vmatprep.subr.mxu0 0.0
      %7036 = vmatpush1.msra.mxu0 %v6980
      %7037 = vmatprep.subr.mxu0 0.0
      %7038 = vmatpush1.msra.mxu0 %v6981
      %7039 = vmatprep.subr.mxu0 0.0
      %7040 = vmatpush1.msra.mxu0 %v6982
      %7041 = vmatprep.subr.mxu0 0.0
      %7042 = vmatpush1.msra.mxu0 %v6983
      %7043 = vmatprep.subr.mxu0 0.0
      %7044 = vmatpush1.msra.mxu0 0.0
      %7045 = vmatprep.subr.mxu0 0.0
      %7046 = vmatpush1.msra.mxu0 0.0
      %7047 = vmatprep.subr.mxu0 0.0
      %7048 = vmatpush1.msra.mxu0 0.0
      %7049 = vmatprep.subr.mxu0 0.0
      %7050 = vmatpush1.msra.mxu0 0.0
      %7051 = vmatprep.subr.mxu0 0.0
      %7052 = vmatpush1.msra.mxu0 0.0
      %7053 = vmatprep.subr.mxu0 0.0
      %7054 = vmatpush1.msra.mxu0 0.0
      %7055 = vmatprep.subr.mxu0 0.0
      %7056 = vmatpush1.msra.mxu0 0.0
      %7057 = vmatprep.subr.mxu0 0.0
      %7058 = vmatpush1.msra.mxu0 0.0
      %7059 = vmatprep.subr.mxu0 0.0
      %7060 = vmatpush1.msra.mxu0 0.0
      %7061 = vmatprep.subr.mxu0 0.0
      %7062 = vmatpush1.msra.mxu0 0.0
      %7063 = vmatprep.subr.mxu0 0.0
      %7064 = vmatpush1.msra.mxu0 0.0
      %7065 = vmatprep.subr.mxu0 0.0
      %7066 = vmatpush1.msra.mxu0 0.0
      %7067 = vmatprep.subr.mxu0 0.0
      %7068 = vmatpush1.msra.mxu0 0.0
      %7069 = vmatprep.subr.mxu0 0.0
      %7070 = vmatpush1.msra.mxu0 0.0
      %7071 = vmatprep.mubr.f32.mxu0 %v6991
      %7072 = vmatmul.mubr.f32.gmra.mrb[0].mxu0 %v6958
      %v7073 = vpop.f32.mrb[0].mxu0
      %v7074 = vadd.f32 %v6989, %v7073
      %v7075 = vpop.f32.mrb[0].mxu0
      %7076 = vmatprep.mubr.f32.mxu0 %v6993
      %7077 = vmatmul.mubr.f32.gmra.mrb[0].mxu0 %v6959
      %v7078 = vpop.f32.mrb[0].mxu0
      %v7079 = vadd.f32 %v6989, %v7078
      %v7080 = vpop.f32.mrb[0].mxu0
      %7081 = vmatprep.mubr.f32.mxu0 %v6995
      %7082 = vmatmul.mubr.f32.gmra.mrb[0].mxu0 %v6960
      %v7083 = vpop.f32.mrb[0].mxu0
      %v7084 = vadd.f32 %v6989, %v7083
      %v7085 = vpop.f32.mrb[0].mxu0
      %7086 = vmatprep.mubr.f32.mxu0 %v6997
      %7087 = vmatmul.mubr.f32.gmra.mrb[0].mxu0 %v6961
      %v7088 = vpop.f32.mrb[0].mxu0
      %v7089 = vadd.f32 %v6989, %v7088
      %v7090 = vpop.f32.mrb[0].mxu0
      %7091 = vmatprep.mubr.f32.mxu0 %v6999
      %7092 = vmatmul.mubr.f32.gmra.mrb[0].mxu0 %v6962
      %v7093 = vpop.f32.mrb[0].mxu0
      %v7094 = vadd.f32 %v6989, %v7093
      %v7095 = vpop.f32.mrb[0].mxu0
      %7096 = vmatprep.mubr.f32.mxu0 %v7001
      %7097 = vmatmul.mubr.f32.gmra.mrb[0].mxu0 %v6963
      %v7098 = vpop.f32.mrb[0].mxu0
      %v7099 = vadd.f32 %v6989, %v7098
      %v7100 = vpop.f32.mrb[0].mxu0
      %7101 = vmatprep.mubr.f32.mxu0 %v7003
      %7102 = vmatmul.mubr.f32.gmra.mrb[0].mxu0 %v6964
      %v7103 = vpop.f32.mrb[0].mxu0
      %v7104 = vadd.f32 %v6989, %v7103
      %v7105 = vpop.f32.mrb[0].mxu0
      %7106 = vmatprep.mubr.f32.mxu0 %v7005
      %7107 = vmatmul.mubr.f32.gmra.mrb[0].mxu0 %v6965
      %v7108 = vpop.f32.mrb[0].mxu0
      %v7109 = vadd.f32 %v6989, %v7108
      %v7110 = vpop.f32.mrb[0].mxu0
      %7111 = vdwg.mxu0
      %v7112 = vmax.f32 %v7074, 0.0
      %v7113 = vmax.f32 %v7079, 0.0
      %v7114 = vmax.f32 %v7084, 0.0
      %v7115 = vmax.f32 %v7089, 0.0
      %v7116 = vmax.f32 %v7094, 0.0
      %v7117 = vmax.f32 %v7099, 0.0
      %v7118 = vmax.f32 %v7104, 0.0
      %v7119 = vmax.f32 %v7109, 0.0
      %vm7120 = vcmp.ne.f32.partialorder %v7074, %v7074
      %vm7121 = vcmp.ne.f32.partialorder %v7079, %v7079
      %vm7122 = vcmp.ne.f32.partialorder %v7084, %v7084
      %vm7123 = vcmp.ne.f32.partialorder %v7089, %v7089
      %vm7124 = vcmp.ne.f32.partialorder %v7094, %v7094
      %vm7125 = vcmp.ne.f32.partialorder %v7099, %v7099
      %vm7126 = vcmp.ne.f32.partialorder %v7104, %v7104
      %vm7127 = vcmp.ne.f32.partialorder %v7109, %v7109
      %v7128 = vadd.f32 %v7074, 0.0
      %v7129 = vadd.f32 %v7079, 0.0
      %v7130 = vadd.f32 %v7084, 0.0
      %v7131 = vadd.f32 %v7089, 0.0
      %v7132 = vadd.f32 %v7094, 0.0
      %v7133 = vadd.f32 %v7099, 0.0
      %v7134 = vadd.f32 %v7104, 0.0
      %v7135 = vadd.f32 %v7109, 0.0
      %v7136 = vand.u32 2147483647, %v7074
      %v7137 = vand.u32 2147483647, %v7079
      %v7138 = vand.u32 2147483647, %v7084
      %v7139 = vand.u32 2147483647, %v7089
      %v7140 = vand.u32 2147483647, %v7094
      %v7141 = vand.u32 2147483647, %v7099
      %v7142 = vand.u32 2147483647, %v7104
      %v7143 = vand.u32 2147483647, %v7109
      %v7144 = vsub.f32 0.0, %v7136
      %v7145 = vsub.f32 0.0, %v7137
      %v7146 = vsub.f32 0.0, %v7138
      %v7147 = vsub.f32 0.0, %v7139
      %v7148 = vsub.f32 0.0, %v7140
      %v7149 = vsub.f32 0.0, %v7141
      %v7150 = vsub.f32 0.0, %v7142
      %v7151 = vsub.f32 0.0, %v7143
      %v7152 = vmul.f32 %v7144, 1.442695
      %v7153 = vpow.pop %v7152
      %v7154 = vmul.f32 %v7145, 1.442695
      %v7155 = vpow.pop %v7154
      %v7156 = vmul.f32 %v7146, 1.442695
      %v7157 = vpow.pop %v7156
      %v7158 = vmul.f32 %v7147, 1.442695
      %v7159 = vpow.pop %v7158
      %v7160 = vmul.f32 %v7148, 1.442695
      %v7161 = vpow.pop %v7160
      %v7162 = vmul.f32 %v7149, 1.442695
      %v7163 = vpow.pop %v7162
      %v7164 = vmul.f32 %v7150, 1.442695
      %v7165 = vpow.pop %v7164
      %v7166 = vmul.f32 %v7151, 1.442695
      %v7167 = vpow.pop %v7166
      %v7168 = vadd.f32 %v7153, 1.0
      %v7169 = vlog2.pop %v7168
      %v7170 = vmul.f32 %v7169, 0.6931472
      %v7171 = vmul.f32 -0.5, %v7153
      %v7172 = vadd.f32 %v7171, 1.0
      %v7173 = vmul.f32 %v7172, %v7153
      %v7174 = vand.u32 2147483647, %v7153
      %vm7175 = vcmp.lt.f32.partialorder %v7174, 0.0004427343
      %v7176 = vsel %vm7175, %v7173, %v7170
      %v7177 = vadd.f32 %v7155, 1.0
      %v7178 = vlog2.pop %v7177
      %v7179 = vmul.f32 %v7178, 0.6931472
      %v7180 = vmul.f32 -0.5, %v7155
      %v7181 = vadd.f32 %v7180, 1.0
      %v7182 = vmul.f32 %v7181, %v7155
      %v7183 = vand.u32 2147483647, %v7155
      %vm7184 = vcmp.lt.f32.partialorder %v7183, 0.0004427343
      %v7185 = vsel %vm7184, %v7182, %v7179
      %v7186 = vadd.f32 %v7157, 1.0
      %v7187 = vlog2.pop %v7186
      %v7188 = vmul.f32 %v7187, 0.6931472
      %v7189 = vmul.f32 -0.5, %v7157
      %v7190 = vadd.f32 %v7189, 1.0
      %v7191 = vmul.f32 %v7190, %v7157
      %v7192 = vand.u32 2147483647, %v7157
      %vm7193 = vcmp.lt.f32.partialorder %v7192, 0.0004427343
      %v7194 = vsel %vm7193, %v7191, %v7188
      %v7195 = vadd.f32 %v7159, 1.0
      %v7196 = vlog2.pop %v7195
      %v7197 = vmul.f32 %v7196, 0.6931472
      %v7198 = vmul.f32 -0.5, %v7159
      %v7199 = vadd.f32 %v7198, 1.0
      %v7200 = vmul.f32 %v7199, %v7159
      %v7201 = vand.u32 2147483647, %v7159
      %vm7202 = vcmp.lt.f32.partialorder %v7201, 0.0004427343
      %v7203 = vsel %vm7202, %v7200, %v7197
      %v7204 = vadd.f32 %v7161, 1.0
      %v7205 = vlog2.pop %v7204
      %v7206 = vmul.f32 %v7205, 0.6931472
      %v7207 = vmul.f32 -0.5, %v7161
      %v7208 = vadd.f32 %v7207, 1.0
      %v7209 = vmul.f32 %v7208, %v7161
      %v7210 = vand.u32 2147483647, %v7161
      %vm7211 = vcmp.lt.f32.partialorder %v7210, 0.0004427343
      %v7212 = vsel %vm7211, %v7209, %v7206
      %v7213 = vadd.f32 %v7163, 1.0
      %v7214 = vlog2.pop %v7213
      %v7215 = vmul.f32 %v7214, 0.6931472
      %v7216 = vmul.f32 -0.5, %v7163
      %v7217 = vadd.f32 %v7216, 1.0
      %v7218 = vmul.f32 %v7217, %v7163
      %v7219 = vand.u32 2147483647, %v7163
      %vm7220 = vcmp.lt.f32.partialorder %v7219, 0.0004427343
      %v7221 = vsel %vm7220, %v7218, %v7215
      %v7222 = vadd.f32 %v7165, 1.0
      %v7223 = vlog2.pop %v7222
      %v7224 = vmul.f32 %v7223, 0.6931472
      %v7225 = vmul.f32 -0.5, %v7165
      %v7226 = vadd.f32 %v7225, 1.0
      %v7227 = vmul.f32 %v7226, %v7165
      %v7228 = vand.u32 2147483647, %v7165
      %vm7229 = vcmp.lt.f32.partialorder %v7228, 0.0004427343
      %v7230 = vsel %vm7229, %v7227, %v7224
      %v7231 = vadd.f32 %v7167, 1.0
      %v7232 = vlog2.pop %v7231
      %v7233 = vmul.f32 %v7232, 0.6931472
      %v7234 = vmul.f32 -0.5, %v7167
      %v7235 = vadd.f32 %v7234, 1.0
      %v7236 = vmul.f32 %v7235, %v7167
      %v7237 = vand.u32 2147483647, %v7167
      %vm7238 = vcmp.lt.f32.partialorder %v7237, 0.0004427343
      %v7239 = vsel %vm7238, %v7236, %v7233
      %v7240 = vadd.f32 %v7112, %v7176
      %v7241 = vadd.f32 %v7113, %v7185
      %v7242 = vadd.f32 %v7114, %v7194
      %v7243 = vadd.f32 %v7115, %v7203
      %v7244 = vadd.f32 %v7116, %v7212
      %v7245 = vadd.f32 %v7117, %v7221
      %v7246 = vadd.f32 %v7118, %v7230
      %v7247 = vadd.f32 %v7119, %v7239
      %v7248 = vsel %vm7120, %v7128, %v7240
      %v7249 = vsel %vm7121, %v7129, %v7241
      %v7250 = vsel %vm7122, %v7130, %v7242
      %v7251 = vsel %vm7123, %v7131, %v7243
      %v7252 = vsel %vm7124, %v7132, %v7244
      %v7253 = vsel %vm7125, %v7133, %v7245
      %v7254 = vsel %vm7126, %v7134, %v7246
      %v7255 = vsel %vm7127, %v7135, %v7247
      %v7256 = vtanh.pop %v7248
      %v7257 = vtanh.pop %v7249
      %v7258 = vtanh.pop %v7250
      %v7259 = vtanh.pop %v7251
      %v7260 = vtanh.pop %v7252
      %v7261 = vtanh.pop %v7253
      %v7262 = vtanh.pop %v7254
      %v7263 = vtanh.pop %v7255
      %v7264 = vmul.f32 %v7074, %v7256
      %v7265 = vmul.f32 %v7079, %v7257
      %v7266 = vmul.f32 %v7084, %v7258
      %v7267 = vmul.f32 %v7089, %v7259
      %v7268 = vmul.f32 %v7094, %v7260
      %v7269 = vmul.f32 %v7099, %v7261
      %v7270 = vmul.f32 %v7104, %v7262
      %v7271 = vmul.f32 %v7109, %v7263
      %s7272 = scalar_lea.vmem [#allocation4], 24
      %7273 = vst.msk [vmem:[%s7272 + $0x8] sm:$0xff] %vm657, %v7264
      %7274 = vst.msk [vmem:[%s7272 + $0x20] sm:$0xff] %vm657, %v7265
      %7275 = vst.msk [vmem:[%s7272 + $0x38] sm:$0xff] %vm657, %v7266
      %7276 = vst.msk [vmem:[%s7272 + $0x50] sm:$0xff] %vm657, %v7267
      %7277 = vst.msk [vmem:[%s7272 + $0x68] sm:$0xff] %vm657, %v7268
      %7278 = vst.msk [vmem:[%s7272 + $0x80] sm:$0xff] %vm657, %v7269
      %7279 = vst.msk [vmem:[%s7272 + $0x98] sm:$0xff] %vm657, %v7270
      %7280 = vst.msk [vmem:[%s7272 + $0xb0] sm:$0xff] %vm657, %v7271
      %v7281 = vld [vmem:[#allocation4] sm:$0xff]
      %v7282 = vld [vmem:[#allocation4 + $0x8] sm:$0xff]
      %v7283 = vld [vmem:[#allocation4 + $0x10] sm:$0xff]
      %v7284 = vld [vmem:[#allocation4 + $0x18] sm:$0xff]
      %v7285 = vld [vmem:[#allocation4 + $0x20] sm:$0xff]
      %v7286 = vld [vmem:[#allocation4 + $0x28] sm:$0xff]
      %v7287 = vld [vmem:[#allocation4 + $0x30] sm:$0xff]
      %v7288 = vld [vmem:[#allocation4 + $0x38] sm:$0xff]
      %v7289 = vld [vmem:[#allocation4 + $0x40] sm:$0xff]
      %v7290 = vld [vmem:[#allocation4 + $0x48] sm:$0xff]
      %v7291 = vld [vmem:[#allocation4 + $0x50] sm:$0xff]
      %v7292 = vld [vmem:[#allocation4 + $0x58] sm:$0xff]
      %v7293 = vld [vmem:[#allocation4 + $0x60] sm:$0xff]
      %v7294 = vld [vmem:[#allocation4 + $0x68] sm:$0xff]
      %v7295 = vld [vmem:[#allocation4 + $0x70] sm:$0xff]
      %v7296 = vld [vmem:[#allocation4 + $0x78] sm:$0xff]
      %v7297 = vld [vmem:[#allocation4 + $0x80] sm:$0xff]
      %v7298 = vld [vmem:[#allocation4 + $0x88] sm:$0xff]
      %v7299 = vld [vmem:[#allocation4 + $0x90] sm:$0xff]
      %v7300 = vld [vmem:[#allocation4 + $0x98] sm:$0xff]
      %v7301 = vld [vmem:[#allocation4 + $0xa0] sm:$0xff]
      %v7302 = vld [vmem:[#allocation4 + $0xa8] sm:$0xff]
      %v7303 = vld [vmem:[#allocation4 + $0xb0] sm:$0xff]
      %v7304 = vld [vmem:[#allocation4 + $0xb8] sm:$0xff]
      %v7305 = vld [vmem:[#allocation4 + $0xc0] sm:$0xff]
      %v7306 = vld [vmem:[#allocation4 + $0xc8] sm:$0xff]
      %v7307 = vld [vmem:[#allocation4 + $0xd0] sm:$0xff]
      %v7308 = vld [vmem:[#allocation4 + $0xd8] sm:$0xff]
      %v7309 = vld [vmem:[#allocation4 + $0xe0] sm:$0xff]
      %v7310 = vld [vmem:[#allocation4 + $0xe8] sm:$0xff]
      %v7327 = vrot.slane %v7281, 7
      %v7328 = vrot.slane %v7282, 7
      %v7329 = vsel %vm3547, %v7327, %v7328
      %v7330 = vrot.slane %v7284, 7
      %v7331 = vrot.slane %v7285, 7
      %v7332 = vsel %vm3547, %v7330, %v7331
      %v7333 = vrot.slane %v7287, 7
      %v7334 = vrot.slane %v7288, 7
      %v7335 = vsel %vm3547, %v7333, %v7334
      %v7336 = vrot.slane %v7290, 7
      %v7337 = vrot.slane %v7291, 7
      %v7338 = vsel %vm3547, %v7336, %v7337
      %v7339 = vrot.slane %v7293, 7
      %v7340 = vrot.slane %v7294, 7
      %v7341 = vsel %vm3547, %v7339, %v7340
      %v7342 = vrot.slane %v7296, 7
      %v7343 = vrot.slane %v7297, 7
      %v7344 = vsel %vm3547, %v7342, %v7343
      %v7345 = vrot.slane %v7299, 7
      %v7346 = vrot.slane %v7300, 7
      %v7347 = vsel %vm3547, %v7345, %v7346
      %v7348 = vrot.slane %v7302, 7
      %v7349 = vrot.slane %v7303, 7
      %v7350 = vsel %vm3547, %v7348, %v7349
      %v7367 = vrot.slane %v7282, 1
      %v7368 = vrot.slane %v7283, 1
      %v7369 = vsel %vm976, %v7367, %v7368
      %v7370 = vrot.slane %v7285, 1
      %v7371 = vrot.slane %v7286, 1
      %v7372 = vsel %vm976, %v7370, %v7371
      %v7373 = vrot.slane %v7288, 1
      %v7374 = vrot.slane %v7289, 1
      %v7375 = vsel %vm976, %v7373, %v7374
      %v7376 = vrot.slane %v7291, 1
      %v7377 = vrot.slane %v7292, 1
      %v7378 = vsel %vm976, %v7376, %v7377
      %v7379 = vrot.slane %v7294, 1
      %v7380 = vrot.slane %v7295, 1
      %v7381 = vsel %vm976, %v7379, %v7380
      %v7382 = vrot.slane %v7297, 1
      %v7383 = vrot.slane %v7298, 1
      %v7384 = vsel %vm976, %v7382, %v7383
      %v7385 = vrot.slane %v7300, 1
      %v7386 = vrot.slane %v7301, 1
      %v7387 = vsel %vm976, %v7385, %v7386
      %v7388 = vrot.slane %v7303, 1
      %v7389 = vrot.slane %v7304, 1
      %v7390 = vsel %vm976, %v7388, %v7389
      %v7393 = vrot.slane %v7305, 7
      %v7394 = vrot.slane %v7306, 7
      %v7395 = vsel %vm3547, %v7393, %v7394
      %v7397 = vrot.slane %v7306, 1
      %v7398 = vrot.slane %v7307, 1
      %v7399 = vsel %vm976, %v7397, %v7398
      %v7402 = vrot.slane %v7308, 7
      %v7403 = vrot.slane %v7309, 7
      %v7404 = vsel %vm3547, %v7402, %v7403
      %v7406 = vrot.slane %v7309, 1
      %v7407 = vrot.slane %v7310, 1
      %v7408 = vsel %vm976, %v7406, %v7407
      %7409 = vrot.lane.b32.xlu0 %v7282, 8
      %v7410 = vpop.permute.xlu0 %7409
      %7411 = vrot.lane.b32.xlu0 %v7285, 8
      %v7412 = vpop.permute.xlu0 %7411
      %7413 = vrot.lane.b32.xlu0 %v7288, 8
      %v7414 = vpop.permute.xlu0 %7413
      %7415 = vrot.lane.b32.xlu0 %v7291, 8
      %v7416 = vpop.permute.xlu0 %7415
      %7417 = vrot.lane.b32.xlu0 %v7294, 8
      %v7418 = vpop.permute.xlu0 %7417
      %7419 = vrot.lane.b32.xlu0 %v7297, 8
      %v7420 = vpop.permute.xlu0 %7419
      %7421 = vrot.lane.b32.xlu0 %v7300, 8
      %v7422 = vpop.permute.xlu0 %7421
      %7423 = vrot.lane.b32.xlu0 %v7303, 8
      %v7424 = vpop.permute.xlu0 %7423
      %7433 = vrot.lane.b32.xlu0 %v7369, 16
      %v7434 = vpop.permute.xlu0 %7433
      %7435 = vrot.lane.b32.xlu0 %v7372, 16
      %v7436 = vpop.permute.xlu0 %7435
      %7437 = vrot.lane.b32.xlu0 %v7375, 16
      %v7438 = vpop.permute.xlu0 %7437
      %7439 = vrot.lane.b32.xlu0 %v7378, 16
      %v7440 = vpop.permute.xlu0 %7439
      %7441 = vrot.lane.b32.xlu0 %v7381, 16
      %v7442 = vpop.permute.xlu0 %7441
      %7443 = vrot.lane.b32.xlu0 %v7384, 16
      %v7444 = vpop.permute.xlu0 %7443
      %7445 = vrot.lane.b32.xlu0 %v7387, 16
      %v7446 = vpop.permute.xlu0 %7445
      %7447 = vrot.lane.b32.xlu0 %v7390, 16
      %v7448 = vpop.permute.xlu0 %7447
      %7457 = vrot.lane.b32.xlu0 %v7332, 24
      %v7458 = vpop.permute.xlu0 %7457
      %7459 = vrot.lane.b32.xlu0 %v7335, 24
      %v7460 = vpop.permute.xlu0 %7459
      %7461 = vrot.lane.b32.xlu0 %v7338, 24
      %v7462 = vpop.permute.xlu0 %7461
      %7463 = vrot.lane.b32.xlu0 %v7341, 24
      %v7464 = vpop.permute.xlu0 %7463
      %7465 = vrot.lane.b32.xlu0 %v7344, 24
      %v7466 = vpop.permute.xlu0 %7465
      %7467 = vrot.lane.b32.xlu0 %v7347, 24
      %v7468 = vpop.permute.xlu0 %7467
      %7469 = vrot.lane.b32.xlu0 %v7350, 24
      %v7470 = vpop.permute.xlu0 %7469
      %7471 = vrot.lane.b32.xlu0 %v7395, 24
      %v7472 = vpop.permute.xlu0 %7471
      %7481 = vrot.lane.b32.xlu0 %v7285, 32
      %v7482 = vpop.permute.xlu0 %7481
      %7483 = vrot.lane.b32.xlu0 %v7288, 32
      %v7484 = vpop.permute.xlu0 %7483
      %7485 = vrot.lane.b32.xlu0 %v7291, 32
      %v7486 = vpop.permute.xlu0 %7485
      %7487 = vrot.lane.b32.xlu0 %v7294, 32
      %v7488 = vpop.permute.xlu0 %7487
      %7489 = vrot.lane.b32.xlu0 %v7297, 32
      %v7490 = vpop.permute.xlu0 %7489
      %7491 = vrot.lane.b32.xlu0 %v7300, 32
      %v7492 = vpop.permute.xlu0 %7491
      %7493 = vrot.lane.b32.xlu0 %v7303, 32
      %v7494 = vpop.permute.xlu0 %7493
      %7495 = vrot.lane.b32.xlu0 %v7306, 32
      %v7496 = vpop.permute.xlu0 %7495
      %7505 = vrot.lane.b32.xlu0 %v7372, 40
      %v7506 = vpop.permute.xlu0 %7505
      %7507 = vrot.lane.b32.xlu0 %v7375, 40
      %v7508 = vpop.permute.xlu0 %7507
      %7509 = vrot.lane.b32.xlu0 %v7378, 40
      %v7510 = vpop.permute.xlu0 %7509
      %7511 = vrot.lane.b32.xlu0 %v7381, 40
      %v7512 = vpop.permute.xlu0 %7511
      %7513 = vrot.lane.b32.xlu0 %v7384, 40
      %v7514 = vpop.permute.xlu0 %7513
      %7515 = vrot.lane.b32.xlu0 %v7387, 40
      %v7516 = vpop.permute.xlu0 %7515
      %7517 = vrot.lane.b32.xlu0 %v7390, 40
      %v7518 = vpop.permute.xlu0 %7517
      %7519 = vrot.lane.b32.xlu0 %v7399, 40
      %v7520 = vpop.permute.xlu0 %7519
      %7529 = vrot.lane.b32.xlu0 %v7335, 48
      %v7530 = vpop.permute.xlu0 %7529
      %7531 = vrot.lane.b32.xlu0 %v7338, 48
      %v7532 = vpop.permute.xlu0 %7531
      %7533 = vrot.lane.b32.xlu0 %v7341, 48
      %v7534 = vpop.permute.xlu0 %7533
      %7535 = vrot.lane.b32.xlu0 %v7344, 48
      %v7536 = vpop.permute.xlu0 %7535
      %7537 = vrot.lane.b32.xlu0 %v7347, 48
      %v7538 = vpop.permute.xlu0 %7537
      %7539 = vrot.lane.b32.xlu0 %v7350, 48
      %v7540 = vpop.permute.xlu0 %7539
      %7541 = vrot.lane.b32.xlu0 %v7395, 48
      %v7542 = vpop.permute.xlu0 %7541
      %7543 = vrot.lane.b32.xlu0 %v7404, 48
      %v7544 = vpop.permute.xlu0 %7543
      %7553 = vrot.lane.b32.xlu0 %v7288, 56
      %v7554 = vpop.permute.xlu0 %7553
      %7555 = vrot.lane.b32.xlu0 %v7291, 56
      %v7556 = vpop.permute.xlu0 %7555
      %7557 = vrot.lane.b32.xlu0 %v7294, 56
      %v7558 = vpop.permute.xlu0 %7557
      %7559 = vrot.lane.b32.xlu0 %v7297, 56
      %v7560 = vpop.permute.xlu0 %7559
      %7561 = vrot.lane.b32.xlu0 %v7300, 56
      %v7562 = vpop.permute.xlu0 %7561
      %7563 = vrot.lane.b32.xlu0 %v7303, 56
      %v7564 = vpop.permute.xlu0 %7563
      %7565 = vrot.lane.b32.xlu0 %v7306, 56
      %v7566 = vpop.permute.xlu0 %7565
      %7567 = vrot.lane.b32.xlu0 %v7309, 56
      %v7568 = vpop.permute.xlu0 %7567
      %7577 = vrot.lane.b32.xlu0 %v7375, 64
      %v7578 = vpop.permute.xlu0 %7577
      %7579 = vrot.lane.b32.xlu0 %v7378, 64
      %v7580 = vpop.permute.xlu0 %7579
      %7581 = vrot.lane.b32.xlu0 %v7381, 64
      %v7582 = vpop.permute.xlu0 %7581
      %7583 = vrot.lane.b32.xlu0 %v7384, 64
      %v7584 = vpop.permute.xlu0 %7583
      %7585 = vrot.lane.b32.xlu0 %v7387, 64
      %v7586 = vpop.permute.xlu0 %7585
      %7587 = vrot.lane.b32.xlu0 %v7390, 64
      %v7588 = vpop.permute.xlu0 %7587
      %7589 = vrot.lane.b32.xlu0 %v7399, 64
      %v7590 = vpop.permute.xlu0 %7589
      %7591 = vrot.lane.b32.xlu0 %v7408, 64
      %v7592 = vpop.permute.xlu0 %7591
      %v7601 = vsel %vm657, %v7329, %v7410
      %v7602 = vsel %vm657, %v7332, %v7412
      %v7603 = vsel %vm657, %v7335, %v7414
      %v7604 = vsel %vm657, %v7338, %v7416
      %v7605 = vsel %vm657, %v7341, %v7418
      %v7606 = vsel %vm657, %v7344, %v7420
      %v7607 = vsel %vm657, %v7347, %v7422
      %v7608 = vsel %vm657, %v7350, %v7424
      %v7609 = vsel %vm694, %v7601, %v7434
      %v7610 = vsel %vm694, %v7602, %v7436
      %v7611 = vsel %vm694, %v7603, %v7438
      %v7612 = vsel %vm694, %v7604, %v7440
      %v7613 = vsel %vm694, %v7605, %v7442
      %v7614 = vsel %vm694, %v7606, %v7444
      %v7615 = vsel %vm694, %v7607, %v7446
      %v7616 = vsel %vm694, %v7608, %v7448
      %vm7617 = vcmask 195584
      %v7618 = vsel %vm7617, %v7609, %v7458
      %v7619 = vsel %vm7617, %v7610, %v7460
      %v7620 = vsel %vm7617, %v7611, %v7462
      %v7621 = vsel %vm7617, %v7612, %v7464
      %v7622 = vsel %vm7617, %v7613, %v7466
      %v7623 = vsel %vm7617, %v7614, %v7468
      %v7624 = vsel %vm7617, %v7615, %v7470
      %v7625 = vsel %vm7617, %v7616, %v7472
      %v7626 = vsel %vm6288, %v7618, %v7482
      %v7627 = vsel %vm6288, %v7619, %v7484
      %v7628 = vsel %vm6288, %v7620, %v7486
      %v7629 = vsel %vm6288, %v7621, %v7488
      %v7630 = vsel %vm6288, %v7622, %v7490
      %v7631 = vsel %vm6288, %v7623, %v7492
      %v7632 = vsel %vm6288, %v7624, %v7494
      %v7633 = vsel %vm6288, %v7625, %v7496
      %vm7634 = vcmask 326656
      %v7635 = vsel %vm7634, %v7626, %v7506
      %v7636 = vsel %vm7634, %v7627, %v7508
      %v7637 = vsel %vm7634, %v7628, %v7510
      %v7638 = vsel %vm7634, %v7629, %v7512
      %v7639 = vsel %vm7634, %v7630, %v7514
      %v7640 = vsel %vm7634, %v7631, %v7516
      %v7641 = vsel %vm7634, %v7632, %v7518
      %v7642 = vsel %vm7634, %v7633, %v7520
      %v7643 = vsel %vm6922, %v7635, %v7530
      %v7644 = vsel %vm6922, %v7636, %v7532
      %v7645 = vsel %vm6922, %v7637, %v7534
      %v7646 = vsel %vm6922, %v7638, %v7536
      %v7647 = vsel %vm6922, %v7639, %v7538
      %v7648 = vsel %vm6922, %v7640, %v7540
      %v7649 = vsel %vm6922, %v7641, %v7542
      %v7650 = vsel %vm6922, %v7642, %v7544
      %vm7651 = vcmask 457728
      %v7652 = vsel %vm7651, %v7643, %v7554
      %v7653 = vsel %vm7651, %v7644, %v7556
      %v7654 = vsel %vm7651, %v7645, %v7558
      %v7655 = vsel %vm7651, %v7646, %v7560
      %v7656 = vsel %vm7651, %v7647, %v7562
      %v7657 = vsel %vm7651, %v7648, %v7564
      %v7658 = vsel %vm7651, %v7649, %v7566
      %v7659 = vsel %vm7651, %v7650, %v7568
      %v7660 = vsel %vm3756, %v7652, %v7578
      %v7661 = vsel %vm3756, %v7653, %v7580
      %v7662 = vsel %vm3756, %v7654, %v7582
      %v7663 = vsel %vm3756, %v7655, %v7584
      %v7664 = vsel %vm3756, %v7656, %v7586
      %v7665 = vsel %vm3756, %v7657, %v7588
      %v7666 = vsel %vm3756, %v7658, %v7590
      %v7667 = vsel %vm3756, %v7659, %v7592
      %v7668 = vld [vmem:[%s17] sm:$0xff]
      %v7669 = vld [vmem:[%s17 + $0x8] sm:$0xff]
      %v7670 = vld [vmem:[%s17 + $0x10] sm:$0xff]
      %v7671 = vld [vmem:[%s17 + $0x18] sm:$0xff]
      %v7672 = vld [vmem:[%s17 + $0x20] sm:$0xff]
      %v7673 = vld [vmem:[%s17 + $0x28] sm:$0xff]
      %v7674 = vld [vmem:[%s17 + $0x30] sm:$0xff]
      %v7675 = vld [vmem:[%s17 + $0x38] sm:$0xff]
      %v7676 = vld [vmem:[%s17 + $0x40] sm:$0xff]
      %v7677 = vld [vmem:[%s18] sm:$0x1]
      %v7679 = vlaneseq
      %v7680 = vshrl.u32 %v7679, 7
      %v7681 = vsub.s32 0, %v7680
      %v7682 = vrot.slane %v7677, %v7681
      %vm7684 = vcmask 588800
      %v7686 = vsel %vm7684, %v7660, 0
      %v7689 = vsel %vm7684, %v7661, 0
      %v7692 = vsel %vm7684, %v7662, 0
      %v7695 = vsel %vm7684, %v7663, 0
      %v7698 = vsel %vm7684, %v7664, 0
      %v7701 = vsel %vm7684, %v7665, 0
      %v7704 = vsel %vm7684, %v7666, 0
      %v7707 = vsel %vm7684, %v7667, 0
      %7709 = vmatprep.subr.mxu0 0.0
      %7710 = vmatpush1.msra.mxu0 %v7668
      %7711 = vmatprep.subr.mxu0 0.0
      %7712 = vmatpush1.msra.mxu0 %v7669
      %7713 = vmatprep.subr.mxu0 0.0
      %7714 = vmatpush1.msra.mxu0 %v7670
      %7715 = vmatprep.subr.mxu0 0.0
      %7716 = vmatpush1.msra.mxu0 %v7671
      %7717 = vmatprep.subr.mxu0 0.0
      %7718 = vmatpush1.msra.mxu0 %v7672
      %7719 = vmatprep.subr.mxu0 0.0
      %7720 = vmatpush1.msra.mxu0 %v7673
      %7721 = vmatprep.subr.mxu0 0.0
      %7722 = vmatpush1.msra.mxu0 %v7674
      %7723 = vmatprep.subr.mxu0 0.0
      %7724 = vmatpush1.msra.mxu0 %v7675
      %7725 = vmatprep.subr.mxu0 0.0
      %7726 = vmatpush1.msra.mxu0 %v7676
      %7727 = vmatprep.subr.mxu0 0.0
      %7728 = vmatpush1.msra.mxu0 0.0
      %7729 = vmatprep.subr.mxu0 0.0
      %7730 = vmatpush1.msra.mxu0 0.0
      %7731 = vmatprep.subr.mxu0 0.0
      %7732 = vmatpush1.msra.mxu0 0.0
      %7733 = vmatprep.subr.mxu0 0.0
      %7734 = vmatpush1.msra.mxu0 0.0
      %7735 = vmatprep.subr.mxu0 0.0
      %7736 = vmatpush1.msra.mxu0 0.0
      %7737 = vmatprep.subr.mxu0 0.0
      %7738 = vmatpush1.msra.mxu0 0.0
      %7739 = vmatprep.subr.mxu0 0.0
      %7740 = vmatpush1.msra.mxu0 0.0
      %7741 = vmatprep.subr.mxu0 0.0
      %7742 = vmatpush1.msra.mxu0 0.0
      %7743 = vmatprep.subr.mxu0 0.0
      %7744 = vmatpush1.msra.mxu0 0.0
      %7745 = vmatprep.subr.mxu0 0.0
      %7746 = vmatpush1.msra.mxu0 0.0
      %7747 = vmatprep.subr.mxu0 0.0
      %7748 = vmatpush1.msra.mxu0 0.0
      %7749 = vmatprep.subr.mxu0 0.0
      %7750 = vmatpush1.msra.mxu0 0.0
      %7751 = vmatprep.subr.mxu0 0.0
      %7752 = vmatpush1.msra.mxu0 0.0
      %7753 = vmatprep.subr.mxu0 0.0
      %7754 = vmatpush1.msra.mxu0 0.0
      %7755 = vmatprep.subr.mxu0 0.0
      %7756 = vmatpush1.msra.mxu0 0.0
      %7757 = vmatprep.subr.mxu0 0.0
      %7758 = vmatpush1.msra.mxu0 0.0
      %7759 = vmatprep.subr.mxu0 0.0
      %7760 = vmatpush1.msra.mxu0 0.0
      %7761 = vmatprep.subr.mxu0 0.0
      %7762 = vmatpush1.msra.mxu0 0.0
      %7763 = vmatprep.subr.mxu0 0.0
      %7764 = vmatpush1.msra.mxu0 0.0
      %7765 = vmatprep.subr.mxu0 0.0
      %7766 = vmatpush1.msra.mxu0 0.0
      %7767 = vmatprep.subr.mxu0 0.0
      %7768 = vmatpush1.msra.mxu0 0.0
      %7769 = vmatprep.subr.mxu0 0.0
      %7770 = vmatpush1.msra.mxu0 0.0
      %7771 = vmatprep.subr.mxu0 0.0
      %7772 = vmatpush1.msra.mxu0 0.0
      %7773 = vmatprep.mubr.f32.mxu0 0.0
      %7774 = vmatmul.mubr.f32.gmra.mrb[0].mxu0 %v7686
      %v7775 = vpop.f32.mrb[0].mxu0
      %v7776 = vadd.f32 %v7682, %v7775
      %v7777 = vpop.f32.mrb[0].mxu0
      %7778 = vmatprep.mubr.f32.mxu0 0.0
      %7779 = vmatmul.mubr.f32.gmra.mrb[0].mxu0 %v7689
      %v7780 = vpop.f32.mrb[0].mxu0
      %v7781 = vadd.f32 %v7682, %v7780
      %v7782 = vpop.f32.mrb[0].mxu0
      %7783 = vmatprep.mubr.f32.mxu0 0.0
      %7784 = vmatmul.mubr.f32.gmra.mrb[0].mxu0 %v7692
      %v7785 = vpop.f32.mrb[0].mxu0
      %v7786 = vadd.f32 %v7682, %v7785
      %v7787 = vpop.f32.mrb[0].mxu0
      %7788 = vmatprep.mubr.f32.mxu0 0.0
      %7789 = vmatmul.mubr.f32.gmra.mrb[0].mxu0 %v7695
      %v7790 = vpop.f32.mrb[0].mxu0
      %v7791 = vadd.f32 %v7682, %v7790
      %v7792 = vpop.f32.mrb[0].mxu0
      %7793 = vmatprep.mubr.f32.mxu0 0.0
      %7794 = vmatmul.mubr.f32.gmra.mrb[0].mxu0 %v7698
      %v7795 = vpop.f32.mrb[0].mxu0
      %v7796 = vadd.f32 %v7682, %v7795
      %v7797 = vpop.f32.mrb[0].mxu0
      %7798 = vmatprep.mubr.f32.mxu0 0.0
      %7799 = vmatmul.mubr.f32.gmra.mrb[0].mxu0 %v7701
      %v7800 = vpop.f32.mrb[0].mxu0
      %v7801 = vadd.f32 %v7682, %v7800
      %v7802 = vpop.f32.mrb[0].mxu0
      %7803 = vmatprep.mubr.f32.mxu0 0.0
      %7804 = vmatmul.mubr.f32.gmra.mrb[0].mxu0 %v7704
      %v7805 = vpop.f32.mrb[0].mxu0
      %v7806 = vadd.f32 %v7682, %v7805
      %v7807 = vpop.f32.mrb[0].mxu0
      %7808 = vmatprep.mubr.f32.mxu0 0.0
      %7809 = vmatmul.mubr.f32.gmra.mrb[0].mxu0 %v7707
      %v7810 = vpop.f32.mrb[0].mxu0
      %v7811 = vadd.f32 %v7682, %v7810
      %v7812 = vpop.f32.mrb[0].mxu0
      %7813 = vdwg.mxu0
      %v7814 = vmax.f32 %v7776, 0.0
      %v7815 = vmax.f32 %v7781, 0.0
      %v7816 = vmax.f32 %v7786, 0.0
      %v7817 = vmax.f32 %v7791, 0.0
      %v7818 = vmax.f32 %v7796, 0.0
      %v7819 = vmax.f32 %v7801, 0.0
      %v7820 = vmax.f32 %v7806, 0.0
      %v7821 = vmax.f32 %v7811, 0.0
      %vm7822 = vcmp.ne.f32.partialorder %v7776, %v7776
      %vm7823 = vcmp.ne.f32.partialorder %v7781, %v7781
      %vm7824 = vcmp.ne.f32.partialorder %v7786, %v7786
      %vm7825 = vcmp.ne.f32.partialorder %v7791, %v7791
      %vm7826 = vcmp.ne.f32.partialorder %v7796, %v7796
      %vm7827 = vcmp.ne.f32.partialorder %v7801, %v7801
      %vm7828 = vcmp.ne.f32.partialorder %v7806, %v7806
      %vm7829 = vcmp.ne.f32.partialorder %v7811, %v7811
      %v7830 = vadd.f32 %v7776, 0.0
      %v7831 = vadd.f32 %v7781, 0.0
      %v7832 = vadd.f32 %v7786, 0.0
      %v7833 = vadd.f32 %v7791, 0.0
      %v7834 = vadd.f32 %v7796, 0.0
      %v7835 = vadd.f32 %v7801, 0.0
      %v7836 = vadd.f32 %v7806, 0.0
      %v7837 = vadd.f32 %v7811, 0.0
      %v7838 = vand.u32 2147483647, %v7776
      %v7839 = vand.u32 2147483647, %v7781
      %v7840 = vand.u32 2147483647, %v7786
      %v7841 = vand.u32 2147483647, %v7791
      %v7842 = vand.u32 2147483647, %v7796
      %v7843 = vand.u32 2147483647, %v7801
      %v7844 = vand.u32 2147483647, %v7806
      %v7845 = vand.u32 2147483647, %v7811
      %v7846 = vsub.f32 0.0, %v7838
      %v7847 = vsub.f32 0.0, %v7839
      %v7848 = vsub.f32 0.0, %v7840
      %v7849 = vsub.f32 0.0, %v7841
      %v7850 = vsub.f32 0.0, %v7842
      %v7851 = vsub.f32 0.0, %v7843
      %v7852 = vsub.f32 0.0, %v7844
      %v7853 = vsub.f32 0.0, %v7845
      %v7854 = vmul.f32 %v7846, 1.442695
      %v7855 = vpow.pop %v7854
      %v7856 = vmul.f32 %v7847, 1.442695
      %v7857 = vpow.pop %v7856
      %v7858 = vmul.f32 %v7848, 1.442695
      %v7859 = vpow.pop %v7858
      %v7860 = vmul.f32 %v7849, 1.442695
      %v7861 = vpow.pop %v7860
      %v7862 = vmul.f32 %v7850, 1.442695
      %v7863 = vpow.pop %v7862
      %v7864 = vmul.f32 %v7851, 1.442695
      %v7865 = vpow.pop %v7864
      %v7866 = vmul.f32 %v7852, 1.442695
      %v7867 = vpow.pop %v7866
      %v7868 = vmul.f32 %v7853, 1.442695
      %v7869 = vpow.pop %v7868
      %v7870 = vadd.f32 %v7855, 1.0
      %v7871 = vlog2.pop %v7870
      %v7872 = vmul.f32 %v7871, 0.6931472
      %v7873 = vmul.f32 -0.5, %v7855
      %v7874 = vadd.f32 %v7873, 1.0
      %v7875 = vmul.f32 %v7874, %v7855
      %v7876 = vand.u32 2147483647, %v7855
      %vm7877 = vcmp.lt.f32.partialorder %v7876, 0.0004427343
      %v7878 = vsel %vm7877, %v7875, %v7872
      %v7879 = vadd.f32 %v7857, 1.0
      %v7880 = vlog2.pop %v7879
      %v7881 = vmul.f32 %v7880, 0.6931472
      %v7882 = vmul.f32 -0.5, %v7857
      %v7883 = vadd.f32 %v7882, 1.0
      %v7884 = vmul.f32 %v7883, %v7857
      %v7885 = vand.u32 2147483647, %v7857
      %vm7886 = vcmp.lt.f32.partialorder %v7885, 0.0004427343
      %v7887 = vsel %vm7886, %v7884, %v7881
      %v7888 = vadd.f32 %v7859, 1.0
      %v7889 = vlog2.pop %v7888
      %v7890 = vmul.f32 %v7889, 0.6931472
      %v7891 = vmul.f32 -0.5, %v7859
      %v7892 = vadd.f32 %v7891, 1.0
      %v7893 = vmul.f32 %v7892, %v7859
      %v7894 = vand.u32 2147483647, %v7859
      %vm7895 = vcmp.lt.f32.partialorder %v7894, 0.0004427343
      %v7896 = vsel %vm7895, %v7893, %v7890
      %v7897 = vadd.f32 %v7861, 1.0
      %v7898 = vlog2.pop %v7897
      %v7899 = vmul.f32 %v7898, 0.6931472
      %v7900 = vmul.f32 -0.5, %v7861
      %v7901 = vadd.f32 %v7900, 1.0
      %v7902 = vmul.f32 %v7901, %v7861
      %v7903 = vand.u32 2147483647, %v7861
      %vm7904 = vcmp.lt.f32.partialorder %v7903, 0.0004427343
      %v7905 = vsel %vm7904, %v7902, %v7899
      %v7906 = vadd.f32 %v7863, 1.0
      %v7907 = vlog2.pop %v7906
      %v7908 = vmul.f32 %v7907, 0.6931472
      %v7909 = vmul.f32 -0.5, %v7863
      %v7910 = vadd.f32 %v7909, 1.0
      %v7911 = vmul.f32 %v7910, %v7863
      %v7912 = vand.u32 2147483647, %v7863
      %vm7913 = vcmp.lt.f32.partialorder %v7912, 0.0004427343
      %v7914 = vsel %vm7913, %v7911, %v7908
      %v7915 = vadd.f32 %v7865, 1.0
      %v7916 = vlog2.pop %v7915
      %v7917 = vmul.f32 %v7916, 0.6931472
      %v7918 = vmul.f32 -0.5, %v7865
      %v7919 = vadd.f32 %v7918, 1.0
      %v7920 = vmul.f32 %v7919, %v7865
      %v7921 = vand.u32 2147483647, %v7865
      %vm7922 = vcmp.lt.f32.partialorder %v7921, 0.0004427343
      %v7923 = vsel %vm7922, %v7920, %v7917
      %v7924 = vadd.f32 %v7867, 1.0
      %v7925 = vlog2.pop %v7924
      %v7926 = vmul.f32 %v7925, 0.6931472
      %v7927 = vmul.f32 -0.5, %v7867
      %v7928 = vadd.f32 %v7927, 1.0
      %v7929 = vmul.f32 %v7928, %v7867
      %v7930 = vand.u32 2147483647, %v7867
      %vm7931 = vcmp.lt.f32.partialorder %v7930, 0.0004427343
      %v7932 = vsel %vm7931, %v7929, %v7926
      %v7933 = vadd.f32 %v7869, 1.0
      %v7934 = vlog2.pop %v7933
      %v7935 = vmul.f32 %v7934, 0.6931472
      %v7936 = vmul.f32 -0.5, %v7869
      %v7937 = vadd.f32 %v7936, 1.0
      %v7938 = vmul.f32 %v7937, %v7869
      %v7939 = vand.u32 2147483647, %v7869
      %vm7940 = vcmp.lt.f32.partialorder %v7939, 0.0004427343
      %v7941 = vsel %vm7940, %v7938, %v7935
      %v7942 = vadd.f32 %v7814, %v7878
      %v7943 = vadd.f32 %v7815, %v7887
      %v7944 = vadd.f32 %v7816, %v7896
      %v7945 = vadd.f32 %v7817, %v7905
      %v7946 = vadd.f32 %v7818, %v7914
      %v7947 = vadd.f32 %v7819, %v7923
      %v7948 = vadd.f32 %v7820, %v7932
      %v7949 = vadd.f32 %v7821, %v7941
      %v7950 = vsel %vm7822, %v7830, %v7942
      %v7951 = vsel %vm7823, %v7831, %v7943
      %v7952 = vsel %vm7824, %v7832, %v7944
      %v7953 = vsel %vm7825, %v7833, %v7945
      %v7954 = vsel %vm7826, %v7834, %v7946
      %v7955 = vsel %vm7827, %v7835, %v7947
      %v7956 = vsel %vm7828, %v7836, %v7948
      %v7957 = vsel %vm7829, %v7837, %v7949
      %v7958 = vtanh.pop %v7950
      %v7959 = vtanh.pop %v7951
      %v7960 = vtanh.pop %v7952
      %v7961 = vtanh.pop %v7953
      %v7962 = vtanh.pop %v7954
      %v7963 = vtanh.pop %v7955
      %v7964 = vtanh.pop %v7956
      %v7965 = vtanh.pop %v7957
      %v7966 = vmul.f32 %v7776, %v7958
      %v7967 = vmul.f32 %v7781, %v7959
      %v7968 = vmul.f32 %v7786, %v7960
      %v7969 = vmul.f32 %v7791, %v7961
      %v7970 = vmul.f32 %v7796, %v7962
      %v7971 = vmul.f32 %v7801, %v7963
      %v7972 = vmul.f32 %v7806, %v7964
      %v7973 = vmul.f32 %v7811, %v7965
      %v7974 = vld [vmem:[%s19] sm:$0xff]
      %v7975 = vld [vmem:[%s19 + $0x8] sm:$0xff]
      %v7976 = vld [vmem:[%s20] sm:$0x1]
      %v7978 = vlaneseq
      %v7979 = vshrl.u32 %v7978, 7
      %v7980 = vsub.s32 0, %v7979
      %v7981 = vrot.slane %v7976, %v7980
      %v7984 = vsel %vm694, %v6593, 0
      %v7987 = vsel %vm694, %v6594, 0
      %v7990 = vsel %vm694, %v6595, 0
      %v7993 = vsel %vm694, %v6596, 0
      %v7996 = vsel %vm694, %v6597, 0
      %v7999 = vsel %vm694, %v6598, 0
      %v8002 = vsel %vm694, %v6599, 0
      %v8005 = vsel %vm694, %v6600, 0
      %8007 = vmatprep.subr.mxu0 0.0
      %8008 = vmatpush1.msra.mxu0 %v7974
      %8009 = vmatprep.subr.mxu0 0.0
      %8010 = vmatpush1.msra.mxu0 %v7975
      %8011 = vmatprep.subr.mxu0 0.0
      %8012 = vmatpush1.msra.mxu0 0.0
      %8013 = vmatprep.subr.mxu0 0.0
      %8014 = vmatpush1.msra.mxu0 0.0
      %8015 = vmatprep.subr.mxu0 0.0
      %8016 = vmatpush1.msra.mxu0 0.0
      %8017 = vmatprep.subr.mxu0 0.0
      %8018 = vmatpush1.msra.mxu0 0.0
      %8019 = vmatprep.subr.mxu0 0.0
      %8020 = vmatpush1.msra.mxu0 0.0
      %8021 = vmatprep.subr.mxu0 0.0
      %8022 = vmatpush1.msra.mxu0 0.0
      %8023 = vmatprep.subr.mxu0 0.0
      %8024 = vmatpush1.msra.mxu0 0.0
      %8025 = vmatprep.subr.mxu0 0.0
      %8026 = vmatpush1.msra.mxu0 0.0
      %8027 = vmatprep.subr.mxu0 0.0
      %8028 = vmatpush1.msra.mxu0 0.0
      %8029 = vmatprep.subr.mxu0 0.0
      %8030 = vmatpush1.msra.mxu0 0.0
      %8031 = vmatprep.subr.mxu0 0.0
      %8032 = vmatpush1.msra.mxu0 0.0
      %8033 = vmatprep.subr.mxu0 0.0
      %8034 = vmatpush1.msra.mxu0 0.0
      %8035 = vmatprep.subr.mxu0 0.0
      %8036 = vmatpush1.msra.mxu0 0.0
      %8037 = vmatprep.subr.mxu0 0.0
      %8038 = vmatpush1.msra.mxu0 0.0
      %8039 = vmatprep.subr.mxu0 0.0
      %8040 = vmatpush1.msra.mxu0 0.0
      %8041 = vmatprep.subr.mxu0 0.0
      %8042 = vmatpush1.msra.mxu0 0.0
      %8043 = vmatprep.subr.mxu0 0.0
      %8044 = vmatpush1.msra.mxu0 0.0
      %8045 = vmatprep.subr.mxu0 0.0
      %8046 = vmatpush1.msra.mxu0 0.0
      %8047 = vmatprep.subr.mxu0 0.0
      %8048 = vmatpush1.msra.mxu0 0.0
      %8049 = vmatprep.subr.mxu0 0.0
      %8050 = vmatpush1.msra.mxu0 0.0
      %8051 = vmatprep.subr.mxu0 0.0
      %8052 = vmatpush1.msra.mxu0 0.0
      %8053 = vmatprep.subr.mxu0 0.0
      %8054 = vmatpush1.msra.mxu0 0.0
      %8055 = vmatprep.subr.mxu0 0.0
      %8056 = vmatpush1.msra.mxu0 0.0
      %8057 = vmatprep.subr.mxu0 0.0
      %8058 = vmatpush1.msra.mxu0 0.0
      %8059 = vmatprep.subr.mxu0 0.0
      %8060 = vmatpush1.msra.mxu0 0.0
      %8061 = vmatprep.subr.mxu0 0.0
      %8062 = vmatpush1.msra.mxu0 0.0
      %8063 = vmatprep.subr.mxu0 0.0
      %8064 = vmatpush1.msra.mxu0 0.0
      %8065 = vmatprep.subr.mxu0 0.0
      %8066 = vmatpush1.msra.mxu0 0.0
      %8067 = vmatprep.subr.mxu0 0.0
      %8068 = vmatpush1.msra.mxu0 0.0
      %8069 = vmatprep.subr.mxu0 0.0
      %8070 = vmatpush1.msra.mxu0 0.0
      %8071 = vmatprep.mubr.f32.mxu0 0.0
      %8072 = vmatmul.mubr.f32.gmra.mrb[0].mxu0 %v7984
      %v8073 = vpop.f32.mrb[0].mxu0
      %v8074 = vadd.f32 %v7981, %v8073
      %v8075 = vpop.f32.mrb[0].mxu0
      %8076 = vmatprep.mubr.f32.mxu0 0.0
      %8077 = vmatmul.mubr.f32.gmra.mrb[0].mxu0 %v7987
      %v8078 = vpop.f32.mrb[0].mxu0
      %v8079 = vadd.f32 %v7981, %v8078
      %v8080 = vpop.f32.mrb[0].mxu0
      %8081 = vmatprep.mubr.f32.mxu0 0.0
      %8082 = vmatmul.mubr.f32.gmra.mrb[0].mxu0 %v7990
      %v8083 = vpop.f32.mrb[0].mxu0
      %v8084 = vadd.f32 %v7981, %v8083
      %v8085 = vpop.f32.mrb[0].mxu0
      %8086 = vmatprep.mubr.f32.mxu0 0.0
      %8087 = vmatmul.mubr.f32.gmra.mrb[0].mxu0 %v7993
      %v8088 = vpop.f32.mrb[0].mxu0
      %v8089 = vadd.f32 %v7981, %v8088
      %v8090 = vpop.f32.mrb[0].mxu0
      %8091 = vmatprep.mubr.f32.mxu0 0.0
      %8092 = vmatmul.mubr.f32.gmra.mrb[0].mxu0 %v7996
      %v8093 = vpop.f32.mrb[0].mxu0
      %v8094 = vadd.f32 %v7981, %v8093
      %v8095 = vpop.f32.mrb[0].mxu0
      %8096 = vmatprep.mubr.f32.mxu0 0.0
      %8097 = vmatmul.mubr.f32.gmra.mrb[0].mxu0 %v7999
      %v8098 = vpop.f32.mrb[0].mxu0
      %v8099 = vadd.f32 %v7981, %v8098
      %v8100 = vpop.f32.mrb[0].mxu0
      %8101 = vmatprep.mubr.f32.mxu0 0.0
      %8102 = vmatmul.mubr.f32.gmra.mrb[0].mxu0 %v8002
      %v8103 = vpop.f32.mrb[0].mxu0
      %v8104 = vadd.f32 %v7981, %v8103
      %v8105 = vpop.f32.mrb[0].mxu0
      %8106 = vmatprep.mubr.f32.mxu0 0.0
      %8107 = vmatmul.mubr.f32.gmra.mrb[0].mxu0 %v8005
      %v8108 = vpop.f32.mrb[0].mxu0
      %v8109 = vadd.f32 %v7981, %v8108
      %v8110 = vpop.f32.mrb[0].mxu0
      %8111 = vdwg.mxu0
      %v8112 = vadd.f32 %v7966, %v8074
      %v8113 = vadd.f32 %v7967, %v8079
      %v8114 = vadd.f32 %v7968, %v8084
      %v8115 = vadd.f32 %v7969, %v8089
      %v8116 = vadd.f32 %v7970, %v8094
      %v8117 = vadd.f32 %v7971, %v8099
      %v8118 = vadd.f32 %v7972, %v8104
      %v8119 = vadd.f32 %v7973, %v8109
      %8120 = vst.msk [vmem:[%s656] sm:$0xff] %vm657, %v8112
      %8121 = vst.msk [vmem:[%s656 + $0x8] sm:$0xff] %vm657, %v8113
      %8122 = vst.msk [vmem:[%s656 + $0x10] sm:$0xff] %vm657, %v8114
      %8123 = vst.msk [vmem:[%s656 + $0x18] sm:$0xff] %vm657, %v8115
      %8124 = vst.msk [vmem:[%s656 + $0x20] sm:$0xff] %vm657, %v8116
      %8125 = vst.msk [vmem:[%s656 + $0x28] sm:$0xff] %vm657, %v8117
      %8126 = vst.msk [vmem:[%s656 + $0x30] sm:$0xff] %vm657, %v8118
      %8127 = vst.msk [vmem:[%s656 + $0x38] sm:$0xff] %vm657, %v8119
      %p8128 = scmp.lt.s32.totalorder %s32, 1
      %s8129 = scalar_select %p8128, %s32, 1
      %s8130 = smul.addr %s8129, 8
      %s8131 = smul.addr %s8130, 8
      %s8132 = scalar_lea.vmem %s21, %s8131
      // Predicated region
      $region105: #{lblock_forward.1} parent=103 // pred_check
        %p8133 = pneg %p496
      $region106: #{lblock_forward.1} parent=103 // pred_check_branch
        %8135 = sbr.rel (%p8133) target = $region108
      $region107: #{lblock_forward.1} parent=103 // pred_region
        _
      $region108: #{lblock_forward.1} parent=103 // pred_fallthru
        _
    $region104: #{lblock_forward.1} parent=5 // pred_fallthru
      _
    %p8136 = scmp.le.s32.totalorder 2, %s27
    // Predicated region
    $region109: #{lblock_forward.1} parent=5 // pred_check
      %p8137 = pneg %p8136
    $region110: #{lblock_forward.1} parent=5 // pred_check_branch
      %8139 = sbr.rel (%p8137) target = $region112
    $region111: #{lblock_forward.1} parent=5 // pred_region
      %s8140 = ssub.s32 %s27, 2
      // Predicated region
      $region113: #{lblock_forward.1} parent=111 // pred_check
        %p8141 = pneg %p502
      $region114: #{lblock_forward.1} parent=111 // pred_check_branch
        %8143 = sbr.rel (%p8141) target = $region116
      $region115: #{lblock_forward.1} parent=111 // pred_region
        %p8144 = scmp.lt.s32.totalorder %s33, 1
        %s8145 = scalar_select %p8144, %s33, 1
        %s8146 = smul.addr %s8145, 8
        %s8147 = smul.addr %s8146, 8
        %s8148 = scalar_lea.vmem %s21, %s8147
      $region116: #{lblock_forward.1} parent=111 // pred_fallthru
        _
    $region112: #{lblock_forward.1} parent=5 // pred_fallthru
      _
  $region6: #{lblock_forward.1} parent=0 // loop_footer
    %s31 = sadd.s32 1, %s27
  $region7: #{lblock_forward.1} parent=0 // loop_footer_branch
    %26 = sbr.rel target = $region3
  $region8: #{lblock_forward.1} parent=0 // loop_exit
    _

</llo_original>
